<compile_context>
chip_gen: v7x
topology: tpu7x:2x2x1
jax: 0.10.0
libtpu: 0.0.40
codegen_flags: <defaults>
</compile_context>

<pallas_src>
import math
import functools

import jax
import jax.numpy as jnp
from jax import lax
from jax.experimental import pallas as pl
from jax.experimental.pallas import tpu as pltpu


def _pick_mxu_dtype():
    """bf16 matmul operands on v6e/v7x (full-rate MXU, half the weight
    VMEM/DMA); f32 elsewhere (v5e has no bf16 VPU/EUP).  Accumulation is
    always f32 via preferred_element_type."""
    try:
        kind = jax.devices()[0].device_kind.lower()
    except Exception:
        return jnp.float32
    if ("v6" in kind) or ("v7" in kind) or ("7x" in kind):
        return jnp.bfloat16
    return jnp.float32


MXU_DTYPE = _pick_mxu_dtype()

_LAYER_KEYS = ('wqkv', 'bqkv', 'wo', 'bo', 'ln1_g', 'ln1_b',
               'w1', 'b1', 'w2', 'b2', 'ln2_g', 'ln2_b',
               'cw', 'cb', 'bn_scale', 'bn_shift')
_NW = len(_LAYER_KEYS)


def _mm(a, b):
    return jnp.dot(a.astype(MXU_DTYPE), b.astype(MXU_DTYPE),
                   preferred_element_type=jnp.float32)


def _layer_norm(z, g, b):
    mu = jnp.mean(z, axis=-1, keepdims=True)
    var = jnp.mean((z - mu) ** 2, axis=-1, keepdims=True)
    return (z - mu) * lax.rsqrt(var + 1e-5) * g + b


def _gelu(x):          # exact (erf) GELU, matching F.gelu default
    return 0.5 * x * (1.0 + lax.erf(x * (1.0 / math.sqrt(2.0))))


def _elu(x):           # ELU(alpha=1)
    return jnp.where(x > 0, x, jnp.exp(jnp.minimum(x, 0.0)) - 1.0)


# ----------------------------- fused kernel --------------------------------

def _informer_encoder_kernel(*refs, n_layers, H, L0, Bt, scale):
    """Whole Informer encoder (embedding + PE + all layers) for one block of
    Bt batch elements.  refs = (x, emb_w, emb_b, pe, 16*n_layers weights,
    out, scratch)."""
    x_ref, emb_w_ref, emb_b_ref, pe_ref = refs[:4]
    layer_refs = [refs[4 + i * _NW: 4 + (i + 1) * _NW] for i in range(n_layers)]
    out_ref = refs[4 + n_layers * _NW]
    pad_ref = refs[4 + n_layers * _NW + 1]          # (Bt*(L0+2), D) VMEM

    D = emb_w_ref.shape[-1]
    Dh = D // H

    # ---- embedding * sqrt(d_model) + positional encoding (in-kernel) ------
    x2d = jnp.concatenate([x_ref[bi] for bi in range(Bt)], axis=0)  # (Bt*L0,Cin)
    pe = pe_ref[...]
    h = (_mm(x2d, emb_w_ref[...]) + emb_b_ref[...]) * scale
    h = h + jnp.concatenate([pe] * Bt, axis=0)                      # (Bt*L0, D)

    L = L0
    for li in range(n_layers):
        (wqkv, bqkv, wo, bo, g1, be1, w1, b1, w2, b2, g2, be2,
         cw, cb, bns, bnsh) = layer_refs[li]

        # ---- attention: fused QKV over all Bt*L rows (fills MXU M dim) ----
        qkv = _mm(h, wqkv[...]) + bqkv[...]                         # (Bt*L, 3D)
        wo_v = wo[...]
        attn_rows = []
        for bi in range(Bt):
            r0 = bi * L
            acc = None
            for hh in range(H):
                c0 = hh * Dh
                q = qkv[r0:r0 + L, c0:c0 + Dh]
                k = qkv[r0:r0 + L, D + c0:D + c0 + Dh]
                v = qkv[r0:r0 + L, 2 * D + c0:2 * D + c0 + Dh]
                # ProbAttention(scale=None): `if self.scale:` is False in the
                # reference -> no 1/sqrt(Dh) scaling of the scores.
                sc = lax.dot_general(q.astype(MXU_DTYPE), k.astype(MXU_DTYPE),
                                     (((1,), (1,)), ((), ())),
                                     preferred_element_type=jnp.float32)
                sc = sc - jnp.max(sc, axis=-1, keepdims=True)
                p = jnp.exp(sc)
                p = p * pl.reciprocal(jnp.sum(p, axis=-1, keepdims=True))
                # Fold this head straight into the output projection: no
                # lane-axis head concat; MXU-friendly (L,Dh)x(Dh,D) accumulate.
                contrib = _mm(_mm(p, v), wo_v[c0:c0 + Dh, :])       # (L, D)
                acc = contrib if acc is None else acc + contrib
            attn_rows.append(acc)
        attn = jnp.concatenate(attn_rows, axis=0) + bo[...]         # (Bt*L, D)

        x1 = _layer_norm(h + attn, g1[...], be1[...])               # norm1

        # ---- FFN (1x1 convs == linears), exact GELU, residual, norm2 ------
        hd = _gelu(_mm(x1, w1[...]) + b1[...])
        x2 = _layer_norm(x1 + _mm(hd, w2[...]) + b2[...], g2[...], be2[...])

        # ---- ConvLayer: Conv1d(k=3, replicate) + BN(eval) + ELU + maxpool --
        Lp = L + 2
        Lout = (L - 1) // 2 + 1
        # shared replicate-padded slab for all Bt batch elements (scratch)
        for bi in range(Bt):
            base, r0 = bi * Lp, bi * L
            pad_ref[base + 1:base + 1 + L, :] = x2[r0:r0 + L, :]
            pad_ref[base:base + 1, :] = x2[r0:r0 + 1, :]
            pad_ref[base + 1 + L:base + 2 + L, :] = x2[r0 + L - 1:r0 + L, :]
        slab = pad_ref[0:Bt * Lp, :]
        t0 = _mm(slab, cw[0])        # one big (Bt*Lp, D) matmul per conv tap
        t1 = _mm(slab, cw[1])
        t2 = _mm(slab, cw[2])

        neg = jnp.full((1, D), -jnp.inf, jnp.float32)
        pooled = []
        for bi in range(Bt):
            base = bi * Lp
            y = (cb[...] + t0[base:base + L, :] + t1[base + 1:base + 1 + L, :]
                 + t2[base + 2:base + 2 + L, :])
            y = _elu(y * bns[...] + bnsh[...])            # BatchNorm(eval)+ELU
            # MaxPool1d(3, 2, 1): -inf padded edge rows, 3 stride-2 loads,
            # 2 elementwise maxima.
            pad_ref[base + 1:base + 1 + L, :] = y
            pad_ref[base:base + 1, :] = neg
            pad_ref[base + 1 + L:base + 2 + L, :] = neg
            m0 = pad_ref[pl.ds(base + 0, Lout, stride=2), :]
            m1 = pad_ref[pl.ds(base + 1, Lout, stride=2), :]
            m2 = pad_ref[pl.ds(base + 2, Lout, stride=2), :]
            pooled.append(jnp.maximum(jnp.maximum(m0, m1), m2))

        if li == n_layers - 1:
            for bi in range(Bt):
                out_ref[bi] = pooled[bi].astype(out_ref.dtype)
        else:
            h = jnp.concatenate(pooled, axis=0)                     # (Bt*Lout, D)
            L = Lout


# ------------------------------ wrapper -------------------------------------

def informer_encoder_pallas(x, params, *, n_heads, block_b=None):
    B, L0, Cin = x.shape
    D = params['emb_w'].shape[-1]
    layers = params['layers']
    n_layers = len(layers)

    Lf = L0
    for _ in range(n_layers):
        Lf = (Lf - 1) // 2 + 1

    # Batch blocking: largest divisor of B keeping <=~256 rows per grid step
    # (fills the MXU M dimension; remaining grid is sharded "parallel").
    if block_b is None:
        block_b = 1
        for cand in range(B, 0, -1):
            if B % cand == 0 and cand * L0 <= 256:
                block_b = cand
                break
    Bt = block_b
    assert B % Bt == 0

    def full_spec(shape):
        if len(shape) == 2:
            return pl.BlockSpec(shape, lambda i: (0, 0))
        return pl.BlockSpec(shape, lambda i: (0, 0, 0))

    pe = params['pe'][:L0]
    args = [x, params['emb_w'], params['emb_b'], pe]
    in_specs = [pl.BlockSpec((Bt, L0, Cin), lambda i: (i, 0, 0)),
                full_spec(params['emb_w'].shape),
                full_spec(params['emb_b'].shape),
                full_spec(pe.shape)]
    # NOTE: these weight specs have constant block indices; at production
    # shapes on v7x (64 MiB VMEM) add pipeline_mode=pl.Buffered(1) so they are
    # single-buffered.  At these small shapes double-buffering is negligible.
    for lp in layers:
        for k in _LAYER_KEYS:
            args.append(lp[k])
            in_specs.append(full_spec(lp[k].shape))

    kernel = functools.partial(
        _informer_encoder_kernel, n_layers=n_layers, H=n_heads, L0=L0, Bt=Bt,
        scale=float(math.sqrt(D)))

    return pl.pallas_call(
        kernel,
        out_shape=jax.ShapeDtypeStruct((B, Lf, D), jnp.float32),
        grid=(B // Bt,),
        in_specs=in_specs,
        out_specs=pl.BlockSpec((Bt, Lf, D), lambda i: (i, 0, 0)),
        scratch_shapes=[pltpu.VMEM((Bt * (L0 + 2), D), jnp.float32)],
        compiler_params=pltpu.CompilerParams(
            dimension_semantics=("parallel",),
            vmem_limit_bytes=48 * 1024 * 1024),
    )(*args)


# ------------------------------ parameters ----------------------------------

def init_params(key, input_size, d_model, n_heads, e_layers, d_ff,
                output_size, max_len=64):
    keys = iter(jax.random.split(key, 128))

    def lin(kk, fan_in, fan_out):
        bound = 1.0 / math.sqrt(fan_in)
        w = jax.random.uniform(kk, (fan_in, fan_out), jnp.float32, -bound, bound)
        b = jax.random.uniform(jax.random.fold_in(kk, 1), (1, fan_out),
                               jnp.float32, -bound, bound)
        return w, b

    params = {}
    params['emb_w'], params['emb_b'] = lin(next(keys), input_size, d_model)

    # positional encoding buffer (same construction as PositionalEncoding)
    pos = jnp.arange(max_len, dtype=jnp.float32)[:, None]
    div = jnp.exp(jnp.arange(0, d_model, 2, dtype=jnp.float32)
                  * (-math.log(10000.0) / d_model))
    pe = jnp.zeros((max_len, d_model), jnp.float32)
    pe = pe.at[:, 0::2].set(jnp.sin(pos * div))
    pe = pe.at[:, 1::2].set(jnp.cos(pos * div))
    params['pe'] = pe

    layers = []
    for _ in range(e_layers):
        lp = {}
        wq, bq = lin(next(keys), d_model, d_model)
        wk, bk = lin(next(keys), d_model, d_model)
        wv, bv = lin(next(keys), d_model, d_model)
        lp['wqkv'] = jnp.concatenate([wq, wk, wv], axis=1)        # (D, 3D) fused
        lp['bqkv'] = jnp.concatenate([bq, bk, bv], axis=1)        # (1, 3D)
        lp['wo'], lp['bo'] = lin(next(keys), d_model, d_model)
        lp['ln1_g'] = jnp.ones((1, d_model), jnp.float32)
        lp['ln1_b'] = jnp.zeros((1, d_model), jnp.float32)
        lp['w1'], lp['b1'] = lin(next(keys), d_model, d_ff)
        lp['w2'], lp['b2'] = lin(next(keys), d_ff, d_model)
        lp['ln2_g'] = jnp.ones((1, d_model), jnp.float32)
        lp['ln2_b'] = jnp.zeros((1, d_model), jnp.float32)
        # Conv1d(C, C, k=3) weight (C_out, C_in, 3) -> per-tap (3, C_in, C_out)
        cbound = 1.0 / math.sqrt(3 * d_model)
        cw = jax.random.uniform(next(keys), (d_model, d_model, 3), jnp.float32,
                                -cbound, cbound)
        lp['cw'] = jnp.transpose(cw, (2, 1, 0))
        lp['cb'] = jax.random.uniform(next(keys), (1, d_model), jnp.float32,
                                      -cbound, cbound)
        # BatchNorm1d (eval mode): fold running stats + affine into scale/shift
        gamma = 1.0 + 0.1 * jax.random.normal(next(keys), (d_model,), jnp.float32)
        beta = 0.1 * jax.random.normal(next(keys), (d_model,), jnp.float32)
        rmean = 0.1 * jax.random.normal(next(keys), (d_model,), jnp.float32)
        rvar = 1.0 + 0.1 * jax.random.uniform(next(keys), (d_model,), jnp.float32)
        bscale = gamma / jnp.sqrt(rvar + 1e-5)
        lp['bn_scale'] = bscale[None, :]
        lp['bn_shift'] = (beta - rmean * bscale)[None, :]
        layers.append(lp)
    params['layers'] = layers

    params['proj_w'], params['proj_b'] = lin(next(keys), d_model, output_size)

    # Pre-cast matmul operand weights to the MXU dtype (bf16 on v6e/v7x):
    # halves their DMA / VMEM footprint and avoids in-kernel re-conversion.
    params['emb_w'] = params['emb_w'].astype(MXU_DTYPE)
    for lp in params['layers']:
        for k in ('wqkv', 'wo', 'w1', 'w2', 'cw'):
            lp[k] = lp[k].astype(MXU_DTYPE)
    return params


# ------------------------------- forward ------------------------------------

def informer_forward(x, params, *, n_heads):
    # Fused encoder: embedding + positional encoding + all encoder blocks.
    h = informer_encoder_pallas(x, params, n_heads=n_heads)      # (B, Lf, D)
    # Tiny (B, D) @ (D, output_size=1) tail: 1-lane output -> leave to XLA.
    last = h[:, -1, :]
    out = last @ params['proj_w'] + params['proj_b']
    return out[:, None, :]


if __name__ == "__main__":
    # Small but lane-dense shapes (d_model / d_ff multiples of 128 so stores
    # are unmasked and the MXU N dimension is filled).
    input_size, d_model, n_heads, e_layers, d_ff, output_size = 4, 128, 4, 2, 256, 1
    B, L = 2, 16
    key = jax.random.PRNGKey(0)
    kp, kx = jax.random.split(key)
    params = init_params(kp, input_size, d_model, n_heads, e_layers, d_ff,
                         output_size, max_len=64)
    x = jax.random.normal(kx, (B, L, input_size), jnp.float32)

    fwd = jax.jit(functools.partial(informer_forward, n_heads=n_heads))
    out = fwd(x, params)
    jax.block_until_ready(out)
    assert out.shape == (B, 1, output_size), out.shape
    assert bool(jnp.all(jnp.isfinite(out)))
    print("KERNEL_OK")
</pallas_src>

<mosaic_0001>
module attributes {stable_mosaic.version = 11 : i64} {
  func.func @_informer_encoder_kernel(%arg0: i32, %arg1: memref<2x16x4xf32, #tpu.memory_space<vmem>>, %arg2: memref<4x128xf32, #tpu.memory_space<vmem>>, %arg3: memref<1x128xf32, #tpu.memory_space<vmem>>, %arg4: memref<16x128xf32, #tpu.memory_space<vmem>>, %arg5: memref<128x384xf32, #tpu.memory_space<vmem>>, %arg6: memref<1x384xf32, #tpu.memory_space<vmem>>, %arg7: memref<128x128xf32, #tpu.memory_space<vmem>>, %arg8: memref<1x128xf32, #tpu.memory_space<vmem>>, %arg9: memref<1x128xf32, #tpu.memory_space<vmem>>, %arg10: memref<1x128xf32, #tpu.memory_space<vmem>>, %arg11: memref<128x256xf32, #tpu.memory_space<vmem>>, %arg12: memref<1x256xf32, #tpu.memory_space<vmem>>, %arg13: memref<256x128xf32, #tpu.memory_space<vmem>>, %arg14: memref<1x128xf32, #tpu.memory_space<vmem>>, %arg15: memref<1x128xf32, #tpu.memory_space<vmem>>, %arg16: memref<1x128xf32, #tpu.memory_space<vmem>>, %arg17: memref<3x128x128xf32, #tpu.memory_space<vmem>>, %arg18: memref<1x128xf32, #tpu.memory_space<vmem>>, %arg19: memref<1x128xf32, #tpu.memory_space<vmem>>, %arg20: memref<1x128xf32, #tpu.memory_space<vmem>>, %arg21: memref<128x384xf32, #tpu.memory_space<vmem>>, %arg22: memref<1x384xf32, #tpu.memory_space<vmem>>, %arg23: memref<128x128xf32, #tpu.memory_space<vmem>>, %arg24: memref<1x128xf32, #tpu.memory_space<vmem>>, %arg25: memref<1x128xf32, #tpu.memory_space<vmem>>, %arg26: memref<1x128xf32, #tpu.memory_space<vmem>>, %arg27: memref<128x256xf32, #tpu.memory_space<vmem>>, %arg28: memref<1x256xf32, #tpu.memory_space<vmem>>, %arg29: memref<256x128xf32, #tpu.memory_space<vmem>>, %arg30: memref<1x128xf32, #tpu.memory_space<vmem>>, %arg31: memref<1x128xf32, #tpu.memory_space<vmem>>, %arg32: memref<1x128xf32, #tpu.memory_space<vmem>>, %arg33: memref<3x128x128xf32, #tpu.memory_space<vmem>>, %arg34: memref<1x128xf32, #tpu.memory_space<vmem>>, %arg35: memref<1x128xf32, #tpu.memory_space<vmem>>, %arg36: memref<1x128xf32, #tpu.memory_space<vmem>>, %arg37: memref<2x4x128xf32, #tpu.memory_space<vmem>>, %arg38: memref<36x128xf32, #tpu.memory_space<vmem>>) attributes {dimension_semantics = [#tpu.dimension_semantics<parallel>], iteration_bounds = array<i64: 1>, scalar_prefetch = 0 : i64, scratch_operands = 1 : i64, tpu.core_type = #tpu.core_type<tc>, window_params = [{transform_indices = @transform_0, window_bounds = array<i64: 2, 16, 4>}, {pipeline_mode = #tpu.pipeline_mode<synchronous>, transform_indices = @transform_1, window_bounds = array<i64: 4, 128>}, {pipeline_mode = #tpu.pipeline_mode<synchronous>, transform_indices = @transform_2, window_bounds = array<i64: 1, 128>}, {pipeline_mode = #tpu.pipeline_mode<synchronous>, transform_indices = @transform_3, window_bounds = array<i64: 16, 128>}, {pipeline_mode = #tpu.pipeline_mode<synchronous>, transform_indices = @transform_4, window_bounds = array<i64: 128, 384>}, {pipeline_mode = #tpu.pipeline_mode<synchronous>, transform_indices = @transform_5, window_bounds = array<i64: 1, 384>}, {pipeline_mode = #tpu.pipeline_mode<synchronous>, transform_indices = @transform_6, window_bounds = array<i64: 128, 128>}, {pipeline_mode = #tpu.pipeline_mode<synchronous>, transform_indices = @transform_7, window_bounds = array<i64: 1, 128>}, {pipeline_mode = #tpu.pipeline_mode<synchronous>, transform_indices = @transform_8, window_bounds = array<i64: 1, 128>}, {pipeline_mode = #tpu.pipeline_mode<synchronous>, transform_indices = @transform_9, window_bounds = array<i64: 1, 128>}, {pipeline_mode = #tpu.pipeline_mode<synchronous>, transform_indices = @transform_10, window_bounds = array<i64: 128, 256>}, {pipeline_mode = #tpu.pipeline_mode<synchronous>, transform_indices = @transform_11, window_bounds = array<i64: 1, 256>}, {pipeline_mode = #tpu.pipeline_mode<synchronous>, transform_indices = @transform_12, window_bounds = array<i64: 256, 128>}, {pipeline_mode = #tpu.pipeline_mode<synchronous>, transform_indices = @transform_13, window_bounds = array<i64: 1, 128>}, {pipeline_mode = #tpu.pipeline_mode<synchronous>, transform_indices = @transform_14, window_bounds = array<i64: 1, 128>}, {pipeline_mode = #tpu.pipeline_mode<synchronous>, transform_indices = @transform_15, window_bounds = array<i64: 1, 128>}, {pipeline_mode = #tpu.pipeline_mode<synchronous>, transform_indices = @transform_16, window_bounds = array<i64: 3, 128, 128>}, {pipeline_mode = #tpu.pipeline_mode<synchronous>, transform_indices = @transform_17, window_bounds = array<i64: 1, 128>}, {pipeline_mode = #tpu.pipeline_mode<synchronous>, transform_indices = @transform_18, window_bounds = array<i64: 1, 128>}, {pipeline_mode = #tpu.pipeline_mode<synchronous>, transform_indices = @transform_19, window_bounds = array<i64: 1, 128>}, {pipeline_mode = #tpu.pipeline_mode<synchronous>, transform_indices = @transform_20, window_bounds = array<i64: 128, 384>}, {pipeline_mode = #tpu.pipeline_mode<synchronous>, transform_indices = @transform_21, window_bounds = array<i64: 1, 384>}, {pipeline_mode = #tpu.pipeline_mode<synchronous>, transform_indices = @transform_22, window_bounds = array<i64: 128, 128>}, {pipeline_mode = #tpu.pipeline_mode<synchronous>, transform_indices = @transform_23, window_bounds = array<i64: 1, 128>}, {pipeline_mode = #tpu.pipeline_mode<synchronous>, transform_indices = @transform_24, window_bounds = array<i64: 1, 128>}, {pipeline_mode = #tpu.pipeline_mode<synchronous>, transform_indices = @transform_25, window_bounds = array<i64: 1, 128>}, {pipeline_mode = #tpu.pipeline_mode<synchronous>, transform_indices = @transform_26, window_bounds = array<i64: 128, 256>}, {pipeline_mode = #tpu.pipeline_mode<synchronous>, transform_indices = @transform_27, window_bounds = array<i64: 1, 256>}, {pipeline_mode = #tpu.pipeline_mode<synchronous>, transform_indices = @transform_28, window_bounds = array<i64: 256, 128>}, {pipeline_mode = #tpu.pipeline_mode<synchronous>, transform_indices = @transform_29, window_bounds = array<i64: 1, 128>}, {pipeline_mode = #tpu.pipeline_mode<synchronous>, transform_indices = @transform_30, window_bounds = array<i64: 1, 128>}, {pipeline_mode = #tpu.pipeline_mode<synchronous>, transform_indices = @transform_31, window_bounds = array<i64: 1, 128>}, {pipeline_mode = #tpu.pipeline_mode<synchronous>, transform_indices = @transform_32, window_bounds = array<i64: 3, 128, 128>}, {pipeline_mode = #tpu.pipeline_mode<synchronous>, transform_indices = @transform_33, window_bounds = array<i64: 1, 128>}, {pipeline_mode = #tpu.pipeline_mode<synchronous>, transform_indices = @transform_34, window_bounds = array<i64: 1, 128>}, {pipeline_mode = #tpu.pipeline_mode<synchronous>, transform_indices = @transform_35, window_bounds = array<i64: 1, 128>}, {transform_indices = @transform_36, window_bounds = array<i64: 2, 4, 128>}]} {
    %c0 = arith.constant 0 : index
    %c0_0 = arith.constant 0 : index
    %c0_1 = arith.constant 0 : index
    %0 = vector.load %arg1[%c0, %c0_0, %c0_1] : memref<2x16x4xf32, #tpu.memory_space<vmem>>, vector<1x16x4xf32>
    %1 = vector.shape_cast %0 : vector<1x16x4xf32> to vector<16x4xf32>
    %c1 = arith.constant 1 : index
    %c0_2 = arith.constant 0 : index
    %c0_3 = arith.constant 0 : index
    %2 = vector.load %arg1[%c1, %c0_2, %c0_3] : memref<2x16x4xf32, #tpu.memory_space<vmem>>, vector<1x16x4xf32>
    %3 = vector.shape_cast %2 : vector<1x16x4xf32> to vector<16x4xf32>
    %4 = tpu.concatenate %1, %3 in 0 : vector<16x4xf32>, vector<16x4xf32> -> vector<32x4xf32>
    %c0_4 = arith.constant 0 : index
    %c0_5 = arith.constant 0 : index
    %5 = vector.load %arg4[%c0_4, %c0_5] : memref<16x128xf32, #tpu.memory_space<vmem>>, vector<16x128xf32>
    %c0_6 = arith.constant 0 : index
    %c0_7 = arith.constant 0 : index
    %6 = vector.load %arg2[%c0_6, %c0_7] : memref<4x128xf32, #tpu.memory_space<vmem>>, vector<4x128xf32>
    %cst = arith.constant dense<0.000000e+00> : vector<32x128xf32>
    %7 = tpu.matmul %4, %6, %cst {dimension_numbers = #tpu.dot_dimension_numbers<[1], [0], [0], [1], [0, 0, 1, 1], [], []>} : vector<32x4xf32>, vector<4x128xf32>, vector<32x128xf32> -> vector<32x128xf32>
    %c0_8 = arith.constant 0 : index
    %c0_9 = arith.constant 0 : index
    %8 = vector.load %arg3[%c0_8, %c0_9] : memref<1x128xf32, #tpu.memory_space<vmem>>, vector<1x128xf32>
    %9 = vector.broadcast %8 : vector<1x128xf32> to vector<32x128xf32>
    %10 = arith.addf %7, %9 : vector<32x128xf32>
    %cst_10 = arith.constant 11.3137083 : f32
    %11 = vector.broadcast %cst_10 : f32 to vector<32x128xf32>
    %12 = arith.mulf %10, %11 : vector<32x128xf32>
    %13 = tpu.concatenate %5, %5 in 0 : vector<16x128xf32>, vector<16x128xf32> -> vector<32x128xf32>
    %14 = arith.addf %12, %13 : vector<32x128xf32>
    %c0_11 = arith.constant 0 : index
    %c0_12 = arith.constant 0 : index
    %15 = vector.load %arg5[%c0_11, %c0_12] : memref<128x384xf32, #tpu.memory_space<vmem>>, vector<128x384xf32>
    %cst_13 = arith.constant dense<0.000000e+00> : vector<32x384xf32>
    %16 = tpu.matmul %14, %15, %cst_13 {dimension_numbers = #tpu.dot_dimension_numbers<[1], [0], [0], [1], [0, 0, 1, 1], [], []>} : vector<32x128xf32>, vector<128x384xf32>, vector<32x384xf32> -> vector<32x384xf32>
    %c0_14 = arith.constant 0 : index
    %c0_15 = arith.constant 0 : index
    %17 = vector.load %arg6[%c0_14, %c0_15] : memref<1x384xf32, #tpu.memory_space<vmem>>, vector<1x384xf32>
    %18 = vector.broadcast %17 : vector<1x384xf32> to vector<32x384xf32>
    %19 = arith.addf %16, %18 : vector<32x384xf32>
    %c0_16 = arith.constant 0 : index
    %c0_17 = arith.constant 0 : index
    %20 = vector.load %arg7[%c0_16, %c0_17] : memref<128x128xf32, #tpu.memory_space<vmem>>, vector<128x128xf32>
    %21 = vector.extract_strided_slice %19 {offsets = [0, 0], sizes = [16, 32], strides = [1, 1]} : vector<32x384xf32> to vector<16x32xf32>
    %22 = vector.extract_strided_slice %19 {offsets = [0, 128], sizes = [16, 32], strides = [1, 1]} : vector<32x384xf32> to vector<16x32xf32>
    %23 = vector.extract_strided_slice %19 {offsets = [0, 256], sizes = [16, 32], strides = [1, 1]} : vector<32x384xf32> to vector<16x32xf32>
    %cst_18 = arith.constant dense<0.000000e+00> : vector<16x16xf32>
    %24 = tpu.matmul %21, %22, %cst_18 {dimension_numbers = #tpu.dot_dimension_numbers<[1], [1], [0], [0], [0, 0, 1, 0], [], []>} : vector<16x32xf32>, vector<16x32xf32>, vector<16x16xf32> -> vector<16x16xf32>
    %cst_19 = arith.constant dense<0xFF800000> : vector<16xf32>
    %25 = vector.multi_reduction <maximumf>, %24, %cst_19 [1] : vector<16x16xf32> to vector<16xf32>
    %26 = vector.shape_cast %25 : vector<16xf32> to vector<16x1xf32>
    %27 = vector.broadcast %26 : vector<16x1xf32> to vector<16x16xf32>
    %28 = arith.subf %24, %27 : vector<16x16xf32>
    %29 = math.exp %28 : vector<16x16xf32>
    %cst_20 = arith.constant dense<0.000000e+00> : vector<16xf32>
    %30 = vector.multi_reduction <add>, %29, %cst_20 [1] : vector<16x16xf32> to vector<16xf32>
    %31 = vector.shape_cast %30 : vector<16xf32> to vector<16x1xf32>
    %32 = tpu.reciprocal %31 : vector<16x1xf32> -> vector<16x1xf32>
    %33 = vector.broadcast %32 : vector<16x1xf32> to vector<16x16xf32>
    %34 = arith.mulf %29, %33 : vector<16x16xf32>
    %cst_21 = arith.constant dense<0.000000e+00> : vector<16x32xf32>
    %35 = tpu.matmul %34, %23, %cst_21 {dimension_numbers = #tpu.dot_dimension_numbers<[1], [0], [0], [1], [0, 0, 1, 1], [], []>} : vector<16x16xf32>, vector<16x32xf32>, vector<16x32xf32> -> vector<16x32xf32>
    %36 = vector.extract_strided_slice %20 {offsets = [0, 0], sizes = [32, 128], strides = [1, 1]} : vector<128x128xf32> to vector<32x128xf32>
    %cst_22 = arith.constant dense<0.000000e+00> : vector<16x128xf32>
    %37 = tpu.matmul %35, %36, %cst_22 {dimension_numbers = #tpu.dot_dimension_numbers<[1], [0], [0], [1], [0, 0, 1, 1], [], []>} : vector<16x32xf32>, vector<32x128xf32>, vector<16x128xf32> -> vector<16x128xf32>
    %38 = vector.extract_strided_slice %19 {offsets = [0, 32], sizes = [16, 32], strides = [1, 1]} : vector<32x384xf32> to vector<16x32xf32>
    %39 = vector.extract_strided_slice %19 {offsets = [0, 160], sizes = [16, 32], strides = [1, 1]} : vector<32x384xf32> to vector<16x32xf32>
    %40 = vector.extract_strided_slice %19 {offsets = [0, 288], sizes = [16, 32], strides = [1, 1]} : vector<32x384xf32> to vector<16x32xf32>
    %cst_23 = arith.constant dense<0.000000e+00> : vector<16x16xf32>
    %41 = tpu.matmul %38, %39, %cst_23 {dimension_numbers = #tpu.dot_dimension_numbers<[1], [1], [0], [0], [0, 0, 1, 0], [], []>} : vector<16x32xf32>, vector<16x32xf32>, vector<16x16xf32> -> vector<16x16xf32>
    %cst_24 = arith.constant dense<0xFF800000> : vector<16xf32>
    %42 = vector.multi_reduction <maximumf>, %41, %cst_24 [1] : vector<16x16xf32> to vector<16xf32>
    %43 = vector.shape_cast %42 : vector<16xf32> to vector<16x1xf32>
    %44 = vector.broadcast %43 : vector<16x1xf32> to vector<16x16xf32>
    %45 = arith.subf %41, %44 : vector<16x16xf32>
    %46 = math.exp %45 : vector<16x16xf32>
    %cst_25 = arith.constant dense<0.000000e+00> : vector<16xf32>
    %47 = vector.multi_reduction <add>, %46, %cst_25 [1] : vector<16x16xf32> to vector<16xf32>
    %48 = vector.shape_cast %47 : vector<16xf32> to vector<16x1xf32>
    %49 = tpu.reciprocal %48 : vector<16x1xf32> -> vector<16x1xf32>
    %50 = vector.broadcast %49 : vector<16x1xf32> to vector<16x16xf32>
    %51 = arith.mulf %46, %50 : vector<16x16xf32>
    %cst_26 = arith.constant dense<0.000000e+00> : vector<16x32xf32>
    %52 = tpu.matmul %51, %40, %cst_26 {dimension_numbers = #tpu.dot_dimension_numbers<[1], [0], [0], [1], [0, 0, 1, 1], [], []>} : vector<16x16xf32>, vector<16x32xf32>, vector<16x32xf32> -> vector<16x32xf32>
    %53 = vector.extract_strided_slice %20 {offsets = [32, 0], sizes = [32, 128], strides = [1, 1]} : vector<128x128xf32> to vector<32x128xf32>
    %cst_27 = arith.constant dense<0.000000e+00> : vector<16x128xf32>
    %54 = tpu.matmul %52, %53, %cst_27 {dimension_numbers = #tpu.dot_dimension_numbers<[1], [0], [0], [1], [0, 0, 1, 1], [], []>} : vector<16x32xf32>, vector<32x128xf32>, vector<16x128xf32> -> vector<16x128xf32>
    %55 = arith.addf %37, %54 : vector<16x128xf32>
    %56 = vector.extract_strided_slice %19 {offsets = [0, 64], sizes = [16, 32], strides = [1, 1]} : vector<32x384xf32> to vector<16x32xf32>
    %57 = vector.extract_strided_slice %19 {offsets = [0, 192], sizes = [16, 32], strides = [1, 1]} : vector<32x384xf32> to vector<16x32xf32>
    %58 = vector.extract_strided_slice %19 {offsets = [0, 320], sizes = [16, 32], strides = [1, 1]} : vector<32x384xf32> to vector<16x32xf32>
    %cst_28 = arith.constant dense<0.000000e+00> : vector<16x16xf32>
    %59 = tpu.matmul %56, %57, %cst_28 {dimension_numbers = #tpu.dot_dimension_numbers<[1], [1], [0], [0], [0, 0, 1, 0], [], []>} : vector<16x32xf32>, vector<16x32xf32>, vector<16x16xf32> -> vector<16x16xf32>
    %cst_29 = arith.constant dense<0xFF800000> : vector<16xf32>
    %60 = vector.multi_reduction <maximumf>, %59, %cst_29 [1] : vector<16x16xf32> to vector<16xf32>
    %61 = vector.shape_cast %60 : vector<16xf32> to vector<16x1xf32>
    %62 = vector.broadcast %61 : vector<16x1xf32> to vector<16x16xf32>
    %63 = arith.subf %59, %62 : vector<16x16xf32>
    %64 = math.exp %63 : vector<16x16xf32>
    %cst_30 = arith.constant dense<0.000000e+00> : vector<16xf32>
    %65 = vector.multi_reduction <add>, %64, %cst_30 [1] : vector<16x16xf32> to vector<16xf32>
    %66 = vector.shape_cast %65 : vector<16xf32> to vector<16x1xf32>
    %67 = tpu.reciprocal %66 : vector<16x1xf32> -> vector<16x1xf32>
    %68 = vector.broadcast %67 : vector<16x1xf32> to vector<16x16xf32>
    %69 = arith.mulf %64, %68 : vector<16x16xf32>
    %cst_31 = arith.constant dense<0.000000e+00> : vector<16x32xf32>
    %70 = tpu.matmul %69, %58, %cst_31 {dimension_numbers = #tpu.dot_dimension_numbers<[1], [0], [0], [1], [0, 0, 1, 1], [], []>} : vector<16x16xf32>, vector<16x32xf32>, vector<16x32xf32> -> vector<16x32xf32>
    %71 = vector.extract_strided_slice %20 {offsets = [64, 0], sizes = [32, 128], strides = [1, 1]} : vector<128x128xf32> to vector<32x128xf32>
    %cst_32 = arith.constant dense<0.000000e+00> : vector<16x128xf32>
    %72 = tpu.matmul %70, %71, %cst_32 {dimension_numbers = #tpu.dot_dimension_numbers<[1], [0], [0], [1], [0, 0, 1, 1], [], []>} : vector<16x32xf32>, vector<32x128xf32>, vector<16x128xf32> -> vector<16x128xf32>
    %73 = arith.addf %55, %72 : vector<16x128xf32>
    %74 = vector.extract_strided_slice %19 {offsets = [0, 96], sizes = [16, 32], strides = [1, 1]} : vector<32x384xf32> to vector<16x32xf32>
    %75 = vector.extract_strided_slice %19 {offsets = [0, 224], sizes = [16, 32], strides = [1, 1]} : vector<32x384xf32> to vector<16x32xf32>
    %76 = vector.extract_strided_slice %19 {offsets = [0, 352], sizes = [16, 32], strides = [1, 1]} : vector<32x384xf32> to vector<16x32xf32>
    %cst_33 = arith.constant dense<0.000000e+00> : vector<16x16xf32>
    %77 = tpu.matmul %74, %75, %cst_33 {dimension_numbers = #tpu.dot_dimension_numbers<[1], [1], [0], [0], [0, 0, 1, 0], [], []>} : vector<16x32xf32>, vector<16x32xf32>, vector<16x16xf32> -> vector<16x16xf32>
    %cst_34 = arith.constant dense<0xFF800000> : vector<16xf32>
    %78 = vector.multi_reduction <maximumf>, %77, %cst_34 [1] : vector<16x16xf32> to vector<16xf32>
    %79 = vector.shape_cast %78 : vector<16xf32> to vector<16x1xf32>
    %80 = vector.broadcast %79 : vector<16x1xf32> to vector<16x16xf32>
    %81 = arith.subf %77, %80 : vector<16x16xf32>
    %82 = math.exp %81 : vector<16x16xf32>
    %cst_35 = arith.constant dense<0.000000e+00> : vector<16xf32>
    %83 = vector.multi_reduction <add>, %82, %cst_35 [1] : vector<16x16xf32> to vector<16xf32>
    %84 = vector.shape_cast %83 : vector<16xf32> to vector<16x1xf32>
    %85 = tpu.reciprocal %84 : vector<16x1xf32> -> vector<16x1xf32>
    %86 = vector.broadcast %85 : vector<16x1xf32> to vector<16x16xf32>
    %87 = arith.mulf %82, %86 : vector<16x16xf32>
    %cst_36 = arith.constant dense<0.000000e+00> : vector<16x32xf32>
    %88 = tpu.matmul %87, %76, %cst_36 {dimension_numbers = #tpu.dot_dimension_numbers<[1], [0], [0], [1], [0, 0, 1, 1], [], []>} : vector<16x16xf32>, vector<16x32xf32>, vector<16x32xf32> -> vector<16x32xf32>
    %89 = vector.extract_strided_slice %20 {offsets = [96, 0], sizes = [32, 128], strides = [1, 1]} : vector<128x128xf32> to vector<32x128xf32>
    %cst_37 = arith.constant dense<0.000000e+00> : vector<16x128xf32>
    %90 = tpu.matmul %88, %89, %cst_37 {dimension_numbers = #tpu.dot_dimension_numbers<[1], [0], [0], [1], [0, 0, 1, 1], [], []>} : vector<16x32xf32>, vector<32x128xf32>, vector<16x128xf32> -> vector<16x128xf32>
    %91 = arith.addf %73, %90 : vector<16x128xf32>
    %92 = vector.extract_strided_slice %19 {offsets = [16, 0], sizes = [16, 32], strides = [1, 1]} : vector<32x384xf32> to vector<16x32xf32>
    %93 = vector.extract_strided_slice %19 {offsets = [16, 128], sizes = [16, 32], strides = [1, 1]} : vector<32x384xf32> to vector<16x32xf32>
    %94 = vector.extract_strided_slice %19 {offsets = [16, 256], sizes = [16, 32], strides = [1, 1]} : vector<32x384xf32> to vector<16x32xf32>
    %cst_38 = arith.constant dense<0.000000e+00> : vector<16x16xf32>
    %95 = tpu.matmul %92, %93, %cst_38 {dimension_numbers = #tpu.dot_dimension_numbers<[1], [1], [0], [0], [0, 0, 1, 0], [], []>} : vector<16x32xf32>, vector<16x32xf32>, vector<16x16xf32> -> vector<16x16xf32>
    %cst_39 = arith.constant dense<0xFF800000> : vector<16xf32>
    %96 = vector.multi_reduction <maximumf>, %95, %cst_39 [1] : vector<16x16xf32> to vector<16xf32>
    %97 = vector.shape_cast %96 : vector<16xf32> to vector<16x1xf32>
    %98 = vector.broadcast %97 : vector<16x1xf32> to vector<16x16xf32>
    %99 = arith.subf %95, %98 : vector<16x16xf32>
    %100 = math.exp %99 : vector<16x16xf32>
    %cst_40 = arith.constant dense<0.000000e+00> : vector<16xf32>
    %101 = vector.multi_reduction <add>, %100, %cst_40 [1] : vector<16x16xf32> to vector<16xf32>
    %102 = vector.shape_cast %101 : vector<16xf32> to vector<16x1xf32>
    %103 = tpu.reciprocal %102 : vector<16x1xf32> -> vector<16x1xf32>
    %104 = vector.broadcast %103 : vector<16x1xf32> to vector<16x16xf32>
    %105 = arith.mulf %100, %104 : vector<16x16xf32>
    %cst_41 = arith.constant dense<0.000000e+00> : vector<16x32xf32>
    %106 = tpu.matmul %105, %94, %cst_41 {dimension_numbers = #tpu.dot_dimension_numbers<[1], [0], [0], [1], [0, 0, 1, 1], [], []>} : vector<16x16xf32>, vector<16x32xf32>, vector<16x32xf32> -> vector<16x32xf32>
    %107 = vector.extract_strided_slice %20 {offsets = [0, 0], sizes = [32, 128], strides = [1, 1]} : vector<128x128xf32> to vector<32x128xf32>
    %cst_42 = arith.constant dense<0.000000e+00> : vector<16x128xf32>
    %108 = tpu.matmul %106, %107, %cst_42 {dimension_numbers = #tpu.dot_dimension_numbers<[1], [0], [0], [1], [0, 0, 1, 1], [], []>} : vector<16x32xf32>, vector<32x128xf32>, vector<16x128xf32> -> vector<16x128xf32>
    %109 = vector.extract_strided_slice %19 {offsets = [16, 32], sizes = [16, 32], strides = [1, 1]} : vector<32x384xf32> to vector<16x32xf32>
    %110 = vector.extract_strided_slice %19 {offsets = [16, 160], sizes = [16, 32], strides = [1, 1]} : vector<32x384xf32> to vector<16x32xf32>
    %111 = vector.extract_strided_slice %19 {offsets = [16, 288], sizes = [16, 32], strides = [1, 1]} : vector<32x384xf32> to vector<16x32xf32>
    %cst_43 = arith.constant dense<0.000000e+00> : vector<16x16xf32>
    %112 = tpu.matmul %109, %110, %cst_43 {dimension_numbers = #tpu.dot_dimension_numbers<[1], [1], [0], [0], [0, 0, 1, 0], [], []>} : vector<16x32xf32>, vector<16x32xf32>, vector<16x16xf32> -> vector<16x16xf32>
    %cst_44 = arith.constant dense<0xFF800000> : vector<16xf32>
    %113 = vector.multi_reduction <maximumf>, %112, %cst_44 [1] : vector<16x16xf32> to vector<16xf32>
    %114 = vector.shape_cast %113 : vector<16xf32> to vector<16x1xf32>
    %115 = vector.broadcast %114 : vector<16x1xf32> to vector<16x16xf32>
    %116 = arith.subf %112, %115 : vector<16x16xf32>
    %117 = math.exp %116 : vector<16x16xf32>
    %cst_45 = arith.constant dense<0.000000e+00> : vector<16xf32>
    %118 = vector.multi_reduction <add>, %117, %cst_45 [1] : vector<16x16xf32> to vector<16xf32>
    %119 = vector.shape_cast %118 : vector<16xf32> to vector<16x1xf32>
    %120 = tpu.reciprocal %119 : vector<16x1xf32> -> vector<16x1xf32>
    %121 = vector.broadcast %120 : vector<16x1xf32> to vector<16x16xf32>
    %122 = arith.mulf %117, %121 : vector<16x16xf32>
    %cst_46 = arith.constant dense<0.000000e+00> : vector<16x32xf32>
    %123 = tpu.matmul %122, %111, %cst_46 {dimension_numbers = #tpu.dot_dimension_numbers<[1], [0], [0], [1], [0, 0, 1, 1], [], []>} : vector<16x16xf32>, vector<16x32xf32>, vector<16x32xf32> -> vector<16x32xf32>
    %124 = vector.extract_strided_slice %20 {offsets = [32, 0], sizes = [32, 128], strides = [1, 1]} : vector<128x128xf32> to vector<32x128xf32>
    %cst_47 = arith.constant dense<0.000000e+00> : vector<16x128xf32>
    %125 = tpu.matmul %123, %124, %cst_47 {dimension_numbers = #tpu.dot_dimension_numbers<[1], [0], [0], [1], [0, 0, 1, 1], [], []>} : vector<16x32xf32>, vector<32x128xf32>, vector<16x128xf32> -> vector<16x128xf32>
    %126 = arith.addf %108, %125 : vector<16x128xf32>
    %127 = vector.extract_strided_slice %19 {offsets = [16, 64], sizes = [16, 32], strides = [1, 1]} : vector<32x384xf32> to vector<16x32xf32>
    %128 = vector.extract_strided_slice %19 {offsets = [16, 192], sizes = [16, 32], strides = [1, 1]} : vector<32x384xf32> to vector<16x32xf32>
    %129 = vector.extract_strided_slice %19 {offsets = [16, 320], sizes = [16, 32], strides = [1, 1]} : vector<32x384xf32> to vector<16x32xf32>
    %cst_48 = arith.constant dense<0.000000e+00> : vector<16x16xf32>
    %130 = tpu.matmul %127, %128, %cst_48 {dimension_numbers = #tpu.dot_dimension_numbers<[1], [1], [0], [0], [0, 0, 1, 0], [], []>} : vector<16x32xf32>, vector<16x32xf32>, vector<16x16xf32> -> vector<16x16xf32>
    %cst_49 = arith.constant dense<0xFF800000> : vector<16xf32>
    %131 = vector.multi_reduction <maximumf>, %130, %cst_49 [1] : vector<16x16xf32> to vector<16xf32>
    %132 = vector.shape_cast %131 : vector<16xf32> to vector<16x1xf32>
    %133 = vector.broadcast %132 : vector<16x1xf32> to vector<16x16xf32>
    %134 = arith.subf %130, %133 : vector<16x16xf32>
    %135 = math.exp %134 : vector<16x16xf32>
    %cst_50 = arith.constant dense<0.000000e+00> : vector<16xf32>
    %136 = vector.multi_reduction <add>, %135, %cst_50 [1] : vector<16x16xf32> to vector<16xf32>
    %137 = vector.shape_cast %136 : vector<16xf32> to vector<16x1xf32>
    %138 = tpu.reciprocal %137 : vector<16x1xf32> -> vector<16x1xf32>
    %139 = vector.broadcast %138 : vector<16x1xf32> to vector<16x16xf32>
    %140 = arith.mulf %135, %139 : vector<16x16xf32>
    %cst_51 = arith.constant dense<0.000000e+00> : vector<16x32xf32>
    %141 = tpu.matmul %140, %129, %cst_51 {dimension_numbers = #tpu.dot_dimension_numbers<[1], [0], [0], [1], [0, 0, 1, 1], [], []>} : vector<16x16xf32>, vector<16x32xf32>, vector<16x32xf32> -> vector<16x32xf32>
    %142 = vector.extract_strided_slice %20 {offsets = [64, 0], sizes = [32, 128], strides = [1, 1]} : vector<128x128xf32> to vector<32x128xf32>
    %cst_52 = arith.constant dense<0.000000e+00> : vector<16x128xf32>
    %143 = tpu.matmul %141, %142, %cst_52 {dimension_numbers = #tpu.dot_dimension_numbers<[1], [0], [0], [1], [0, 0, 1, 1], [], []>} : vector<16x32xf32>, vector<32x128xf32>, vector<16x128xf32> -> vector<16x128xf32>
    %144 = arith.addf %126, %143 : vector<16x128xf32>
    %145 = vector.extract_strided_slice %19 {offsets = [16, 96], sizes = [16, 32], strides = [1, 1]} : vector<32x384xf32> to vector<16x32xf32>
    %146 = vector.extract_strided_slice %19 {offsets = [16, 224], sizes = [16, 32], strides = [1, 1]} : vector<32x384xf32> to vector<16x32xf32>
    %147 = vector.extract_strided_slice %19 {offsets = [16, 352], sizes = [16, 32], strides = [1, 1]} : vector<32x384xf32> to vector<16x32xf32>
    %cst_53 = arith.constant dense<0.000000e+00> : vector<16x16xf32>
    %148 = tpu.matmul %145, %146, %cst_53 {dimension_numbers = #tpu.dot_dimension_numbers<[1], [1], [0], [0], [0, 0, 1, 0], [], []>} : vector<16x32xf32>, vector<16x32xf32>, vector<16x16xf32> -> vector<16x16xf32>
    %cst_54 = arith.constant dense<0xFF800000> : vector<16xf32>
    %149 = vector.multi_reduction <maximumf>, %148, %cst_54 [1] : vector<16x16xf32> to vector<16xf32>
    %150 = vector.shape_cast %149 : vector<16xf32> to vector<16x1xf32>
    %151 = vector.broadcast %150 : vector<16x1xf32> to vector<16x16xf32>
    %152 = arith.subf %148, %151 : vector<16x16xf32>
    %153 = math.exp %152 : vector<16x16xf32>
    %cst_55 = arith.constant dense<0.000000e+00> : vector<16xf32>
    %154 = vector.multi_reduction <add>, %153, %cst_55 [1] : vector<16x16xf32> to vector<16xf32>
    %155 = vector.shape_cast %154 : vector<16xf32> to vector<16x1xf32>
    %156 = tpu.reciprocal %155 : vector<16x1xf32> -> vector<16x1xf32>
    %157 = vector.broadcast %156 : vector<16x1xf32> to vector<16x16xf32>
    %158 = arith.mulf %153, %157 : vector<16x16xf32>
    %cst_56 = arith.constant dense<0.000000e+00> : vector<16x32xf32>
    %159 = tpu.matmul %158, %147, %cst_56 {dimension_numbers = #tpu.dot_dimension_numbers<[1], [0], [0], [1], [0, 0, 1, 1], [], []>} : vector<16x16xf32>, vector<16x32xf32>, vector<16x32xf32> -> vector<16x32xf32>
    %160 = vector.extract_strided_slice %20 {offsets = [96, 0], sizes = [32, 128], strides = [1, 1]} : vector<128x128xf32> to vector<32x128xf32>
    %cst_57 = arith.constant dense<0.000000e+00> : vector<16x128xf32>
    %161 = tpu.matmul %159, %160, %cst_57 {dimension_numbers = #tpu.dot_dimension_numbers<[1], [0], [0], [1], [0, 0, 1, 1], [], []>} : vector<16x32xf32>, vector<32x128xf32>, vector<16x128xf32> -> vector<16x128xf32>
    %162 = arith.addf %144, %161 : vector<16x128xf32>
    %163 = tpu.concatenate %91, %162 in 0 : vector<16x128xf32>, vector<16x128xf32> -> vector<32x128xf32>
    %c0_58 = arith.constant 0 : index
    %c0_59 = arith.constant 0 : index
    %164 = vector.load %arg8[%c0_58, %c0_59] : memref<1x128xf32, #tpu.memory_space<vmem>>, vector<1x128xf32>
    %165 = vector.broadcast %164 : vector<1x128xf32> to vector<32x128xf32>
    %166 = arith.addf %163, %165 : vector<32x128xf32>
    %167 = arith.addf %14, %166 : vector<32x128xf32>
    %c0_60 = arith.constant 0 : index
    %c0_61 = arith.constant 0 : index
    %168 = vector.load %arg9[%c0_60, %c0_61] : memref<1x128xf32, #tpu.memory_space<vmem>>, vector<1x128xf32>
    %c0_62 = arith.constant 0 : index
    %c0_63 = arith.constant 0 : index
    %169 = vector.load %arg10[%c0_62, %c0_63] : memref<1x128xf32, #tpu.memory_space<vmem>>, vector<1x128xf32>
    %cst_64 = arith.constant dense<0.000000e+00> : vector<32xf32>
    %170 = vector.multi_reduction <add>, %167, %cst_64 [1] : vector<32x128xf32> to vector<32xf32>
    %171 = vector.shape_cast %170 : vector<32xf32> to vector<32x1xf32>
    %cst_65 = arith.constant 1.280000e+02 : f32
    %172 = vector.broadcast %cst_65 : f32 to vector<32x1xf32>
    %173 = arith.divf %171, %172 : vector<32x1xf32>
    %174 = vector.broadcast %173 : vector<32x1xf32> to vector<32x128xf32>
    %175 = arith.subf %167, %174 : vector<32x128xf32>
    %176 = arith.mulf %175, %175 : vector<32x128xf32>
    %cst_66 = arith.constant dense<0.000000e+00> : vector<32xf32>
    %177 = vector.multi_reduction <add>, %176, %cst_66 [1] : vector<32x128xf32> to vector<32xf32>
    %178 = vector.shape_cast %177 : vector<32xf32> to vector<32x1xf32>
    %cst_67 = arith.constant 1.280000e+02 : f32
    %179 = vector.broadcast %cst_67 : f32 to vector<32x1xf32>
    %180 = arith.divf %178, %179 : vector<32x1xf32>
    %181 = vector.broadcast %173 : vector<32x1xf32> to vector<32x128xf32>
    %182 = arith.subf %167, %181 : vector<32x128xf32>
    %cst_68 = arith.constant 9.99999974E-6 : f32
    %183 = vector.broadcast %cst_68 : f32 to vector<32x1xf32>
    %184 = arith.addf %180, %183 : vector<32x1xf32>
    %185 = math.rsqrt %184 : vector<32x1xf32>
    %186 = vector.broadcast %185 : vector<32x1xf32> to vector<32x128xf32>
    %187 = arith.mulf %182, %186 : vector<32x128xf32>
    %188 = vector.broadcast %168 : vector<1x128xf32> to vector<32x128xf32>
    %189 = arith.mulf %187, %188 : vector<32x128xf32>
    %190 = vector.broadcast %169 : vector<1x128xf32> to vector<32x128xf32>
    %191 = arith.addf %189, %190 : vector<32x128xf32>
    %c0_69 = arith.constant 0 : index
    %c0_70 = arith.constant 0 : index
    %192 = vector.load %arg11[%c0_69, %c0_70] : memref<128x256xf32, #tpu.memory_space<vmem>>, vector<128x256xf32>
    %cst_71 = arith.constant dense<0.000000e+00> : vector<32x256xf32>
    %193 = tpu.matmul %191, %192, %cst_71 {dimension_numbers = #tpu.dot_dimension_numbers<[1], [0], [0], [1], [0, 0, 1, 1], [], []>} : vector<32x128xf32>, vector<128x256xf32>, vector<32x256xf32> -> vector<32x256xf32>
    %c0_72 = arith.constant 0 : index
    %c0_73 = arith.constant 0 : index
    %194 = vector.load %arg12[%c0_72, %c0_73] : memref<1x256xf32, #tpu.memory_space<vmem>>, vector<1x256xf32>
    %195 = vector.broadcast %194 : vector<1x256xf32> to vector<32x256xf32>
    %196 = arith.addf %193, %195 : vector<32x256xf32>
    %cst_74 = arith.constant 5.000000e-01 : f32
    %197 = vector.broadcast %cst_74 : f32 to vector<32x256xf32>
    %198 = arith.mulf %197, %196 : vector<32x256xf32>
    %cst_75 = arith.constant 0.707106769 : f32
    %199 = vector.broadcast %cst_75 : f32 to vector<32x256xf32>
    %200 = arith.mulf %196, %199 : vector<32x256xf32>
    %201 = math.erf %200 : vector<32x256xf32>
    %cst_76 = arith.constant 1.000000e+00 : f32
    %202 = vector.broadcast %cst_76 : f32 to vector<32x256xf32>
    %203 = arith.addf %202, %201 : vector<32x256xf32>
    %204 = arith.mulf %198, %203 : vector<32x256xf32>
    %c0_77 = arith.constant 0 : index
    %c0_78 = arith.constant 0 : index
    %205 = vector.load %arg13[%c0_77, %c0_78] : memref<256x128xf32, #tpu.memory_space<vmem>>, vector<256x128xf32>
    %cst_79 = arith.constant dense<0.000000e+00> : vector<32x128xf32>
    %206 = tpu.matmul %204, %205, %cst_79 {dimension_numbers = #tpu.dot_dimension_numbers<[1], [0], [0], [1], [0, 0, 1, 1], [], []>} : vector<32x256xf32>, vector<256x128xf32>, vector<32x128xf32> -> vector<32x128xf32>
    %207 = arith.addf %191, %206 : vector<32x128xf32>
    %c0_80 = arith.constant 0 : index
    %c0_81 = arith.constant 0 : index
    %208 = vector.load %arg14[%c0_80, %c0_81] : memref<1x128xf32, #tpu.memory_space<vmem>>, vector<1x128xf32>
    %209 = vector.broadcast %208 : vector<1x128xf32> to vector<32x128xf32>
    %210 = arith.addf %207, %209 : vector<32x128xf32>
    %c0_82 = arith.constant 0 : index
    %c0_83 = arith.constant 0 : index
    %211 = vector.load %arg15[%c0_82, %c0_83] : memref<1x128xf32, #tpu.memory_space<vmem>>, vector<1x128xf32>
    %c0_84 = arith.constant 0 : index
    %c0_85 = arith.constant 0 : index
    %212 = vector.load %arg16[%c0_84, %c0_85] : memref<1x128xf32, #tpu.memory_space<vmem>>, vector<1x128xf32>
    %cst_86 = arith.constant dense<0.000000e+00> : vector<32xf32>
    %213 = vector.multi_reduction <add>, %210, %cst_86 [1] : vector<32x128xf32> to vector<32xf32>
    %214 = vector.shape_cast %213 : vector<32xf32> to vector<32x1xf32>
    %cst_87 = arith.constant 1.280000e+02 : f32
    %215 = vector.broadcast %cst_87 : f32 to vector<32x1xf32>
    %216 = arith.divf %214, %215 : vector<32x1xf32>
    %217 = vector.broadcast %216 : vector<32x1xf32> to vector<32x128xf32>
    %218 = arith.subf %210, %217 : vector<32x128xf32>
    %219 = arith.mulf %218, %218 : vector<32x128xf32>
    %cst_88 = arith.constant dense<0.000000e+00> : vector<32xf32>
    %220 = vector.multi_reduction <add>, %219, %cst_88 [1] : vector<32x128xf32> to vector<32xf32>
    %221 = vector.shape_cast %220 : vector<32xf32> to vector<32x1xf32>
    %cst_89 = arith.constant 1.280000e+02 : f32
    %222 = vector.broadcast %cst_89 : f32 to vector<32x1xf32>
    %223 = arith.divf %221, %222 : vector<32x1xf32>
    %224 = vector.broadcast %216 : vector<32x1xf32> to vector<32x128xf32>
    %225 = arith.subf %210, %224 : vector<32x128xf32>
    %cst_90 = arith.constant 9.99999974E-6 : f32
    %226 = vector.broadcast %cst_90 : f32 to vector<32x1xf32>
    %227 = arith.addf %223, %226 : vector<32x1xf32>
    %228 = math.rsqrt %227 : vector<32x1xf32>
    %229 = vector.broadcast %228 : vector<32x1xf32> to vector<32x128xf32>
    %230 = arith.mulf %225, %229 : vector<32x128xf32>
    %231 = vector.broadcast %211 : vector<1x128xf32> to vector<32x128xf32>
    %232 = arith.mulf %230, %231 : vector<32x128xf32>
    %233 = vector.broadcast %212 : vector<1x128xf32> to vector<32x128xf32>
    %234 = arith.addf %232, %233 : vector<32x128xf32>
    %235 = vector.extract_strided_slice %234 {offsets = [0, 0], sizes = [16, 128], strides = [1, 1]} : vector<32x128xf32> to vector<16x128xf32>
    %c1_91 = arith.constant 1 : index
    %c0_92 = arith.constant 0 : index
    %236 = vector.load %arg38[%c1_91, %c0_92] : memref<36x128xf32, #tpu.memory_space<vmem>>, vector<16x128xf32>
    tpu.vector_store %arg38[%c1_91, %c0_92], %235 {strides = array<i32>} : memref<36x128xf32, #tpu.memory_space<vmem>>, vector<16x128xf32>,
    %237 = vector.extract_strided_slice %234 {offsets = [0, 0], sizes = [1, 128], strides = [1, 1]} : vector<32x128xf32> to vector<1x128xf32>
    %c0_93 = arith.constant 0 : index
    %c0_94 = arith.constant 0 : index
    %238 = vector.load %arg38[%c0_93, %c0_94] : memref<36x128xf32, #tpu.memory_space<vmem>>, vector<1x128xf32>
    tpu.vector_store %arg38[%c0_93, %c0_94], %237 {strides = array<i32>} : memref<36x128xf32, #tpu.memory_space<vmem>>, vector<1x128xf32>,
    %239 = vector.extract_strided_slice %234 {offsets = [15, 0], sizes = [1, 128], strides = [1, 1]} : vector<32x128xf32> to vector<1x128xf32>
    %c17 = arith.constant 17 : index
    %c0_95 = arith.constant 0 : index
    %240 = vector.load %arg38[%c17, %c0_95] : memref<36x128xf32, #tpu.memory_space<vmem>>, vector<1x128xf32>
    tpu.vector_store %arg38[%c17, %c0_95], %239 {strides = array<i32>} : memref<36x128xf32, #tpu.memory_space<vmem>>, vector<1x128xf32>,
    %241 = vector.extract_strided_slice %234 {offsets = [16, 0], sizes = [16, 128], strides = [1, 1]} : vector<32x128xf32> to vector<16x128xf32>
    %c19 = arith.constant 19 : index
    %c0_96 = arith.constant 0 : index
    %242 = vector.load %arg38[%c19, %c0_96] : memref<36x128xf32, #tpu.memory_space<vmem>>, vector<16x128xf32>
    tpu.vector_store %arg38[%c19, %c0_96], %241 {strides = array<i32>} : memref<36x128xf32, #tpu.memory_space<vmem>>, vector<16x128xf32>,
    %243 = vector.extract_strided_slice %234 {offsets = [16, 0], sizes = [1, 128], strides = [1, 1]} : vector<32x128xf32> to vector<1x128xf32>
    %c18 = arith.constant 18 : index
    %c0_97 = arith.constant 0 : index
    %244 = vector.load %arg38[%c18, %c0_97] : memref<36x128xf32, #tpu.memory_space<vmem>>, vector<1x128xf32>
    tpu.vector_store %arg38[%c18, %c0_97], %243 {strides = array<i32>} : memref<36x128xf32, #tpu.memory_space<vmem>>, vector<1x128xf32>,
    %245 = vector.extract_strided_slice %234 {offsets = [31, 0], sizes = [1, 128], strides = [1, 1]} : vector<32x128xf32> to vector<1x128xf32>
    %c35 = arith.constant 35 : index
    %c0_98 = arith.constant 0 : index
    %246 = vector.load %arg38[%c35, %c0_98] : memref<36x128xf32, #tpu.memory_space<vmem>>, vector<1x128xf32>
    tpu.vector_store %arg38[%c35, %c0_98], %245 {strides = array<i32>} : memref<36x128xf32, #tpu.memory_space<vmem>>, vector<1x128xf32>,
    %c0_99 = arith.constant 0 : index
    %c0_100 = arith.constant 0 : index
    %247 = vector.load %arg38[%c0_99, %c0_100] : memref<36x128xf32, #tpu.memory_space<vmem>>, vector<36x128xf32>
    %c0_101 = arith.constant 0 : index
    %c0_102 = arith.constant 0 : index
    %c0_103 = arith.constant 0 : index
    %248 = vector.load %arg17[%c0_101, %c0_102, %c0_103] : memref<3x128x128xf32, #tpu.memory_space<vmem>>, vector<1x128x128xf32>
    %249 = vector.shape_cast %248 : vector<1x128x128xf32> to vector<128x128xf32>
    %cst_104 = arith.constant dense<0.000000e+00> : vector<36x128xf32>
    %250 = tpu.matmul %247, %249, %cst_104 {dimension_numbers = #tpu.dot_dimension_numbers<[1], [0], [0], [1], [0, 0, 1, 1], [], []>} : vector<36x128xf32>, vector<128x128xf32>, vector<36x128xf32> -> vector<36x128xf32>
    %c1_105 = arith.constant 1 : index
    %c0_106 = arith.constant 0 : index
    %c0_107 = arith.constant 0 : index
    %251 = vector.load %arg17[%c1_105, %c0_106, %c0_107] : memref<3x128x128xf32, #tpu.memory_space<vmem>>, vector<1x128x128xf32>
    %252 = vector.shape_cast %251 : vector<1x128x128xf32> to vector<128x128xf32>
    %cst_108 = arith.constant dense<0.000000e+00> : vector<36x128xf32>
    %253 = tpu.matmul %247, %252, %cst_108 {dimension_numbers = #tpu.dot_dimension_numbers<[1], [0], [0], [1], [0, 0, 1, 1], [], []>} : vector<36x128xf32>, vector<128x128xf32>, vector<36x128xf32> -> vector<36x128xf32>
    %c2 = arith.constant 2 : index
    %c0_109 = arith.constant 0 : index
    %c0_110 = arith.constant 0 : index
    %254 = vector.load %arg17[%c2, %c0_109, %c0_110] : memref<3x128x128xf32, #tpu.memory_space<vmem>>, vector<1x128x128xf32>
    %255 = vector.shape_cast %254 : vector<1x128x128xf32> to vector<128x128xf32>
    %cst_111 = arith.constant dense<0.000000e+00> : vector<36x128xf32>
    %256 = tpu.matmul %247, %255, %cst_111 {dimension_numbers = #tpu.dot_dimension_numbers<[1], [0], [0], [1], [0, 0, 1, 1], [], []>} : vector<36x128xf32>, vector<128x128xf32>, vector<36x128xf32> -> vector<36x128xf32>
    %cst_112 = arith.constant 0xFF800000 : f32
    %257 = vector.broadcast %cst_112 : f32 to vector<1x128xf32>
    %c0_113 = arith.constant 0 : index
    %c0_114 = arith.constant 0 : index
    %258 = vector.load %arg18[%c0_113, %c0_114] : memref<1x128xf32, #tpu.memory_space<vmem>>, vector<1x128xf32>
    %259 = vector.extract_strided_slice %250 {offsets = [0, 0], sizes = [16, 128], strides = [1, 1]} : vector<36x128xf32> to vector<16x128xf32>
    %260 = vector.broadcast %258 : vector<1x128xf32> to vector<16x128xf32>
    %261 = arith.addf %260, %259 : vector<16x128xf32>
    %262 = vector.extract_strided_slice %253 {offsets = [1, 0], sizes = [16, 128], strides = [1, 1]} : vector<36x128xf32> to vector<16x128xf32>
    %263 = arith.addf %261, %262 : vector<16x128xf32>
    %264 = vector.extract_strided_slice %256 {offsets = [2, 0], sizes = [16, 128], strides = [1, 1]} : vector<36x128xf32> to vector<16x128xf32>
    %265 = arith.addf %263, %264 : vector<16x128xf32>
    %c0_115 = arith.constant 0 : index
    %c0_116 = arith.constant 0 : index
    %266 = vector.load %arg19[%c0_115, %c0_116] : memref<1x128xf32, #tpu.memory_space<vmem>>, vector<1x128xf32>
    %267 = vector.broadcast %266 : vector<1x128xf32> to vector<16x128xf32>
    %268 = arith.mulf %265, %267 : vector<16x128xf32>
    %c0_117 = arith.constant 0 : index
    %c0_118 = arith.constant 0 : index
    %269 = vector.load %arg20[%c0_117, %c0_118] : memref<1x128xf32, #tpu.memory_space<vmem>>, vector<1x128xf32>
    %270 = vector.broadcast %269 : vector<1x128xf32> to vector<16x128xf32>
    %271 = arith.addf %268, %270 : vector<16x128xf32>
    %cst_119 = arith.constant 0.000000e+00 : f32
    %272 = vector.broadcast %cst_119 : f32 to vector<16x128xf32>
    %273 = arith.cmpf ogt, %271, %272 : vector<16x128xf32>
    %cst_120 = arith.constant 0.000000e+00 : f32
    %274 = vector.broadcast %cst_120 : f32 to vector<16x128xf32>
    %275 = arith.minimumf %271, %274 : vector<16x128xf32>
    %276 = math.exp %275 : vector<16x128xf32>
    %cst_121 = arith.constant 1.000000e+00 : f32
    %277 = vector.broadcast %cst_121 : f32 to vector<16x128xf32>
    %278 = arith.subf %276, %277 : vector<16x128xf32>
    %279 = arith.select %273, %271, %278 : vector<16x128xi1>, vector<16x128xf32>
    %c1_122 = arith.constant 1 : index
    %c0_123 = arith.constant 0 : index
    %280 = vector.load %arg38[%c1_122, %c0_123] : memref<36x128xf32, #tpu.memory_space<vmem>>, vector<16x128xf32>
    tpu.vector_store %arg38[%c1_122, %c0_123], %279 {strides = array<i32>} : memref<36x128xf32, #tpu.memory_space<vmem>>, vector<16x128xf32>,
    %c0_124 = arith.constant 0 : index
    %c0_125 = arith.constant 0 : index
    %281 = vector.load %arg38[%c0_124, %c0_125] : memref<36x128xf32, #tpu.memory_space<vmem>>, vector<1x128xf32>
    tpu.vector_store %arg38[%c0_124, %c0_125], %257 {strides = array<i32>} : memref<36x128xf32, #tpu.memory_space<vmem>>, vector<1x128xf32>,
    %c17_126 = arith.constant 17 : index
    %c0_127 = arith.constant 0 : index
    %282 = vector.load %arg38[%c17_126, %c0_127] : memref<36x128xf32, #tpu.memory_space<vmem>>, vector<1x128xf32>
    tpu.vector_store %arg38[%c17_126, %c0_127], %257 {strides = array<i32>} : memref<36x128xf32, #tpu.memory_space<vmem>>, vector<1x128xf32>,
    %c0_128 = arith.constant 0 : index
    %c0_129 = arith.constant 0 : index
    %283 = tpu.strided_load %arg38[%c0_128, %c0_129] {strides = array<i32: 2, 1>} : memref<36x128xf32, #tpu.memory_space<vmem>>, vector<8x128xf32>
    %c1_130 = arith.constant 1 : index
    %c0_131 = arith.constant 0 : index
    %284 = tpu.strided_load %arg38[%c1_130, %c0_131] {strides = array<i32: 2, 1>} : memref<36x128xf32, #tpu.memory_space<vmem>>, vector<8x128xf32>
    %c2_132 = arith.constant 2 : index
    %c0_133 = arith.constant 0 : index
    %285 = tpu.strided_load %arg38[%c2_132, %c0_133] {strides = array<i32: 2, 1>} : memref<36x128xf32, #tpu.memory_space<vmem>>, vector<8x128xf32>
    %286 = arith.maximumf %283, %284 : vector<8x128xf32>
    %287 = arith.maximumf %286, %285 : vector<8x128xf32>
    %c0_134 = arith.constant 0 : index
    %c0_135 = arith.constant 0 : index
    %288 = vector.load %arg18[%c0_134, %c0_135] : memref<1x128xf32, #tpu.memory_space<vmem>>, vector<1x128xf32>
    %289 = vector.extract_strided_slice %250 {offsets = [18, 0], sizes = [16, 128], strides = [1, 1]} : vector<36x128xf32> to vector<16x128xf32>
    %290 = vector.broadcast %288 : vector<1x128xf32> to vector<16x128xf32>
    %291 = arith.addf %290, %289 : vector<16x128xf32>
    %292 = vector.extract_strided_slice %253 {offsets = [19, 0], sizes = [16, 128], strides = [1, 1]} : vector<36x128xf32> to vector<16x128xf32>
    %293 = arith.addf %291, %292 : vector<16x128xf32>
    %294 = vector.extract_strided_slice %256 {offsets = [20, 0], sizes = [16, 128], strides = [1, 1]} : vector<36x128xf32> to vector<16x128xf32>
    %295 = arith.addf %293, %294 : vector<16x128xf32>
    %c0_136 = arith.constant 0 : index
    %c0_137 = arith.constant 0 : index
    %296 = vector.load %arg19[%c0_136, %c0_137] : memref<1x128xf32, #tpu.memory_space<vmem>>, vector<1x128xf32>
    %297 = vector.broadcast %296 : vector<1x128xf32> to vector<16x128xf32>
    %298 = arith.mulf %295, %297 : vector<16x128xf32>
    %c0_138 = arith.constant 0 : index
    %c0_139 = arith.constant 0 : index
    %299 = vector.load %arg20[%c0_138, %c0_139] : memref<1x128xf32, #tpu.memory_space<vmem>>, vector<1x128xf32>
    %300 = vector.broadcast %299 : vector<1x128xf32> to vector<16x128xf32>
    %301 = arith.addf %298, %300 : vector<16x128xf32>
    %cst_140 = arith.constant 0.000000e+00 : f32
    %302 = vector.broadcast %cst_140 : f32 to vector<16x128xf32>
    %303 = arith.cmpf ogt, %301, %302 : vector<16x128xf32>
    %cst_141 = arith.constant 0.000000e+00 : f32
    %304 = vector.broadcast %cst_141 : f32 to vector<16x128xf32>
    %305 = arith.minimumf %301, %304 : vector<16x128xf32>
    %306 = math.exp %305 : vector<16x128xf32>
    %cst_142 = arith.constant 1.000000e+00 : f32
    %307 = vector.broadcast %cst_142 : f32 to vector<16x128xf32>
    %308 = arith.subf %306, %307 : vector<16x128xf32>
    %309 = arith.select %303, %301, %308 : vector<16x128xi1>, vector<16x128xf32>
    %c19_143 = arith.constant 19 : index
    %c0_144 = arith.constant 0 : index
    %310 = vector.load %arg38[%c19_143, %c0_144] : memref<36x128xf32, #tpu.memory_space<vmem>>, vector<16x128xf32>
    tpu.vector_store %arg38[%c19_143, %c0_144], %309 {strides = array<i32>} : memref<36x128xf32, #tpu.memory_space<vmem>>, vector<16x128xf32>,
    %c18_145 = arith.constant 18 : index
    %c0_146 = arith.constant 0 : index
    %311 = vector.load %arg38[%c18_145, %c0_146] : memref<36x128xf32, #tpu.memory_space<vmem>>, vector<1x128xf32>
    tpu.vector_store %arg38[%c18_145, %c0_146], %257 {strides = array<i32>} : memref<36x128xf32, #tpu.memory_space<vmem>>, vector<1x128xf32>,
    %c35_147 = arith.constant 35 : index
    %c0_148 = arith.constant 0 : index
    %312 = vector.load %arg38[%c35_147, %c0_148] : memref<36x128xf32, #tpu.memory_space<vmem>>, vector<1x128xf32>
    tpu.vector_store %arg38[%c35_147, %c0_148], %257 {strides = array<i32>} : memref<36x128xf32, #tpu.memory_space<vmem>>, vector<1x128xf32>,
    %c18_149 = arith.constant 18 : index
    %c0_150 = arith.constant 0 : index
    %313 = tpu.strided_load %arg38[%c18_149, %c0_150] {strides = array<i32: 2, 1>} : memref<36x128xf32, #tpu.memory_space<vmem>>, vector<8x128xf32>
    %c19_151 = arith.constant 19 : index
    %c0_152 = arith.constant 0 : index
    %314 = tpu.strided_load %arg38[%c19_151, %c0_152] {strides = array<i32: 2, 1>} : memref<36x128xf32, #tpu.memory_space<vmem>>, vector<8x128xf32>
    %c20 = arith.constant 20 : index
    %c0_153 = arith.constant 0 : index
    %315 = tpu.strided_load %arg38[%c20, %c0_153] {strides = array<i32: 2, 1>} : memref<36x128xf32, #tpu.memory_space<vmem>>, vector<8x128xf32>
    %316 = arith.maximumf %313, %314 : vector<8x128xf32>
    %317 = arith.maximumf %316, %315 : vector<8x128xf32>
    %318 = tpu.concatenate %287, %317 in 0 : vector<8x128xf32>, vector<8x128xf32> -> vector<16x128xf32>
    %c0_154 = arith.constant 0 : index
    %c0_155 = arith.constant 0 : index
    %319 = vector.load %arg21[%c0_154, %c0_155] : memref<128x384xf32, #tpu.memory_space<vmem>>, vector<128x384xf32>
    %cst_156 = arith.constant dense<0.000000e+00> : vector<16x384xf32>
    %320 = tpu.matmul %318, %319, %cst_156 {dimension_numbers = #tpu.dot_dimension_numbers<[1], [0], [0], [1], [0, 0, 1, 1], [], []>} : vector<16x128xf32>, vector<128x384xf32>, vector<16x384xf32> -> vector<16x384xf32>
    %c0_157 = arith.constant 0 : index
    %c0_158 = arith.constant 0 : index
    %321 = vector.load %arg22[%c0_157, %c0_158] : memref<1x384xf32, #tpu.memory_space<vmem>>, vector<1x384xf32>
    %322 = vector.broadcast %321 : vector<1x384xf32> to vector<16x384xf32>
    %323 = arith.addf %320, %322 : vector<16x384xf32>
    %c0_159 = arith.constant 0 : index
    %c0_160 = arith.constant 0 : index
    %324 = vector.load %arg23[%c0_159, %c0_160] : memref<128x128xf32, #tpu.memory_space<vmem>>, vector<128x128xf32>
    %325 = vector.extract_strided_slice %323 {offsets = [0, 0], sizes = [8, 32], strides = [1, 1]} : vector<16x384xf32> to vector<8x32xf32>
    %326 = vector.extract_strided_slice %323 {offsets = [0, 128], sizes = [8, 32], strides = [1, 1]} : vector<16x384xf32> to vector<8x32xf32>
    %327 = vector.extract_strided_slice %323 {offsets = [0, 256], sizes = [8, 32], strides = [1, 1]} : vector<16x384xf32> to vector<8x32xf32>
    %cst_161 = arith.constant dense<0.000000e+00> : vector<8x8xf32>
    %328 = tpu.matmul %325, %326, %cst_161 {dimension_numbers = #tpu.dot_dimension_numbers<[1], [1], [0], [0], [0, 0, 1, 0], [], []>} : vector<8x32xf32>, vector<8x32xf32>, vector<8x8xf32> -> vector<8x8xf32>
    %cst_162 = arith.constant dense<0xFF800000> : vector<8xf32>
    %329 = vector.multi_reduction <maximumf>, %328, %cst_162 [1] : vector<8x8xf32> to vector<8xf32>
    %330 = vector.shape_cast %329 : vector<8xf32> to vector<8x1xf32>
    %331 = vector.broadcast %330 : vector<8x1xf32> to vector<8x8xf32>
    %332 = arith.subf %328, %331 : vector<8x8xf32>
    %333 = math.exp %332 : vector<8x8xf32>
    %cst_163 = arith.constant dense<0.000000e+00> : vector<8xf32>
    %334 = vector.multi_reduction <add>, %333, %cst_163 [1] : vector<8x8xf32> to vector<8xf32>
    %335 = vector.shape_cast %334 : vector<8xf32> to vector<8x1xf32>
    %336 = tpu.reciprocal %335 : vector<8x1xf32> -> vector<8x1xf32>
    %337 = vector.broadcast %336 : vector<8x1xf32> to vector<8x8xf32>
    %338 = arith.mulf %333, %337 : vector<8x8xf32>
    %cst_164 = arith.constant dense<0.000000e+00> : vector<8x32xf32>
    %339 = tpu.matmul %338, %327, %cst_164 {dimension_numbers = #tpu.dot_dimension_numbers<[1], [0], [0], [1], [0, 0, 1, 1], [], []>} : vector<8x8xf32>, vector<8x32xf32>, vector<8x32xf32> -> vector<8x32xf32>
    %340 = vector.extract_strided_slice %324 {offsets = [0, 0], sizes = [32, 128], strides = [1, 1]} : vector<128x128xf32> to vector<32x128xf32>
    %cst_165 = arith.constant dense<0.000000e+00> : vector<8x128xf32>
    %341 = tpu.matmul %339, %340, %cst_165 {dimension_numbers = #tpu.dot_dimension_numbers<[1], [0], [0], [1], [0, 0, 1, 1], [], []>} : vector<8x32xf32>, vector<32x128xf32>, vector<8x128xf32> -> vector<8x128xf32>
    %342 = vector.extract_strided_slice %323 {offsets = [0, 32], sizes = [8, 32], strides = [1, 1]} : vector<16x384xf32> to vector<8x32xf32>
    %343 = vector.extract_strided_slice %323 {offsets = [0, 160], sizes = [8, 32], strides = [1, 1]} : vector<16x384xf32> to vector<8x32xf32>
    %344 = vector.extract_strided_slice %323 {offsets = [0, 288], sizes = [8, 32], strides = [1, 1]} : vector<16x384xf32> to vector<8x32xf32>
    %cst_166 = arith.constant dense<0.000000e+00> : vector<8x8xf32>
    %345 = tpu.matmul %342, %343, %cst_166 {dimension_numbers = #tpu.dot_dimension_numbers<[1], [1], [0], [0], [0, 0, 1, 0], [], []>} : vector<8x32xf32>, vector<8x32xf32>, vector<8x8xf32> -> vector<8x8xf32>
    %cst_167 = arith.constant dense<0xFF800000> : vector<8xf32>
    %346 = vector.multi_reduction <maximumf>, %345, %cst_167 [1] : vector<8x8xf32> to vector<8xf32>
    %347 = vector.shape_cast %346 : vector<8xf32> to vector<8x1xf32>
    %348 = vector.broadcast %347 : vector<8x1xf32> to vector<8x8xf32>
    %349 = arith.subf %345, %348 : vector<8x8xf32>
    %350 = math.exp %349 : vector<8x8xf32>
    %cst_168 = arith.constant dense<0.000000e+00> : vector<8xf32>
    %351 = vector.multi_reduction <add>, %350, %cst_168 [1] : vector<8x8xf32> to vector<8xf32>
    %352 = vector.shape_cast %351 : vector<8xf32> to vector<8x1xf32>
    %353 = tpu.reciprocal %352 : vector<8x1xf32> -> vector<8x1xf32>
    %354 = vector.broadcast %353 : vector<8x1xf32> to vector<8x8xf32>
    %355 = arith.mulf %350, %354 : vector<8x8xf32>
    %cst_169 = arith.constant dense<0.000000e+00> : vector<8x32xf32>
    %356 = tpu.matmul %355, %344, %cst_169 {dimension_numbers = #tpu.dot_dimension_numbers<[1], [0], [0], [1], [0, 0, 1, 1], [], []>} : vector<8x8xf32>, vector<8x32xf32>, vector<8x32xf32> -> vector<8x32xf32>
    %357 = vector.extract_strided_slice %324 {offsets = [32, 0], sizes = [32, 128], strides = [1, 1]} : vector<128x128xf32> to vector<32x128xf32>
    %cst_170 = arith.constant dense<0.000000e+00> : vector<8x128xf32>
    %358 = tpu.matmul %356, %357, %cst_170 {dimension_numbers = #tpu.dot_dimension_numbers<[1], [0], [0], [1], [0, 0, 1, 1], [], []>} : vector<8x32xf32>, vector<32x128xf32>, vector<8x128xf32> -> vector<8x128xf32>
    %359 = arith.addf %341, %358 : vector<8x128xf32>
    %360 = vector.extract_strided_slice %323 {offsets = [0, 64], sizes = [8, 32], strides = [1, 1]} : vector<16x384xf32> to vector<8x32xf32>
    %361 = vector.extract_strided_slice %323 {offsets = [0, 192], sizes = [8, 32], strides = [1, 1]} : vector<16x384xf32> to vector<8x32xf32>
    %362 = vector.extract_strided_slice %323 {offsets = [0, 320], sizes = [8, 32], strides = [1, 1]} : vector<16x384xf32> to vector<8x32xf32>
    %cst_171 = arith.constant dense<0.000000e+00> : vector<8x8xf32>
    %363 = tpu.matmul %360, %361, %cst_171 {dimension_numbers = #tpu.dot_dimension_numbers<[1], [1], [0], [0], [0, 0, 1, 0], [], []>} : vector<8x32xf32>, vector<8x32xf32>, vector<8x8xf32> -> vector<8x8xf32>
    %cst_172 = arith.constant dense<0xFF800000> : vector<8xf32>
    %364 = vector.multi_reduction <maximumf>, %363, %cst_172 [1] : vector<8x8xf32> to vector<8xf32>
    %365 = vector.shape_cast %364 : vector<8xf32> to vector<8x1xf32>
    %366 = vector.broadcast %365 : vector<8x1xf32> to vector<8x8xf32>
    %367 = arith.subf %363, %366 : vector<8x8xf32>
    %368 = math.exp %367 : vector<8x8xf32>
    %cst_173 = arith.constant dense<0.000000e+00> : vector<8xf32>
    %369 = vector.multi_reduction <add>, %368, %cst_173 [1] : vector<8x8xf32> to vector<8xf32>
    %370 = vector.shape_cast %369 : vector<8xf32> to vector<8x1xf32>
    %371 = tpu.reciprocal %370 : vector<8x1xf32> -> vector<8x1xf32>
    %372 = vector.broadcast %371 : vector<8x1xf32> to vector<8x8xf32>
    %373 = arith.mulf %368, %372 : vector<8x8xf32>
    %cst_174 = arith.constant dense<0.000000e+00> : vector<8x32xf32>
    %374 = tpu.matmul %373, %362, %cst_174 {dimension_numbers = #tpu.dot_dimension_numbers<[1], [0], [0], [1], [0, 0, 1, 1], [], []>} : vector<8x8xf32>, vector<8x32xf32>, vector<8x32xf32> -> vector<8x32xf32>
    %375 = vector.extract_strided_slice %324 {offsets = [64, 0], sizes = [32, 128], strides = [1, 1]} : vector<128x128xf32> to vector<32x128xf32>
    %cst_175 = arith.constant dense<0.000000e+00> : vector<8x128xf32>
    %376 = tpu.matmul %374, %375, %cst_175 {dimension_numbers = #tpu.dot_dimension_numbers<[1], [0], [0], [1], [0, 0, 1, 1], [], []>} : vector<8x32xf32>, vector<32x128xf32>, vector<8x128xf32> -> vector<8x128xf32>
    %377 = arith.addf %359, %376 : vector<8x128xf32>
    %378 = vector.extract_strided_slice %323 {offsets = [0, 96], sizes = [8, 32], strides = [1, 1]} : vector<16x384xf32> to vector<8x32xf32>
    %379 = vector.extract_strided_slice %323 {offsets = [0, 224], sizes = [8, 32], strides = [1, 1]} : vector<16x384xf32> to vector<8x32xf32>
    %380 = vector.extract_strided_slice %323 {offsets = [0, 352], sizes = [8, 32], strides = [1, 1]} : vector<16x384xf32> to vector<8x32xf32>
    %cst_176 = arith.constant dense<0.000000e+00> : vector<8x8xf32>
    %381 = tpu.matmul %378, %379, %cst_176 {dimension_numbers = #tpu.dot_dimension_numbers<[1], [1], [0], [0], [0, 0, 1, 0], [], []>} : vector<8x32xf32>, vector<8x32xf32>, vector<8x8xf32> -> vector<8x8xf32>
    %cst_177 = arith.constant dense<0xFF800000> : vector<8xf32>
    %382 = vector.multi_reduction <maximumf>, %381, %cst_177 [1] : vector<8x8xf32> to vector<8xf32>
    %383 = vector.shape_cast %382 : vector<8xf32> to vector<8x1xf32>
    %384 = vector.broadcast %383 : vector<8x1xf32> to vector<8x8xf32>
    %385 = arith.subf %381, %384 : vector<8x8xf32>
    %386 = math.exp %385 : vector<8x8xf32>
    %cst_178 = arith.constant dense<0.000000e+00> : vector<8xf32>
    %387 = vector.multi_reduction <add>, %386, %cst_178 [1] : vector<8x8xf32> to vector<8xf32>
    %388 = vector.shape_cast %387 : vector<8xf32> to vector<8x1xf32>
    %389 = tpu.reciprocal %388 : vector<8x1xf32> -> vector<8x1xf32>
    %390 = vector.broadcast %389 : vector<8x1xf32> to vector<8x8xf32>
    %391 = arith.mulf %386, %390 : vector<8x8xf32>
    %cst_179 = arith.constant dense<0.000000e+00> : vector<8x32xf32>
    %392 = tpu.matmul %391, %380, %cst_179 {dimension_numbers = #tpu.dot_dimension_numbers<[1], [0], [0], [1], [0, 0, 1, 1], [], []>} : vector<8x8xf32>, vector<8x32xf32>, vector<8x32xf32> -> vector<8x32xf32>
    %393 = vector.extract_strided_slice %324 {offsets = [96, 0], sizes = [32, 128], strides = [1, 1]} : vector<128x128xf32> to vector<32x128xf32>
    %cst_180 = arith.constant dense<0.000000e+00> : vector<8x128xf32>
    %394 = tpu.matmul %392, %393, %cst_180 {dimension_numbers = #tpu.dot_dimension_numbers<[1], [0], [0], [1], [0, 0, 1, 1], [], []>} : vector<8x32xf32>, vector<32x128xf32>, vector<8x128xf32> -> vector<8x128xf32>
    %395 = arith.addf %377, %394 : vector<8x128xf32>
    %396 = vector.extract_strided_slice %323 {offsets = [8, 0], sizes = [8, 32], strides = [1, 1]} : vector<16x384xf32> to vector<8x32xf32>
    %397 = vector.extract_strided_slice %323 {offsets = [8, 128], sizes = [8, 32], strides = [1, 1]} : vector<16x384xf32> to vector<8x32xf32>
    %398 = vector.extract_strided_slice %323 {offsets = [8, 256], sizes = [8, 32], strides = [1, 1]} : vector<16x384xf32> to vector<8x32xf32>
    %cst_181 = arith.constant dense<0.000000e+00> : vector<8x8xf32>
    %399 = tpu.matmul %396, %397, %cst_181 {dimension_numbers = #tpu.dot_dimension_numbers<[1], [1], [0], [0], [0, 0, 1, 0], [], []>} : vector<8x32xf32>, vector<8x32xf32>, vector<8x8xf32> -> vector<8x8xf32>
    %cst_182 = arith.constant dense<0xFF800000> : vector<8xf32>
    %400 = vector.multi_reduction <maximumf>, %399, %cst_182 [1] : vector<8x8xf32> to vector<8xf32>
    %401 = vector.shape_cast %400 : vector<8xf32> to vector<8x1xf32>
    %402 = vector.broadcast %401 : vector<8x1xf32> to vector<8x8xf32>
    %403 = arith.subf %399, %402 : vector<8x8xf32>
    %404 = math.exp %403 : vector<8x8xf32>
    %cst_183 = arith.constant dense<0.000000e+00> : vector<8xf32>
    %405 = vector.multi_reduction <add>, %404, %cst_183 [1] : vector<8x8xf32> to vector<8xf32>
    %406 = vector.shape_cast %405 : vector<8xf32> to vector<8x1xf32>
    %407 = tpu.reciprocal %406 : vector<8x1xf32> -> vector<8x1xf32>
    %408 = vector.broadcast %407 : vector<8x1xf32> to vector<8x8xf32>
    %409 = arith.mulf %404, %408 : vector<8x8xf32>
    %cst_184 = arith.constant dense<0.000000e+00> : vector<8x32xf32>
    %410 = tpu.matmul %409, %398, %cst_184 {dimension_numbers = #tpu.dot_dimension_numbers<[1], [0], [0], [1], [0, 0, 1, 1], [], []>} : vector<8x8xf32>, vector<8x32xf32>, vector<8x32xf32> -> vector<8x32xf32>
    %411 = vector.extract_strided_slice %324 {offsets = [0, 0], sizes = [32, 128], strides = [1, 1]} : vector<128x128xf32> to vector<32x128xf32>
    %cst_185 = arith.constant dense<0.000000e+00> : vector<8x128xf32>
    %412 = tpu.matmul %410, %411, %cst_185 {dimension_numbers = #tpu.dot_dimension_numbers<[1], [0], [0], [1], [0, 0, 1, 1], [], []>} : vector<8x32xf32>, vector<32x128xf32>, vector<8x128xf32> -> vector<8x128xf32>
    %413 = vector.extract_strided_slice %323 {offsets = [8, 32], sizes = [8, 32], strides = [1, 1]} : vector<16x384xf32> to vector<8x32xf32>
    %414 = vector.extract_strided_slice %323 {offsets = [8, 160], sizes = [8, 32], strides = [1, 1]} : vector<16x384xf32> to vector<8x32xf32>
    %415 = vector.extract_strided_slice %323 {offsets = [8, 288], sizes = [8, 32], strides = [1, 1]} : vector<16x384xf32> to vector<8x32xf32>
    %cst_186 = arith.constant dense<0.000000e+00> : vector<8x8xf32>
    %416 = tpu.matmul %413, %414, %cst_186 {dimension_numbers = #tpu.dot_dimension_numbers<[1], [1], [0], [0], [0, 0, 1, 0], [], []>} : vector<8x32xf32>, vector<8x32xf32>, vector<8x8xf32> -> vector<8x8xf32>
    %cst_187 = arith.constant dense<0xFF800000> : vector<8xf32>
    %417 = vector.multi_reduction <maximumf>, %416, %cst_187 [1] : vector<8x8xf32> to vector<8xf32>
    %418 = vector.shape_cast %417 : vector<8xf32> to vector<8x1xf32>
    %419 = vector.broadcast %418 : vector<8x1xf32> to vector<8x8xf32>
    %420 = arith.subf %416, %419 : vector<8x8xf32>
    %421 = math.exp %420 : vector<8x8xf32>
    %cst_188 = arith.constant dense<0.000000e+00> : vector<8xf32>
    %422 = vector.multi_reduction <add>, %421, %cst_188 [1] : vector<8x8xf32> to vector<8xf32>
    %423 = vector.shape_cast %422 : vector<8xf32> to vector<8x1xf32>
    %424 = tpu.reciprocal %423 : vector<8x1xf32> -> vector<8x1xf32>
    %425 = vector.broadcast %424 : vector<8x1xf32> to vector<8x8xf32>
    %426 = arith.mulf %421, %425 : vector<8x8xf32>
    %cst_189 = arith.constant dense<0.000000e+00> : vector<8x32xf32>
    %427 = tpu.matmul %426, %415, %cst_189 {dimension_numbers = #tpu.dot_dimension_numbers<[1], [0], [0], [1], [0, 0, 1, 1], [], []>} : vector<8x8xf32>, vector<8x32xf32>, vector<8x32xf32> -> vector<8x32xf32>
    %428 = vector.extract_strided_slice %324 {offsets = [32, 0], sizes = [32, 128], strides = [1, 1]} : vector<128x128xf32> to vector<32x128xf32>
    %cst_190 = arith.constant dense<0.000000e+00> : vector<8x128xf32>
    %429 = tpu.matmul %427, %428, %cst_190 {dimension_numbers = #tpu.dot_dimension_numbers<[1], [0], [0], [1], [0, 0, 1, 1], [], []>} : vector<8x32xf32>, vector<32x128xf32>, vector<8x128xf32> -> vector<8x128xf32>
    %430 = arith.addf %412, %429 : vector<8x128xf32>
    %431 = vector.extract_strided_slice %323 {offsets = [8, 64], sizes = [8, 32], strides = [1, 1]} : vector<16x384xf32> to vector<8x32xf32>
    %432 = vector.extract_strided_slice %323 {offsets = [8, 192], sizes = [8, 32], strides = [1, 1]} : vector<16x384xf32> to vector<8x32xf32>
    %433 = vector.extract_strided_slice %323 {offsets = [8, 320], sizes = [8, 32], strides = [1, 1]} : vector<16x384xf32> to vector<8x32xf32>
    %cst_191 = arith.constant dense<0.000000e+00> : vector<8x8xf32>
    %434 = tpu.matmul %431, %432, %cst_191 {dimension_numbers = #tpu.dot_dimension_numbers<[1], [1], [0], [0], [0, 0, 1, 0], [], []>} : vector<8x32xf32>, vector<8x32xf32>, vector<8x8xf32> -> vector<8x8xf32>
    %cst_192 = arith.constant dense<0xFF800000> : vector<8xf32>
    %435 = vector.multi_reduction <maximumf>, %434, %cst_192 [1] : vector<8x8xf32> to vector<8xf32>
    %436 = vector.shape_cast %435 : vector<8xf32> to vector<8x1xf32>
    %437 = vector.broadcast %436 : vector<8x1xf32> to vector<8x8xf32>
    %438 = arith.subf %434, %437 : vector<8x8xf32>
    %439 = math.exp %438 : vector<8x8xf32>
    %cst_193 = arith.constant dense<0.000000e+00> : vector<8xf32>
    %440 = vector.multi_reduction <add>, %439, %cst_193 [1] : vector<8x8xf32> to vector<8xf32>
    %441 = vector.shape_cast %440 : vector<8xf32> to vector<8x1xf32>
    %442 = tpu.reciprocal %441 : vector<8x1xf32> -> vector<8x1xf32>
    %443 = vector.broadcast %442 : vector<8x1xf32> to vector<8x8xf32>
    %444 = arith.mulf %439, %443 : vector<8x8xf32>
    %cst_194 = arith.constant dense<0.000000e+00> : vector<8x32xf32>
    %445 = tpu.matmul %444, %433, %cst_194 {dimension_numbers = #tpu.dot_dimension_numbers<[1], [0], [0], [1], [0, 0, 1, 1], [], []>} : vector<8x8xf32>, vector<8x32xf32>, vector<8x32xf32> -> vector<8x32xf32>
    %446 = vector.extract_strided_slice %324 {offsets = [64, 0], sizes = [32, 128], strides = [1, 1]} : vector<128x128xf32> to vector<32x128xf32>
    %cst_195 = arith.constant dense<0.000000e+00> : vector<8x128xf32>
    %447 = tpu.matmul %445, %446, %cst_195 {dimension_numbers = #tpu.dot_dimension_numbers<[1], [0], [0], [1], [0, 0, 1, 1], [], []>} : vector<8x32xf32>, vector<32x128xf32>, vector<8x128xf32> -> vector<8x128xf32>
    %448 = arith.addf %430, %447 : vector<8x128xf32>
    %449 = vector.extract_strided_slice %323 {offsets = [8, 96], sizes = [8, 32], strides = [1, 1]} : vector<16x384xf32> to vector<8x32xf32>
    %450 = vector.extract_strided_slice %323 {offsets = [8, 224], sizes = [8, 32], strides = [1, 1]} : vector<16x384xf32> to vector<8x32xf32>
    %451 = vector.extract_strided_slice %323 {offsets = [8, 352], sizes = [8, 32], strides = [1, 1]} : vector<16x384xf32> to vector<8x32xf32>
    %cst_196 = arith.constant dense<0.000000e+00> : vector<8x8xf32>
    %452 = tpu.matmul %449, %450, %cst_196 {dimension_numbers = #tpu.dot_dimension_numbers<[1], [1], [0], [0], [0, 0, 1, 0], [], []>} : vector<8x32xf32>, vector<8x32xf32>, vector<8x8xf32> -> vector<8x8xf32>
    %cst_197 = arith.constant dense<0xFF800000> : vector<8xf32>
    %453 = vector.multi_reduction <maximumf>, %452, %cst_197 [1] : vector<8x8xf32> to vector<8xf32>
    %454 = vector.shape_cast %453 : vector<8xf32> to vector<8x1xf32>
    %455 = vector.broadcast %454 : vector<8x1xf32> to vector<8x8xf32>
    %456 = arith.subf %452, %455 : vector<8x8xf32>
    %457 = math.exp %456 : vector<8x8xf32>
    %cst_198 = arith.constant dense<0.000000e+00> : vector<8xf32>
    %458 = vector.multi_reduction <add>, %457, %cst_198 [1] : vector<8x8xf32> to vector<8xf32>
    %459 = vector.shape_cast %458 : vector<8xf32> to vector<8x1xf32>
    %460 = tpu.reciprocal %459 : vector<8x1xf32> -> vector<8x1xf32>
    %461 = vector.broadcast %460 : vector<8x1xf32> to vector<8x8xf32>
    %462 = arith.mulf %457, %461 : vector<8x8xf32>
    %cst_199 = arith.constant dense<0.000000e+00> : vector<8x32xf32>
    %463 = tpu.matmul %462, %451, %cst_199 {dimension_numbers = #tpu.dot_dimension_numbers<[1], [0], [0], [1], [0, 0, 1, 1], [], []>} : vector<8x8xf32>, vector<8x32xf32>, vector<8x32xf32> -> vector<8x32xf32>
    %464 = vector.extract_strided_slice %324 {offsets = [96, 0], sizes = [32, 128], strides = [1, 1]} : vector<128x128xf32> to vector<32x128xf32>
    %cst_200 = arith.constant dense<0.000000e+00> : vector<8x128xf32>
    %465 = tpu.matmul %463, %464, %cst_200 {dimension_numbers = #tpu.dot_dimension_numbers<[1], [0], [0], [1], [0, 0, 1, 1], [], []>} : vector<8x32xf32>, vector<32x128xf32>, vector<8x128xf32> -> vector<8x128xf32>
    %466 = arith.addf %448, %465 : vector<8x128xf32>
    %467 = tpu.concatenate %395, %466 in 0 : vector<8x128xf32>, vector<8x128xf32> -> vector<16x128xf32>
    %c0_201 = arith.constant 0 : index
    %c0_202 = arith.constant 0 : index
    %468 = vector.load %arg24[%c0_201, %c0_202] : memref<1x128xf32, #tpu.memory_space<vmem>>, vector<1x128xf32>
    %469 = vector.broadcast %468 : vector<1x128xf32> to vector<16x128xf32>
    %470 = arith.addf %467, %469 : vector<16x128xf32>
    %471 = arith.addf %318, %470 : vector<16x128xf32>
    %c0_203 = arith.constant 0 : index
    %c0_204 = arith.constant 0 : index
    %472 = vector.load %arg25[%c0_203, %c0_204] : memref<1x128xf32, #tpu.memory_space<vmem>>, vector<1x128xf32>
    %c0_205 = arith.constant 0 : index
    %c0_206 = arith.constant 0 : index
    %473 = vector.load %arg26[%c0_205, %c0_206] : memref<1x128xf32, #tpu.memory_space<vmem>>, vector<1x128xf32>
    %cst_207 = arith.constant dense<0.000000e+00> : vector<16xf32>
    %474 = vector.multi_reduction <add>, %471, %cst_207 [1] : vector<16x128xf32> to vector<16xf32>
    %475 = vector.shape_cast %474 : vector<16xf32> to vector<16x1xf32>
    %cst_208 = arith.constant 1.280000e+02 : f32
    %476 = vector.broadcast %cst_208 : f32 to vector<16x1xf32>
    %477 = arith.divf %475, %476 : vector<16x1xf32>
    %478 = vector.broadcast %477 : vector<16x1xf32> to vector<16x128xf32>
    %479 = arith.subf %471, %478 : vector<16x128xf32>
    %480 = arith.mulf %479, %479 : vector<16x128xf32>
    %cst_209 = arith.constant dense<0.000000e+00> : vector<16xf32>
    %481 = vector.multi_reduction <add>, %480, %cst_209 [1] : vector<16x128xf32> to vector<16xf32>
    %482 = vector.shape_cast %481 : vector<16xf32> to vector<16x1xf32>
    %cst_210 = arith.constant 1.280000e+02 : f32
    %483 = vector.broadcast %cst_210 : f32 to vector<16x1xf32>
    %484 = arith.divf %482, %483 : vector<16x1xf32>
    %485 = vector.broadcast %477 : vector<16x1xf32> to vector<16x128xf32>
    %486 = arith.subf %471, %485 : vector<16x128xf32>
    %cst_211 = arith.constant 9.99999974E-6 : f32
    %487 = vector.broadcast %cst_211 : f32 to vector<16x1xf32>
    %488 = arith.addf %484, %487 : vector<16x1xf32>
    %489 = math.rsqrt %488 : vector<16x1xf32>
    %490 = vector.broadcast %489 : vector<16x1xf32> to vector<16x128xf32>
    %491 = arith.mulf %486, %490 : vector<16x128xf32>
    %492 = vector.broadcast %472 : vector<1x128xf32> to vector<16x128xf32>
    %493 = arith.mulf %491, %492 : vector<16x128xf32>
    %494 = vector.broadcast %473 : vector<1x128xf32> to vector<16x128xf32>
    %495 = arith.addf %493, %494 : vector<16x128xf32>
    %c0_212 = arith.constant 0 : index
    %c0_213 = arith.constant 0 : index
    %496 = vector.load %arg27[%c0_212, %c0_213] : memref<128x256xf32, #tpu.memory_space<vmem>>, vector<128x256xf32>
    %cst_214 = arith.constant dense<0.000000e+00> : vector<16x256xf32>
    %497 = tpu.matmul %495, %496, %cst_214 {dimension_numbers = #tpu.dot_dimension_numbers<[1], [0], [0], [1], [0, 0, 1, 1], [], []>} : vector<16x128xf32>, vector<128x256xf32>, vector<16x256xf32> -> vector<16x256xf32>
    %c0_215 = arith.constant 0 : index
    %c0_216 = arith.constant 0 : index
    %498 = vector.load %arg28[%c0_215, %c0_216] : memref<1x256xf32, #tpu.memory_space<vmem>>, vector<1x256xf32>
    %499 = vector.broadcast %498 : vector<1x256xf32> to vector<16x256xf32>
    %500 = arith.addf %497, %499 : vector<16x256xf32>
    %cst_217 = arith.constant 5.000000e-01 : f32
    %501 = vector.broadcast %cst_217 : f32 to vector<16x256xf32>
    %502 = arith.mulf %501, %500 : vector<16x256xf32>
    %cst_218 = arith.constant 0.707106769 : f32
    %503 = vector.broadcast %cst_218 : f32 to vector<16x256xf32>
    %504 = arith.mulf %500, %503 : vector<16x256xf32>
    %505 = math.erf %504 : vector<16x256xf32>
    %cst_219 = arith.constant 1.000000e+00 : f32
    %506 = vector.broadcast %cst_219 : f32 to vector<16x256xf32>
    %507 = arith.addf %506, %505 : vector<16x256xf32>
    %508 = arith.mulf %502, %507 : vector<16x256xf32>
    %c0_220 = arith.constant 0 : index
    %c0_221 = arith.constant 0 : index
    %509 = vector.load %arg29[%c0_220, %c0_221] : memref<256x128xf32, #tpu.memory_space<vmem>>, vector<256x128xf32>
    %cst_222 = arith.constant dense<0.000000e+00> : vector<16x128xf32>
    %510 = tpu.matmul %508, %509, %cst_222 {dimension_numbers = #tpu.dot_dimension_numbers<[1], [0], [0], [1], [0, 0, 1, 1], [], []>} : vector<16x256xf32>, vector<256x128xf32>, vector<16x128xf32> -> vector<16x128xf32>
    %511 = arith.addf %495, %510 : vector<16x128xf32>
    %c0_223 = arith.constant 0 : index
    %c0_224 = arith.constant 0 : index
    %512 = vector.load %arg30[%c0_223, %c0_224] : memref<1x128xf32, #tpu.memory_space<vmem>>, vector<1x128xf32>
    %513 = vector.broadcast %512 : vector<1x128xf32> to vector<16x128xf32>
    %514 = arith.addf %511, %513 : vector<16x128xf32>
    %c0_225 = arith.constant 0 : index
    %c0_226 = arith.constant 0 : index
    %515 = vector.load %arg31[%c0_225, %c0_226] : memref<1x128xf32, #tpu.memory_space<vmem>>, vector<1x128xf32>
    %c0_227 = arith.constant 0 : index
    %c0_228 = arith.constant 0 : index
    %516 = vector.load %arg32[%c0_227, %c0_228] : memref<1x128xf32, #tpu.memory_space<vmem>>, vector<1x128xf32>
    %cst_229 = arith.constant dense<0.000000e+00> : vector<16xf32>
    %517 = vector.multi_reduction <add>, %514, %cst_229 [1] : vector<16x128xf32> to vector<16xf32>
    %518 = vector.shape_cast %517 : vector<16xf32> to vector<16x1xf32>
    %cst_230 = arith.constant 1.280000e+02 : f32
    %519 = vector.broadcast %cst_230 : f32 to vector<16x1xf32>
    %520 = arith.divf %518, %519 : vector<16x1xf32>
    %521 = vector.broadcast %520 : vector<16x1xf32> to vector<16x128xf32>
    %522 = arith.subf %514, %521 : vector<16x128xf32>
    %523 = arith.mulf %522, %522 : vector<16x128xf32>
    %cst_231 = arith.constant dense<0.000000e+00> : vector<16xf32>
    %524 = vector.multi_reduction <add>, %523, %cst_231 [1] : vector<16x128xf32> to vector<16xf32>
    %525 = vector.shape_cast %524 : vector<16xf32> to vector<16x1xf32>
    %cst_232 = arith.constant 1.280000e+02 : f32
    %526 = vector.broadcast %cst_232 : f32 to vector<16x1xf32>
    %527 = arith.divf %525, %526 : vector<16x1xf32>
    %528 = vector.broadcast %520 : vector<16x1xf32> to vector<16x128xf32>
    %529 = arith.subf %514, %528 : vector<16x128xf32>
    %cst_233 = arith.constant 9.99999974E-6 : f32
    %530 = vector.broadcast %cst_233 : f32 to vector<16x1xf32>
    %531 = arith.addf %527, %530 : vector<16x1xf32>
    %532 = math.rsqrt %531 : vector<16x1xf32>
    %533 = vector.broadcast %532 : vector<16x1xf32> to vector<16x128xf32>
    %534 = arith.mulf %529, %533 : vector<16x128xf32>
    %535 = vector.broadcast %515 : vector<1x128xf32> to vector<16x128xf32>
    %536 = arith.mulf %534, %535 : vector<16x128xf32>
    %537 = vector.broadcast %516 : vector<1x128xf32> to vector<16x128xf32>
    %538 = arith.addf %536, %537 : vector<16x128xf32>
    %539 = vector.extract_strided_slice %538 {offsets = [0, 0], sizes = [8, 128], strides = [1, 1]} : vector<16x128xf32> to vector<8x128xf32>
    %c1_234 = arith.constant 1 : index
    %c0_235 = arith.constant 0 : index
    %540 = vector.load %arg38[%c1_234, %c0_235] : memref<36x128xf32, #tpu.memory_space<vmem>>, vector<8x128xf32>
    tpu.vector_store %arg38[%c1_234, %c0_235], %539 {strides = array<i32>} : memref<36x128xf32, #tpu.memory_space<vmem>>, vector<8x128xf32>,
    %541 = vector.extract_strided_slice %538 {offsets = [0, 0], sizes = [1, 128], strides = [1, 1]} : vector<16x128xf32> to vector<1x128xf32>
    %c0_236 = arith.constant 0 : index
    %c0_237 = arith.constant 0 : index
    %542 = vector.load %arg38[%c0_236, %c0_237] : memref<36x128xf32, #tpu.memory_space<vmem>>, vector<1x128xf32>
    tpu.vector_store %arg38[%c0_236, %c0_237], %541 {strides = array<i32>} : memref<36x128xf32, #tpu.memory_space<vmem>>, vector<1x128xf32>,
    %543 = vector.extract_strided_slice %538 {offsets = [7, 0], sizes = [1, 128], strides = [1, 1]} : vector<16x128xf32> to vector<1x128xf32>
    %c9 = arith.constant 9 : index
    %c0_238 = arith.constant 0 : index
    %544 = vector.load %arg38[%c9, %c0_238] : memref<36x128xf32, #tpu.memory_space<vmem>>, vector<1x128xf32>
    tpu.vector_store %arg38[%c9, %c0_238], %543 {strides = array<i32>} : memref<36x128xf32, #tpu.memory_space<vmem>>, vector<1x128xf32>,
    %545 = vector.extract_strided_slice %538 {offsets = [8, 0], sizes = [8, 128], strides = [1, 1]} : vector<16x128xf32> to vector<8x128xf32>
    %c11 = arith.constant 11 : index
    %c0_239 = arith.constant 0 : index
    %546 = vector.load %arg38[%c11, %c0_239] : memref<36x128xf32, #tpu.memory_space<vmem>>, vector<8x128xf32>
    tpu.vector_store %arg38[%c11, %c0_239], %545 {strides = array<i32>} : memref<36x128xf32, #tpu.memory_space<vmem>>, vector<8x128xf32>,
    %547 = vector.extract_strided_slice %538 {offsets = [8, 0], sizes = [1, 128], strides = [1, 1]} : vector<16x128xf32> to vector<1x128xf32>
    %c10 = arith.constant 10 : index
    %c0_240 = arith.constant 0 : index
    %548 = vector.load %arg38[%c10, %c0_240] : memref<36x128xf32, #tpu.memory_space<vmem>>, vector<1x128xf32>
    tpu.vector_store %arg38[%c10, %c0_240], %547 {strides = array<i32>} : memref<36x128xf32, #tpu.memory_space<vmem>>, vector<1x128xf32>,
    %549 = vector.extract_strided_slice %538 {offsets = [15, 0], sizes = [1, 128], strides = [1, 1]} : vector<16x128xf32> to vector<1x128xf32>
    %c19_241 = arith.constant 19 : index
    %c0_242 = arith.constant 0 : index
    %550 = vector.load %arg38[%c19_241, %c0_242] : memref<36x128xf32, #tpu.memory_space<vmem>>, vector<1x128xf32>
    tpu.vector_store %arg38[%c19_241, %c0_242], %549 {strides = array<i32>} : memref<36x128xf32, #tpu.memory_space<vmem>>, vector<1x128xf32>,
    %c0_243 = arith.constant 0 : index
    %c0_244 = arith.constant 0 : index
    %551 = vector.load %arg38[%c0_243, %c0_244] : memref<36x128xf32, #tpu.memory_space<vmem>>, vector<20x128xf32>
    %c0_245 = arith.constant 0 : index
    %c0_246 = arith.constant 0 : index
    %c0_247 = arith.constant 0 : index
    %552 = vector.load %arg33[%c0_245, %c0_246, %c0_247] : memref<3x128x128xf32, #tpu.memory_space<vmem>>, vector<1x128x128xf32>
    %553 = vector.shape_cast %552 : vector<1x128x128xf32> to vector<128x128xf32>
    %cst_248 = arith.constant dense<0.000000e+00> : vector<20x128xf32>
    %554 = tpu.matmul %551, %553, %cst_248 {dimension_numbers = #tpu.dot_dimension_numbers<[1], [0], [0], [1], [0, 0, 1, 1], [], []>} : vector<20x128xf32>, vector<128x128xf32>, vector<20x128xf32> -> vector<20x128xf32>
    %c1_249 = arith.constant 1 : index
    %c0_250 = arith.constant 0 : index
    %c0_251 = arith.constant 0 : index
    %555 = vector.load %arg33[%c1_249, %c0_250, %c0_251] : memref<3x128x128xf32, #tpu.memory_space<vmem>>, vector<1x128x128xf32>
    %556 = vector.shape_cast %555 : vector<1x128x128xf32> to vector<128x128xf32>
    %cst_252 = arith.constant dense<0.000000e+00> : vector<20x128xf32>
    %557 = tpu.matmul %551, %556, %cst_252 {dimension_numbers = #tpu.dot_dimension_numbers<[1], [0], [0], [1], [0, 0, 1, 1], [], []>} : vector<20x128xf32>, vector<128x128xf32>, vector<20x128xf32> -> vector<20x128xf32>
    %c2_253 = arith.constant 2 : index
    %c0_254 = arith.constant 0 : index
    %c0_255 = arith.constant 0 : index
    %558 = vector.load %arg33[%c2_253, %c0_254, %c0_255] : memref<3x128x128xf32, #tpu.memory_space<vmem>>, vector<1x128x128xf32>
    %559 = vector.shape_cast %558 : vector<1x128x128xf32> to vector<128x128xf32>
    %cst_256 = arith.constant dense<0.000000e+00> : vector<20x128xf32>
    %560 = tpu.matmul %551, %559, %cst_256 {dimension_numbers = #tpu.dot_dimension_numbers<[1], [0], [0], [1], [0, 0, 1, 1], [], []>} : vector<20x128xf32>, vector<128x128xf32>, vector<20x128xf32> -> vector<20x128xf32>
    %cst_257 = arith.constant 0xFF800000 : f32
    %561 = vector.broadcast %cst_257 : f32 to vector<1x128xf32>
    %c0_258 = arith.constant 0 : index
    %c0_259 = arith.constant 0 : index
    %562 = vector.load %arg34[%c0_258, %c0_259] : memref<1x128xf32, #tpu.memory_space<vmem>>, vector<1x128xf32>
    %563 = vector.extract_strided_slice %554 {offsets = [0, 0], sizes = [8, 128], strides = [1, 1]} : vector<20x128xf32> to vector<8x128xf32>
    %564 = vector.broadcast %562 : vector<1x128xf32> to vector<8x128xf32>
    %565 = arith.addf %564, %563 : vector<8x128xf32>
    %566 = vector.extract_strided_slice %557 {offsets = [1, 0], sizes = [8, 128], strides = [1, 1]} : vector<20x128xf32> to vector<8x128xf32>
    %567 = arith.addf %565, %566 : vector<8x128xf32>
    %568 = vector.extract_strided_slice %560 {offsets = [2, 0], sizes = [8, 128], strides = [1, 1]} : vector<20x128xf32> to vector<8x128xf32>
    %569 = arith.addf %567, %568 : vector<8x128xf32>
    %c0_260 = arith.constant 0 : index
    %c0_261 = arith.constant 0 : index
    %570 = vector.load %arg35[%c0_260, %c0_261] : memref<1x128xf32, #tpu.memory_space<vmem>>, vector<1x128xf32>
    %571 = vector.broadcast %570 : vector<1x128xf32> to vector<8x128xf32>
    %572 = arith.mulf %569, %571 : vector<8x128xf32>
    %c0_262 = arith.constant 0 : index
    %c0_263 = arith.constant 0 : index
    %573 = vector.load %arg36[%c0_262, %c0_263] : memref<1x128xf32, #tpu.memory_space<vmem>>, vector<1x128xf32>
    %574 = vector.broadcast %573 : vector<1x128xf32> to vector<8x128xf32>
    %575 = arith.addf %572, %574 : vector<8x128xf32>
    %cst_264 = arith.constant 0.000000e+00 : f32
    %576 = vector.broadcast %cst_264 : f32 to vector<8x128xf32>
    %577 = arith.cmpf ogt, %575, %576 : vector<8x128xf32>
    %cst_265 = arith.constant 0.000000e+00 : f32
    %578 = vector.broadcast %cst_265 : f32 to vector<8x128xf32>
    %579 = arith.minimumf %575, %578 : vector<8x128xf32>
    %580 = math.exp %579 : vector<8x128xf32>
    %cst_266 = arith.constant 1.000000e+00 : f32
    %581 = vector.broadcast %cst_266 : f32 to vector<8x128xf32>
    %582 = arith.subf %580, %581 : vector<8x128xf32>
    %583 = arith.select %577, %575, %582 : vector<8x128xi1>, vector<8x128xf32>
    %c1_267 = arith.constant 1 : index
    %c0_268 = arith.constant 0 : index
    %584 = vector.load %arg38[%c1_267, %c0_268] : memref<36x128xf32, #tpu.memory_space<vmem>>, vector<8x128xf32>
    tpu.vector_store %arg38[%c1_267, %c0_268], %583 {strides = array<i32>} : memref<36x128xf32, #tpu.memory_space<vmem>>, vector<8x128xf32>,
    %c0_269 = arith.constant 0 : index
    %c0_270 = arith.constant 0 : index
    %585 = vector.load %arg38[%c0_269, %c0_270] : memref<36x128xf32, #tpu.memory_space<vmem>>, vector<1x128xf32>
    tpu.vector_store %arg38[%c0_269, %c0_270], %561 {strides = array<i32>} : memref<36x128xf32, #tpu.memory_space<vmem>>, vector<1x128xf32>,
    %c9_271 = arith.constant 9 : index
    %c0_272 = arith.constant 0 : index
    %586 = vector.load %arg38[%c9_271, %c0_272] : memref<36x128xf32, #tpu.memory_space<vmem>>, vector<1x128xf32>
    tpu.vector_store %arg38[%c9_271, %c0_272], %561 {strides = array<i32>} : memref<36x128xf32, #tpu.memory_space<vmem>>, vector<1x128xf32>,
    %c0_273 = arith.constant 0 : index
    %c0_274 = arith.constant 0 : index
    %587 = tpu.strided_load %arg38[%c0_273, %c0_274] {strides = array<i32: 2, 1>} : memref<36x128xf32, #tpu.memory_space<vmem>>, vector<4x128xf32>
    %c1_275 = arith.constant 1 : index
    %c0_276 = arith.constant 0 : index
    %588 = tpu.strided_load %arg38[%c1_275, %c0_276] {strides = array<i32: 2, 1>} : memref<36x128xf32, #tpu.memory_space<vmem>>, vector<4x128xf32>
    %c2_277 = arith.constant 2 : index
    %c0_278 = arith.constant 0 : index
    %589 = tpu.strided_load %arg38[%c2_277, %c0_278] {strides = array<i32: 2, 1>} : memref<36x128xf32, #tpu.memory_space<vmem>>, vector<4x128xf32>
    %590 = arith.maximumf %587, %588 : vector<4x128xf32>
    %591 = arith.maximumf %590, %589 : vector<4x128xf32>
    %c0_279 = arith.constant 0 : index
    %c0_280 = arith.constant 0 : index
    %592 = vector.load %arg34[%c0_279, %c0_280] : memref<1x128xf32, #tpu.memory_space<vmem>>, vector<1x128xf32>
    %593 = vector.extract_strided_slice %554 {offsets = [10, 0], sizes = [8, 128], strides = [1, 1]} : vector<20x128xf32> to vector<8x128xf32>
    %594 = vector.broadcast %592 : vector<1x128xf32> to vector<8x128xf32>
    %595 = arith.addf %594, %593 : vector<8x128xf32>
    %596 = vector.extract_strided_slice %557 {offsets = [11, 0], sizes = [8, 128], strides = [1, 1]} : vector<20x128xf32> to vector<8x128xf32>
    %597 = arith.addf %595, %596 : vector<8x128xf32>
    %598 = vector.extract_strided_slice %560 {offsets = [12, 0], sizes = [8, 128], strides = [1, 1]} : vector<20x128xf32> to vector<8x128xf32>
    %599 = arith.addf %597, %598 : vector<8x128xf32>
    %c0_281 = arith.constant 0 : index
    %c0_282 = arith.constant 0 : index
    %600 = vector.load %arg35[%c0_281, %c0_282] : memref<1x128xf32, #tpu.memory_space<vmem>>, vector<1x128xf32>
    %601 = vector.broadcast %600 : vector<1x128xf32> to vector<8x128xf32>
    %602 = arith.mulf %599, %601 : vector<8x128xf32>
    %c0_283 = arith.constant 0 : index
    %c0_284 = arith.constant 0 : index
    %603 = vector.load %arg36[%c0_283, %c0_284] : memref<1x128xf32, #tpu.memory_space<vmem>>, vector<1x128xf32>
    %604 = vector.broadcast %603 : vector<1x128xf32> to vector<8x128xf32>
    %605 = arith.addf %602, %604 : vector<8x128xf32>
    %cst_285 = arith.constant 0.000000e+00 : f32
    %606 = vector.broadcast %cst_285 : f32 to vector<8x128xf32>
    %607 = arith.cmpf ogt, %605, %606 : vector<8x128xf32>
    %cst_286 = arith.constant 0.000000e+00 : f32
    %608 = vector.broadcast %cst_286 : f32 to vector<8x128xf32>
    %609 = arith.minimumf %605, %608 : vector<8x128xf32>
    %610 = math.exp %609 : vector<8x128xf32>
    %cst_287 = arith.constant 1.000000e+00 : f32
    %611 = vector.broadcast %cst_287 : f32 to vector<8x128xf32>
    %612 = arith.subf %610, %611 : vector<8x128xf32>
    %613 = arith.select %607, %605, %612 : vector<8x128xi1>, vector<8x128xf32>
    %c11_288 = arith.constant 11 : index
    %c0_289 = arith.constant 0 : index
    %614 = vector.load %arg38[%c11_288, %c0_289] : memref<36x128xf32, #tpu.memory_space<vmem>>, vector<8x128xf32>
    tpu.vector_store %arg38[%c11_288, %c0_289], %613 {strides = array<i32>} : memref<36x128xf32, #tpu.memory_space<vmem>>, vector<8x128xf32>,
    %c10_290 = arith.constant 10 : index
    %c0_291 = arith.constant 0 : index
    %615 = vector.load %arg38[%c10_290, %c0_291] : memref<36x128xf32, #tpu.memory_space<vmem>>, vector<1x128xf32>
    tpu.vector_store %arg38[%c10_290, %c0_291], %561 {strides = array<i32>} : memref<36x128xf32, #tpu.memory_space<vmem>>, vector<1x128xf32>,
    %c19_292 = arith.constant 19 : index
    %c0_293 = arith.constant 0 : index
    %616 = vector.load %arg38[%c19_292, %c0_293] : memref<36x128xf32, #tpu.memory_space<vmem>>, vector<1x128xf32>
    tpu.vector_store %arg38[%c19_292, %c0_293], %561 {strides = array<i32>} : memref<36x128xf32, #tpu.memory_space<vmem>>, vector<1x128xf32>,
    %c10_294 = arith.constant 10 : index
    %c0_295 = arith.constant 0 : index
    %617 = tpu.strided_load %arg38[%c10_294, %c0_295] {strides = array<i32: 2, 1>} : memref<36x128xf32, #tpu.memory_space<vmem>>, vector<4x128xf32>
    %c11_296 = arith.constant 11 : index
    %c0_297 = arith.constant 0 : index
    %618 = tpu.strided_load %arg38[%c11_296, %c0_297] {strides = array<i32: 2, 1>} : memref<36x128xf32, #tpu.memory_space<vmem>>, vector<4x128xf32>
    %c12 = arith.constant 12 : index
    %c0_298 = arith.constant 0 : index
    %619 = tpu.strided_load %arg38[%c12, %c0_298] {strides = array<i32: 2, 1>} : memref<36x128xf32, #tpu.memory_space<vmem>>, vector<4x128xf32>
    %620 = arith.maximumf %617, %618 : vector<4x128xf32>
    %621 = arith.maximumf %620, %619 : vector<4x128xf32>
    %c0_299 = arith.constant 0 : index
    %c0_300 = arith.constant 0 : index
    %c0_301 = arith.constant 0 : index
    %622 = vector.load %arg37[%c0_299, %c0_300, %c0_301] : memref<2x4x128xf32, #tpu.memory_space<vmem>>, vector<1x4x128xf32>
    %623 = vector.shape_cast %622 : vector<1x4x128xf32> to vector<4x128xf32>
    %624 = vector.shape_cast %591 : vector<4x128xf32> to vector<1x4x128xf32>
    tpu.vector_store %arg37[%c0_299, %c0_300, %c0_301], %624 {strides = array<i32>} : memref<2x4x128xf32, #tpu.memory_space<vmem>>, vector<1x4x128xf32>,
    %c1_302 = arith.constant 1 : index
    %c0_303 = arith.constant 0 : index
    %c0_304 = arith.constant 0 : index
    %625 = vector.load %arg37[%c1_302, %c0_303, %c0_304] : memref<2x4x128xf32, #tpu.memory_space<vmem>>, vector<1x4x128xf32>
    %626 = vector.shape_cast %625 : vector<1x4x128xf32> to vector<4x128xf32>
    %627 = vector.shape_cast %621 : vector<4x128xf32> to vector<1x4x128xf32>
    tpu.vector_store %arg37[%c1_302, %c0_303, %c0_304], %627 {strides = array<i32>} : memref<2x4x128xf32, #tpu.memory_space<vmem>>, vector<1x4x128xf32>,
    return
  }
  func.func @transform_0(%arg0: i32) -> (i32, i32, i32) {
    %c0_i32 = arith.constant 0 : i32
    %c0_i32_0 = arith.constant 0 : i32
    %c0_i32_1 = arith.constant 0 : i32
    return %arg0, %c0_i32, %c0_i32_0 : i32, i32, i32
  }
  func.func @transform_1(%arg0: i32) -> (i32, i32) {
    %c0_i32 = arith.constant 0 : i32
    %c0_i32_0 = arith.constant 0 : i32
    %c0_i32_1 = arith.constant 0 : i32
    return %c0_i32, %c0_i32_0 : i32, i32
  }
  func.func @transform_2(%arg0: i32) -> (i32, i32) {
    %c0_i32 = arith.constant 0 : i32
    %c0_i32_0 = arith.constant 0 : i32
    %c0_i32_1 = arith.constant 0 : i32
    return %c0_i32, %c0_i32_0 : i32, i32
  }
  func.func @transform_3(%arg0: i32) -> (i32, i32) {
    %c0_i32 = arith.constant 0 : i32
    %c0_i32_0 = arith.constant 0 : i32
    %c0_i32_1 = arith.constant 0 : i32
    return %c0_i32, %c0_i32_0 : i32, i32
  }
  func.func @transform_4(%arg0: i32) -> (i32, i32) {
    %c0_i32 = arith.constant 0 : i32
    %c0_i32_0 = arith.constant 0 : i32
    %c0_i32_1 = arith.constant 0 : i32
    return %c0_i32, %c0_i32_0 : i32, i32
  }
  func.func @transform_5(%arg0: i32) -> (i32, i32) {
    %c0_i32 = arith.constant 0 : i32
    %c0_i32_0 = arith.constant 0 : i32
    %c0_i32_1 = arith.constant 0 : i32
    return %c0_i32, %c0_i32_0 : i32, i32
  }
  func.func @transform_6(%arg0: i32) -> (i32, i32) {
    %c0_i32 = arith.constant 0 : i32
    %c0_i32_0 = arith.constant 0 : i32
    %c0_i32_1 = arith.constant 0 : i32
    return %c0_i32, %c0_i32_0 : i32, i32
  }
  func.func @transform_7(%arg0: i32) -> (i32, i32) {
    %c0_i32 = arith.constant 0 : i32
    %c0_i32_0 = arith.constant 0 : i32
    %c0_i32_1 = arith.constant 0 : i32
    return %c0_i32, %c0_i32_0 : i32, i32
  }
  func.func @transform_8(%arg0: i32) -> (i32, i32) {
    %c0_i32 = arith.constant 0 : i32
    %c0_i32_0 = arith.constant 0 : i32
    %c0_i32_1 = arith.constant 0 : i32
    return %c0_i32, %c0_i32_0 : i32, i32
  }
  func.func @transform_9(%arg0: i32) -> (i32, i32) {
    %c0_i32 = arith.constant 0 : i32
    %c0_i32_0 = arith.constant 0 : i32
    %c0_i32_1 = arith.constant 0 : i32
    return %c0_i32, %c0_i32_0 : i32, i32
  }
  func.func @transform_10(%arg0: i32) -> (i32, i32) {
    %c0_i32 = arith.constant 0 : i32
    %c0_i32_0 = arith.constant 0 : i32
    %c0_i32_1 = arith.constant 0 : i32
    return %c0_i32, %c0_i32_0 : i32, i32
  }
  func.func @transform_11(%arg0: i32) -> (i32, i32) {
    %c0_i32 = arith.constant 0 : i32
    %c0_i32_0 = arith.constant 0 : i32
    %c0_i32_1 = arith.constant 0 : i32
    return %c0_i32, %c0_i32_0 : i32, i32
  }
  func.func @transform_12(%arg0: i32) -> (i32, i32) {
    %c0_i32 = arith.constant 0 : i32
    %c0_i32_0 = arith.constant 0 : i32
    %c0_i32_1 = arith.constant 0 : i32
    return %c0_i32, %c0_i32_0 : i32, i32
  }
  func.func @transform_13(%arg0: i32) -> (i32, i32) {
    %c0_i32 = arith.constant 0 : i32
    %c0_i32_0 = arith.constant 0 : i32
    %c0_i32_1 = arith.constant 0 : i32
    return %c0_i32, %c0_i32_0 : i32, i32
  }
  func.func @transform_14(%arg0: i32) -> (i32, i32) {
    %c0_i32 = arith.constant 0 : i32
    %c0_i32_0 = arith.constant 0 : i32
    %c0_i32_1 = arith.constant 0 : i32
    return %c0_i32, %c0_i32_0 : i32, i32
  }
  func.func @transform_15(%arg0: i32) -> (i32, i32) {
    %c0_i32 = arith.constant 0 : i32
    %c0_i32_0 = arith.constant 0 : i32
    %c0_i32_1 = arith.constant 0 : i32
    return %c0_i32, %c0_i32_0 : i32, i32
  }
  func.func @transform_16(%arg0: i32) -> (i32, i32, i32) {
    %c0_i32 = arith.constant 0 : i32
    %c0_i32_0 = arith.constant 0 : i32
    %c0_i32_1 = arith.constant 0 : i32
    %c0_i32_2 = arith.constant 0 : i32
    return %c0_i32, %c0_i32_0, %c0_i32_1 : i32, i32, i32
  }
  func.func @transform_17(%arg0: i32) -> (i32, i32) {
    %c0_i32 = arith.constant 0 : i32
    %c0_i32_0 = arith.constant 0 : i32
    %c0_i32_1 = arith.constant 0 : i32
    return %c0_i32, %c0_i32_0 : i32, i32
  }
  func.func @transform_18(%arg0: i32) -> (i32, i32) {
    %c0_i32 = arith.constant 0 : i32
    %c0_i32_0 = arith.constant 0 : i32
    %c0_i32_1 = arith.constant 0 : i32
    return %c0_i32, %c0_i32_0 : i32, i32
  }
  func.func @transform_19(%arg0: i32) -> (i32, i32) {
    %c0_i32 = arith.constant 0 : i32
    %c0_i32_0 = arith.constant 0 : i32
    %c0_i32_1 = arith.constant 0 : i32
    return %c0_i32, %c0_i32_0 : i32, i32
  }
  func.func @transform_20(%arg0: i32) -> (i32, i32) {
    %c0_i32 = arith.constant 0 : i32
    %c0_i32_0 = arith.constant 0 : i32
    %c0_i32_1 = arith.constant 0 : i32
    return %c0_i32, %c0_i32_0 : i32, i32
  }
  func.func @transform_21(%arg0: i32) -> (i32, i32) {
    %c0_i32 = arith.constant 0 : i32
    %c0_i32_0 = arith.constant 0 : i32
    %c0_i32_1 = arith.constant 0 : i32
    return %c0_i32, %c0_i32_0 : i32, i32
  }
  func.func @transform_22(%arg0: i32) -> (i32, i32) {
    %c0_i32 = arith.constant 0 : i32
    %c0_i32_0 = arith.constant 0 : i32
    %c0_i32_1 = arith.constant 0 : i32
    return %c0_i32, %c0_i32_0 : i32, i32
  }
  func.func @transform_23(%arg0: i32) -> (i32, i32) {
    %c0_i32 = arith.constant 0 : i32
    %c0_i32_0 = arith.constant 0 : i32
    %c0_i32_1 = arith.constant 0 : i32
    return %c0_i32, %c0_i32_0 : i32, i32
  }
  func.func @transform_24(%arg0: i32) -> (i32, i32) {
    %c0_i32 = arith.constant 0 : i32
    %c0_i32_0 = arith.constant 0 : i32
    %c0_i32_1 = arith.constant 0 : i32
    return %c0_i32, %c0_i32_0 : i32, i32
  }
  func.func @transform_25(%arg0: i32) -> (i32, i32) {
    %c0_i32 = arith.constant 0 : i32
    %c0_i32_0 = arith.constant 0 : i32
    %c0_i32_1 = arith.constant 0 : i32
    return %c0_i32, %c0_i32_0 : i32, i32
  }
  func.func @transform_26(%arg0: i32) -> (i32, i32) {
    %c0_i32 = arith.constant 0 : i32
    %c0_i32_0 = arith.constant 0 : i32
    %c0_i32_1 = arith.constant 0 : i32
    return %c0_i32, %c0_i32_0 : i32, i32
  }
  func.func @transform_27(%arg0: i32) -> (i32, i32) {
    %c0_i32 = arith.constant 0 : i32
    %c0_i32_0 = arith.constant 0 : i32
    %c0_i32_1 = arith.constant 0 : i32
    return %c0_i32, %c0_i32_0 : i32, i32
  }
  func.func @transform_28(%arg0: i32) -> (i32, i32) {
    %c0_i32 = arith.constant 0 : i32
    %c0_i32_0 = arith.constant 0 : i32
    %c0_i32_1 = arith.constant 0 : i32
    return %c0_i32, %c0_i32_0 : i32, i32
  }
  func.func @transform_29(%arg0: i32) -> (i32, i32) {
    %c0_i32 = arith.constant 0 : i32
    %c0_i32_0 = arith.constant 0 : i32
    %c0_i32_1 = arith.constant 0 : i32
    return %c0_i32, %c0_i32_0 : i32, i32
  }
  func.func @transform_30(%arg0: i32) -> (i32, i32) {
    %c0_i32 = arith.constant 0 : i32
    %c0_i32_0 = arith.constant 0 : i32
    %c0_i32_1 = arith.constant 0 : i32
    return %c0_i32, %c0_i32_0 : i32, i32
  }
  func.func @transform_31(%arg0: i32) -> (i32, i32) {
    %c0_i32 = arith.constant 0 : i32
    %c0_i32_0 = arith.constant 0 : i32
    %c0_i32_1 = arith.constant 0 : i32
    return %c0_i32, %c0_i32_0 : i32, i32
  }
  func.func @transform_32(%arg0: i32) -> (i32, i32, i32) {
    %c0_i32 = arith.constant 0 : i32
    %c0_i32_0 = arith.constant 0 : i32
    %c0_i32_1 = arith.constant 0 : i32
    %c0_i32_2 = arith.constant 0 : i32
    return %c0_i32, %c0_i32_0, %c0_i32_1 : i32, i32, i32
  }
  func.func @transform_33(%arg0: i32) -> (i32, i32) {
    %c0_i32 = arith.constant 0 : i32
    %c0_i32_0 = arith.constant 0 : i32
    %c0_i32_1 = arith.constant 0 : i32
    return %c0_i32, %c0_i32_0 : i32, i32
  }
  func.func @transform_34(%arg0: i32) -> (i32, i32) {
    %c0_i32 = arith.constant 0 : i32
    %c0_i32_0 = arith.constant 0 : i32
    %c0_i32_1 = arith.constant 0 : i32
    return %c0_i32, %c0_i32_0 : i32, i32
  }
  func.func @transform_35(%arg0: i32) -> (i32, i32) {
    %c0_i32 = arith.constant 0 : i32
    %c0_i32_0 = arith.constant 0 : i32
    %c0_i32_1 = arith.constant 0 : i32
    return %c0_i32, %c0_i32_0 : i32, i32
  }
  func.func @transform_36(%arg0: i32) -> (i32, i32, i32) {
    %c0_i32 = arith.constant 0 : i32
    %c0_i32_0 = arith.constant 0 : i32
    %c0_i32_1 = arith.constant 0 : i32
    return %arg0, %c0_i32, %c0_i32_0 : i32, i32, i32
  }
}

</mosaic_0001>

<llo_original>
// kernel: informer_forward.1
$region0: #{informer_forward.1}
  #allocation0 [shape = 'u32[]', space=smem, size = 0x4, offset = 0x4, fixed_abs, tag = 'smem constant byte address 0x4 - core index']
  #allocation1 [shape = 'u32[144,128]{1,0:T(1,128)}', space=vmem, size = 0x12000, scoped, tag = 'internal scratch']
  #allocation2 [shape = 'f32[36,128]{1,0:T(8,128)}', space=vmem, size = 0x5000, scoped, tag = 'scratch operand']
  %s0 = inlined_call_operand.smem [shape: u32[37], index: -1, kind: input, shape index: {}]
  %s1 = sld [smem:[%s0]]
  %s2 = scalar_lea.smem %s0, 1
  %s3 = sld [smem:[%s2]]
  %s4 = scalar_lea.smem %s0, 2
  %s5 = sld [smem:[%s4]]
  %s6 = scalar_lea.smem %s0, 3
  %s7 = sld [smem:[%s6]]
  %s8 = scalar_lea.smem %s0, 4
  %s9 = sld [smem:[%s8]]
  %s10 = scalar_lea.smem %s0, 5
  %s11 = sld [smem:[%s10]]
  %s12 = scalar_lea.smem %s0, 6
  %s13 = sld [smem:[%s12]]
  %s14 = scalar_lea.smem %s0, 7
  %s15 = sld [smem:[%s14]]
  %s16 = scalar_lea.smem %s0, 8
  %s17 = sld [smem:[%s16]]
  %s18 = scalar_lea.smem %s0, 9
  %s19 = sld [smem:[%s18]]
  %s20 = scalar_lea.smem %s0, 10
  %s21 = sld [smem:[%s20]]
  %s22 = scalar_lea.smem %s0, 11
  %s23 = sld [smem:[%s22]]
  %s24 = scalar_lea.smem %s0, 12
  %s25 = sld [smem:[%s24]]
  %s26 = scalar_lea.smem %s0, 13
  %s27 = sld [smem:[%s26]]
  %s28 = scalar_lea.smem %s0, 14
  %s29 = sld [smem:[%s28]]
  %s30 = scalar_lea.smem %s0, 15
  %s31 = sld [smem:[%s30]]
  %s32 = scalar_lea.smem %s0, 16
  %s33 = sld [smem:[%s32]]
  %s34 = scalar_lea.smem %s0, 17
  %s35 = sld [smem:[%s34]]
  %s36 = scalar_lea.smem %s0, 18
  %s37 = sld [smem:[%s36]]
  %s38 = scalar_lea.smem %s0, 19
  %s39 = sld [smem:[%s38]]
  %s40 = scalar_lea.smem %s0, 20
  %s41 = sld [smem:[%s40]]
  %s42 = scalar_lea.smem %s0, 21
  %s43 = sld [smem:[%s42]]
  %s44 = scalar_lea.smem %s0, 22
  %s45 = sld [smem:[%s44]]
  %s46 = scalar_lea.smem %s0, 23
  %s47 = sld [smem:[%s46]]
  %s48 = scalar_lea.smem %s0, 24
  %s49 = sld [smem:[%s48]]
  %s50 = scalar_lea.smem %s0, 25
  %s51 = sld [smem:[%s50]]
  %s52 = scalar_lea.smem %s0, 26
  %s53 = sld [smem:[%s52]]
  %s54 = scalar_lea.smem %s0, 27
  %s55 = sld [smem:[%s54]]
  %s56 = scalar_lea.smem %s0, 28
  %s57 = sld [smem:[%s56]]
  %s58 = scalar_lea.smem %s0, 29
  %s59 = sld [smem:[%s58]]
  %s60 = scalar_lea.smem %s0, 30
  %s61 = sld [smem:[%s60]]
  %s62 = scalar_lea.smem %s0, 31
  %s63 = sld [smem:[%s62]]
  %s64 = scalar_lea.smem %s0, 32
  %s65 = sld [smem:[%s64]]
  %s66 = scalar_lea.smem %s0, 33
  %s67 = sld [smem:[%s66]]
  %s68 = scalar_lea.smem %s0, 34
  %s69 = sld [smem:[%s68]]
  %s70 = scalar_lea.smem %s0, 35
  %s71 = sld [smem:[%s70]]
  %s72 = scalar_lea.smem %s0, 36
  %s73 = sld [smem:[%s72]]
  %s74 = sld [smem:[#allocation0]]
  $region250: #{informer_forward.1} parent=0
    _
  %s76 = ssub.s32 1, %s74
  %s77 = scalar_select 0, %s76, %s74
  $region1: #{informer_forward.1} parent=0
    #allocation3 [shape = 'u8[196608]{0}', space=vmem, size = 0x30000, scoped, tag = 'input window, operand 4, single buffered']
    #allocation4 [shape = 's32[1]{0}', space=sflag, size = 0x4, scoped, tag = 'scoped memory for informer_forward.1']
    #allocation5 [shape = 'u8[512]{0}', space=vmem, size = 0x400, scoped, tag = 'input window, operand 8, single buffered']
    #allocation6 [shape = 's32[1]{0}', space=sflag, size = 0x4, scoped, tag = 'scoped memory for informer_forward.1']
    #allocation7 [shape = 'u8[512]{0}', space=vmem, size = 0x400, scoped, tag = 'input window, operand 9, single buffered']
    #allocation8 [shape = 'u8[131072]{0}', space=vmem, size = 0x20000, scoped, tag = 'input window, operand 10, single buffered']
    #allocation9 [shape = 's32[1]{0}', space=sflag, size = 0x4, scoped, tag = 'scoped memory for informer_forward.1']
    #allocation10 [shape = 'u8[131072]{0}', space=vmem, size = 0x20000, scoped, tag = 'input window, operand 12, single buffered']
    #allocation11 [shape = 'u8[512]{0}', space=vmem, size = 0x400, scoped, tag = 'input window, operand 14, single buffered']
    #allocation12 [shape = 's32[1]{0}', space=sflag, size = 0x4, scoped, tag = 'scoped memory for informer_forward.1']
    #allocation13 [shape = 'u8[512]{0}', space=vmem, size = 0x400, scoped, tag = 'input window, operand 15, single buffered']
    #allocation14 [shape = 'u8[196608]{0}', space=vmem, size = 0x30000, scoped, tag = 'input window, operand 16, single buffered']
    #allocation15 [shape = 's32[1]{0}', space=sflag, size = 0x4, scoped, tag = 'scoped memory for informer_forward.1']
    #allocation16 [shape = 'u8[196608]{0}', space=vmem, size = 0x30000, scoped, tag = 'input window, operand 20, single buffered']
    #allocation17 [shape = 'u8[1536]{0}', space=vmem, size = 0x800, scoped, tag = 'input window, operand 21, single buffered']
    #allocation18 [shape = 's32[1]{0}', space=sflag, size = 0x4, scoped, tag = 'scoped memory for informer_forward.1']
    #allocation19 [shape = 'u8[65536]{0}', space=vmem, size = 0x10000, scoped, tag = 'input window, operand 22, single buffered']
    #allocation20 [shape = 'u8[512]{0}', space=vmem, size = 0x400, scoped, tag = 'input window, operand 23, single buffered']
    #allocation21 [shape = 's32[1]{0}', space=sflag, size = 0x4, scoped, tag = 'scoped memory for informer_forward.1']
    #allocation22 [shape = 'u8[512]{0}', space=vmem, size = 0x400, scoped, tag = 'input window, operand 24, single buffered']
    #allocation23 [shape = 'u8[512]{0}', space=vmem, size = 0x400, scoped, tag = 'input window, operand 25, single buffered']
    #allocation24 [shape = 's32[1]{0}', space=sflag, size = 0x4, scoped, tag = 'scoped memory for informer_forward.1']
    #allocation25 [shape = 'u8[131072]{0}', space=vmem, size = 0x20000, scoped, tag = 'input window, operand 26, single buffered']
    #allocation26 [shape = 'u8[1024]{0}', space=vmem, size = 0x400, scoped, tag = 'input window, operand 27, single buffered']
    #allocation27 [shape = 's32[1]{0}', space=sflag, size = 0x4, scoped, tag = 'scoped memory for informer_forward.1']
    #allocation28 [shape = 'u8[131072]{0}', space=vmem, size = 0x20000, scoped, tag = 'input window, operand 28, single buffered']
    #allocation29 [shape = 'u8[512]{0}', space=vmem, size = 0x400, scoped, tag = 'input window, operand 29, single buffered']
    #allocation30 [shape = 's32[1]{0}', space=sflag, size = 0x4, scoped, tag = 'scoped memory for informer_forward.1']
    #allocation31 [shape = 'u8[512]{0}', space=vmem, size = 0x400, scoped, tag = 'input window, operand 30, single buffered']
    #allocation32 [shape = 'u8[512]{0}', space=vmem, size = 0x400, scoped, tag = 'input window, operand 31, single buffered']
    #allocation33 [shape = 's32[1]{0}', space=sflag, size = 0x4, scoped, tag = 'scoped memory for informer_forward.1']
    #allocation34 [shape = 'u8[196608]{0}', space=vmem, size = 0x30000, scoped, tag = 'input window, operand 32, single buffered']
    #allocation35 [shape = 'u8[512]{0}', space=vmem, size = 0x400, scoped, tag = 'input window, operand 33, single buffered']
    #allocation36 [shape = 's32[1]{0}', space=sflag, size = 0x4, scoped, tag = 'scoped memory for informer_forward.1']
    #allocation37 [shape = 'u8[512]{0}', space=vmem, size = 0x400, scoped, tag = 'input window, operand 34, single buffered']
    #allocation38 [shape = 'u8[512]{0}', space=vmem, size = 0x400, scoped, tag = 'input window, operand 35, single buffered']
    #allocation39 [shape = 's32[1]{0}', space=sflag, size = 0x4, scoped, tag = 'scoped memory for informer_forward.1']
    %78 = vsyncpa [#allocation4], 0
    %79 = vsyncpa [#allocation6], 0
    %80 = vsyncpa [#allocation9], 0
    %81 = vsyncpa [#allocation12], 0
    %82 = vsyncpa [#allocation15], 0
    %83 = vsyncpa [#allocation18], 0
    %84 = vsyncpa [#allocation21], 0
    %85 = vsyncpa [#allocation24], 0
    %86 = vsyncpa [#allocation27], 0
    %87 = vsyncpa [#allocation30], 0
    %88 = vsyncpa [#allocation33], 0
    %89 = vsyncpa [#allocation36], 0
    %90 = vsyncpa [#allocation39], 0
    // Predicated region
    $region2: #{informer_forward.1} parent=1 // pred_check
      _
    $region3: #{informer_forward.1} parent=1 // pred_check_branch
      %92 = sbr.rel (0) target = $region5
    $region4: #{informer_forward.1} parent=1 // pred_region
      _
    $region5: #{informer_forward.1} parent=1 // pred_fallthru
      _
    // Predicated region
    $region6: #{informer_forward.1} parent=1 // pred_check
      _
    $region7: #{informer_forward.1} parent=1 // pred_check_branch
      %94 = sbr.rel (0) target = $region9
    $region8: #{informer_forward.1} parent=1 // pred_region
      _
    $region9: #{informer_forward.1} parent=1 // pred_fallthru
      _
    // Predicated region
    $region10: #{informer_forward.1} parent=1 // pred_check
      _
    $region11: #{informer_forward.1} parent=1 // pred_check_branch
      %96 = sbr.rel (0) target = $region13
    $region12: #{informer_forward.1} parent=1 // pred_region
      _
    $region13: #{informer_forward.1} parent=1 // pred_fallthru
      _
    // Predicated region
    $region14: #{informer_forward.1} parent=1 // pred_check
      _
    $region15: #{informer_forward.1} parent=1 // pred_check_branch
      %98 = sbr.rel (0) target = $region17
    $region16: #{informer_forward.1} parent=1 // pred_region
      _
    $region17: #{informer_forward.1} parent=1 // pred_fallthru
      _
    // Predicated region
    $region18: #{informer_forward.1} parent=1 // pred_check
      _
    $region19: #{informer_forward.1} parent=1 // pred_check_branch
      %100 = sbr.rel (0) target = $region21
    $region20: #{informer_forward.1} parent=1 // pred_region
      %s102 = ssub.s32 6144, 6144
      %103 = vsyncadd [#allocation4], %s102
      %s104 = sshll.u32 [#allocation3], 4
      %s105 = int_to_ptr.vmem [resolvable:$true] %s104
      %110 = dma.hbm_to_vmem [thread:$0]  %s9, 6144, %s105, [#allocation4], 384, 384, 24
    $region21: #{informer_forward.1} parent=1 // pred_fallthru
      _
    // Predicated region
    $region22: #{informer_forward.1} parent=1 // pred_check
      _
    $region23: #{informer_forward.1} parent=1 // pred_check_branch
      %112 = sbr.rel (0) target = $region25
    $region24: #{informer_forward.1} parent=1 // pred_region
      _
    $region25: #{informer_forward.1} parent=1 // pred_fallthru
      _
    // Predicated region
    $region26: #{informer_forward.1} parent=1 // pred_check
      _
    $region27: #{informer_forward.1} parent=1 // pred_check_branch
      %114 = sbr.rel (0) target = $region29
    $region28: #{informer_forward.1} parent=1 // pred_region
      _
    $region29: #{informer_forward.1} parent=1 // pred_fallthru
      _
    // Predicated region
    $region30: #{informer_forward.1} parent=1 // pred_check
      _
    $region31: #{informer_forward.1} parent=1 // pred_check_branch
      %116 = sbr.rel (0) target = $region33
    $region32: #{informer_forward.1} parent=1 // pred_region
      _
    $region33: #{informer_forward.1} parent=1 // pred_fallthru
      _
    // Predicated region
    $region34: #{informer_forward.1} parent=1 // pred_check
      _
    $region35: #{informer_forward.1} parent=1 // pred_check_branch
      %118 = sbr.rel (0) target = $region37
    $region36: #{informer_forward.1} parent=1 // pred_region
      %s120 = ssub.s32 16, 16
      %121 = vsyncadd [#allocation6], %s120
      %s123 = sshll.u32 [#allocation5], 4
      %s124 = int_to_ptr.vmem [resolvable:$true] %s123
      %126 = dma.hbm_to_vmem [thread:$0]  %s17, 16, %s124, [#allocation6]
    $region37: #{informer_forward.1} parent=1 // pred_fallthru
      _
    // Predicated region
    $region38: #{informer_forward.1} parent=1 // pred_check
      _
    $region39: #{informer_forward.1} parent=1 // pred_check_branch
      %128 = sbr.rel (0) target = $region41
    $region40: #{informer_forward.1} parent=1 // pred_region
      %s130 = ssub.s32 16, 16
      %131 = vsyncadd [#allocation6], %s130
      %s133 = sshll.u32 [#allocation7], 4
      %s134 = int_to_ptr.vmem [resolvable:$true] %s133
      %136 = dma.hbm_to_vmem [thread:$0]  %s19, 16, %s134, [#allocation6]
    $region41: #{informer_forward.1} parent=1 // pred_fallthru
      _
    // Predicated region
    $region42: #{informer_forward.1} parent=1 // pred_check
      _
    $region43: #{informer_forward.1} parent=1 // pred_check_branch
      %138 = sbr.rel (0) target = $region45
    $region44: #{informer_forward.1} parent=1 // pred_region
      %s140 = ssub.s32 4096, 4096
      %141 = vsyncadd [#allocation9], %s140
      %s142 = sshll.u32 [#allocation8], 4
      %s143 = int_to_ptr.vmem [resolvable:$true] %s142
      %148 = dma.hbm_to_vmem [thread:$0]  %s21, 4096, %s143, [#allocation9], 256, 256, 16
    $region45: #{informer_forward.1} parent=1 // pred_fallthru
      _
    // Predicated region
    $region46: #{informer_forward.1} parent=1 // pred_check
      _
    $region47: #{informer_forward.1} parent=1 // pred_check_branch
      %150 = sbr.rel (0) target = $region49
    $region48: #{informer_forward.1} parent=1 // pred_region
      _
    $region49: #{informer_forward.1} parent=1 // pred_fallthru
      _
    // Predicated region
    $region50: #{informer_forward.1} parent=1 // pred_check
      _
    $region51: #{informer_forward.1} parent=1 // pred_check_branch
      %152 = sbr.rel (0) target = $region53
    $region52: #{informer_forward.1} parent=1 // pred_region
      %s154 = ssub.s32 4096, 4096
      %155 = vsyncadd [#allocation9], %s154
      %s156 = sshll.u32 [#allocation10], 4
      %s157 = int_to_ptr.vmem [resolvable:$true] %s156
      %162 = dma.hbm_to_vmem [thread:$0]  %s25, 4096, %s157, [#allocation9], 128, 128, 8
    $region53: #{informer_forward.1} parent=1 // pred_fallthru
      _
    // Predicated region
    $region54: #{informer_forward.1} parent=1 // pred_check
      _
    $region55: #{informer_forward.1} parent=1 // pred_check_branch
      %164 = sbr.rel (0) target = $region57
    $region56: #{informer_forward.1} parent=1 // pred_region
      _
    $region57: #{informer_forward.1} parent=1 // pred_fallthru
      _
    // Predicated region
    $region58: #{informer_forward.1} parent=1 // pred_check
      _
    $region59: #{informer_forward.1} parent=1 // pred_check_branch
      %166 = sbr.rel (0) target = $region61
    $region60: #{informer_forward.1} parent=1 // pred_region
      %s168 = ssub.s32 16, 16
      %169 = vsyncadd [#allocation12], %s168
      %s171 = sshll.u32 [#allocation11], 4
      %s172 = int_to_ptr.vmem [resolvable:$true] %s171
      %174 = dma.hbm_to_vmem [thread:$0]  %s29, 16, %s172, [#allocation12]
    $region61: #{informer_forward.1} parent=1 // pred_fallthru
      _
    // Predicated region
    $region62: #{informer_forward.1} parent=1 // pred_check
      _
    $region63: #{informer_forward.1} parent=1 // pred_check_branch
      %176 = sbr.rel (0) target = $region65
    $region64: #{informer_forward.1} parent=1 // pred_region
      %s178 = ssub.s32 16, 16
      %179 = vsyncadd [#allocation12], %s178
      %s181 = sshll.u32 [#allocation13], 4
      %s182 = int_to_ptr.vmem [resolvable:$true] %s181
      %184 = dma.hbm_to_vmem [thread:$0]  %s31, 16, %s182, [#allocation12]
    $region65: #{informer_forward.1} parent=1 // pred_fallthru
      _
    // Predicated region
    $region66: #{informer_forward.1} parent=1 // pred_check
      _
    $region67: #{informer_forward.1} parent=1 // pred_check_branch
      %186 = sbr.rel (0) target = $region69
    $region68: #{informer_forward.1} parent=1 // pred_region
      %s188 = ssub.s32 6144, 6144
      %189 = vsyncadd [#allocation15], %s188
      %s190 = sshll.u32 [#allocation14], 4
      %s191 = int_to_ptr.vmem [resolvable:$true] %s190
      %196 = dma.hbm_to_vmem [thread:$0]  %s33, 6144, %s191, [#allocation15], 128, 128, 8
    $region69: #{informer_forward.1} parent=1 // pred_fallthru
      _
    // Predicated region
    $region70: #{informer_forward.1} parent=1 // pred_check
      _
    $region71: #{informer_forward.1} parent=1 // pred_check_branch
      %198 = sbr.rel (0) target = $region73
    $region72: #{informer_forward.1} parent=1 // pred_region
      _
    $region73: #{informer_forward.1} parent=1 // pred_fallthru
      _
    // Predicated region
    $region74: #{informer_forward.1} parent=1 // pred_check
      _
    $region75: #{informer_forward.1} parent=1 // pred_check_branch
      %200 = sbr.rel (0) target = $region77
    $region76: #{informer_forward.1} parent=1 // pred_region
      _
    $region77: #{informer_forward.1} parent=1 // pred_fallthru
      _
    // Predicated region
    $region78: #{informer_forward.1} parent=1 // pred_check
      _
    $region79: #{informer_forward.1} parent=1 // pred_check_branch
      %202 = sbr.rel (0) target = $region81
    $region80: #{informer_forward.1} parent=1 // pred_region
      _
    $region81: #{informer_forward.1} parent=1 // pred_fallthru
      _
    // Predicated region
    $region82: #{informer_forward.1} parent=1 // pred_check
      _
    $region83: #{informer_forward.1} parent=1 // pred_check_branch
      %204 = sbr.rel (0) target = $region85
    $region84: #{informer_forward.1} parent=1 // pred_region
      %s206 = ssub.s32 6144, 6144
      %207 = vsyncadd [#allocation15], %s206
      %s208 = sshll.u32 [#allocation16], 4
      %s209 = int_to_ptr.vmem [resolvable:$true] %s208
      %214 = dma.hbm_to_vmem [thread:$0]  %s41, 6144, %s209, [#allocation15], 384, 384, 24
    $region85: #{informer_forward.1} parent=1 // pred_fallthru
      _
    // Predicated region
    $region86: #{informer_forward.1} parent=1 // pred_check
      _
    $region87: #{informer_forward.1} parent=1 // pred_check_branch
      %216 = sbr.rel (0) target = $region89
    $region88: #{informer_forward.1} parent=1 // pred_region
      %s218 = ssub.s32 48, 48
      %219 = vsyncadd [#allocation18], %s218
      %s221 = sshll.u32 [#allocation17], 4
      %s222 = int_to_ptr.vmem [resolvable:$true] %s221
      %224 = dma.hbm_to_vmem [thread:$0]  %s43, 48, %s222, [#allocation18]
    $region89: #{informer_forward.1} parent=1 // pred_fallthru
      _
    // Predicated region
    $region90: #{informer_forward.1} parent=1 // pred_check
      _
    $region91: #{informer_forward.1} parent=1 // pred_check_branch
      %226 = sbr.rel (0) target = $region93
    $region92: #{informer_forward.1} parent=1 // pred_region
      %s228 = ssub.s32 2048, 2048
      %229 = vsyncadd [#allocation18], %s228
      %s230 = sshll.u32 [#allocation19], 4
      %s231 = int_to_ptr.vmem [resolvable:$true] %s230
      %236 = dma.hbm_to_vmem [thread:$0]  %s45, 2048, %s231, [#allocation18], 128, 128, 8
    $region93: #{informer_forward.1} parent=1 // pred_fallthru
      _
    // Predicated region
    $region94: #{informer_forward.1} parent=1 // pred_check
      _
    $region95: #{informer_forward.1} parent=1 // pred_check_branch
      %238 = sbr.rel (0) target = $region97
    $region96: #{informer_forward.1} parent=1 // pred_region
      %s240 = ssub.s32 16, 16
      %241 = vsyncadd [#allocation21], %s240
      %s243 = sshll.u32 [#allocation20], 4
      %s244 = int_to_ptr.vmem [resolvable:$true] %s243
      %246 = dma.hbm_to_vmem [thread:$0]  %s47, 16, %s244, [#allocation21]
    $region97: #{informer_forward.1} parent=1 // pred_fallthru
      _
    // Predicated region
    $region98: #{informer_forward.1} parent=1 // pred_check
      _
    $region99: #{informer_forward.1} parent=1 // pred_check_branch
      %248 = sbr.rel (0) target = $region101
    $region100: #{informer_forward.1} parent=1 // pred_region
      %s250 = ssub.s32 16, 16
      %251 = vsyncadd [#allocation21], %s250
      %s253 = sshll.u32 [#allocation22], 4
      %s254 = int_to_ptr.vmem [resolvable:$true] %s253
      %256 = dma.hbm_to_vmem [thread:$0]  %s49, 16, %s254, [#allocation21]
    $region101: #{informer_forward.1} parent=1 // pred_fallthru
      _
    // Predicated region
    $region102: #{informer_forward.1} parent=1 // pred_check
      _
    $region103: #{informer_forward.1} parent=1 // pred_check_branch
      %258 = sbr.rel (0) target = $region105
    $region104: #{informer_forward.1} parent=1 // pred_region
      %s260 = ssub.s32 16, 16
      %261 = vsyncadd [#allocation24], %s260
      %s263 = sshll.u32 [#allocation23], 4
      %s264 = int_to_ptr.vmem [resolvable:$true] %s263
      %266 = dma.hbm_to_vmem [thread:$0]  %s51, 16, %s264, [#allocation24]
    $region105: #{informer_forward.1} parent=1 // pred_fallthru
      _
    // Predicated region
    $region106: #{informer_forward.1} parent=1 // pred_check
      _
    $region107: #{informer_forward.1} parent=1 // pred_check_branch
      %268 = sbr.rel (0) target = $region109
    $region108: #{informer_forward.1} parent=1 // pred_region
      %s270 = ssub.s32 4096, 4096
      %271 = vsyncadd [#allocation24], %s270
      %s272 = sshll.u32 [#allocation25], 4
      %s273 = int_to_ptr.vmem [resolvable:$true] %s272
      %278 = dma.hbm_to_vmem [thread:$0]  %s53, 4096, %s273, [#allocation24], 256, 256, 16
    $region109: #{informer_forward.1} parent=1 // pred_fallthru
      _
    // Predicated region
    $region110: #{informer_forward.1} parent=1 // pred_check
      _
    $region111: #{informer_forward.1} parent=1 // pred_check_branch
      %280 = sbr.rel (0) target = $region113
    $region112: #{informer_forward.1} parent=1 // pred_region
      %s282 = ssub.s32 32, 32
      %283 = vsyncadd [#allocation27], %s282
      %s285 = sshll.u32 [#allocation26], 4
      %s286 = int_to_ptr.vmem [resolvable:$true] %s285
      %288 = dma.hbm_to_vmem [thread:$0]  %s55, 32, %s286, [#allocation27]
    $region113: #{informer_forward.1} parent=1 // pred_fallthru
      _
    // Predicated region
    $region114: #{informer_forward.1} parent=1 // pred_check
      _
    $region115: #{informer_forward.1} parent=1 // pred_check_branch
      %290 = sbr.rel (0) target = $region117
    $region116: #{informer_forward.1} parent=1 // pred_region
      %s292 = ssub.s32 4096, 4096
      %293 = vsyncadd [#allocation27], %s292
      %s294 = sshll.u32 [#allocation28], 4
      %s295 = int_to_ptr.vmem [resolvable:$true] %s294
      %300 = dma.hbm_to_vmem [thread:$0]  %s57, 4096, %s295, [#allocation27], 128, 128, 8
    $region117: #{informer_forward.1} parent=1 // pred_fallthru
      _
    // Predicated region
    $region118: #{informer_forward.1} parent=1 // pred_check
      _
    $region119: #{informer_forward.1} parent=1 // pred_check_branch
      %302 = sbr.rel (0) target = $region121
    $region120: #{informer_forward.1} parent=1 // pred_region
      %s304 = ssub.s32 16, 16
      %305 = vsyncadd [#allocation30], %s304
      %s307 = sshll.u32 [#allocation29], 4
      %s308 = int_to_ptr.vmem [resolvable:$true] %s307
      %310 = dma.hbm_to_vmem [thread:$0]  %s59, 16, %s308, [#allocation30]
    $region121: #{informer_forward.1} parent=1 // pred_fallthru
      _
    // Predicated region
    $region122: #{informer_forward.1} parent=1 // pred_check
      _
    $region123: #{informer_forward.1} parent=1 // pred_check_branch
      %312 = sbr.rel (0) target = $region125
    $region124: #{informer_forward.1} parent=1 // pred_region
      %s314 = ssub.s32 16, 16
      %315 = vsyncadd [#allocation30], %s314
      %s317 = sshll.u32 [#allocation31], 4
      %s318 = int_to_ptr.vmem [resolvable:$true] %s317
      %320 = dma.hbm_to_vmem [thread:$0]  %s61, 16, %s318, [#allocation30]
    $region125: #{informer_forward.1} parent=1 // pred_fallthru
      _
    // Predicated region
    $region126: #{informer_forward.1} parent=1 // pred_check
      _
    $region127: #{informer_forward.1} parent=1 // pred_check_branch
      %322 = sbr.rel (0) target = $region129
    $region128: #{informer_forward.1} parent=1 // pred_region
      %s324 = ssub.s32 16, 16
      %325 = vsyncadd [#allocation33], %s324
      %s327 = sshll.u32 [#allocation32], 4
      %s328 = int_to_ptr.vmem [resolvable:$true] %s327
      %330 = dma.hbm_to_vmem [thread:$0]  %s63, 16, %s328, [#allocation33]
    $region129: #{informer_forward.1} parent=1 // pred_fallthru
      _
    // Predicated region
    $region130: #{informer_forward.1} parent=1 // pred_check
      _
    $region131: #{informer_forward.1} parent=1 // pred_check_branch
      %332 = sbr.rel (0) target = $region133
    $region132: #{informer_forward.1} parent=1 // pred_region
      %s334 = ssub.s32 6144, 6144
      %335 = vsyncadd [#allocation33], %s334
      %s336 = sshll.u32 [#allocation34], 4
      %s337 = int_to_ptr.vmem [resolvable:$true] %s336
      %342 = dma.hbm_to_vmem [thread:$0]  %s65, 6144, %s337, [#allocation33], 128, 128, 8
    $region133: #{informer_forward.1} parent=1 // pred_fallthru
      _
    // Predicated region
    $region134: #{informer_forward.1} parent=1 // pred_check
      _
    $region135: #{informer_forward.1} parent=1 // pred_check_branch
      %344 = sbr.rel (0) target = $region137
    $region136: #{informer_forward.1} parent=1 // pred_region
      %s346 = ssub.s32 16, 16
      %347 = vsyncadd [#allocation36], %s346
      %s349 = sshll.u32 [#allocation35], 4
      %s350 = int_to_ptr.vmem [resolvable:$true] %s349
      %352 = dma.hbm_to_vmem [thread:$0]  %s67, 16, %s350, [#allocation36]
    $region137: #{informer_forward.1} parent=1 // pred_fallthru
      _
    // Predicated region
    $region138: #{informer_forward.1} parent=1 // pred_check
      _
    $region139: #{informer_forward.1} parent=1 // pred_check_branch
      %354 = sbr.rel (0) target = $region141
    $region140: #{informer_forward.1} parent=1 // pred_region
      %s356 = ssub.s32 16, 16
      %357 = vsyncadd [#allocation36], %s356
      %s359 = sshll.u32 [#allocation37], 4
      %s360 = int_to_ptr.vmem [resolvable:$true] %s359
      %362 = dma.hbm_to_vmem [thread:$0]  %s69, 16, %s360, [#allocation36]
    $region141: #{informer_forward.1} parent=1 // pred_fallthru
      _
    // Predicated region
    $region142: #{informer_forward.1} parent=1 // pred_check
      _
    $region143: #{informer_forward.1} parent=1 // pred_check_branch
      %364 = sbr.rel (0) target = $region145
    $region144: #{informer_forward.1} parent=1 // pred_region
      %s366 = ssub.s32 16, 16
      %367 = vsyncadd [#allocation39], %s366
      %s369 = sshll.u32 [#allocation38], 4
      %s370 = int_to_ptr.vmem [resolvable:$true] %s369
      %372 = dma.hbm_to_vmem [thread:$0]  %s71, 16, %s370, [#allocation39]
    $region145: #{informer_forward.1} parent=1 // pred_fallthru
      _
    // Predicated region
    $region146: #{informer_forward.1} parent=1 // pred_check
      _
    $region147: #{informer_forward.1} parent=1 // pred_check_branch
      %374 = sbr.rel (0) target = $region149
    $region148: #{informer_forward.1} parent=1 // pred_region
      %375 = dma.done [#allocation4], 6144
    $region149: #{informer_forward.1} parent=1 // pred_fallthru
      _
    // Predicated region
    $region150: #{informer_forward.1} parent=1 // pred_check
      _
    $region151: #{informer_forward.1} parent=1 // pred_check_branch
      %377 = sbr.rel (0) target = $region153
    $region152: #{informer_forward.1} parent=1 // pred_region
      %378 = dma.done [#allocation6], 16
    $region153: #{informer_forward.1} parent=1 // pred_fallthru
      _
    // Predicated region
    $region154: #{informer_forward.1} parent=1 // pred_check
      _
    $region155: #{informer_forward.1} parent=1 // pred_check_branch
      %380 = sbr.rel (0) target = $region157
    $region156: #{informer_forward.1} parent=1 // pred_region
      %381 = dma.done [#allocation6], 16
    $region157: #{informer_forward.1} parent=1 // pred_fallthru
      _
    // Predicated region
    $region158: #{informer_forward.1} parent=1 // pred_check
      _
    $region159: #{informer_forward.1} parent=1 // pred_check_branch
      %383 = sbr.rel (0) target = $region161
    $region160: #{informer_forward.1} parent=1 // pred_region
      %384 = dma.done [#allocation9], 4096
    $region161: #{informer_forward.1} parent=1 // pred_fallthru
      _
    // Predicated region
    $region162: #{informer_forward.1} parent=1 // pred_check
      _
    $region163: #{informer_forward.1} parent=1 // pred_check_branch
      %386 = sbr.rel (0) target = $region165
    $region164: #{informer_forward.1} parent=1 // pred_region
      %387 = dma.done [#allocation9], 4096
    $region165: #{informer_forward.1} parent=1 // pred_fallthru
      _
    // Predicated region
    $region166: #{informer_forward.1} parent=1 // pred_check
      _
    $region167: #{informer_forward.1} parent=1 // pred_check_branch
      %389 = sbr.rel (0) target = $region169
    $region168: #{informer_forward.1} parent=1 // pred_region
      %390 = dma.done [#allocation12], 16
    $region169: #{informer_forward.1} parent=1 // pred_fallthru
      _
    // Predicated region
    $region170: #{informer_forward.1} parent=1 // pred_check
      _
    $region171: #{informer_forward.1} parent=1 // pred_check_branch
      %392 = sbr.rel (0) target = $region173
    $region172: #{informer_forward.1} parent=1 // pred_region
      %393 = dma.done [#allocation12], 16
    $region173: #{informer_forward.1} parent=1 // pred_fallthru
      _
    // Predicated region
    $region174: #{informer_forward.1} parent=1 // pred_check
      _
    $region175: #{informer_forward.1} parent=1 // pred_check_branch
      %395 = sbr.rel (0) target = $region177
    $region176: #{informer_forward.1} parent=1 // pred_region
      %396 = dma.done [#allocation15], 6144
    $region177: #{informer_forward.1} parent=1 // pred_fallthru
      _
    // Predicated region
    $region178: #{informer_forward.1} parent=1 // pred_check
      _
    $region179: #{informer_forward.1} parent=1 // pred_check_branch
      %398 = sbr.rel (0) target = $region181
    $region180: #{informer_forward.1} parent=1 // pred_region
      %399 = dma.done [#allocation15], 6144
    $region181: #{informer_forward.1} parent=1 // pred_fallthru
      _
    // Predicated region
    $region182: #{informer_forward.1} parent=1 // pred_check
      _
    $region183: #{informer_forward.1} parent=1 // pred_check_branch
      %401 = sbr.rel (0) target = $region185
    $region184: #{informer_forward.1} parent=1 // pred_region
      %402 = dma.done [#allocation18], 48
    $region185: #{informer_forward.1} parent=1 // pred_fallthru
      _
    // Predicated region
    $region186: #{informer_forward.1} parent=1 // pred_check
      _
    $region187: #{informer_forward.1} parent=1 // pred_check_branch
      %404 = sbr.rel (0) target = $region189
    $region188: #{informer_forward.1} parent=1 // pred_region
      %405 = dma.done [#allocation18], 2048
    $region189: #{informer_forward.1} parent=1 // pred_fallthru
      _
    // Predicated region
    $region190: #{informer_forward.1} parent=1 // pred_check
      _
    $region191: #{informer_forward.1} parent=1 // pred_check_branch
      %407 = sbr.rel (0) target = $region193
    $region192: #{informer_forward.1} parent=1 // pred_region
      %408 = dma.done [#allocation21], 16
    $region193: #{informer_forward.1} parent=1 // pred_fallthru
      _
    // Predicated region
    $region194: #{informer_forward.1} parent=1 // pred_check
      _
    $region195: #{informer_forward.1} parent=1 // pred_check_branch
      %410 = sbr.rel (0) target = $region197
    $region196: #{informer_forward.1} parent=1 // pred_region
      %411 = dma.done [#allocation21], 16
    $region197: #{informer_forward.1} parent=1 // pred_fallthru
      _
    // Predicated region
    $region198: #{informer_forward.1} parent=1 // pred_check
      _
    $region199: #{informer_forward.1} parent=1 // pred_check_branch
      %413 = sbr.rel (0) target = $region201
    $region200: #{informer_forward.1} parent=1 // pred_region
      %414 = dma.done [#allocation24], 16
    $region201: #{informer_forward.1} parent=1 // pred_fallthru
      _
    // Predicated region
    $region202: #{informer_forward.1} parent=1 // pred_check
      _
    $region203: #{informer_forward.1} parent=1 // pred_check_branch
      %416 = sbr.rel (0) target = $region205
    $region204: #{informer_forward.1} parent=1 // pred_region
      %417 = dma.done [#allocation24], 4096
    $region205: #{informer_forward.1} parent=1 // pred_fallthru
      _
    // Predicated region
    $region206: #{informer_forward.1} parent=1 // pred_check
      _
    $region207: #{informer_forward.1} parent=1 // pred_check_branch
      %419 = sbr.rel (0) target = $region209
    $region208: #{informer_forward.1} parent=1 // pred_region
      %420 = dma.done [#allocation27], 32
    $region209: #{informer_forward.1} parent=1 // pred_fallthru
      _
    // Predicated region
    $region210: #{informer_forward.1} parent=1 // pred_check
      _
    $region211: #{informer_forward.1} parent=1 // pred_check_branch
      %422 = sbr.rel (0) target = $region213
    $region212: #{informer_forward.1} parent=1 // pred_region
      %423 = dma.done [#allocation27], 4096
    $region213: #{informer_forward.1} parent=1 // pred_fallthru
      _
    // Predicated region
    $region214: #{informer_forward.1} parent=1 // pred_check
      _
    $region215: #{informer_forward.1} parent=1 // pred_check_branch
      %425 = sbr.rel (0) target = $region217
    $region216: #{informer_forward.1} parent=1 // pred_region
      %426 = dma.done [#allocation30], 16
    $region217: #{informer_forward.1} parent=1 // pred_fallthru
      _
    // Predicated region
    $region218: #{informer_forward.1} parent=1 // pred_check
      _
    $region219: #{informer_forward.1} parent=1 // pred_check_branch
      %428 = sbr.rel (0) target = $region221
    $region220: #{informer_forward.1} parent=1 // pred_region
      %429 = dma.done [#allocation30], 16
    $region221: #{informer_forward.1} parent=1 // pred_fallthru
      _
    // Predicated region
    $region222: #{informer_forward.1} parent=1 // pred_check
      _
    $region223: #{informer_forward.1} parent=1 // pred_check_branch
      %431 = sbr.rel (0) target = $region225
    $region224: #{informer_forward.1} parent=1 // pred_region
      %432 = dma.done [#allocation33], 16
    $region225: #{informer_forward.1} parent=1 // pred_fallthru
      _
    // Predicated region
    $region226: #{informer_forward.1} parent=1 // pred_check
      _
    $region227: #{informer_forward.1} parent=1 // pred_check_branch
      %434 = sbr.rel (0) target = $region229
    $region228: #{informer_forward.1} parent=1 // pred_region
      %435 = dma.done [#allocation33], 6144
    $region229: #{informer_forward.1} parent=1 // pred_fallthru
      _
    // Predicated region
    $region230: #{informer_forward.1} parent=1 // pred_check
      _
    $region231: #{informer_forward.1} parent=1 // pred_check_branch
      %437 = sbr.rel (0) target = $region233
    $region232: #{informer_forward.1} parent=1 // pred_region
      %438 = dma.done [#allocation36], 16
    $region233: #{informer_forward.1} parent=1 // pred_fallthru
      _
    // Predicated region
    $region234: #{informer_forward.1} parent=1 // pred_check
      _
    $region235: #{informer_forward.1} parent=1 // pred_check_branch
      %440 = sbr.rel (0) target = $region237
    $region236: #{informer_forward.1} parent=1 // pred_region
      %441 = dma.done [#allocation36], 16
    $region237: #{informer_forward.1} parent=1 // pred_fallthru
      _
    // Predicated region
    $region238: #{informer_forward.1} parent=1 // pred_check
      _
    $region239: #{informer_forward.1} parent=1 // pred_check_branch
      %443 = sbr.rel (0) target = $region241
    $region240: #{informer_forward.1} parent=1 // pred_region
      %444 = dma.done [#allocation39], 16
    $region241: #{informer_forward.1} parent=1 // pred_fallthru
      _
    %v445 = vld [vmem:[%s1] sm:$0xff]
    %v446 = vld [vmem:[%s1 + $0x8] sm:$0xff]
    %s447 = scalar_lea.vmem %s1, 16
    %v448 = vld [vmem:[%s447] sm:$0xff]
    %v449 = vld [vmem:[%s447 + $0x8] sm:$0xff]
    %v450 = vld [vmem:[%s7] sm:$0xff]
    %v451 = vld [vmem:[%s7 + $0x8] sm:$0xff]
    %v452 = vld [vmem:[%s3] sm:$0xf]
    %v453 = vld [vmem:[%s5] sm:$0x1]
    %v455 = vlaneseq
    %v456 = vshrl.u32 %v455, 7
    %v457 = vsub.s32 0, %v456
    %v458 = vrot.slane %v453, %v457
    %vm460 = vcmask 31744
    %v462 = vsel %vm460, %v445, 0
    %v465 = vsel %vm460, %v446, 0
    %v468 = vsel %vm460, %v448, 0
    %v471 = vsel %vm460, %v449, 0
    %vm473 = vcmask 1043456
    %v475 = vsel %vm473, %v452, 0
    %477 = vmatprep.subr.mxu0 0.0
    %478 = vmatpush1.msra.mxu0 %v475
    %479 = vmatprep.subr.mxu0 0.0
    %480 = vmatpush1.msra.mxu0 0.0
    %481 = vmatprep.subr.mxu0 0.0
    %482 = vmatpush1.msra.mxu0 0.0
    %483 = vmatprep.subr.mxu0 0.0
    %484 = vmatpush1.msra.mxu0 0.0
    %485 = vmatprep.subr.mxu0 0.0
    %486 = vmatpush1.msra.mxu0 0.0
    %487 = vmatprep.subr.mxu0 0.0
    %488 = vmatpush1.msra.mxu0 0.0
    %489 = vmatprep.subr.mxu0 0.0
    %490 = vmatpush1.msra.mxu0 0.0
    %491 = vmatprep.subr.mxu0 0.0
    %492 = vmatpush1.msra.mxu0 0.0
    %493 = vmatprep.subr.mxu0 0.0
    %494 = vmatpush1.msra.mxu0 0.0
    %495 = vmatprep.subr.mxu0 0.0
    %496 = vmatpush1.msra.mxu0 0.0
    %497 = vmatprep.subr.mxu0 0.0
    %498 = vmatpush1.msra.mxu0 0.0
    %499 = vmatprep.subr.mxu0 0.0
    %500 = vmatpush1.msra.mxu0 0.0
    %501 = vmatprep.subr.mxu0 0.0
    %502 = vmatpush1.msra.mxu0 0.0
    %503 = vmatprep.subr.mxu0 0.0
    %504 = vmatpush1.msra.mxu0 0.0
    %505 = vmatprep.subr.mxu0 0.0
    %506 = vmatpush1.msra.mxu0 0.0
    %507 = vmatprep.subr.mxu0 0.0
    %508 = vmatpush1.msra.mxu0 0.0
    %509 = vmatprep.subr.mxu0 0.0
    %510 = vmatpush1.msra.mxu0 0.0
    %511 = vmatprep.subr.mxu0 0.0
    %512 = vmatpush1.msra.mxu0 0.0
    %513 = vmatprep.subr.mxu0 0.0
    %514 = vmatpush1.msra.mxu0 0.0
    %515 = vmatprep.subr.mxu0 0.0
    %516 = vmatpush1.msra.mxu0 0.0
    %517 = vmatprep.subr.mxu0 0.0
    %518 = vmatpush1.msra.mxu0 0.0
    %519 = vmatprep.subr.mxu0 0.0
    %520 = vmatpush1.msra.mxu0 0.0
    %521 = vmatprep.subr.mxu0 0.0
    %522 = vmatpush1.msra.mxu0 0.0
    %523 = vmatprep.subr.mxu0 0.0
    %524 = vmatpush1.msra.mxu0 0.0
    %525 = vmatprep.subr.mxu0 0.0
    %526 = vmatpush1.msra.mxu0 0.0
    %527 = vmatprep.subr.mxu0 0.0
    %528 = vmatpush1.msra.mxu0 0.0
    %529 = vmatprep.subr.mxu0 0.0
    %530 = vmatpush1.msra.mxu0 0.0
    %531 = vmatprep.subr.mxu0 0.0
    %532 = vmatpush1.msra.mxu0 0.0
    %533 = vmatprep.subr.mxu0 0.0
    %534 = vmatpush1.msra.mxu0 0.0
    %535 = vmatprep.subr.mxu0 0.0
    %536 = vmatpush1.msra.mxu0 0.0
    %537 = vmatprep.subr.mxu0 0.0
    %538 = vmatpush1.msra.mxu0 0.0
    %539 = vmatprep.subr.mxu0 0.0
    %540 = vmatpush1.msra.mxu0 0.0
    %541 = vmatprep.mubr.f32.mxu0 0.0
    %542 = vmatmul.mubr.f32.gmra.mrb[0].mxu0 %v462
    %v543 = vpop.f32.mrb[0].mxu0
    %v544 = vadd.f32 %v458, %v543
    %v545 = vpop.f32.mrb[0].mxu0
    %546 = vmatprep.mubr.f32.mxu0 0.0
    %547 = vmatmul.mubr.f32.gmra.mrb[0].mxu0 %v465
    %v548 = vpop.f32.mrb[0].mxu0
    %v549 = vadd.f32 %v458, %v548
    %v550 = vpop.f32.mrb[0].mxu0
    %551 = vmatprep.mubr.f32.mxu0 0.0
    %552 = vmatmul.mubr.f32.gmra.mrb[0].mxu0 %v468
    %v553 = vpop.f32.mrb[0].mxu0
    %v554 = vadd.f32 %v458, %v553
    %v555 = vpop.f32.mrb[0].mxu0
    %556 = vmatprep.mubr.f32.mxu0 0.0
    %557 = vmatmul.mubr.f32.gmra.mrb[0].mxu0 %v471
    %v558 = vpop.f32.mrb[0].mxu0
    %v559 = vadd.f32 %v458, %v558
    %v560 = vpop.f32.mrb[0].mxu0
    %561 = vdwg.mxu0
    %v562 = vmul.f32 %v544, 11.313708
    %v563 = vmul.f32 %v549, 11.313708
    %v564 = vmul.f32 %v554, 11.313708
    %v565 = vmul.f32 %v559, 11.313708
    %v566 = vadd.f32 %v562, %v450
    %v567 = vadd.f32 %v563, %v451
    %v568 = vadd.f32 %v564, %v450
    %v569 = vadd.f32 %v565, %v451
    %v570 = vld [vmem:[#allocation3] sm:$0xff]
    %v571 = vld [vmem:[#allocation3 + $0x8] sm:$0xff]
    %v572 = vld [vmem:[#allocation3 + $0x10] sm:$0xff]
    %v573 = vld [vmem:[#allocation3 + $0x18] sm:$0xff]
    %v574 = vld [vmem:[#allocation3 + $0x20] sm:$0xff]
    %v575 = vld [vmem:[#allocation3 + $0x28] sm:$0xff]
    %v576 = vld [vmem:[#allocation3 + $0x30] sm:$0xff]
    %v577 = vld [vmem:[#allocation3 + $0x38] sm:$0xff]
    %v578 = vld [vmem:[#allocation3 + $0x40] sm:$0xff]
    %v579 = vld [vmem:[#allocation3 + $0x48] sm:$0xff]
    %v580 = vld [vmem:[#allocation3 + $0x50] sm:$0xff]
    %v581 = vld [vmem:[#allocation3 + $0x58] sm:$0xff]
    %v582 = vld [vmem:[#allocation3 + $0x60] sm:$0xff]
    %v583 = vld [vmem:[#allocation3 + $0x68] sm:$0xff]
    %v584 = vld [vmem:[#allocation3 + $0x70] sm:$0xff]
    %v585 = vld [vmem:[#allocation3 + $0x78] sm:$0xff]
    %v586 = vld [vmem:[#allocation3 + $0x80] sm:$0xff]
    %v587 = vld [vmem:[#allocation3 + $0x88] sm:$0xff]
    %v588 = vld [vmem:[#allocation3 + $0x90] sm:$0xff]
    %v589 = vld [vmem:[#allocation3 + $0x98] sm:$0xff]
    %v590 = vld [vmem:[#allocation3 + $0xa0] sm:$0xff]
    %v591 = vld [vmem:[#allocation3 + $0xa8] sm:$0xff]
    %v592 = vld [vmem:[#allocation3 + $0xb0] sm:$0xff]
    %v593 = vld [vmem:[#allocation3 + $0xb8] sm:$0xff]
    %v594 = vld [vmem:[#allocation3 + $0xc0] sm:$0xff]
    %v595 = vld [vmem:[#allocation3 + $0xc8] sm:$0xff]
    %v596 = vld [vmem:[#allocation3 + $0xd0] sm:$0xff]
    %v597 = vld [vmem:[#allocation3 + $0xd8] sm:$0xff]
    %v598 = vld [vmem:[#allocation3 + $0xe0] sm:$0xff]
    %v599 = vld [vmem:[#allocation3 + $0xe8] sm:$0xff]
    %v600 = vld [vmem:[#allocation3 + $0xf0] sm:$0xff]
    %v601 = vld [vmem:[#allocation3 + $0xf8] sm:$0xff]
    %v602 = vld [vmem:[#allocation3 + $0x100] sm:$0xff]
    %v603 = vld [vmem:[#allocation3 + $0x108] sm:$0xff]
    %v604 = vld [vmem:[#allocation3 + $0x110] sm:$0xff]
    %v605 = vld [vmem:[#allocation3 + $0x118] sm:$0xff]
    %v606 = vld [vmem:[#allocation3 + $0x120] sm:$0xff]
    %v607 = vld [vmem:[#allocation3 + $0x128] sm:$0xff]
    %v608 = vld [vmem:[#allocation3 + $0x130] sm:$0xff]
    %v609 = vld [vmem:[#allocation3 + $0x138] sm:$0xff]
    %v610 = vld [vmem:[#allocation3 + $0x140] sm:$0xff]
    %v611 = vld [vmem:[#allocation3 + $0x148] sm:$0xff]
    %v612 = vld [vmem:[#allocation3 + $0x150] sm:$0xff]
    %v613 = vld [vmem:[#allocation3 + $0x158] sm:$0xff]
    %v614 = vld [vmem:[#allocation3 + $0x160] sm:$0xff]
    %v615 = vld [vmem:[#allocation3 + $0x168] sm:$0xff]
    %v616 = vld [vmem:[#allocation3 + $0x170] sm:$0xff]
    %v617 = vld [vmem:[#allocation3 + $0x178] sm:$0xff]
    %v618 = vld [vmem:[%s11] sm:$0x7]
    %v620 = vlaneseq
    %v621 = vshrl.u32 %v620, 7
    %v622 = vsub.s32 0, %v621
    %v623 = vrot.slane %v618, %v622
    %v624 = vlaneseq
    %v625 = vshrl.u32 %v624, 7
    %v626 = vsub.s32 1, %v625
    %v627 = vrot.slane %v618, %v626
    %v628 = vlaneseq
    %v629 = vshrl.u32 %v628, 7
    %v630 = vsub.s32 2, %v629
    %v631 = vrot.slane %v618, %v630
    %635 = vmatprep.subr.mxu0 %v571
    %636 = vmatpush1.msra.mxu0 %v570
    %637 = vmatprep.subr.mxu0 %v574
    %638 = vmatpush1.msra.mxu0 %v573
    %639 = vmatprep.subr.mxu0 %v577
    %640 = vmatpush1.msra.mxu0 %v576
    %641 = vmatprep.subr.mxu0 %v580
    %642 = vmatpush1.msra.mxu0 %v579
    %643 = vmatprep.subr.mxu0 %v583
    %644 = vmatpush1.msra.mxu0 %v582
    %645 = vmatprep.subr.mxu0 %v586
    %646 = vmatpush1.msra.mxu0 %v585
    %647 = vmatprep.subr.mxu0 %v589
    %648 = vmatpush1.msra.mxu0 %v588
    %649 = vmatprep.subr.mxu0 %v592
    %650 = vmatpush1.msra.mxu0 %v591
    %651 = vmatprep.subr.mxu0 %v595
    %652 = vmatpush1.msra.mxu0 %v594
    %653 = vmatprep.subr.mxu0 %v598
    %654 = vmatpush1.msra.mxu0 %v597
    %655 = vmatprep.subr.mxu0 %v601
    %656 = vmatpush1.msra.mxu0 %v600
    %657 = vmatprep.subr.mxu0 %v604
    %658 = vmatpush1.msra.mxu0 %v603
    %659 = vmatprep.subr.mxu0 %v607
    %660 = vmatpush1.msra.mxu0 %v606
    %661 = vmatprep.subr.mxu0 %v610
    %662 = vmatpush1.msra.mxu0 %v609
    %663 = vmatprep.subr.mxu0 %v613
    %664 = vmatpush1.msra.mxu0 %v612
    %665 = vmatprep.subr.mxu0 %v616
    %666 = vmatpush1.msra.mxu0 %v615
    %667 = vmatprep.subr.mxu0 0.0
    %668 = vmatpush1.msra.mxu0 0.0
    %669 = vmatprep.subr.mxu0 0.0
    %670 = vmatpush1.msra.mxu0 0.0
    %671 = vmatprep.subr.mxu0 0.0
    %672 = vmatpush1.msra.mxu0 0.0
    %673 = vmatprep.subr.mxu0 0.0
    %674 = vmatpush1.msra.mxu0 0.0
    %675 = vmatprep.subr.mxu0 0.0
    %676 = vmatpush1.msra.mxu0 0.0
    %677 = vmatprep.subr.mxu0 0.0
    %678 = vmatpush1.msra.mxu0 0.0
    %679 = vmatprep.subr.mxu0 0.0
    %680 = vmatpush1.msra.mxu0 0.0
    %681 = vmatprep.subr.mxu0 0.0
    %682 = vmatpush1.msra.mxu0 0.0
    %683 = vmatprep.subr.mxu0 0.0
    %684 = vmatpush1.msra.mxu0 0.0
    %685 = vmatprep.subr.mxu0 0.0
    %686 = vmatpush1.msra.mxu0 0.0
    %687 = vmatprep.subr.mxu0 0.0
    %688 = vmatpush1.msra.mxu0 0.0
    %689 = vmatprep.subr.mxu0 0.0
    %690 = vmatpush1.msra.mxu0 0.0
    %691 = vmatprep.subr.mxu0 0.0
    %692 = vmatpush1.msra.mxu0 0.0
    %693 = vmatprep.subr.mxu0 0.0
    %694 = vmatpush1.msra.mxu0 0.0
    %695 = vmatprep.subr.mxu0 0.0
    %696 = vmatpush1.msra.mxu0 0.0
    %697 = vmatprep.subr.mxu0 0.0
    %698 = vmatpush1.msra.mxu0 0.0
    %699 = vmatprep.mubr.f32.mxu0 0.0
    %700 = vmatmul.mubr.f32.gmra.mrb[0].mxu0 %v566
    %v701 = vpop.f32.mrb[0].mxu0
    %v702 = vadd.f32 %v623, %v701
    %v703 = vpop.f32.mrb[0].mxu0
    %v704 = vadd.f32 %v627, %v703
    %705 = vmatprep.mubr.f32.mxu0 0.0
    %706 = vmatmul.mubr.f32.gmra.mrb[0].mxu0 %v567
    %v707 = vpop.f32.mrb[0].mxu0
    %v708 = vadd.f32 %v623, %v707
    %v709 = vpop.f32.mrb[0].mxu0
    %v710 = vadd.f32 %v627, %v709
    %711 = vmatprep.mubr.f32.mxu0 0.0
    %712 = vmatmul.mubr.f32.gmra.mrb[0].mxu0 %v568
    %v713 = vpop.f32.mrb[0].mxu0
    %v714 = vadd.f32 %v623, %v713
    %v715 = vpop.f32.mrb[0].mxu0
    %v716 = vadd.f32 %v627, %v715
    %717 = vmatprep.mubr.f32.mxu0 0.0
    %718 = vmatmul.mubr.f32.gmra.mrb[0].mxu0 %v569
    %v719 = vpop.f32.mrb[0].mxu0
    %v720 = vadd.f32 %v623, %v719
    %v721 = vpop.f32.mrb[0].mxu0
    %v722 = vadd.f32 %v627, %v721
    %723 = vdwg.mxu0
    %724 = vmatprep.subr.mxu0 0.0
    %725 = vmatpush1.msra.mxu0 %v572
    %726 = vmatprep.subr.mxu0 0.0
    %727 = vmatpush1.msra.mxu0 %v575
    %728 = vmatprep.subr.mxu0 0.0
    %729 = vmatpush1.msra.mxu0 %v578
    %730 = vmatprep.subr.mxu0 0.0
    %731 = vmatpush1.msra.mxu0 %v581
    %732 = vmatprep.subr.mxu0 0.0
    %733 = vmatpush1.msra.mxu0 %v584
    %734 = vmatprep.subr.mxu0 0.0
    %735 = vmatpush1.msra.mxu0 %v587
    %736 = vmatprep.subr.mxu0 0.0
    %737 = vmatpush1.msra.mxu0 %v590
    %738 = vmatprep.subr.mxu0 0.0
    %739 = vmatpush1.msra.mxu0 %v593
    %740 = vmatprep.subr.mxu0 0.0
    %741 = vmatpush1.msra.mxu0 %v596
    %742 = vmatprep.subr.mxu0 0.0
    %743 = vmatpush1.msra.mxu0 %v599
    %744 = vmatprep.subr.mxu0 0.0
    %745 = vmatpush1.msra.mxu0 %v602
    %746 = vmatprep.subr.mxu0 0.0
    %747 = vmatpush1.msra.mxu0 %v605
    %748 = vmatprep.subr.mxu0 0.0
    %749 = vmatpush1.msra.mxu0 %v608
    %750 = vmatprep.subr.mxu0 0.0
    %751 = vmatpush1.msra.mxu0 %v611
    %752 = vmatprep.subr.mxu0 0.0
    %753 = vmatpush1.msra.mxu0 %v614
    %754 = vmatprep.subr.mxu0 0.0
    %755 = vmatpush1.msra.mxu0 %v617
    %756 = vmatprep.subr.mxu0 0.0
    %757 = vmatpush1.msra.mxu0 0.0
    %758 = vmatprep.subr.mxu0 0.0
    %759 = vmatpush1.msra.mxu0 0.0
    %760 = vmatprep.subr.mxu0 0.0
    %761 = vmatpush1.msra.mxu0 0.0
    %762 = vmatprep.subr.mxu0 0.0
    %763 = vmatpush1.msra.mxu0 0.0
    %764 = vmatprep.subr.mxu0 0.0
    %765 = vmatpush1.msra.mxu0 0.0
    %766 = vmatprep.subr.mxu0 0.0
    %767 = vmatpush1.msra.mxu0 0.0
    %768 = vmatprep.subr.mxu0 0.0
    %769 = vmatpush1.msra.mxu0 0.0
    %770 = vmatprep.subr.mxu0 0.0
    %771 = vmatpush1.msra.mxu0 0.0
    %772 = vmatprep.subr.mxu0 0.0
    %773 = vmatpush1.msra.mxu0 0.0
    %774 = vmatprep.subr.mxu0 0.0
    %775 = vmatpush1.msra.mxu0 0.0
    %776 = vmatprep.subr.mxu0 0.0
    %777 = vmatpush1.msra.mxu0 0.0
    %778 = vmatprep.subr.mxu0 0.0
    %779 = vmatpush1.msra.mxu0 0.0
    %780 = vmatprep.subr.mxu0 0.0
    %781 = vmatpush1.msra.mxu0 0.0
    %782 = vmatprep.subr.mxu0 0.0
    %783 = vmatpush1.msra.mxu0 0.0
    %784 = vmatprep.subr.mxu0 0.0
    %785 = vmatpush1.msra.mxu0 0.0
    %786 = vmatprep.subr.mxu0 0.0
    %787 = vmatpush1.msra.mxu0 0.0
    %788 = vmatprep.mubr.f32.mxu0 0.0
    %789 = vmatmul.mubr.f32.gmra.mrb[0].mxu0 %v566
    %v790 = vpop.f32.mrb[0].mxu0
    %v791 = vadd.f32 %v631, %v790
    %v792 = vpop.f32.mrb[0].mxu0
    %793 = vmatprep.mubr.f32.mxu0 0.0
    %794 = vmatmul.mubr.f32.gmra.mrb[0].mxu0 %v567
    %v795 = vpop.f32.mrb[0].mxu0
    %v796 = vadd.f32 %v631, %v795
    %v797 = vpop.f32.mrb[0].mxu0
    %798 = vmatprep.mubr.f32.mxu0 0.0
    %799 = vmatmul.mubr.f32.gmra.mrb[0].mxu0 %v568
    %v800 = vpop.f32.mrb[0].mxu0
    %v801 = vadd.f32 %v631, %v800
    %v802 = vpop.f32.mrb[0].mxu0
    %803 = vmatprep.mubr.f32.mxu0 0.0
    %804 = vmatmul.mubr.f32.gmra.mrb[0].mxu0 %v569
    %v805 = vpop.f32.mrb[0].mxu0
    %v806 = vadd.f32 %v631, %v805
    %v807 = vpop.f32.mrb[0].mxu0
    %808 = vdwg.mxu0
    %v809 = vld [vmem:[%s13] sm:$0xff]
    %v810 = vld [vmem:[%s13 + $0x8] sm:$0xff]
    %v811 = vld [vmem:[%s13 + $0x10] sm:$0xff]
    %v812 = vld [vmem:[%s13 + $0x18] sm:$0xff]
    %v813 = vld [vmem:[%s13 + $0x20] sm:$0xff]
    %v814 = vld [vmem:[%s13 + $0x28] sm:$0xff]
    %v815 = vld [vmem:[%s13 + $0x30] sm:$0xff]
    %v816 = vld [vmem:[%s13 + $0x38] sm:$0xff]
    %v817 = vld [vmem:[%s13 + $0x40] sm:$0xff]
    %v818 = vld [vmem:[%s13 + $0x48] sm:$0xff]
    %v819 = vld [vmem:[%s13 + $0x50] sm:$0xff]
    %v820 = vld [vmem:[%s13 + $0x58] sm:$0xff]
    %v821 = vld [vmem:[%s13 + $0x60] sm:$0xff]
    %v822 = vld [vmem:[%s13 + $0x68] sm:$0xff]
    %v823 = vld [vmem:[%s13 + $0x70] sm:$0xff]
    %v824 = vld [vmem:[%s13 + $0x78] sm:$0xff]
    %vm825 = vcmask 261120
    %v827 = vsel %vm825, %v702, 0
    %v830 = vsel %vm825, %v708, 0
    %v833 = vsel %vm825, %v704, 0
    %v836 = vsel %vm825, %v710, 0
    %838 = vmatprep.subr.mxu0 0.0
    %839 = vmatpush1.xpose.msra.mxu0 %v833
    %840 = vmatprep.subr.mxu0 0.0
    %841 = vmatpush1.xpose.msra.mxu0 %v836
    %842 = vmatprep.subr.mxu0 0.0
    %843 = vmatpush1.xpose.msra.mxu0 0.0
    %844 = vmatprep.subr.mxu0 0.0
    %845 = vmatpush1.xpose.msra.mxu0 0.0
    %846 = vmatprep.subr.mxu0 0.0
    %847 = vmatpush1.xpose.msra.mxu0 0.0
    %848 = vmatprep.subr.mxu0 0.0
    %849 = vmatpush1.xpose.msra.mxu0 0.0
    %850 = vmatprep.subr.mxu0 0.0
    %851 = vmatpush1.xpose.msra.mxu0 0.0
    %852 = vmatprep.subr.mxu0 0.0
    %853 = vmatpush1.xpose.msra.mxu0 0.0
    %854 = vmatprep.subr.mxu0 0.0
    %855 = vmatpush1.xpose.msra.mxu0 0.0
    %856 = vmatprep.subr.mxu0 0.0
    %857 = vmatpush1.xpose.msra.mxu0 0.0
    %858 = vmatprep.subr.mxu0 0.0
    %859 = vmatpush1.xpose.msra.mxu0 0.0
    %860 = vmatprep.subr.mxu0 0.0
    %861 = vmatpush1.xpose.msra.mxu0 0.0
    %862 = vmatprep.subr.mxu0 0.0
    %863 = vmatpush1.xpose.msra.mxu0 0.0
    %864 = vmatprep.subr.mxu0 0.0
    %865 = vmatpush1.xpose.msra.mxu0 0.0
    %866 = vmatprep.subr.mxu0 0.0
    %867 = vmatpush1.xpose.msra.mxu0 0.0
    %868 = vmatprep.subr.mxu0 0.0
    %869 = vmatpush1.xpose.msra.mxu0 0.0
    %870 = vmatprep.subr.mxu0 0.0
    %871 = vmatpush1.xpose.msra.mxu0 0.0
    %872 = vmatprep.subr.mxu0 0.0
    %873 = vmatpush1.xpose.msra.mxu0 0.0
    %874 = vmatprep.subr.mxu0 0.0
    %875 = vmatpush1.xpose.msra.mxu0 0.0
    %876 = vmatprep.subr.mxu0 0.0
    %877 = vmatpush1.xpose.msra.mxu0 0.0
    %878 = vmatprep.subr.mxu0 0.0
    %879 = vmatpush1.xpose.msra.mxu0 0.0
    %880 = vmatprep.subr.mxu0 0.0
    %881 = vmatpush1.xpose.msra.mxu0 0.0
    %882 = vmatprep.subr.mxu0 0.0
    %883 = vmatpush1.xpose.msra.mxu0 0.0
    %884 = vmatprep.subr.mxu0 0.0
    %885 = vmatpush1.xpose.msra.mxu0 0.0
    %886 = vmatprep.subr.mxu0 0.0
    %887 = vmatpush1.xpose.msra.mxu0 0.0
    %888 = vmatprep.subr.mxu0 0.0
    %889 = vmatpush1.xpose.msra.mxu0 0.0
    %890 = vmatprep.subr.mxu0 0.0
    %891 = vmatpush1.xpose.msra.mxu0 0.0
    %892 = vmatprep.subr.mxu0 0.0
    %893 = vmatpush1.xpose.msra.mxu0 0.0
    %894 = vmatprep.subr.mxu0 0.0
    %895 = vmatpush1.xpose.msra.mxu0 0.0
    %896 = vmatprep.subr.mxu0 0.0
    %897 = vmatpush1.xpose.msra.mxu0 0.0
    %898 = vmatprep.subr.mxu0 0.0
    %899 = vmatpush1.xpose.msra.mxu0 0.0
    %900 = vmatprep.subr.mxu0 0.0
    %901 = vmatpush1.xpose.msra.mxu0 0.0
    %902 = vmatprep.mubr.f32.mxu0 0.0
    %903 = vmatmul.mubr.f32.gmra.mrb[0].mxu0 %v827
    %v904 = vpop.f32.mrb[0].mxu0
    %v905 = vadd.f32 0.0, %v904
    %v906 = vpop.f32.mrb[0].mxu0
    %907 = vmatprep.mubr.f32.mxu0 0.0
    %908 = vmatmul.mubr.f32.gmra.mrb[0].mxu0 %v830
    %v909 = vpop.f32.mrb[0].mxu0
    %v910 = vadd.f32 0.0, %v909
    %v911 = vpop.f32.mrb[0].mxu0
    %912 = vdwg.mxu0
    %vm913 = vcmask 130048
    %v914 = vsel %vm913, %v905, -inf
    %915 = vmax.xlane.f32.xlu0 %v914
    %v916 = vpop.xlane.xlu0 %915
    %v917 = vsel %vm913, %v910, -inf
    %918 = vmax.xlane.f32.xlu0 %v917
    %v919 = vpop.xlane.xlu0 %918
    %v920 = vsub.f32 %v905, %v916
    %v921 = vsub.f32 %v910, %v919
    %v922 = vmul.f32 %v920, 1.442695
    %v923 = vpow.pop %v922
    %v924 = vmul.f32 %v921, 1.442695
    %v925 = vpow.pop %v924
    %v926 = vsel %vm913, %v923, 0.0
    %927 = vadd.xlane.f32.xlu0 %v926
    %v928 = vpop.xlane.xlu0 %927
    %v929 = vsel %vm913, %v925, 0.0
    %930 = vadd.xlane.f32.xlu0 %v929
    %v931 = vpop.xlane.xlu0 %930
    %v932 = vrcp.pop %v928
    %v933 = vrcp.pop %v931
    %v934 = vmul.f32 %v923, %v932
    %v935 = vmul.f32 %v925, %v933
    %v937 = vsel %vm913, %v934, 0
    %v940 = vsel %vm913, %v935, 0
    %942 = vmatprep.subr.mxu0 0.0
    %943 = vmatpush1.msra.mxu0 %v791
    %944 = vmatprep.subr.mxu0 0.0
    %945 = vmatpush1.msra.mxu0 %v796
    %946 = vmatprep.subr.mxu0 0.0
    %947 = vmatpush1.msra.mxu0 0.0
    %948 = vmatprep.subr.mxu0 0.0
    %949 = vmatpush1.msra.mxu0 0.0
    %950 = vmatprep.subr.mxu0 0.0
    %951 = vmatpush1.msra.mxu0 0.0
    %952 = vmatprep.subr.mxu0 0.0
    %953 = vmatpush1.msra.mxu0 0.0
    %954 = vmatprep.subr.mxu0 0.0
    %955 = vmatpush1.msra.mxu0 0.0
    %956 = vmatprep.subr.mxu0 0.0
    %957 = vmatpush1.msra.mxu0 0.0
    %958 = vmatprep.subr.mxu0 0.0
    %959 = vmatpush1.msra.mxu0 0.0
    %960 = vmatprep.subr.mxu0 0.0
    %961 = vmatpush1.msra.mxu0 0.0
    %962 = vmatprep.subr.mxu0 0.0
    %963 = vmatpush1.msra.mxu0 0.0
    %964 = vmatprep.subr.mxu0 0.0
    %965 = vmatpush1.msra.mxu0 0.0
    %966 = vmatprep.subr.mxu0 0.0
    %967 = vmatpush1.msra.mxu0 0.0
    %968 = vmatprep.subr.mxu0 0.0
    %969 = vmatpush1.msra.mxu0 0.0
    %970 = vmatprep.subr.mxu0 0.0
    %971 = vmatpush1.msra.mxu0 0.0
    %972 = vmatprep.subr.mxu0 0.0
    %973 = vmatpush1.msra.mxu0 0.0
    %974 = vmatprep.subr.mxu0 0.0
    %975 = vmatpush1.msra.mxu0 0.0
    %976 = vmatprep.subr.mxu0 0.0
    %977 = vmatpush1.msra.mxu0 0.0
    %978 = vmatprep.subr.mxu0 0.0
    %979 = vmatpush1.msra.mxu0 0.0
    %980 = vmatprep.subr.mxu0 0.0
    %981 = vmatpush1.msra.mxu0 0.0
    %982 = vmatprep.subr.mxu0 0.0
    %983 = vmatpush1.msra.mxu0 0.0
    %984 = vmatprep.subr.mxu0 0.0
    %985 = vmatpush1.msra.mxu0 0.0
    %986 = vmatprep.subr.mxu0 0.0
    %987 = vmatpush1.msra.mxu0 0.0
    %988 = vmatprep.subr.mxu0 0.0
    %989 = vmatpush1.msra.mxu0 0.0
    %990 = vmatprep.subr.mxu0 0.0
    %991 = vmatpush1.msra.mxu0 0.0
    %992 = vmatprep.subr.mxu0 0.0
    %993 = vmatpush1.msra.mxu0 0.0
    %994 = vmatprep.subr.mxu0 0.0
    %995 = vmatpush1.msra.mxu0 0.0
    %996 = vmatprep.subr.mxu0 0.0
    %997 = vmatpush1.msra.mxu0 0.0
    %998 = vmatprep.subr.mxu0 0.0
    %999 = vmatpush1.msra.mxu0 0.0
    %1000 = vmatprep.subr.mxu0 0.0
    %1001 = vmatpush1.msra.mxu0 0.0
    %1002 = vmatprep.subr.mxu0 0.0
    %1003 = vmatpush1.msra.mxu0 0.0
    %1004 = vmatprep.subr.mxu0 0.0
    %1005 = vmatpush1.msra.mxu0 0.0
    %1006 = vmatprep.mubr.f32.mxu0 0.0
    %1007 = vmatmul.mubr.f32.gmra.mrb[0].mxu0 %v937
    %v1008 = vpop.f32.mrb[0].mxu0
    %v1009 = vadd.f32 0.0, %v1008
    %v1010 = vpop.f32.mrb[0].mxu0
    %1011 = vmatprep.mubr.f32.mxu0 0.0
    %1012 = vmatmul.mubr.f32.gmra.mrb[0].mxu0 %v940
    %v1013 = vpop.f32.mrb[0].mxu0
    %v1014 = vadd.f32 0.0, %v1013
    %v1015 = vpop.f32.mrb[0].mxu0
    %1016 = vdwg.mxu0
    %1017 = vrot.lane.b32.xlu0 %v702, 96
    %v1018 = vpop.permute.xlu0 %1017
    %1019 = vrot.lane.b32.xlu0 %v708, 96
    %v1020 = vpop.permute.xlu0 %1019
    %1021 = vrot.lane.b32.xlu0 %v704, 96
    %v1022 = vpop.permute.xlu0 %1021
    %1023 = vrot.lane.b32.xlu0 %v710, 96
    %v1024 = vpop.permute.xlu0 %1023
    %v1025 = vsel %vm825, %v1018, 0
    %v1027 = vsel %vm825, %v1020, 0
    %v1029 = vsel %vm825, %v1022, 0
    %v1031 = vsel %vm825, %v1024, 0
    %1033 = vmatprep.subr.mxu0 0.0
    %1034 = vmatpush1.xpose.msra.mxu0 %v1029
    %1035 = vmatprep.subr.mxu0 0.0
    %1036 = vmatpush1.xpose.msra.mxu0 %v1031
    %1037 = vmatprep.subr.mxu0 0.0
    %1038 = vmatpush1.xpose.msra.mxu0 0.0
    %1039 = vmatprep.subr.mxu0 0.0
    %1040 = vmatpush1.xpose.msra.mxu0 0.0
    %1041 = vmatprep.subr.mxu0 0.0
    %1042 = vmatpush1.xpose.msra.mxu0 0.0
    %1043 = vmatprep.subr.mxu0 0.0
    %1044 = vmatpush1.xpose.msra.mxu0 0.0
    %1045 = vmatprep.subr.mxu0 0.0
    %1046 = vmatpush1.xpose.msra.mxu0 0.0
    %1047 = vmatprep.subr.mxu0 0.0
    %1048 = vmatpush1.xpose.msra.mxu0 0.0
    %1049 = vmatprep.subr.mxu0 0.0
    %1050 = vmatpush1.xpose.msra.mxu0 0.0
    %1051 = vmatprep.subr.mxu0 0.0
    %1052 = vmatpush1.xpose.msra.mxu0 0.0
    %1053 = vmatprep.subr.mxu0 0.0
    %1054 = vmatpush1.xpose.msra.mxu0 0.0
    %1055 = vmatprep.subr.mxu0 0.0
    %1056 = vmatpush1.xpose.msra.mxu0 0.0
    %1057 = vmatprep.subr.mxu0 0.0
    %1058 = vmatpush1.xpose.msra.mxu0 0.0
    %1059 = vmatprep.subr.mxu0 0.0
    %1060 = vmatpush1.xpose.msra.mxu0 0.0
    %1061 = vmatprep.subr.mxu0 0.0
    %1062 = vmatpush1.xpose.msra.mxu0 0.0
    %1063 = vmatprep.subr.mxu0 0.0
    %1064 = vmatpush1.xpose.msra.mxu0 0.0
    %1065 = vmatprep.subr.mxu0 0.0
    %1066 = vmatpush1.xpose.msra.mxu0 0.0
    %1067 = vmatprep.subr.mxu0 0.0
    %1068 = vmatpush1.xpose.msra.mxu0 0.0
    %1069 = vmatprep.subr.mxu0 0.0
    %1070 = vmatpush1.xpose.msra.mxu0 0.0
    %1071 = vmatprep.subr.mxu0 0.0
    %1072 = vmatpush1.xpose.msra.mxu0 0.0
    %1073 = vmatprep.subr.mxu0 0.0
    %1074 = vmatpush1.xpose.msra.mxu0 0.0
    %1075 = vmatprep.subr.mxu0 0.0
    %1076 = vmatpush1.xpose.msra.mxu0 0.0
    %1077 = vmatprep.subr.mxu0 0.0
    %1078 = vmatpush1.xpose.msra.mxu0 0.0
    %1079 = vmatprep.subr.mxu0 0.0
    %1080 = vmatpush1.xpose.msra.mxu0 0.0
    %1081 = vmatprep.subr.mxu0 0.0
    %1082 = vmatpush1.xpose.msra.mxu0 0.0
    %1083 = vmatprep.subr.mxu0 0.0
    %1084 = vmatpush1.xpose.msra.mxu0 0.0
    %1085 = vmatprep.subr.mxu0 0.0
    %1086 = vmatpush1.xpose.msra.mxu0 0.0
    %1087 = vmatprep.subr.mxu0 0.0
    %1088 = vmatpush1.xpose.msra.mxu0 0.0
    %1089 = vmatprep.subr.mxu0 0.0
    %1090 = vmatpush1.xpose.msra.mxu0 0.0
    %1091 = vmatprep.subr.mxu0 0.0
    %1092 = vmatpush1.xpose.msra.mxu0 0.0
    %1093 = vmatprep.subr.mxu0 0.0
    %1094 = vmatpush1.xpose.msra.mxu0 0.0
    %1095 = vmatprep.subr.mxu0 0.0
    %1096 = vmatpush1.xpose.msra.mxu0 0.0
    %1097 = vmatprep.mubr.f32.mxu0 0.0
    %1098 = vmatmul.mubr.f32.gmra.mrb[0].mxu0 %v1025
    %v1099 = vpop.f32.mrb[0].mxu0
    %v1100 = vadd.f32 0.0, %v1099
    %v1101 = vpop.f32.mrb[0].mxu0
    %1102 = vmatprep.mubr.f32.mxu0 0.0
    %1103 = vmatmul.mubr.f32.gmra.mrb[0].mxu0 %v1027
    %v1104 = vpop.f32.mrb[0].mxu0
    %v1105 = vadd.f32 0.0, %v1104
    %v1106 = vpop.f32.mrb[0].mxu0
    %1107 = vdwg.mxu0
    %v1108 = vsel %vm913, %v1100, -inf
    %1109 = vmax.xlane.f32.xlu0 %v1108
    %v1110 = vpop.xlane.xlu0 %1109
    %v1111 = vsel %vm913, %v1105, -inf
    %1112 = vmax.xlane.f32.xlu0 %v1111
    %v1113 = vpop.xlane.xlu0 %1112
    %v1114 = vsub.f32 %v1100, %v1110
    %v1115 = vsub.f32 %v1105, %v1113
    %v1116 = vmul.f32 %v1114, 1.442695
    %v1117 = vpow.pop %v1116
    %v1118 = vmul.f32 %v1115, 1.442695
    %v1119 = vpow.pop %v1118
    %v1120 = vsel %vm913, %v1117, 0.0
    %1121 = vadd.xlane.f32.xlu0 %v1120
    %v1122 = vpop.xlane.xlu0 %1121
    %v1123 = vsel %vm913, %v1119, 0.0
    %1124 = vadd.xlane.f32.xlu0 %v1123
    %v1125 = vpop.xlane.xlu0 %1124
    %v1126 = vrcp.pop %v1122
    %v1127 = vrcp.pop %v1125
    %v1128 = vmul.f32 %v1117, %v1126
    %v1129 = vmul.f32 %v1119, %v1127
    %1132 = vrot.lane.b32.xlu0 %v791, 96
    %v1133 = vpop.permute.xlu0 %1132
    %1134 = vrot.lane.b32.xlu0 %v796, 96
    %v1135 = vpop.permute.xlu0 %1134
    %v1139 = vsel %vm913, %v1128, 0
    %v1142 = vsel %vm913, %v1129, 0
    %1144 = vmatprep.subr.mxu0 0.0
    %1145 = vmatpush1.msra.mxu0 %v1133
    %1146 = vmatprep.subr.mxu0 0.0
    %1147 = vmatpush1.msra.mxu0 %v1135
    %1148 = vmatprep.subr.mxu0 0.0
    %1149 = vmatpush1.msra.mxu0 0.0
    %1150 = vmatprep.subr.mxu0 0.0
    %1151 = vmatpush1.msra.mxu0 0.0
    %1152 = vmatprep.subr.mxu0 0.0
    %1153 = vmatpush1.msra.mxu0 0.0
    %1154 = vmatprep.subr.mxu0 0.0
    %1155 = vmatpush1.msra.mxu0 0.0
    %1156 = vmatprep.subr.mxu0 0.0
    %1157 = vmatpush1.msra.mxu0 0.0
    %1158 = vmatprep.subr.mxu0 0.0
    %1159 = vmatpush1.msra.mxu0 0.0
    %1160 = vmatprep.subr.mxu0 0.0
    %1161 = vmatpush1.msra.mxu0 0.0
    %1162 = vmatprep.subr.mxu0 0.0
    %1163 = vmatpush1.msra.mxu0 0.0
    %1164 = vmatprep.subr.mxu0 0.0
    %1165 = vmatpush1.msra.mxu0 0.0
    %1166 = vmatprep.subr.mxu0 0.0
    %1167 = vmatpush1.msra.mxu0 0.0
    %1168 = vmatprep.subr.mxu0 0.0
    %1169 = vmatpush1.msra.mxu0 0.0
    %1170 = vmatprep.subr.mxu0 0.0
    %1171 = vmatpush1.msra.mxu0 0.0
    %1172 = vmatprep.subr.mxu0 0.0
    %1173 = vmatpush1.msra.mxu0 0.0
    %1174 = vmatprep.subr.mxu0 0.0
    %1175 = vmatpush1.msra.mxu0 0.0
    %1176 = vmatprep.subr.mxu0 0.0
    %1177 = vmatpush1.msra.mxu0 0.0
    %1178 = vmatprep.subr.mxu0 0.0
    %1179 = vmatpush1.msra.mxu0 0.0
    %1180 = vmatprep.subr.mxu0 0.0
    %1181 = vmatpush1.msra.mxu0 0.0
    %1182 = vmatprep.subr.mxu0 0.0
    %1183 = vmatpush1.msra.mxu0 0.0
    %1184 = vmatprep.subr.mxu0 0.0
    %1185 = vmatpush1.msra.mxu0 0.0
    %1186 = vmatprep.subr.mxu0 0.0
    %1187 = vmatpush1.msra.mxu0 0.0
    %1188 = vmatprep.subr.mxu0 0.0
    %1189 = vmatpush1.msra.mxu0 0.0
    %1190 = vmatprep.subr.mxu0 0.0
    %1191 = vmatpush1.msra.mxu0 0.0
    %1192 = vmatprep.subr.mxu0 0.0
    %1193 = vmatpush1.msra.mxu0 0.0
    %1194 = vmatprep.subr.mxu0 0.0
    %1195 = vmatpush1.msra.mxu0 0.0
    %1196 = vmatprep.subr.mxu0 0.0
    %1197 = vmatpush1.msra.mxu0 0.0
    %1198 = vmatprep.subr.mxu0 0.0
    %1199 = vmatpush1.msra.mxu0 0.0
    %1200 = vmatprep.subr.mxu0 0.0
    %1201 = vmatpush1.msra.mxu0 0.0
    %1202 = vmatprep.subr.mxu0 0.0
    %1203 = vmatpush1.msra.mxu0 0.0
    %1204 = vmatprep.subr.mxu0 0.0
    %1205 = vmatpush1.msra.mxu0 0.0
    %1206 = vmatprep.subr.mxu0 0.0
    %1207 = vmatpush1.msra.mxu0 0.0
    %1208 = vmatprep.mubr.f32.mxu0 0.0
    %1209 = vmatmul.mubr.f32.gmra.mrb[0].mxu0 %v1139
    %v1210 = vpop.f32.mrb[0].mxu0
    %v1211 = vadd.f32 0.0, %v1210
    %v1212 = vpop.f32.mrb[0].mxu0
    %1213 = vmatprep.mubr.f32.mxu0 0.0
    %1214 = vmatmul.mubr.f32.gmra.mrb[0].mxu0 %v1142
    %v1215 = vpop.f32.mrb[0].mxu0
    %v1216 = vadd.f32 0.0, %v1215
    %v1217 = vpop.f32.mrb[0].mxu0
    %1218 = vdwg.mxu0
    %v1220 = vsel %vm825, %v1211, 0
    %v1223 = vsel %vm825, %v1216, 0
    %1225 = vmatprep.subr.mxu0 0.0
    %1226 = vmatpush1.msra.mxu0 %v813
    %1227 = vmatprep.subr.mxu0 0.0
    %1228 = vmatpush1.msra.mxu0 %v814
    %1229 = vmatprep.subr.mxu0 0.0
    %1230 = vmatpush1.msra.mxu0 %v815
    %1231 = vmatprep.subr.mxu0 0.0
    %1232 = vmatpush1.msra.mxu0 %v816
    %1233 = vmatprep.subr.mxu0 0.0
    %1234 = vmatpush1.msra.mxu0 0.0
    %1235 = vmatprep.subr.mxu0 0.0
    %1236 = vmatpush1.msra.mxu0 0.0
    %1237 = vmatprep.subr.mxu0 0.0
    %1238 = vmatpush1.msra.mxu0 0.0
    %1239 = vmatprep.subr.mxu0 0.0
    %1240 = vmatpush1.msra.mxu0 0.0
    %1241 = vmatprep.subr.mxu0 0.0
    %1242 = vmatpush1.msra.mxu0 0.0
    %1243 = vmatprep.subr.mxu0 0.0
    %1244 = vmatpush1.msra.mxu0 0.0
    %1245 = vmatprep.subr.mxu0 0.0
    %1246 = vmatpush1.msra.mxu0 0.0
    %1247 = vmatprep.subr.mxu0 0.0
    %1248 = vmatpush1.msra.mxu0 0.0
    %1249 = vmatprep.subr.mxu0 0.0
    %1250 = vmatpush1.msra.mxu0 0.0
    %1251 = vmatprep.subr.mxu0 0.0
    %1252 = vmatpush1.msra.mxu0 0.0
    %1253 = vmatprep.subr.mxu0 0.0
    %1254 = vmatpush1.msra.mxu0 0.0
    %1255 = vmatprep.subr.mxu0 0.0
    %1256 = vmatpush1.msra.mxu0 0.0
    %1257 = vmatprep.subr.mxu0 0.0
    %1258 = vmatpush1.msra.mxu0 0.0
    %1259 = vmatprep.subr.mxu0 0.0
    %1260 = vmatpush1.msra.mxu0 0.0
    %1261 = vmatprep.subr.mxu0 0.0
    %1262 = vmatpush1.msra.mxu0 0.0
    %1263 = vmatprep.subr.mxu0 0.0
    %1264 = vmatpush1.msra.mxu0 0.0
    %1265 = vmatprep.subr.mxu0 0.0
    %1266 = vmatpush1.msra.mxu0 0.0
    %1267 = vmatprep.subr.mxu0 0.0
    %1268 = vmatpush1.msra.mxu0 0.0
    %1269 = vmatprep.subr.mxu0 0.0
    %1270 = vmatpush1.msra.mxu0 0.0
    %1271 = vmatprep.subr.mxu0 0.0
    %1272 = vmatpush1.msra.mxu0 0.0
    %1273 = vmatprep.subr.mxu0 0.0
    %1274 = vmatpush1.msra.mxu0 0.0
    %1275 = vmatprep.subr.mxu0 0.0
    %1276 = vmatpush1.msra.mxu0 0.0
    %1277 = vmatprep.subr.mxu0 0.0
    %1278 = vmatpush1.msra.mxu0 0.0
    %1279 = vmatprep.subr.mxu0 0.0
    %1280 = vmatpush1.msra.mxu0 0.0
    %1281 = vmatprep.subr.mxu0 0.0
    %1282 = vmatpush1.msra.mxu0 0.0
    %1283 = vmatprep.subr.mxu0 0.0
    %1284 = vmatpush1.msra.mxu0 0.0
    %1285 = vmatprep.subr.mxu0 0.0
    %1286 = vmatpush1.msra.mxu0 0.0
    %1287 = vmatprep.subr.mxu0 0.0
    %1288 = vmatpush1.msra.mxu0 0.0
    %1289 = vmatprep.mubr.f32.mxu0 0.0
    %1290 = vmatmul.mubr.f32.gmra.mrb[0].mxu0 %v1220
    %v1291 = vpop.f32.mrb[0].mxu0
    %v1292 = vadd.f32 0.0, %v1291
    %v1293 = vpop.f32.mrb[0].mxu0
    %1294 = vmatprep.mubr.f32.mxu0 0.0
    %1295 = vmatmul.mubr.f32.gmra.mrb[0].mxu0 %v1223
    %v1296 = vpop.f32.mrb[0].mxu0
    %v1297 = vadd.f32 0.0, %v1296
    %v1298 = vpop.f32.mrb[0].mxu0
    %1299 = vdwg.mxu0
    %v1301 = vsel %vm825, %v1009, 0
    %v1304 = vsel %vm825, %v1014, 0
    %1306 = vmatprep.subr.mxu0 0.0
    %1307 = vmatpush1.msra.mxu0 %v809
    %1308 = vmatprep.subr.mxu0 0.0
    %1309 = vmatpush1.msra.mxu0 %v810
    %1310 = vmatprep.subr.mxu0 0.0
    %1311 = vmatpush1.msra.mxu0 %v811
    %1312 = vmatprep.subr.mxu0 0.0
    %1313 = vmatpush1.msra.mxu0 %v812
    %1314 = vmatprep.subr.mxu0 0.0
    %1315 = vmatpush1.msra.mxu0 0.0
    %1316 = vmatprep.subr.mxu0 0.0
    %1317 = vmatpush1.msra.mxu0 0.0
    %1318 = vmatprep.subr.mxu0 0.0
    %1319 = vmatpush1.msra.mxu0 0.0
    %1320 = vmatprep.subr.mxu0 0.0
    %1321 = vmatpush1.msra.mxu0 0.0
    %1322 = vmatprep.subr.mxu0 0.0
    %1323 = vmatpush1.msra.mxu0 0.0
    %1324 = vmatprep.subr.mxu0 0.0
    %1325 = vmatpush1.msra.mxu0 0.0
    %1326 = vmatprep.subr.mxu0 0.0
    %1327 = vmatpush1.msra.mxu0 0.0
    %1328 = vmatprep.subr.mxu0 0.0
    %1329 = vmatpush1.msra.mxu0 0.0
    %1330 = vmatprep.subr.mxu0 0.0
    %1331 = vmatpush1.msra.mxu0 0.0
    %1332 = vmatprep.subr.mxu0 0.0
    %1333 = vmatpush1.msra.mxu0 0.0
    %1334 = vmatprep.subr.mxu0 0.0
    %1335 = vmatpush1.msra.mxu0 0.0
    %1336 = vmatprep.subr.mxu0 0.0
    %1337 = vmatpush1.msra.mxu0 0.0
    %1338 = vmatprep.subr.mxu0 0.0
    %1339 = vmatpush1.msra.mxu0 0.0
    %1340 = vmatprep.subr.mxu0 0.0
    %1341 = vmatpush1.msra.mxu0 0.0
    %1342 = vmatprep.subr.mxu0 0.0
    %1343 = vmatpush1.msra.mxu0 0.0
    %1344 = vmatprep.subr.mxu0 0.0
    %1345 = vmatpush1.msra.mxu0 0.0
    %1346 = vmatprep.subr.mxu0 0.0
    %1347 = vmatpush1.msra.mxu0 0.0
    %1348 = vmatprep.subr.mxu0 0.0
    %1349 = vmatpush1.msra.mxu0 0.0
    %1350 = vmatprep.subr.mxu0 0.0
    %1351 = vmatpush1.msra.mxu0 0.0
    %1352 = vmatprep.subr.mxu0 0.0
    %1353 = vmatpush1.msra.mxu0 0.0
    %1354 = vmatprep.subr.mxu0 0.0
    %1355 = vmatpush1.msra.mxu0 0.0
    %1356 = vmatprep.subr.mxu0 0.0
    %1357 = vmatpush1.msra.mxu0 0.0
    %1358 = vmatprep.subr.mxu0 0.0
    %1359 = vmatpush1.msra.mxu0 0.0
    %1360 = vmatprep.subr.mxu0 0.0
    %1361 = vmatpush1.msra.mxu0 0.0
    %1362 = vmatprep.subr.mxu0 0.0
    %1363 = vmatpush1.msra.mxu0 0.0
    %1364 = vmatprep.subr.mxu0 0.0
    %1365 = vmatpush1.msra.mxu0 0.0
    %1366 = vmatprep.subr.mxu0 0.0
    %1367 = vmatpush1.msra.mxu0 0.0
    %1368 = vmatprep.subr.mxu0 0.0
    %1369 = vmatpush1.msra.mxu0 0.0
    %1370 = vmatprep.mubr.f32.mxu0 0.0
    %1371 = vmatmul.mubr.f32.gmra.mrb[0].mxu0 %v1301
    %v1372 = vpop.f32.mrb[0].mxu0
    %v1373 = vadd.f32 %v1292, %v1372
    %v1374 = vpop.f32.mrb[0].mxu0
    %1375 = vmatprep.mubr.f32.mxu0 0.0
    %1376 = vmatmul.mubr.f32.gmra.mrb[0].mxu0 %v1304
    %v1377 = vpop.f32.mrb[0].mxu0
    %v1378 = vadd.f32 %v1297, %v1377
    %v1379 = vpop.f32.mrb[0].mxu0
    %1380 = vdwg.mxu0
    %1381 = vrot.lane.b32.xlu0 %v702, 64
    %v1382 = vpop.permute.xlu0 %1381
    %1383 = vrot.lane.b32.xlu0 %v708, 64
    %v1384 = vpop.permute.xlu0 %1383
    %1385 = vrot.lane.b32.xlu0 %v704, 64
    %v1386 = vpop.permute.xlu0 %1385
    %1387 = vrot.lane.b32.xlu0 %v710, 64
    %v1388 = vpop.permute.xlu0 %1387
    %v1389 = vsel %vm825, %v1382, 0
    %v1391 = vsel %vm825, %v1384, 0
    %v1393 = vsel %vm825, %v1386, 0
    %v1395 = vsel %vm825, %v1388, 0
    %1397 = vmatprep.subr.mxu0 0.0
    %1398 = vmatpush1.xpose.msra.mxu0 %v1393
    %1399 = vmatprep.subr.mxu0 0.0
    %1400 = vmatpush1.xpose.msra.mxu0 %v1395
    %1401 = vmatprep.subr.mxu0 0.0
    %1402 = vmatpush1.xpose.msra.mxu0 0.0
    %1403 = vmatprep.subr.mxu0 0.0
    %1404 = vmatpush1.xpose.msra.mxu0 0.0
    %1405 = vmatprep.subr.mxu0 0.0
    %1406 = vmatpush1.xpose.msra.mxu0 0.0
    %1407 = vmatprep.subr.mxu0 0.0
    %1408 = vmatpush1.xpose.msra.mxu0 0.0
    %1409 = vmatprep.subr.mxu0 0.0
    %1410 = vmatpush1.xpose.msra.mxu0 0.0
    %1411 = vmatprep.subr.mxu0 0.0
    %1412 = vmatpush1.xpose.msra.mxu0 0.0
    %1413 = vmatprep.subr.mxu0 0.0
    %1414 = vmatpush1.xpose.msra.mxu0 0.0
    %1415 = vmatprep.subr.mxu0 0.0
    %1416 = vmatpush1.xpose.msra.mxu0 0.0
    %1417 = vmatprep.subr.mxu0 0.0
    %1418 = vmatpush1.xpose.msra.mxu0 0.0
    %1419 = vmatprep.subr.mxu0 0.0
    %1420 = vmatpush1.xpose.msra.mxu0 0.0
    %1421 = vmatprep.subr.mxu0 0.0
    %1422 = vmatpush1.xpose.msra.mxu0 0.0
    %1423 = vmatprep.subr.mxu0 0.0
    %1424 = vmatpush1.xpose.msra.mxu0 0.0
    %1425 = vmatprep.subr.mxu0 0.0
    %1426 = vmatpush1.xpose.msra.mxu0 0.0
    %1427 = vmatprep.subr.mxu0 0.0
    %1428 = vmatpush1.xpose.msra.mxu0 0.0
    %1429 = vmatprep.subr.mxu0 0.0
    %1430 = vmatpush1.xpose.msra.mxu0 0.0
    %1431 = vmatprep.subr.mxu0 0.0
    %1432 = vmatpush1.xpose.msra.mxu0 0.0
    %1433 = vmatprep.subr.mxu0 0.0
    %1434 = vmatpush1.xpose.msra.mxu0 0.0
    %1435 = vmatprep.subr.mxu0 0.0
    %1436 = vmatpush1.xpose.msra.mxu0 0.0
    %1437 = vmatprep.subr.mxu0 0.0
    %1438 = vmatpush1.xpose.msra.mxu0 0.0
    %1439 = vmatprep.subr.mxu0 0.0
    %1440 = vmatpush1.xpose.msra.mxu0 0.0
    %1441 = vmatprep.subr.mxu0 0.0
    %1442 = vmatpush1.xpose.msra.mxu0 0.0
    %1443 = vmatprep.subr.mxu0 0.0
    %1444 = vmatpush1.xpose.msra.mxu0 0.0
    %1445 = vmatprep.subr.mxu0 0.0
    %1446 = vmatpush1.xpose.msra.mxu0 0.0
    %1447 = vmatprep.subr.mxu0 0.0
    %1448 = vmatpush1.xpose.msra.mxu0 0.0
    %1449 = vmatprep.subr.mxu0 0.0
    %1450 = vmatpush1.xpose.msra.mxu0 0.0
    %1451 = vmatprep.subr.mxu0 0.0
    %1452 = vmatpush1.xpose.msra.mxu0 0.0
    %1453 = vmatprep.subr.mxu0 0.0
    %1454 = vmatpush1.xpose.msra.mxu0 0.0
    %1455 = vmatprep.subr.mxu0 0.0
    %1456 = vmatpush1.xpose.msra.mxu0 0.0
    %1457 = vmatprep.subr.mxu0 0.0
    %1458 = vmatpush1.xpose.msra.mxu0 0.0
    %1459 = vmatprep.subr.mxu0 0.0
    %1460 = vmatpush1.xpose.msra.mxu0 0.0
    %1461 = vmatprep.mubr.f32.mxu0 0.0
    %1462 = vmatmul.mubr.f32.gmra.mrb[0].mxu0 %v1389
    %v1463 = vpop.f32.mrb[0].mxu0
    %v1464 = vadd.f32 0.0, %v1463
    %v1465 = vpop.f32.mrb[0].mxu0
    %1466 = vmatprep.mubr.f32.mxu0 0.0
    %1467 = vmatmul.mubr.f32.gmra.mrb[0].mxu0 %v1391
    %v1468 = vpop.f32.mrb[0].mxu0
    %v1469 = vadd.f32 0.0, %v1468
    %v1470 = vpop.f32.mrb[0].mxu0
    %1471 = vdwg.mxu0
    %v1472 = vsel %vm913, %v1464, -inf
    %1473 = vmax.xlane.f32.xlu0 %v1472
    %v1474 = vpop.xlane.xlu0 %1473
    %v1475 = vsel %vm913, %v1469, -inf
    %1476 = vmax.xlane.f32.xlu0 %v1475
    %v1477 = vpop.xlane.xlu0 %1476
    %v1478 = vsub.f32 %v1464, %v1474
    %v1479 = vsub.f32 %v1469, %v1477
    %v1480 = vmul.f32 %v1478, 1.442695
    %v1481 = vpow.pop %v1480
    %v1482 = vmul.f32 %v1479, 1.442695
    %v1483 = vpow.pop %v1482
    %v1484 = vsel %vm913, %v1481, 0.0
    %1485 = vadd.xlane.f32.xlu0 %v1484
    %v1486 = vpop.xlane.xlu0 %1485
    %v1487 = vsel %vm913, %v1483, 0.0
    %1488 = vadd.xlane.f32.xlu0 %v1487
    %v1489 = vpop.xlane.xlu0 %1488
    %v1490 = vrcp.pop %v1486
    %v1491 = vrcp.pop %v1489
    %v1492 = vmul.f32 %v1481, %v1490
    %v1493 = vmul.f32 %v1483, %v1491
    %1494 = vrot.lane.b32.xlu0 %v791, 64
    %v1495 = vpop.permute.xlu0 %1494
    %1496 = vrot.lane.b32.xlu0 %v796, 64
    %v1497 = vpop.permute.xlu0 %1496
    %v1501 = vsel %vm913, %v1492, 0
    %v1504 = vsel %vm913, %v1493, 0
    %1506 = vmatprep.subr.mxu0 0.0
    %1507 = vmatpush1.msra.mxu0 %v1495
    %1508 = vmatprep.subr.mxu0 0.0
    %1509 = vmatpush1.msra.mxu0 %v1497
    %1510 = vmatprep.subr.mxu0 0.0
    %1511 = vmatpush1.msra.mxu0 0.0
    %1512 = vmatprep.subr.mxu0 0.0
    %1513 = vmatpush1.msra.mxu0 0.0
    %1514 = vmatprep.subr.mxu0 0.0
    %1515 = vmatpush1.msra.mxu0 0.0
    %1516 = vmatprep.subr.mxu0 0.0
    %1517 = vmatpush1.msra.mxu0 0.0
    %1518 = vmatprep.subr.mxu0 0.0
    %1519 = vmatpush1.msra.mxu0 0.0
    %1520 = vmatprep.subr.mxu0 0.0
    %1521 = vmatpush1.msra.mxu0 0.0
    %1522 = vmatprep.subr.mxu0 0.0
    %1523 = vmatpush1.msra.mxu0 0.0
    %1524 = vmatprep.subr.mxu0 0.0
    %1525 = vmatpush1.msra.mxu0 0.0
    %1526 = vmatprep.subr.mxu0 0.0
    %1527 = vmatpush1.msra.mxu0 0.0
    %1528 = vmatprep.subr.mxu0 0.0
    %1529 = vmatpush1.msra.mxu0 0.0
    %1530 = vmatprep.subr.mxu0 0.0
    %1531 = vmatpush1.msra.mxu0 0.0
    %1532 = vmatprep.subr.mxu0 0.0
    %1533 = vmatpush1.msra.mxu0 0.0
    %1534 = vmatprep.subr.mxu0 0.0
    %1535 = vmatpush1.msra.mxu0 0.0
    %1536 = vmatprep.subr.mxu0 0.0
    %1537 = vmatpush1.msra.mxu0 0.0
    %1538 = vmatprep.subr.mxu0 0.0
    %1539 = vmatpush1.msra.mxu0 0.0
    %1540 = vmatprep.subr.mxu0 0.0
    %1541 = vmatpush1.msra.mxu0 0.0
    %1542 = vmatprep.subr.mxu0 0.0
    %1543 = vmatpush1.msra.mxu0 0.0
    %1544 = vmatprep.subr.mxu0 0.0
    %1545 = vmatpush1.msra.mxu0 0.0
    %1546 = vmatprep.subr.mxu0 0.0
    %1547 = vmatpush1.msra.mxu0 0.0
    %1548 = vmatprep.subr.mxu0 0.0
    %1549 = vmatpush1.msra.mxu0 0.0
    %1550 = vmatprep.subr.mxu0 0.0
    %1551 = vmatpush1.msra.mxu0 0.0
    %1552 = vmatprep.subr.mxu0 0.0
    %1553 = vmatpush1.msra.mxu0 0.0
    %1554 = vmatprep.subr.mxu0 0.0
    %1555 = vmatpush1.msra.mxu0 0.0
    %1556 = vmatprep.subr.mxu0 0.0
    %1557 = vmatpush1.msra.mxu0 0.0
    %1558 = vmatprep.subr.mxu0 0.0
    %1559 = vmatpush1.msra.mxu0 0.0
    %1560 = vmatprep.subr.mxu0 0.0
    %1561 = vmatpush1.msra.mxu0 0.0
    %1562 = vmatprep.subr.mxu0 0.0
    %1563 = vmatpush1.msra.mxu0 0.0
    %1564 = vmatprep.subr.mxu0 0.0
    %1565 = vmatpush1.msra.mxu0 0.0
    %1566 = vmatprep.subr.mxu0 0.0
    %1567 = vmatpush1.msra.mxu0 0.0
    %1568 = vmatprep.subr.mxu0 0.0
    %1569 = vmatpush1.msra.mxu0 0.0
    %1570 = vmatprep.mubr.f32.mxu0 0.0
    %1571 = vmatmul.mubr.f32.gmra.mrb[0].mxu0 %v1501
    %v1572 = vpop.f32.mrb[0].mxu0
    %v1573 = vadd.f32 0.0, %v1572
    %v1574 = vpop.f32.mrb[0].mxu0
    %1575 = vmatprep.mubr.f32.mxu0 0.0
    %1576 = vmatmul.mubr.f32.gmra.mrb[0].mxu0 %v1504
    %v1577 = vpop.f32.mrb[0].mxu0
    %v1578 = vadd.f32 0.0, %v1577
    %v1579 = vpop.f32.mrb[0].mxu0
    %1580 = vdwg.mxu0
    %v1582 = vsel %vm825, %v1573, 0
    %v1585 = vsel %vm825, %v1578, 0
    %1587 = vmatprep.subr.mxu0 0.0
    %1588 = vmatpush1.msra.mxu0 %v817
    %1589 = vmatprep.subr.mxu0 0.0
    %1590 = vmatpush1.msra.mxu0 %v818
    %1591 = vmatprep.subr.mxu0 0.0
    %1592 = vmatpush1.msra.mxu0 %v819
    %1593 = vmatprep.subr.mxu0 0.0
    %1594 = vmatpush1.msra.mxu0 %v820
    %1595 = vmatprep.subr.mxu0 0.0
    %1596 = vmatpush1.msra.mxu0 0.0
    %1597 = vmatprep.subr.mxu0 0.0
    %1598 = vmatpush1.msra.mxu0 0.0
    %1599 = vmatprep.subr.mxu0 0.0
    %1600 = vmatpush1.msra.mxu0 0.0
    %1601 = vmatprep.subr.mxu0 0.0
    %1602 = vmatpush1.msra.mxu0 0.0
    %1603 = vmatprep.subr.mxu0 0.0
    %1604 = vmatpush1.msra.mxu0 0.0
    %1605 = vmatprep.subr.mxu0 0.0
    %1606 = vmatpush1.msra.mxu0 0.0
    %1607 = vmatprep.subr.mxu0 0.0
    %1608 = vmatpush1.msra.mxu0 0.0
    %1609 = vmatprep.subr.mxu0 0.0
    %1610 = vmatpush1.msra.mxu0 0.0
    %1611 = vmatprep.subr.mxu0 0.0
    %1612 = vmatpush1.msra.mxu0 0.0
    %1613 = vmatprep.subr.mxu0 0.0
    %1614 = vmatpush1.msra.mxu0 0.0
    %1615 = vmatprep.subr.mxu0 0.0
    %1616 = vmatpush1.msra.mxu0 0.0
    %1617 = vmatprep.subr.mxu0 0.0
    %1618 = vmatpush1.msra.mxu0 0.0
    %1619 = vmatprep.subr.mxu0 0.0
    %1620 = vmatpush1.msra.mxu0 0.0
    %1621 = vmatprep.subr.mxu0 0.0
    %1622 = vmatpush1.msra.mxu0 0.0
    %1623 = vmatprep.subr.mxu0 0.0
    %1624 = vmatpush1.msra.mxu0 0.0
    %1625 = vmatprep.subr.mxu0 0.0
    %1626 = vmatpush1.msra.mxu0 0.0
    %1627 = vmatprep.subr.mxu0 0.0
    %1628 = vmatpush1.msra.mxu0 0.0
    %1629 = vmatprep.subr.mxu0 0.0
    %1630 = vmatpush1.msra.mxu0 0.0
    %1631 = vmatprep.subr.mxu0 0.0
    %1632 = vmatpush1.msra.mxu0 0.0
    %1633 = vmatprep.subr.mxu0 0.0
    %1634 = vmatpush1.msra.mxu0 0.0
    %1635 = vmatprep.subr.mxu0 0.0
    %1636 = vmatpush1.msra.mxu0 0.0
    %1637 = vmatprep.subr.mxu0 0.0
    %1638 = vmatpush1.msra.mxu0 0.0
    %1639 = vmatprep.subr.mxu0 0.0
    %1640 = vmatpush1.msra.mxu0 0.0
    %1641 = vmatprep.subr.mxu0 0.0
    %1642 = vmatpush1.msra.mxu0 0.0
    %1643 = vmatprep.subr.mxu0 0.0
    %1644 = vmatpush1.msra.mxu0 0.0
    %1645 = vmatprep.subr.mxu0 0.0
    %1646 = vmatpush1.msra.mxu0 0.0
    %1647 = vmatprep.subr.mxu0 0.0
    %1648 = vmatpush1.msra.mxu0 0.0
    %1649 = vmatprep.subr.mxu0 0.0
    %1650 = vmatpush1.msra.mxu0 0.0
    %1651 = vmatprep.mubr.f32.mxu0 0.0
    %1652 = vmatmul.mubr.f32.gmra.mrb[0].mxu0 %v1582
    %v1653 = vpop.f32.mrb[0].mxu0
    %v1654 = vadd.f32 0.0, %v1653
    %v1655 = vpop.f32.mrb[0].mxu0
    %1656 = vmatprep.mubr.f32.mxu0 0.0
    %1657 = vmatmul.mubr.f32.gmra.mrb[0].mxu0 %v1585
    %v1658 = vpop.f32.mrb[0].mxu0
    %v1659 = vadd.f32 0.0, %v1658
    %v1660 = vpop.f32.mrb[0].mxu0
    %1661 = vdwg.mxu0
    %v1662 = vadd.f32 %v1373, %v1654
    %v1663 = vadd.f32 %v1378, %v1659
    %1664 = vrot.lane.b32.xlu0 %v702, 32
    %v1665 = vpop.permute.xlu0 %1664
    %1666 = vrot.lane.b32.xlu0 %v708, 32
    %v1667 = vpop.permute.xlu0 %1666
    %1668 = vrot.lane.b32.xlu0 %v704, 32
    %v1669 = vpop.permute.xlu0 %1668
    %1670 = vrot.lane.b32.xlu0 %v710, 32
    %v1671 = vpop.permute.xlu0 %1670
    %v1672 = vsel %vm825, %v1665, 0
    %v1674 = vsel %vm825, %v1667, 0
    %v1676 = vsel %vm825, %v1669, 0
    %v1678 = vsel %vm825, %v1671, 0
    %1680 = vmatprep.subr.mxu0 0.0
    %1681 = vmatpush1.xpose.msra.mxu0 %v1676
    %1682 = vmatprep.subr.mxu0 0.0
    %1683 = vmatpush1.xpose.msra.mxu0 %v1678
    %1684 = vmatprep.subr.mxu0 0.0
    %1685 = vmatpush1.xpose.msra.mxu0 0.0
    %1686 = vmatprep.subr.mxu0 0.0
    %1687 = vmatpush1.xpose.msra.mxu0 0.0
    %1688 = vmatprep.subr.mxu0 0.0
    %1689 = vmatpush1.xpose.msra.mxu0 0.0
    %1690 = vmatprep.subr.mxu0 0.0
    %1691 = vmatpush1.xpose.msra.mxu0 0.0
    %1692 = vmatprep.subr.mxu0 0.0
    %1693 = vmatpush1.xpose.msra.mxu0 0.0
    %1694 = vmatprep.subr.mxu0 0.0
    %1695 = vmatpush1.xpose.msra.mxu0 0.0
    %1696 = vmatprep.subr.mxu0 0.0
    %1697 = vmatpush1.xpose.msra.mxu0 0.0
    %1698 = vmatprep.subr.mxu0 0.0
    %1699 = vmatpush1.xpose.msra.mxu0 0.0
    %1700 = vmatprep.subr.mxu0 0.0
    %1701 = vmatpush1.xpose.msra.mxu0 0.0
    %1702 = vmatprep.subr.mxu0 0.0
    %1703 = vmatpush1.xpose.msra.mxu0 0.0
    %1704 = vmatprep.subr.mxu0 0.0
    %1705 = vmatpush1.xpose.msra.mxu0 0.0
    %1706 = vmatprep.subr.mxu0 0.0
    %1707 = vmatpush1.xpose.msra.mxu0 0.0
    %1708 = vmatprep.subr.mxu0 0.0
    %1709 = vmatpush1.xpose.msra.mxu0 0.0
    %1710 = vmatprep.subr.mxu0 0.0
    %1711 = vmatpush1.xpose.msra.mxu0 0.0
    %1712 = vmatprep.subr.mxu0 0.0
    %1713 = vmatpush1.xpose.msra.mxu0 0.0
    %1714 = vmatprep.subr.mxu0 0.0
    %1715 = vmatpush1.xpose.msra.mxu0 0.0
    %1716 = vmatprep.subr.mxu0 0.0
    %1717 = vmatpush1.xpose.msra.mxu0 0.0
    %1718 = vmatprep.subr.mxu0 0.0
    %1719 = vmatpush1.xpose.msra.mxu0 0.0
    %1720 = vmatprep.subr.mxu0 0.0
    %1721 = vmatpush1.xpose.msra.mxu0 0.0
    %1722 = vmatprep.subr.mxu0 0.0
    %1723 = vmatpush1.xpose.msra.mxu0 0.0
    %1724 = vmatprep.subr.mxu0 0.0
    %1725 = vmatpush1.xpose.msra.mxu0 0.0
    %1726 = vmatprep.subr.mxu0 0.0
    %1727 = vmatpush1.xpose.msra.mxu0 0.0
    %1728 = vmatprep.subr.mxu0 0.0
    %1729 = vmatpush1.xpose.msra.mxu0 0.0
    %1730 = vmatprep.subr.mxu0 0.0
    %1731 = vmatpush1.xpose.msra.mxu0 0.0
    %1732 = vmatprep.subr.mxu0 0.0
    %1733 = vmatpush1.xpose.msra.mxu0 0.0
    %1734 = vmatprep.subr.mxu0 0.0
    %1735 = vmatpush1.xpose.msra.mxu0 0.0
    %1736 = vmatprep.subr.mxu0 0.0
    %1737 = vmatpush1.xpose.msra.mxu0 0.0
    %1738 = vmatprep.subr.mxu0 0.0
    %1739 = vmatpush1.xpose.msra.mxu0 0.0
    %1740 = vmatprep.subr.mxu0 0.0
    %1741 = vmatpush1.xpose.msra.mxu0 0.0
    %1742 = vmatprep.subr.mxu0 0.0
    %1743 = vmatpush1.xpose.msra.mxu0 0.0
    %1744 = vmatprep.mubr.f32.mxu0 0.0
    %1745 = vmatmul.mubr.f32.gmra.mrb[0].mxu0 %v1672
    %v1746 = vpop.f32.mrb[0].mxu0
    %v1747 = vadd.f32 0.0, %v1746
    %v1748 = vpop.f32.mrb[0].mxu0
    %1749 = vmatprep.mubr.f32.mxu0 0.0
    %1750 = vmatmul.mubr.f32.gmra.mrb[0].mxu0 %v1674
    %v1751 = vpop.f32.mrb[0].mxu0
    %v1752 = vadd.f32 0.0, %v1751
    %v1753 = vpop.f32.mrb[0].mxu0
    %1754 = vdwg.mxu0
    %v1755 = vsel %vm913, %v1747, -inf
    %1756 = vmax.xlane.f32.xlu0 %v1755
    %v1757 = vpop.xlane.xlu0 %1756
    %v1758 = vsel %vm913, %v1752, -inf
    %1759 = vmax.xlane.f32.xlu0 %v1758
    %v1760 = vpop.xlane.xlu0 %1759
    %v1761 = vsub.f32 %v1747, %v1757
    %v1762 = vsub.f32 %v1752, %v1760
    %v1763 = vmul.f32 %v1761, 1.442695
    %v1764 = vpow.pop %v1763
    %v1765 = vmul.f32 %v1762, 1.442695
    %v1766 = vpow.pop %v1765
    %v1767 = vsel %vm913, %v1764, 0.0
    %1768 = vadd.xlane.f32.xlu0 %v1767
    %v1769 = vpop.xlane.xlu0 %1768
    %v1770 = vsel %vm913, %v1766, 0.0
    %1771 = vadd.xlane.f32.xlu0 %v1770
    %v1772 = vpop.xlane.xlu0 %1771
    %v1773 = vrcp.pop %v1769
    %v1774 = vrcp.pop %v1772
    %v1775 = vmul.f32 %v1764, %v1773
    %v1776 = vmul.f32 %v1766, %v1774
    %1777 = vrot.lane.b32.xlu0 %v791, 32
    %v1778 = vpop.permute.xlu0 %1777
    %1779 = vrot.lane.b32.xlu0 %v796, 32
    %v1780 = vpop.permute.xlu0 %1779
    %v1784 = vsel %vm913, %v1775, 0
    %v1787 = vsel %vm913, %v1776, 0
    %1789 = vmatprep.subr.mxu0 0.0
    %1790 = vmatpush1.msra.mxu0 %v1778
    %1791 = vmatprep.subr.mxu0 0.0
    %1792 = vmatpush1.msra.mxu0 %v1780
    %1793 = vmatprep.subr.mxu0 0.0
    %1794 = vmatpush1.msra.mxu0 0.0
    %1795 = vmatprep.subr.mxu0 0.0
    %1796 = vmatpush1.msra.mxu0 0.0
    %1797 = vmatprep.subr.mxu0 0.0
    %1798 = vmatpush1.msra.mxu0 0.0
    %1799 = vmatprep.subr.mxu0 0.0
    %1800 = vmatpush1.msra.mxu0 0.0
    %1801 = vmatprep.subr.mxu0 0.0
    %1802 = vmatpush1.msra.mxu0 0.0
    %1803 = vmatprep.subr.mxu0 0.0
    %1804 = vmatpush1.msra.mxu0 0.0
    %1805 = vmatprep.subr.mxu0 0.0
    %1806 = vmatpush1.msra.mxu0 0.0
    %1807 = vmatprep.subr.mxu0 0.0
    %1808 = vmatpush1.msra.mxu0 0.0
    %1809 = vmatprep.subr.mxu0 0.0
    %1810 = vmatpush1.msra.mxu0 0.0
    %1811 = vmatprep.subr.mxu0 0.0
    %1812 = vmatpush1.msra.mxu0 0.0
    %1813 = vmatprep.subr.mxu0 0.0
    %1814 = vmatpush1.msra.mxu0 0.0
    %1815 = vmatprep.subr.mxu0 0.0
    %1816 = vmatpush1.msra.mxu0 0.0
    %1817 = vmatprep.subr.mxu0 0.0
    %1818 = vmatpush1.msra.mxu0 0.0
    %1819 = vmatprep.subr.mxu0 0.0
    %1820 = vmatpush1.msra.mxu0 0.0
    %1821 = vmatprep.subr.mxu0 0.0
    %1822 = vmatpush1.msra.mxu0 0.0
    %1823 = vmatprep.subr.mxu0 0.0
    %1824 = vmatpush1.msra.mxu0 0.0
    %1825 = vmatprep.subr.mxu0 0.0
    %1826 = vmatpush1.msra.mxu0 0.0
    %1827 = vmatprep.subr.mxu0 0.0
    %1828 = vmatpush1.msra.mxu0 0.0
    %1829 = vmatprep.subr.mxu0 0.0
    %1830 = vmatpush1.msra.mxu0 0.0
    %1831 = vmatprep.subr.mxu0 0.0
    %1832 = vmatpush1.msra.mxu0 0.0
    %1833 = vmatprep.subr.mxu0 0.0
    %1834 = vmatpush1.msra.mxu0 0.0
    %1835 = vmatprep.subr.mxu0 0.0
    %1836 = vmatpush1.msra.mxu0 0.0
    %1837 = vmatprep.subr.mxu0 0.0
    %1838 = vmatpush1.msra.mxu0 0.0
    %1839 = vmatprep.subr.mxu0 0.0
    %1840 = vmatpush1.msra.mxu0 0.0
    %1841 = vmatprep.subr.mxu0 0.0
    %1842 = vmatpush1.msra.mxu0 0.0
    %1843 = vmatprep.subr.mxu0 0.0
    %1844 = vmatpush1.msra.mxu0 0.0
    %1845 = vmatprep.subr.mxu0 0.0
    %1846 = vmatpush1.msra.mxu0 0.0
    %1847 = vmatprep.subr.mxu0 0.0
    %1848 = vmatpush1.msra.mxu0 0.0
    %1849 = vmatprep.subr.mxu0 0.0
    %1850 = vmatpush1.msra.mxu0 0.0
    %1851 = vmatprep.subr.mxu0 0.0
    %1852 = vmatpush1.msra.mxu0 0.0
    %1853 = vmatprep.mubr.f32.mxu0 0.0
    %1854 = vmatmul.mubr.f32.gmra.mrb[0].mxu0 %v1784
    %v1855 = vpop.f32.mrb[0].mxu0
    %v1856 = vadd.f32 0.0, %v1855
    %v1857 = vpop.f32.mrb[0].mxu0
    %1858 = vmatprep.mubr.f32.mxu0 0.0
    %1859 = vmatmul.mubr.f32.gmra.mrb[0].mxu0 %v1787
    %v1860 = vpop.f32.mrb[0].mxu0
    %v1861 = vadd.f32 0.0, %v1860
    %v1862 = vpop.f32.mrb[0].mxu0
    %1863 = vdwg.mxu0
    %v1865 = vsel %vm825, %v1856, 0
    %v1868 = vsel %vm825, %v1861, 0
    %1870 = vmatprep.subr.mxu0 0.0
    %1871 = vmatpush1.msra.mxu0 %v821
    %1872 = vmatprep.subr.mxu0 0.0
    %1873 = vmatpush1.msra.mxu0 %v822
    %1874 = vmatprep.subr.mxu0 0.0
    %1875 = vmatpush1.msra.mxu0 %v823
    %1876 = vmatprep.subr.mxu0 0.0
    %1877 = vmatpush1.msra.mxu0 %v824
    %1878 = vmatprep.subr.mxu0 0.0
    %1879 = vmatpush1.msra.mxu0 0.0
    %1880 = vmatprep.subr.mxu0 0.0
    %1881 = vmatpush1.msra.mxu0 0.0
    %1882 = vmatprep.subr.mxu0 0.0
    %1883 = vmatpush1.msra.mxu0 0.0
    %1884 = vmatprep.subr.mxu0 0.0
    %1885 = vmatpush1.msra.mxu0 0.0
    %1886 = vmatprep.subr.mxu0 0.0
    %1887 = vmatpush1.msra.mxu0 0.0
    %1888 = vmatprep.subr.mxu0 0.0
    %1889 = vmatpush1.msra.mxu0 0.0
    %1890 = vmatprep.subr.mxu0 0.0
    %1891 = vmatpush1.msra.mxu0 0.0
    %1892 = vmatprep.subr.mxu0 0.0
    %1893 = vmatpush1.msra.mxu0 0.0
    %1894 = vmatprep.subr.mxu0 0.0
    %1895 = vmatpush1.msra.mxu0 0.0
    %1896 = vmatprep.subr.mxu0 0.0
    %1897 = vmatpush1.msra.mxu0 0.0
    %1898 = vmatprep.subr.mxu0 0.0
    %1899 = vmatpush1.msra.mxu0 0.0
    %1900 = vmatprep.subr.mxu0 0.0
    %1901 = vmatpush1.msra.mxu0 0.0
    %1902 = vmatprep.subr.mxu0 0.0
    %1903 = vmatpush1.msra.mxu0 0.0
    %1904 = vmatprep.subr.mxu0 0.0
    %1905 = vmatpush1.msra.mxu0 0.0
    %1906 = vmatprep.subr.mxu0 0.0
    %1907 = vmatpush1.msra.mxu0 0.0
    %1908 = vmatprep.subr.mxu0 0.0
    %1909 = vmatpush1.msra.mxu0 0.0
    %1910 = vmatprep.subr.mxu0 0.0
    %1911 = vmatpush1.msra.mxu0 0.0
    %1912 = vmatprep.subr.mxu0 0.0
    %1913 = vmatpush1.msra.mxu0 0.0
    %1914 = vmatprep.subr.mxu0 0.0
    %1915 = vmatpush1.msra.mxu0 0.0
    %1916 = vmatprep.subr.mxu0 0.0
    %1917 = vmatpush1.msra.mxu0 0.0
    %1918 = vmatprep.subr.mxu0 0.0
    %1919 = vmatpush1.msra.mxu0 0.0
    %1920 = vmatprep.subr.mxu0 0.0
    %1921 = vmatpush1.msra.mxu0 0.0
    %1922 = vmatprep.subr.mxu0 0.0
    %1923 = vmatpush1.msra.mxu0 0.0
    %1924 = vmatprep.subr.mxu0 0.0
    %1925 = vmatpush1.msra.mxu0 0.0
    %1926 = vmatprep.subr.mxu0 0.0
    %1927 = vmatpush1.msra.mxu0 0.0
    %1928 = vmatprep.subr.mxu0 0.0
    %1929 = vmatpush1.msra.mxu0 0.0
    %1930 = vmatprep.subr.mxu0 0.0
    %1931 = vmatpush1.msra.mxu0 0.0
    %1932 = vmatprep.subr.mxu0 0.0
    %1933 = vmatpush1.msra.mxu0 0.0
    %1934 = vmatprep.mubr.f32.mxu0 0.0
    %1935 = vmatmul.mubr.f32.gmra.mrb[0].mxu0 %v1865
    %v1936 = vpop.f32.mrb[0].mxu0
    %v1937 = vadd.f32 0.0, %v1936
    %v1938 = vpop.f32.mrb[0].mxu0
    %1939 = vmatprep.mubr.f32.mxu0 0.0
    %1940 = vmatmul.mubr.f32.gmra.mrb[0].mxu0 %v1868
    %v1941 = vpop.f32.mrb[0].mxu0
    %v1942 = vadd.f32 0.0, %v1941
    %v1943 = vpop.f32.mrb[0].mxu0
    %1944 = vdwg.mxu0
    %v1945 = vadd.f32 %v1662, %v1937
    %v1946 = vadd.f32 %v1663, %v1942
    %v1948 = vsel %vm825, %v714, 0
    %v1951 = vsel %vm825, %v720, 0
    %v1954 = vsel %vm825, %v716, 0
    %v1957 = vsel %vm825, %v722, 0
    %1959 = vmatprep.subr.mxu0 0.0
    %1960 = vmatpush1.xpose.msra.mxu0 %v1954
    %1961 = vmatprep.subr.mxu0 0.0
    %1962 = vmatpush1.xpose.msra.mxu0 %v1957
    %1963 = vmatprep.subr.mxu0 0.0
    %1964 = vmatpush1.xpose.msra.mxu0 0.0
    %1965 = vmatprep.subr.mxu0 0.0
    %1966 = vmatpush1.xpose.msra.mxu0 0.0
    %1967 = vmatprep.subr.mxu0 0.0
    %1968 = vmatpush1.xpose.msra.mxu0 0.0
    %1969 = vmatprep.subr.mxu0 0.0
    %1970 = vmatpush1.xpose.msra.mxu0 0.0
    %1971 = vmatprep.subr.mxu0 0.0
    %1972 = vmatpush1.xpose.msra.mxu0 0.0
    %1973 = vmatprep.subr.mxu0 0.0
    %1974 = vmatpush1.xpose.msra.mxu0 0.0
    %1975 = vmatprep.subr.mxu0 0.0
    %1976 = vmatpush1.xpose.msra.mxu0 0.0
    %1977 = vmatprep.subr.mxu0 0.0
    %1978 = vmatpush1.xpose.msra.mxu0 0.0
    %1979 = vmatprep.subr.mxu0 0.0
    %1980 = vmatpush1.xpose.msra.mxu0 0.0
    %1981 = vmatprep.subr.mxu0 0.0
    %1982 = vmatpush1.xpose.msra.mxu0 0.0
    %1983 = vmatprep.subr.mxu0 0.0
    %1984 = vmatpush1.xpose.msra.mxu0 0.0
    %1985 = vmatprep.subr.mxu0 0.0
    %1986 = vmatpush1.xpose.msra.mxu0 0.0
    %1987 = vmatprep.subr.mxu0 0.0
    %1988 = vmatpush1.xpose.msra.mxu0 0.0
    %1989 = vmatprep.subr.mxu0 0.0
    %1990 = vmatpush1.xpose.msra.mxu0 0.0
    %1991 = vmatprep.subr.mxu0 0.0
    %1992 = vmatpush1.xpose.msra.mxu0 0.0
    %1993 = vmatprep.subr.mxu0 0.0
    %1994 = vmatpush1.xpose.msra.mxu0 0.0
    %1995 = vmatprep.subr.mxu0 0.0
    %1996 = vmatpush1.xpose.msra.mxu0 0.0
    %1997 = vmatprep.subr.mxu0 0.0
    %1998 = vmatpush1.xpose.msra.mxu0 0.0
    %1999 = vmatprep.subr.mxu0 0.0
    %2000 = vmatpush1.xpose.msra.mxu0 0.0
    %2001 = vmatprep.subr.mxu0 0.0
    %2002 = vmatpush1.xpose.msra.mxu0 0.0
    %2003 = vmatprep.subr.mxu0 0.0
    %2004 = vmatpush1.xpose.msra.mxu0 0.0
    %2005 = vmatprep.subr.mxu0 0.0
    %2006 = vmatpush1.xpose.msra.mxu0 0.0
    %2007 = vmatprep.subr.mxu0 0.0
    %2008 = vmatpush1.xpose.msra.mxu0 0.0
    %2009 = vmatprep.subr.mxu0 0.0
    %2010 = vmatpush1.xpose.msra.mxu0 0.0
    %2011 = vmatprep.subr.mxu0 0.0
    %2012 = vmatpush1.xpose.msra.mxu0 0.0
    %2013 = vmatprep.subr.mxu0 0.0
    %2014 = vmatpush1.xpose.msra.mxu0 0.0
    %2015 = vmatprep.subr.mxu0 0.0
    %2016 = vmatpush1.xpose.msra.mxu0 0.0
    %2017 = vmatprep.subr.mxu0 0.0
    %2018 = vmatpush1.xpose.msra.mxu0 0.0
    %2019 = vmatprep.subr.mxu0 0.0
    %2020 = vmatpush1.xpose.msra.mxu0 0.0
    %2021 = vmatprep.subr.mxu0 0.0
    %2022 = vmatpush1.xpose.msra.mxu0 0.0
    %2023 = vmatprep.mubr.f32.mxu0 0.0
    %2024 = vmatmul.mubr.f32.gmra.mrb[0].mxu0 %v1948
    %v2025 = vpop.f32.mrb[0].mxu0
    %v2026 = vadd.f32 0.0, %v2025
    %v2027 = vpop.f32.mrb[0].mxu0
    %2028 = vmatprep.mubr.f32.mxu0 0.0
    %2029 = vmatmul.mubr.f32.gmra.mrb[0].mxu0 %v1951
    %v2030 = vpop.f32.mrb[0].mxu0
    %v2031 = vadd.f32 0.0, %v2030
    %v2032 = vpop.f32.mrb[0].mxu0
    %2033 = vdwg.mxu0
    %v2034 = vsel %vm913, %v2026, -inf
    %2035 = vmax.xlane.f32.xlu0 %v2034
    %v2036 = vpop.xlane.xlu0 %2035
    %v2037 = vsel %vm913, %v2031, -inf
    %2038 = vmax.xlane.f32.xlu0 %v2037
    %v2039 = vpop.xlane.xlu0 %2038
    %v2040 = vsub.f32 %v2026, %v2036
    %v2041 = vsub.f32 %v2031, %v2039
    %v2042 = vmul.f32 %v2040, 1.442695
    %v2043 = vpow.pop %v2042
    %v2044 = vmul.f32 %v2041, 1.442695
    %v2045 = vpow.pop %v2044
    %v2046 = vsel %vm913, %v2043, 0.0
    %2047 = vadd.xlane.f32.xlu0 %v2046
    %v2048 = vpop.xlane.xlu0 %2047
    %v2049 = vsel %vm913, %v2045, 0.0
    %2050 = vadd.xlane.f32.xlu0 %v2049
    %v2051 = vpop.xlane.xlu0 %2050
    %v2052 = vrcp.pop %v2048
    %v2053 = vrcp.pop %v2051
    %v2054 = vmul.f32 %v2043, %v2052
    %v2055 = vmul.f32 %v2045, %v2053
    %v2057 = vsel %vm913, %v2054, 0
    %v2060 = vsel %vm913, %v2055, 0
    %2062 = vmatprep.subr.mxu0 0.0
    %2063 = vmatpush1.msra.mxu0 %v801
    %2064 = vmatprep.subr.mxu0 0.0
    %2065 = vmatpush1.msra.mxu0 %v806
    %2066 = vmatprep.subr.mxu0 0.0
    %2067 = vmatpush1.msra.mxu0 0.0
    %2068 = vmatprep.subr.mxu0 0.0
    %2069 = vmatpush1.msra.mxu0 0.0
    %2070 = vmatprep.subr.mxu0 0.0
    %2071 = vmatpush1.msra.mxu0 0.0
    %2072 = vmatprep.subr.mxu0 0.0
    %2073 = vmatpush1.msra.mxu0 0.0
    %2074 = vmatprep.subr.mxu0 0.0
    %2075 = vmatpush1.msra.mxu0 0.0
    %2076 = vmatprep.subr.mxu0 0.0
    %2077 = vmatpush1.msra.mxu0 0.0
    %2078 = vmatprep.subr.mxu0 0.0
    %2079 = vmatpush1.msra.mxu0 0.0
    %2080 = vmatprep.subr.mxu0 0.0
    %2081 = vmatpush1.msra.mxu0 0.0
    %2082 = vmatprep.subr.mxu0 0.0
    %2083 = vmatpush1.msra.mxu0 0.0
    %2084 = vmatprep.subr.mxu0 0.0
    %2085 = vmatpush1.msra.mxu0 0.0
    %2086 = vmatprep.subr.mxu0 0.0
    %2087 = vmatpush1.msra.mxu0 0.0
    %2088 = vmatprep.subr.mxu0 0.0
    %2089 = vmatpush1.msra.mxu0 0.0
    %2090 = vmatprep.subr.mxu0 0.0
    %2091 = vmatpush1.msra.mxu0 0.0
    %2092 = vmatprep.subr.mxu0 0.0
    %2093 = vmatpush1.msra.mxu0 0.0
    %2094 = vmatprep.subr.mxu0 0.0
    %2095 = vmatpush1.msra.mxu0 0.0
    %2096 = vmatprep.subr.mxu0 0.0
    %2097 = vmatpush1.msra.mxu0 0.0
    %2098 = vmatprep.subr.mxu0 0.0
    %2099 = vmatpush1.msra.mxu0 0.0
    %2100 = vmatprep.subr.mxu0 0.0
    %2101 = vmatpush1.msra.mxu0 0.0
    %2102 = vmatprep.subr.mxu0 0.0
    %2103 = vmatpush1.msra.mxu0 0.0
    %2104 = vmatprep.subr.mxu0 0.0
    %2105 = vmatpush1.msra.mxu0 0.0
    %2106 = vmatprep.subr.mxu0 0.0
    %2107 = vmatpush1.msra.mxu0 0.0
    %2108 = vmatprep.subr.mxu0 0.0
    %2109 = vmatpush1.msra.mxu0 0.0
    %2110 = vmatprep.subr.mxu0 0.0
    %2111 = vmatpush1.msra.mxu0 0.0
    %2112 = vmatprep.subr.mxu0 0.0
    %2113 = vmatpush1.msra.mxu0 0.0
    %2114 = vmatprep.subr.mxu0 0.0
    %2115 = vmatpush1.msra.mxu0 0.0
    %2116 = vmatprep.subr.mxu0 0.0
    %2117 = vmatpush1.msra.mxu0 0.0
    %2118 = vmatprep.subr.mxu0 0.0
    %2119 = vmatpush1.msra.mxu0 0.0
    %2120 = vmatprep.subr.mxu0 0.0
    %2121 = vmatpush1.msra.mxu0 0.0
    %2122 = vmatprep.subr.mxu0 0.0
    %2123 = vmatpush1.msra.mxu0 0.0
    %2124 = vmatprep.subr.mxu0 0.0
    %2125 = vmatpush1.msra.mxu0 0.0
    %2126 = vmatprep.mubr.f32.mxu0 0.0
    %2127 = vmatmul.mubr.f32.gmra.mrb[0].mxu0 %v2057
    %v2128 = vpop.f32.mrb[0].mxu0
    %v2129 = vadd.f32 0.0, %v2128
    %v2130 = vpop.f32.mrb[0].mxu0
    %2131 = vmatprep.mubr.f32.mxu0 0.0
    %2132 = vmatmul.mubr.f32.gmra.mrb[0].mxu0 %v2060
    %v2133 = vpop.f32.mrb[0].mxu0
    %v2134 = vadd.f32 0.0, %v2133
    %v2135 = vpop.f32.mrb[0].mxu0
    %2136 = vdwg.mxu0
    %2137 = vrot.lane.b32.xlu0 %v714, 96
    %v2138 = vpop.permute.xlu0 %2137
    %2139 = vrot.lane.b32.xlu0 %v720, 96
    %v2140 = vpop.permute.xlu0 %2139
    %2141 = vrot.lane.b32.xlu0 %v716, 96
    %v2142 = vpop.permute.xlu0 %2141
    %2143 = vrot.lane.b32.xlu0 %v722, 96
    %v2144 = vpop.permute.xlu0 %2143
    %v2145 = vsel %vm825, %v2138, 0
    %v2147 = vsel %vm825, %v2140, 0
    %v2149 = vsel %vm825, %v2142, 0
    %v2151 = vsel %vm825, %v2144, 0
    %2153 = vmatprep.subr.mxu0 0.0
    %2154 = vmatpush1.xpose.msra.mxu0 %v2149
    %2155 = vmatprep.subr.mxu0 0.0
    %2156 = vmatpush1.xpose.msra.mxu0 %v2151
    %2157 = vmatprep.subr.mxu0 0.0
    %2158 = vmatpush1.xpose.msra.mxu0 0.0
    %2159 = vmatprep.subr.mxu0 0.0
    %2160 = vmatpush1.xpose.msra.mxu0 0.0
    %2161 = vmatprep.subr.mxu0 0.0
    %2162 = vmatpush1.xpose.msra.mxu0 0.0
    %2163 = vmatprep.subr.mxu0 0.0
    %2164 = vmatpush1.xpose.msra.mxu0 0.0
    %2165 = vmatprep.subr.mxu0 0.0
    %2166 = vmatpush1.xpose.msra.mxu0 0.0
    %2167 = vmatprep.subr.mxu0 0.0
    %2168 = vmatpush1.xpose.msra.mxu0 0.0
    %2169 = vmatprep.subr.mxu0 0.0
    %2170 = vmatpush1.xpose.msra.mxu0 0.0
    %2171 = vmatprep.subr.mxu0 0.0
    %2172 = vmatpush1.xpose.msra.mxu0 0.0
    %2173 = vmatprep.subr.mxu0 0.0
    %2174 = vmatpush1.xpose.msra.mxu0 0.0
    %2175 = vmatprep.subr.mxu0 0.0
    %2176 = vmatpush1.xpose.msra.mxu0 0.0
    %2177 = vmatprep.subr.mxu0 0.0
    %2178 = vmatpush1.xpose.msra.mxu0 0.0
    %2179 = vmatprep.subr.mxu0 0.0
    %2180 = vmatpush1.xpose.msra.mxu0 0.0
    %2181 = vmatprep.subr.mxu0 0.0
    %2182 = vmatpush1.xpose.msra.mxu0 0.0
    %2183 = vmatprep.subr.mxu0 0.0
    %2184 = vmatpush1.xpose.msra.mxu0 0.0
    %2185 = vmatprep.subr.mxu0 0.0
    %2186 = vmatpush1.xpose.msra.mxu0 0.0
    %2187 = vmatprep.subr.mxu0 0.0
    %2188 = vmatpush1.xpose.msra.mxu0 0.0
    %2189 = vmatprep.subr.mxu0 0.0
    %2190 = vmatpush1.xpose.msra.mxu0 0.0
    %2191 = vmatprep.subr.mxu0 0.0
    %2192 = vmatpush1.xpose.msra.mxu0 0.0
    %2193 = vmatprep.subr.mxu0 0.0
    %2194 = vmatpush1.xpose.msra.mxu0 0.0
    %2195 = vmatprep.subr.mxu0 0.0
    %2196 = vmatpush1.xpose.msra.mxu0 0.0
    %2197 = vmatprep.subr.mxu0 0.0
    %2198 = vmatpush1.xpose.msra.mxu0 0.0
    %2199 = vmatprep.subr.mxu0 0.0
    %2200 = vmatpush1.xpose.msra.mxu0 0.0
    %2201 = vmatprep.subr.mxu0 0.0
    %2202 = vmatpush1.xpose.msra.mxu0 0.0
    %2203 = vmatprep.subr.mxu0 0.0
    %2204 = vmatpush1.xpose.msra.mxu0 0.0
    %2205 = vmatprep.subr.mxu0 0.0
    %2206 = vmatpush1.xpose.msra.mxu0 0.0
    %2207 = vmatprep.subr.mxu0 0.0
    %2208 = vmatpush1.xpose.msra.mxu0 0.0
    %2209 = vmatprep.subr.mxu0 0.0
    %2210 = vmatpush1.xpose.msra.mxu0 0.0
    %2211 = vmatprep.subr.mxu0 0.0
    %2212 = vmatpush1.xpose.msra.mxu0 0.0
    %2213 = vmatprep.subr.mxu0 0.0
    %2214 = vmatpush1.xpose.msra.mxu0 0.0
    %2215 = vmatprep.subr.mxu0 0.0
    %2216 = vmatpush1.xpose.msra.mxu0 0.0
    %2217 = vmatprep.mubr.f32.mxu0 0.0
    %2218 = vmatmul.mubr.f32.gmra.mrb[0].mxu0 %v2145
    %v2219 = vpop.f32.mrb[0].mxu0
    %v2220 = vadd.f32 0.0, %v2219
    %v2221 = vpop.f32.mrb[0].mxu0
    %2222 = vmatprep.mubr.f32.mxu0 0.0
    %2223 = vmatmul.mubr.f32.gmra.mrb[0].mxu0 %v2147
    %v2224 = vpop.f32.mrb[0].mxu0
    %v2225 = vadd.f32 0.0, %v2224
    %v2226 = vpop.f32.mrb[0].mxu0
    %2227 = vdwg.mxu0
    %v2228 = vsel %vm913, %v2220, -inf
    %2229 = vmax.xlane.f32.xlu0 %v2228
    %v2230 = vpop.xlane.xlu0 %2229
    %v2231 = vsel %vm913, %v2225, -inf
    %2232 = vmax.xlane.f32.xlu0 %v2231
    %v2233 = vpop.xlane.xlu0 %2232
    %v2234 = vsub.f32 %v2220, %v2230
    %v2235 = vsub.f32 %v2225, %v2233
    %v2236 = vmul.f32 %v2234, 1.442695
    %v2237 = vpow.pop %v2236
    %v2238 = vmul.f32 %v2235, 1.442695
    %v2239 = vpow.pop %v2238
    %v2240 = vsel %vm913, %v2237, 0.0
    %2241 = vadd.xlane.f32.xlu0 %v2240
    %v2242 = vpop.xlane.xlu0 %2241
    %v2243 = vsel %vm913, %v2239, 0.0
    %2244 = vadd.xlane.f32.xlu0 %v2243
    %v2245 = vpop.xlane.xlu0 %2244
    %v2246 = vrcp.pop %v2242
    %v2247 = vrcp.pop %v2245
    %v2248 = vmul.f32 %v2237, %v2246
    %v2249 = vmul.f32 %v2239, %v2247
    %2252 = vrot.lane.b32.xlu0 %v801, 96
    %v2253 = vpop.permute.xlu0 %2252
    %2254 = vrot.lane.b32.xlu0 %v806, 96
    %v2255 = vpop.permute.xlu0 %2254
    %v2259 = vsel %vm913, %v2248, 0
    %v2262 = vsel %vm913, %v2249, 0
    %2264 = vmatprep.subr.mxu0 0.0
    %2265 = vmatpush1.msra.mxu0 %v2253
    %2266 = vmatprep.subr.mxu0 0.0
    %2267 = vmatpush1.msra.mxu0 %v2255
    %2268 = vmatprep.subr.mxu0 0.0
    %2269 = vmatpush1.msra.mxu0 0.0
    %2270 = vmatprep.subr.mxu0 0.0
    %2271 = vmatpush1.msra.mxu0 0.0
    %2272 = vmatprep.subr.mxu0 0.0
    %2273 = vmatpush1.msra.mxu0 0.0
    %2274 = vmatprep.subr.mxu0 0.0
    %2275 = vmatpush1.msra.mxu0 0.0
    %2276 = vmatprep.subr.mxu0 0.0
    %2277 = vmatpush1.msra.mxu0 0.0
    %2278 = vmatprep.subr.mxu0 0.0
    %2279 = vmatpush1.msra.mxu0 0.0
    %2280 = vmatprep.subr.mxu0 0.0
    %2281 = vmatpush1.msra.mxu0 0.0
    %2282 = vmatprep.subr.mxu0 0.0
    %2283 = vmatpush1.msra.mxu0 0.0
    %2284 = vmatprep.subr.mxu0 0.0
    %2285 = vmatpush1.msra.mxu0 0.0
    %2286 = vmatprep.subr.mxu0 0.0
    %2287 = vmatpush1.msra.mxu0 0.0
    %2288 = vmatprep.subr.mxu0 0.0
    %2289 = vmatpush1.msra.mxu0 0.0
    %2290 = vmatprep.subr.mxu0 0.0
    %2291 = vmatpush1.msra.mxu0 0.0
    %2292 = vmatprep.subr.mxu0 0.0
    %2293 = vmatpush1.msra.mxu0 0.0
    %2294 = vmatprep.subr.mxu0 0.0
    %2295 = vmatpush1.msra.mxu0 0.0
    %2296 = vmatprep.subr.mxu0 0.0
    %2297 = vmatpush1.msra.mxu0 0.0
    %2298 = vmatprep.subr.mxu0 0.0
    %2299 = vmatpush1.msra.mxu0 0.0
    %2300 = vmatprep.subr.mxu0 0.0
    %2301 = vmatpush1.msra.mxu0 0.0
    %2302 = vmatprep.subr.mxu0 0.0
    %2303 = vmatpush1.msra.mxu0 0.0
    %2304 = vmatprep.subr.mxu0 0.0
    %2305 = vmatpush1.msra.mxu0 0.0
    %2306 = vmatprep.subr.mxu0 0.0
    %2307 = vmatpush1.msra.mxu0 0.0
    %2308 = vmatprep.subr.mxu0 0.0
    %2309 = vmatpush1.msra.mxu0 0.0
    %2310 = vmatprep.subr.mxu0 0.0
    %2311 = vmatpush1.msra.mxu0 0.0
    %2312 = vmatprep.subr.mxu0 0.0
    %2313 = vmatpush1.msra.mxu0 0.0
    %2314 = vmatprep.subr.mxu0 0.0
    %2315 = vmatpush1.msra.mxu0 0.0
    %2316 = vmatprep.subr.mxu0 0.0
    %2317 = vmatpush1.msra.mxu0 0.0
    %2318 = vmatprep.subr.mxu0 0.0
    %2319 = vmatpush1.msra.mxu0 0.0
    %2320 = vmatprep.subr.mxu0 0.0
    %2321 = vmatpush1.msra.mxu0 0.0
    %2322 = vmatprep.subr.mxu0 0.0
    %2323 = vmatpush1.msra.mxu0 0.0
    %2324 = vmatprep.subr.mxu0 0.0
    %2325 = vmatpush1.msra.mxu0 0.0
    %2326 = vmatprep.subr.mxu0 0.0
    %2327 = vmatpush1.msra.mxu0 0.0
    %2328 = vmatprep.mubr.f32.mxu0 0.0
    %2329 = vmatmul.mubr.f32.gmra.mrb[0].mxu0 %v2259
    %v2330 = vpop.f32.mrb[0].mxu0
    %v2331 = vadd.f32 0.0, %v2330
    %v2332 = vpop.f32.mrb[0].mxu0
    %2333 = vmatprep.mubr.f32.mxu0 0.0
    %2334 = vmatmul.mubr.f32.gmra.mrb[0].mxu0 %v2262
    %v2335 = vpop.f32.mrb[0].mxu0
    %v2336 = vadd.f32 0.0, %v2335
    %v2337 = vpop.f32.mrb[0].mxu0
    %2338 = vdwg.mxu0
    %v2340 = vsel %vm825, %v2331, 0
    %v2343 = vsel %vm825, %v2336, 0
    %2345 = vmatprep.subr.mxu0 0.0
    %2346 = vmatpush1.msra.mxu0 %v813
    %2347 = vmatprep.subr.mxu0 0.0
    %2348 = vmatpush1.msra.mxu0 %v814
    %2349 = vmatprep.subr.mxu0 0.0
    %2350 = vmatpush1.msra.mxu0 %v815
    %2351 = vmatprep.subr.mxu0 0.0
    %2352 = vmatpush1.msra.mxu0 %v816
    %2353 = vmatprep.subr.mxu0 0.0
    %2354 = vmatpush1.msra.mxu0 0.0
    %2355 = vmatprep.subr.mxu0 0.0
    %2356 = vmatpush1.msra.mxu0 0.0
    %2357 = vmatprep.subr.mxu0 0.0
    %2358 = vmatpush1.msra.mxu0 0.0
    %2359 = vmatprep.subr.mxu0 0.0
    %2360 = vmatpush1.msra.mxu0 0.0
    %2361 = vmatprep.subr.mxu0 0.0
    %2362 = vmatpush1.msra.mxu0 0.0
    %2363 = vmatprep.subr.mxu0 0.0
    %2364 = vmatpush1.msra.mxu0 0.0
    %2365 = vmatprep.subr.mxu0 0.0
    %2366 = vmatpush1.msra.mxu0 0.0
    %2367 = vmatprep.subr.mxu0 0.0
    %2368 = vmatpush1.msra.mxu0 0.0
    %2369 = vmatprep.subr.mxu0 0.0
    %2370 = vmatpush1.msra.mxu0 0.0
    %2371 = vmatprep.subr.mxu0 0.0
    %2372 = vmatpush1.msra.mxu0 0.0
    %2373 = vmatprep.subr.mxu0 0.0
    %2374 = vmatpush1.msra.mxu0 0.0
    %2375 = vmatprep.subr.mxu0 0.0
    %2376 = vmatpush1.msra.mxu0 0.0
    %2377 = vmatprep.subr.mxu0 0.0
    %2378 = vmatpush1.msra.mxu0 0.0
    %2379 = vmatprep.subr.mxu0 0.0
    %2380 = vmatpush1.msra.mxu0 0.0
    %2381 = vmatprep.subr.mxu0 0.0
    %2382 = vmatpush1.msra.mxu0 0.0
    %2383 = vmatprep.subr.mxu0 0.0
    %2384 = vmatpush1.msra.mxu0 0.0
    %2385 = vmatprep.subr.mxu0 0.0
    %2386 = vmatpush1.msra.mxu0 0.0
    %2387 = vmatprep.subr.mxu0 0.0
    %2388 = vmatpush1.msra.mxu0 0.0
    %2389 = vmatprep.subr.mxu0 0.0
    %2390 = vmatpush1.msra.mxu0 0.0
    %2391 = vmatprep.subr.mxu0 0.0
    %2392 = vmatpush1.msra.mxu0 0.0
    %2393 = vmatprep.subr.mxu0 0.0
    %2394 = vmatpush1.msra.mxu0 0.0
    %2395 = vmatprep.subr.mxu0 0.0
    %2396 = vmatpush1.msra.mxu0 0.0
    %2397 = vmatprep.subr.mxu0 0.0
    %2398 = vmatpush1.msra.mxu0 0.0
    %2399 = vmatprep.subr.mxu0 0.0
    %2400 = vmatpush1.msra.mxu0 0.0
    %2401 = vmatprep.subr.mxu0 0.0
    %2402 = vmatpush1.msra.mxu0 0.0
    %2403 = vmatprep.subr.mxu0 0.0
    %2404 = vmatpush1.msra.mxu0 0.0
    %2405 = vmatprep.subr.mxu0 0.0
    %2406 = vmatpush1.msra.mxu0 0.0
    %2407 = vmatprep.subr.mxu0 0.0
    %2408 = vmatpush1.msra.mxu0 0.0
    %2409 = vmatprep.mubr.f32.mxu0 0.0
    %2410 = vmatmul.mubr.f32.gmra.mrb[0].mxu0 %v2340
    %v2411 = vpop.f32.mrb[0].mxu0
    %v2412 = vadd.f32 0.0, %v2411
    %v2413 = vpop.f32.mrb[0].mxu0
    %2414 = vmatprep.mubr.f32.mxu0 0.0
    %2415 = vmatmul.mubr.f32.gmra.mrb[0].mxu0 %v2343
    %v2416 = vpop.f32.mrb[0].mxu0
    %v2417 = vadd.f32 0.0, %v2416
    %v2418 = vpop.f32.mrb[0].mxu0
    %2419 = vdwg.mxu0
    %v2421 = vsel %vm825, %v2129, 0
    %v2424 = vsel %vm825, %v2134, 0
    %2426 = vmatprep.subr.mxu0 0.0
    %2427 = vmatpush1.msra.mxu0 %v809
    %2428 = vmatprep.subr.mxu0 0.0
    %2429 = vmatpush1.msra.mxu0 %v810
    %2430 = vmatprep.subr.mxu0 0.0
    %2431 = vmatpush1.msra.mxu0 %v811
    %2432 = vmatprep.subr.mxu0 0.0
    %2433 = vmatpush1.msra.mxu0 %v812
    %2434 = vmatprep.subr.mxu0 0.0
    %2435 = vmatpush1.msra.mxu0 0.0
    %2436 = vmatprep.subr.mxu0 0.0
    %2437 = vmatpush1.msra.mxu0 0.0
    %2438 = vmatprep.subr.mxu0 0.0
    %2439 = vmatpush1.msra.mxu0 0.0
    %2440 = vmatprep.subr.mxu0 0.0
    %2441 = vmatpush1.msra.mxu0 0.0
    %2442 = vmatprep.subr.mxu0 0.0
    %2443 = vmatpush1.msra.mxu0 0.0
    %2444 = vmatprep.subr.mxu0 0.0
    %2445 = vmatpush1.msra.mxu0 0.0
    %2446 = vmatprep.subr.mxu0 0.0
    %2447 = vmatpush1.msra.mxu0 0.0
    %2448 = vmatprep.subr.mxu0 0.0
    %2449 = vmatpush1.msra.mxu0 0.0
    %2450 = vmatprep.subr.mxu0 0.0
    %2451 = vmatpush1.msra.mxu0 0.0
    %2452 = vmatprep.subr.mxu0 0.0
    %2453 = vmatpush1.msra.mxu0 0.0
    %2454 = vmatprep.subr.mxu0 0.0
    %2455 = vmatpush1.msra.mxu0 0.0
    %2456 = vmatprep.subr.mxu0 0.0
    %2457 = vmatpush1.msra.mxu0 0.0
    %2458 = vmatprep.subr.mxu0 0.0
    %2459 = vmatpush1.msra.mxu0 0.0
    %2460 = vmatprep.subr.mxu0 0.0
    %2461 = vmatpush1.msra.mxu0 0.0
    %2462 = vmatprep.subr.mxu0 0.0
    %2463 = vmatpush1.msra.mxu0 0.0
    %2464 = vmatprep.subr.mxu0 0.0
    %2465 = vmatpush1.msra.mxu0 0.0
    %2466 = vmatprep.subr.mxu0 0.0
    %2467 = vmatpush1.msra.mxu0 0.0
    %2468 = vmatprep.subr.mxu0 0.0
    %2469 = vmatpush1.msra.mxu0 0.0
    %2470 = vmatprep.subr.mxu0 0.0
    %2471 = vmatpush1.msra.mxu0 0.0
    %2472 = vmatprep.subr.mxu0 0.0
    %2473 = vmatpush1.msra.mxu0 0.0
    %2474 = vmatprep.subr.mxu0 0.0
    %2475 = vmatpush1.msra.mxu0 0.0
    %2476 = vmatprep.subr.mxu0 0.0
    %2477 = vmatpush1.msra.mxu0 0.0
    %2478 = vmatprep.subr.mxu0 0.0
    %2479 = vmatpush1.msra.mxu0 0.0
    %2480 = vmatprep.subr.mxu0 0.0
    %2481 = vmatpush1.msra.mxu0 0.0
    %2482 = vmatprep.subr.mxu0 0.0
    %2483 = vmatpush1.msra.mxu0 0.0
    %2484 = vmatprep.subr.mxu0 0.0
    %2485 = vmatpush1.msra.mxu0 0.0
    %2486 = vmatprep.subr.mxu0 0.0
    %2487 = vmatpush1.msra.mxu0 0.0
    %2488 = vmatprep.subr.mxu0 0.0
    %2489 = vmatpush1.msra.mxu0 0.0
    %2490 = vmatprep.mubr.f32.mxu0 0.0
    %2491 = vmatmul.mubr.f32.gmra.mrb[0].mxu0 %v2421
    %v2492 = vpop.f32.mrb[0].mxu0
    %v2493 = vadd.f32 %v2412, %v2492
    %v2494 = vpop.f32.mrb[0].mxu0
    %2495 = vmatprep.mubr.f32.mxu0 0.0
    %2496 = vmatmul.mubr.f32.gmra.mrb[0].mxu0 %v2424
    %v2497 = vpop.f32.mrb[0].mxu0
    %v2498 = vadd.f32 %v2417, %v2497
    %v2499 = vpop.f32.mrb[0].mxu0
    %2500 = vdwg.mxu0
    %2501 = vrot.lane.b32.xlu0 %v714, 64
    %v2502 = vpop.permute.xlu0 %2501
    %2503 = vrot.lane.b32.xlu0 %v720, 64
    %v2504 = vpop.permute.xlu0 %2503
    %2505 = vrot.lane.b32.xlu0 %v716, 64
    %v2506 = vpop.permute.xlu0 %2505
    %2507 = vrot.lane.b32.xlu0 %v722, 64
    %v2508 = vpop.permute.xlu0 %2507
    %v2509 = vsel %vm825, %v2502, 0
    %v2511 = vsel %vm825, %v2504, 0
    %v2513 = vsel %vm825, %v2506, 0
    %v2515 = vsel %vm825, %v2508, 0
    %2517 = vmatprep.subr.mxu0 0.0
    %2518 = vmatpush1.xpose.msra.mxu0 %v2513
    %2519 = vmatprep.subr.mxu0 0.0
    %2520 = vmatpush1.xpose.msra.mxu0 %v2515
    %2521 = vmatprep.subr.mxu0 0.0
    %2522 = vmatpush1.xpose.msra.mxu0 0.0
    %2523 = vmatprep.subr.mxu0 0.0
    %2524 = vmatpush1.xpose.msra.mxu0 0.0
    %2525 = vmatprep.subr.mxu0 0.0
    %2526 = vmatpush1.xpose.msra.mxu0 0.0
    %2527 = vmatprep.subr.mxu0 0.0
    %2528 = vmatpush1.xpose.msra.mxu0 0.0
    %2529 = vmatprep.subr.mxu0 0.0
    %2530 = vmatpush1.xpose.msra.mxu0 0.0
    %2531 = vmatprep.subr.mxu0 0.0
    %2532 = vmatpush1.xpose.msra.mxu0 0.0
    %2533 = vmatprep.subr.mxu0 0.0
    %2534 = vmatpush1.xpose.msra.mxu0 0.0
    %2535 = vmatprep.subr.mxu0 0.0
    %2536 = vmatpush1.xpose.msra.mxu0 0.0
    %2537 = vmatprep.subr.mxu0 0.0
    %2538 = vmatpush1.xpose.msra.mxu0 0.0
    %2539 = vmatprep.subr.mxu0 0.0
    %2540 = vmatpush1.xpose.msra.mxu0 0.0
    %2541 = vmatprep.subr.mxu0 0.0
    %2542 = vmatpush1.xpose.msra.mxu0 0.0
    %2543 = vmatprep.subr.mxu0 0.0
    %2544 = vmatpush1.xpose.msra.mxu0 0.0
    %2545 = vmatprep.subr.mxu0 0.0
    %2546 = vmatpush1.xpose.msra.mxu0 0.0
    %2547 = vmatprep.subr.mxu0 0.0
    %2548 = vmatpush1.xpose.msra.mxu0 0.0
    %2549 = vmatprep.subr.mxu0 0.0
    %2550 = vmatpush1.xpose.msra.mxu0 0.0
    %2551 = vmatprep.subr.mxu0 0.0
    %2552 = vmatpush1.xpose.msra.mxu0 0.0
    %2553 = vmatprep.subr.mxu0 0.0
    %2554 = vmatpush1.xpose.msra.mxu0 0.0
    %2555 = vmatprep.subr.mxu0 0.0
    %2556 = vmatpush1.xpose.msra.mxu0 0.0
    %2557 = vmatprep.subr.mxu0 0.0
    %2558 = vmatpush1.xpose.msra.mxu0 0.0
    %2559 = vmatprep.subr.mxu0 0.0
    %2560 = vmatpush1.xpose.msra.mxu0 0.0
    %2561 = vmatprep.subr.mxu0 0.0
    %2562 = vmatpush1.xpose.msra.mxu0 0.0
    %2563 = vmatprep.subr.mxu0 0.0
    %2564 = vmatpush1.xpose.msra.mxu0 0.0
    %2565 = vmatprep.subr.mxu0 0.0
    %2566 = vmatpush1.xpose.msra.mxu0 0.0
    %2567 = vmatprep.subr.mxu0 0.0
    %2568 = vmatpush1.xpose.msra.mxu0 0.0
    %2569 = vmatprep.subr.mxu0 0.0
    %2570 = vmatpush1.xpose.msra.mxu0 0.0
    %2571 = vmatprep.subr.mxu0 0.0
    %2572 = vmatpush1.xpose.msra.mxu0 0.0
    %2573 = vmatprep.subr.mxu0 0.0
    %2574 = vmatpush1.xpose.msra.mxu0 0.0
    %2575 = vmatprep.subr.mxu0 0.0
    %2576 = vmatpush1.xpose.msra.mxu0 0.0
    %2577 = vmatprep.subr.mxu0 0.0
    %2578 = vmatpush1.xpose.msra.mxu0 0.0
    %2579 = vmatprep.subr.mxu0 0.0
    %2580 = vmatpush1.xpose.msra.mxu0 0.0
    %2581 = vmatprep.mubr.f32.mxu0 0.0
    %2582 = vmatmul.mubr.f32.gmra.mrb[0].mxu0 %v2509
    %v2583 = vpop.f32.mrb[0].mxu0
    %v2584 = vadd.f32 0.0, %v2583
    %v2585 = vpop.f32.mrb[0].mxu0
    %2586 = vmatprep.mubr.f32.mxu0 0.0
    %2587 = vmatmul.mubr.f32.gmra.mrb[0].mxu0 %v2511
    %v2588 = vpop.f32.mrb[0].mxu0
    %v2589 = vadd.f32 0.0, %v2588
    %v2590 = vpop.f32.mrb[0].mxu0
    %2591 = vdwg.mxu0
    %v2592 = vsel %vm913, %v2584, -inf
    %2593 = vmax.xlane.f32.xlu0 %v2592
    %v2594 = vpop.xlane.xlu0 %2593
    %v2595 = vsel %vm913, %v2589, -inf
    %2596 = vmax.xlane.f32.xlu0 %v2595
    %v2597 = vpop.xlane.xlu0 %2596
    %v2598 = vsub.f32 %v2584, %v2594
    %v2599 = vsub.f32 %v2589, %v2597
    %v2600 = vmul.f32 %v2598, 1.442695
    %v2601 = vpow.pop %v2600
    %v2602 = vmul.f32 %v2599, 1.442695
    %v2603 = vpow.pop %v2602
    %v2604 = vsel %vm913, %v2601, 0.0
    %2605 = vadd.xlane.f32.xlu0 %v2604
    %v2606 = vpop.xlane.xlu0 %2605
    %v2607 = vsel %vm913, %v2603, 0.0
    %2608 = vadd.xlane.f32.xlu0 %v2607
    %v2609 = vpop.xlane.xlu0 %2608
    %v2610 = vrcp.pop %v2606
    %v2611 = vrcp.pop %v2609
    %v2612 = vmul.f32 %v2601, %v2610
    %v2613 = vmul.f32 %v2603, %v2611
    %2614 = vrot.lane.b32.xlu0 %v801, 64
    %v2615 = vpop.permute.xlu0 %2614
    %2616 = vrot.lane.b32.xlu0 %v806, 64
    %v2617 = vpop.permute.xlu0 %2616
    %v2621 = vsel %vm913, %v2612, 0
    %v2624 = vsel %vm913, %v2613, 0
    %2626 = vmatprep.subr.mxu0 0.0
    %2627 = vmatpush1.msra.mxu0 %v2615
    %2628 = vmatprep.subr.mxu0 0.0
    %2629 = vmatpush1.msra.mxu0 %v2617
    %2630 = vmatprep.subr.mxu0 0.0
    %2631 = vmatpush1.msra.mxu0 0.0
    %2632 = vmatprep.subr.mxu0 0.0
    %2633 = vmatpush1.msra.mxu0 0.0
    %2634 = vmatprep.subr.mxu0 0.0
    %2635 = vmatpush1.msra.mxu0 0.0
    %2636 = vmatprep.subr.mxu0 0.0
    %2637 = vmatpush1.msra.mxu0 0.0
    %2638 = vmatprep.subr.mxu0 0.0
    %2639 = vmatpush1.msra.mxu0 0.0
    %2640 = vmatprep.subr.mxu0 0.0
    %2641 = vmatpush1.msra.mxu0 0.0
    %2642 = vmatprep.subr.mxu0 0.0
    %2643 = vmatpush1.msra.mxu0 0.0
    %2644 = vmatprep.subr.mxu0 0.0
    %2645 = vmatpush1.msra.mxu0 0.0
    %2646 = vmatprep.subr.mxu0 0.0
    %2647 = vmatpush1.msra.mxu0 0.0
    %2648 = vmatprep.subr.mxu0 0.0
    %2649 = vmatpush1.msra.mxu0 0.0
    %2650 = vmatprep.subr.mxu0 0.0
    %2651 = vmatpush1.msra.mxu0 0.0
    %2652 = vmatprep.subr.mxu0 0.0
    %2653 = vmatpush1.msra.mxu0 0.0
    %2654 = vmatprep.subr.mxu0 0.0
    %2655 = vmatpush1.msra.mxu0 0.0
    %2656 = vmatprep.subr.mxu0 0.0
    %2657 = vmatpush1.msra.mxu0 0.0
    %2658 = vmatprep.subr.mxu0 0.0
    %2659 = vmatpush1.msra.mxu0 0.0
    %2660 = vmatprep.subr.mxu0 0.0
    %2661 = vmatpush1.msra.mxu0 0.0
    %2662 = vmatprep.subr.mxu0 0.0
    %2663 = vmatpush1.msra.mxu0 0.0
    %2664 = vmatprep.subr.mxu0 0.0
    %2665 = vmatpush1.msra.mxu0 0.0
    %2666 = vmatprep.subr.mxu0 0.0
    %2667 = vmatpush1.msra.mxu0 0.0
    %2668 = vmatprep.subr.mxu0 0.0
    %2669 = vmatpush1.msra.mxu0 0.0
    %2670 = vmatprep.subr.mxu0 0.0
    %2671 = vmatpush1.msra.mxu0 0.0
    %2672 = vmatprep.subr.mxu0 0.0
    %2673 = vmatpush1.msra.mxu0 0.0
    %2674 = vmatprep.subr.mxu0 0.0
    %2675 = vmatpush1.msra.mxu0 0.0
    %2676 = vmatprep.subr.mxu0 0.0
    %2677 = vmatpush1.msra.mxu0 0.0
    %2678 = vmatprep.subr.mxu0 0.0
    %2679 = vmatpush1.msra.mxu0 0.0
    %2680 = vmatprep.subr.mxu0 0.0
    %2681 = vmatpush1.msra.mxu0 0.0
    %2682 = vmatprep.subr.mxu0 0.0
    %2683 = vmatpush1.msra.mxu0 0.0
    %2684 = vmatprep.subr.mxu0 0.0
    %2685 = vmatpush1.msra.mxu0 0.0
    %2686 = vmatprep.subr.mxu0 0.0
    %2687 = vmatpush1.msra.mxu0 0.0
    %2688 = vmatprep.subr.mxu0 0.0
    %2689 = vmatpush1.msra.mxu0 0.0
    %2690 = vmatprep.mubr.f32.mxu0 0.0
    %2691 = vmatmul.mubr.f32.gmra.mrb[0].mxu0 %v2621
    %v2692 = vpop.f32.mrb[0].mxu0
    %v2693 = vadd.f32 0.0, %v2692
    %v2694 = vpop.f32.mrb[0].mxu0
    %2695 = vmatprep.mubr.f32.mxu0 0.0
    %2696 = vmatmul.mubr.f32.gmra.mrb[0].mxu0 %v2624
    %v2697 = vpop.f32.mrb[0].mxu0
    %v2698 = vadd.f32 0.0, %v2697
    %v2699 = vpop.f32.mrb[0].mxu0
    %2700 = vdwg.mxu0
    %v2702 = vsel %vm825, %v2693, 0
    %v2705 = vsel %vm825, %v2698, 0
    %2707 = vmatprep.subr.mxu0 0.0
    %2708 = vmatpush1.msra.mxu0 %v817
    %2709 = vmatprep.subr.mxu0 0.0
    %2710 = vmatpush1.msra.mxu0 %v818
    %2711 = vmatprep.subr.mxu0 0.0
    %2712 = vmatpush1.msra.mxu0 %v819
    %2713 = vmatprep.subr.mxu0 0.0
    %2714 = vmatpush1.msra.mxu0 %v820
    %2715 = vmatprep.subr.mxu0 0.0
    %2716 = vmatpush1.msra.mxu0 0.0
    %2717 = vmatprep.subr.mxu0 0.0
    %2718 = vmatpush1.msra.mxu0 0.0
    %2719 = vmatprep.subr.mxu0 0.0
    %2720 = vmatpush1.msra.mxu0 0.0
    %2721 = vmatprep.subr.mxu0 0.0
    %2722 = vmatpush1.msra.mxu0 0.0
    %2723 = vmatprep.subr.mxu0 0.0
    %2724 = vmatpush1.msra.mxu0 0.0
    %2725 = vmatprep.subr.mxu0 0.0
    %2726 = vmatpush1.msra.mxu0 0.0
    %2727 = vmatprep.subr.mxu0 0.0
    %2728 = vmatpush1.msra.mxu0 0.0
    %2729 = vmatprep.subr.mxu0 0.0
    %2730 = vmatpush1.msra.mxu0 0.0
    %2731 = vmatprep.subr.mxu0 0.0
    %2732 = vmatpush1.msra.mxu0 0.0
    %2733 = vmatprep.subr.mxu0 0.0
    %2734 = vmatpush1.msra.mxu0 0.0
    %2735 = vmatprep.subr.mxu0 0.0
    %2736 = vmatpush1.msra.mxu0 0.0
    %2737 = vmatprep.subr.mxu0 0.0
    %2738 = vmatpush1.msra.mxu0 0.0
    %2739 = vmatprep.subr.mxu0 0.0
    %2740 = vmatpush1.msra.mxu0 0.0
    %2741 = vmatprep.subr.mxu0 0.0
    %2742 = vmatpush1.msra.mxu0 0.0
    %2743 = vmatprep.subr.mxu0 0.0
    %2744 = vmatpush1.msra.mxu0 0.0
    %2745 = vmatprep.subr.mxu0 0.0
    %2746 = vmatpush1.msra.mxu0 0.0
    %2747 = vmatprep.subr.mxu0 0.0
    %2748 = vmatpush1.msra.mxu0 0.0
    %2749 = vmatprep.subr.mxu0 0.0
    %2750 = vmatpush1.msra.mxu0 0.0
    %2751 = vmatprep.subr.mxu0 0.0
    %2752 = vmatpush1.msra.mxu0 0.0
    %2753 = vmatprep.subr.mxu0 0.0
    %2754 = vmatpush1.msra.mxu0 0.0
    %2755 = vmatprep.subr.mxu0 0.0
    %2756 = vmatpush1.msra.mxu0 0.0
    %2757 = vmatprep.subr.mxu0 0.0
    %2758 = vmatpush1.msra.mxu0 0.0
    %2759 = vmatprep.subr.mxu0 0.0
    %2760 = vmatpush1.msra.mxu0 0.0
    %2761 = vmatprep.subr.mxu0 0.0
    %2762 = vmatpush1.msra.mxu0 0.0
    %2763 = vmatprep.subr.mxu0 0.0
    %2764 = vmatpush1.msra.mxu0 0.0
    %2765 = vmatprep.subr.mxu0 0.0
    %2766 = vmatpush1.msra.mxu0 0.0
    %2767 = vmatprep.subr.mxu0 0.0
    %2768 = vmatpush1.msra.mxu0 0.0
    %2769 = vmatprep.subr.mxu0 0.0
    %2770 = vmatpush1.msra.mxu0 0.0
    %2771 = vmatprep.mubr.f32.mxu0 0.0
    %2772 = vmatmul.mubr.f32.gmra.mrb[0].mxu0 %v2702
    %v2773 = vpop.f32.mrb[0].mxu0
    %v2774 = vadd.f32 0.0, %v2773
    %v2775 = vpop.f32.mrb[0].mxu0
    %2776 = vmatprep.mubr.f32.mxu0 0.0
    %2777 = vmatmul.mubr.f32.gmra.mrb[0].mxu0 %v2705
    %v2778 = vpop.f32.mrb[0].mxu0
    %v2779 = vadd.f32 0.0, %v2778
    %v2780 = vpop.f32.mrb[0].mxu0
    %2781 = vdwg.mxu0
    %v2782 = vadd.f32 %v2493, %v2774
    %v2783 = vadd.f32 %v2498, %v2779
    %2784 = vrot.lane.b32.xlu0 %v714, 32
    %v2785 = vpop.permute.xlu0 %2784
    %2786 = vrot.lane.b32.xlu0 %v720, 32
    %v2787 = vpop.permute.xlu0 %2786
    %2788 = vrot.lane.b32.xlu0 %v716, 32
    %v2789 = vpop.permute.xlu0 %2788
    %2790 = vrot.lane.b32.xlu0 %v722, 32
    %v2791 = vpop.permute.xlu0 %2790
    %v2792 = vsel %vm825, %v2785, 0
    %v2794 = vsel %vm825, %v2787, 0
    %v2796 = vsel %vm825, %v2789, 0
    %v2798 = vsel %vm825, %v2791, 0
    %2800 = vmatprep.subr.mxu0 0.0
    %2801 = vmatpush1.xpose.msra.mxu0 %v2796
    %2802 = vmatprep.subr.mxu0 0.0
    %2803 = vmatpush1.xpose.msra.mxu0 %v2798
    %2804 = vmatprep.subr.mxu0 0.0
    %2805 = vmatpush1.xpose.msra.mxu0 0.0
    %2806 = vmatprep.subr.mxu0 0.0
    %2807 = vmatpush1.xpose.msra.mxu0 0.0
    %2808 = vmatprep.subr.mxu0 0.0
    %2809 = vmatpush1.xpose.msra.mxu0 0.0
    %2810 = vmatprep.subr.mxu0 0.0
    %2811 = vmatpush1.xpose.msra.mxu0 0.0
    %2812 = vmatprep.subr.mxu0 0.0
    %2813 = vmatpush1.xpose.msra.mxu0 0.0
    %2814 = vmatprep.subr.mxu0 0.0
    %2815 = vmatpush1.xpose.msra.mxu0 0.0
    %2816 = vmatprep.subr.mxu0 0.0
    %2817 = vmatpush1.xpose.msra.mxu0 0.0
    %2818 = vmatprep.subr.mxu0 0.0
    %2819 = vmatpush1.xpose.msra.mxu0 0.0
    %2820 = vmatprep.subr.mxu0 0.0
    %2821 = vmatpush1.xpose.msra.mxu0 0.0
    %2822 = vmatprep.subr.mxu0 0.0
    %2823 = vmatpush1.xpose.msra.mxu0 0.0
    %2824 = vmatprep.subr.mxu0 0.0
    %2825 = vmatpush1.xpose.msra.mxu0 0.0
    %2826 = vmatprep.subr.mxu0 0.0
    %2827 = vmatpush1.xpose.msra.mxu0 0.0
    %2828 = vmatprep.subr.mxu0 0.0
    %2829 = vmatpush1.xpose.msra.mxu0 0.0
    %2830 = vmatprep.subr.mxu0 0.0
    %2831 = vmatpush1.xpose.msra.mxu0 0.0
    %2832 = vmatprep.subr.mxu0 0.0
    %2833 = vmatpush1.xpose.msra.mxu0 0.0
    %2834 = vmatprep.subr.mxu0 0.0
    %2835 = vmatpush1.xpose.msra.mxu0 0.0
    %2836 = vmatprep.subr.mxu0 0.0
    %2837 = vmatpush1.xpose.msra.mxu0 0.0
    %2838 = vmatprep.subr.mxu0 0.0
    %2839 = vmatpush1.xpose.msra.mxu0 0.0
    %2840 = vmatprep.subr.mxu0 0.0
    %2841 = vmatpush1.xpose.msra.mxu0 0.0
    %2842 = vmatprep.subr.mxu0 0.0
    %2843 = vmatpush1.xpose.msra.mxu0 0.0
    %2844 = vmatprep.subr.mxu0 0.0
    %2845 = vmatpush1.xpose.msra.mxu0 0.0
    %2846 = vmatprep.subr.mxu0 0.0
    %2847 = vmatpush1.xpose.msra.mxu0 0.0
    %2848 = vmatprep.subr.mxu0 0.0
    %2849 = vmatpush1.xpose.msra.mxu0 0.0
    %2850 = vmatprep.subr.mxu0 0.0
    %2851 = vmatpush1.xpose.msra.mxu0 0.0
    %2852 = vmatprep.subr.mxu0 0.0
    %2853 = vmatpush1.xpose.msra.mxu0 0.0
    %2854 = vmatprep.subr.mxu0 0.0
    %2855 = vmatpush1.xpose.msra.mxu0 0.0
    %2856 = vmatprep.subr.mxu0 0.0
    %2857 = vmatpush1.xpose.msra.mxu0 0.0
    %2858 = vmatprep.subr.mxu0 0.0
    %2859 = vmatpush1.xpose.msra.mxu0 0.0
    %2860 = vmatprep.subr.mxu0 0.0
    %2861 = vmatpush1.xpose.msra.mxu0 0.0
    %2862 = vmatprep.subr.mxu0 0.0
    %2863 = vmatpush1.xpose.msra.mxu0 0.0
    %2864 = vmatprep.mubr.f32.mxu0 0.0
    %2865 = vmatmul.mubr.f32.gmra.mrb[0].mxu0 %v2792
    %v2866 = vpop.f32.mrb[0].mxu0
    %v2867 = vadd.f32 0.0, %v2866
    %v2868 = vpop.f32.mrb[0].mxu0
    %2869 = vmatprep.mubr.f32.mxu0 0.0
    %2870 = vmatmul.mubr.f32.gmra.mrb[0].mxu0 %v2794
    %v2871 = vpop.f32.mrb[0].mxu0
    %v2872 = vadd.f32 0.0, %v2871
    %v2873 = vpop.f32.mrb[0].mxu0
    %2874 = vdwg.mxu0
    %v2875 = vsel %vm913, %v2867, -inf
    %2876 = vmax.xlane.f32.xlu0 %v2875
    %v2877 = vpop.xlane.xlu0 %2876
    %v2878 = vsel %vm913, %v2872, -inf
    %2879 = vmax.xlane.f32.xlu0 %v2878
    %v2880 = vpop.xlane.xlu0 %2879
    %v2881 = vsub.f32 %v2867, %v2877
    %v2882 = vsub.f32 %v2872, %v2880
    %v2883 = vmul.f32 %v2881, 1.442695
    %v2884 = vpow.pop %v2883
    %v2885 = vmul.f32 %v2882, 1.442695
    %v2886 = vpow.pop %v2885
    %v2887 = vsel %vm913, %v2884, 0.0
    %2888 = vadd.xlane.f32.xlu0 %v2887
    %v2889 = vpop.xlane.xlu0 %2888
    %v2890 = vsel %vm913, %v2886, 0.0
    %2891 = vadd.xlane.f32.xlu0 %v2890
    %v2892 = vpop.xlane.xlu0 %2891
    %v2893 = vrcp.pop %v2889
    %v2894 = vrcp.pop %v2892
    %v2895 = vmul.f32 %v2884, %v2893
    %v2896 = vmul.f32 %v2886, %v2894
    %2897 = vrot.lane.b32.xlu0 %v801, 32
    %v2898 = vpop.permute.xlu0 %2897
    %2899 = vrot.lane.b32.xlu0 %v806, 32
    %v2900 = vpop.permute.xlu0 %2899
    %v2904 = vsel %vm913, %v2895, 0
    %v2907 = vsel %vm913, %v2896, 0
    %2909 = vmatprep.subr.mxu0 0.0
    %2910 = vmatpush1.msra.mxu0 %v2898
    %2911 = vmatprep.subr.mxu0 0.0
    %2912 = vmatpush1.msra.mxu0 %v2900
    %2913 = vmatprep.subr.mxu0 0.0
    %2914 = vmatpush1.msra.mxu0 0.0
    %2915 = vmatprep.subr.mxu0 0.0
    %2916 = vmatpush1.msra.mxu0 0.0
    %2917 = vmatprep.subr.mxu0 0.0
    %2918 = vmatpush1.msra.mxu0 0.0
    %2919 = vmatprep.subr.mxu0 0.0
    %2920 = vmatpush1.msra.mxu0 0.0
    %2921 = vmatprep.subr.mxu0 0.0
    %2922 = vmatpush1.msra.mxu0 0.0
    %2923 = vmatprep.subr.mxu0 0.0
    %2924 = vmatpush1.msra.mxu0 0.0
    %2925 = vmatprep.subr.mxu0 0.0
    %2926 = vmatpush1.msra.mxu0 0.0
    %2927 = vmatprep.subr.mxu0 0.0
    %2928 = vmatpush1.msra.mxu0 0.0
    %2929 = vmatprep.subr.mxu0 0.0
    %2930 = vmatpush1.msra.mxu0 0.0
    %2931 = vmatprep.subr.mxu0 0.0
    %2932 = vmatpush1.msra.mxu0 0.0
    %2933 = vmatprep.subr.mxu0 0.0
    %2934 = vmatpush1.msra.mxu0 0.0
    %2935 = vmatprep.subr.mxu0 0.0
    %2936 = vmatpush1.msra.mxu0 0.0
    %2937 = vmatprep.subr.mxu0 0.0
    %2938 = vmatpush1.msra.mxu0 0.0
    %2939 = vmatprep.subr.mxu0 0.0
    %2940 = vmatpush1.msra.mxu0 0.0
    %2941 = vmatprep.subr.mxu0 0.0
    %2942 = vmatpush1.msra.mxu0 0.0
    %2943 = vmatprep.subr.mxu0 0.0
    %2944 = vmatpush1.msra.mxu0 0.0
    %2945 = vmatprep.subr.mxu0 0.0
    %2946 = vmatpush1.msra.mxu0 0.0
    %2947 = vmatprep.subr.mxu0 0.0
    %2948 = vmatpush1.msra.mxu0 0.0
    %2949 = vmatprep.subr.mxu0 0.0
    %2950 = vmatpush1.msra.mxu0 0.0
    %2951 = vmatprep.subr.mxu0 0.0
    %2952 = vmatpush1.msra.mxu0 0.0
    %2953 = vmatprep.subr.mxu0 0.0
    %2954 = vmatpush1.msra.mxu0 0.0
    %2955 = vmatprep.subr.mxu0 0.0
    %2956 = vmatpush1.msra.mxu0 0.0
    %2957 = vmatprep.subr.mxu0 0.0
    %2958 = vmatpush1.msra.mxu0 0.0
    %2959 = vmatprep.subr.mxu0 0.0
    %2960 = vmatpush1.msra.mxu0 0.0
    %2961 = vmatprep.subr.mxu0 0.0
    %2962 = vmatpush1.msra.mxu0 0.0
    %2963 = vmatprep.subr.mxu0 0.0
    %2964 = vmatpush1.msra.mxu0 0.0
    %2965 = vmatprep.subr.mxu0 0.0
    %2966 = vmatpush1.msra.mxu0 0.0
    %2967 = vmatprep.subr.mxu0 0.0
    %2968 = vmatpush1.msra.mxu0 0.0
    %2969 = vmatprep.subr.mxu0 0.0
    %2970 = vmatpush1.msra.mxu0 0.0
    %2971 = vmatprep.subr.mxu0 0.0
    %2972 = vmatpush1.msra.mxu0 0.0
    %2973 = vmatprep.mubr.f32.mxu0 0.0
    %2974 = vmatmul.mubr.f32.gmra.mrb[0].mxu0 %v2904
    %v2975 = vpop.f32.mrb[0].mxu0
    %v2976 = vadd.f32 0.0, %v2975
    %v2977 = vpop.f32.mrb[0].mxu0
    %2978 = vmatprep.mubr.f32.mxu0 0.0
    %2979 = vmatmul.mubr.f32.gmra.mrb[0].mxu0 %v2907
    %v2980 = vpop.f32.mrb[0].mxu0
    %v2981 = vadd.f32 0.0, %v2980
    %v2982 = vpop.f32.mrb[0].mxu0
    %2983 = vdwg.mxu0
    %v2985 = vsel %vm825, %v2976, 0
    %v2988 = vsel %vm825, %v2981, 0
    %2990 = vmatprep.subr.mxu0 0.0
    %2991 = vmatpush1.msra.mxu0 %v821
    %2992 = vmatprep.subr.mxu0 0.0
    %2993 = vmatpush1.msra.mxu0 %v822
    %2994 = vmatprep.subr.mxu0 0.0
    %2995 = vmatpush1.msra.mxu0 %v823
    %2996 = vmatprep.subr.mxu0 0.0
    %2997 = vmatpush1.msra.mxu0 %v824
    %2998 = vmatprep.subr.mxu0 0.0
    %2999 = vmatpush1.msra.mxu0 0.0
    %3000 = vmatprep.subr.mxu0 0.0
    %3001 = vmatpush1.msra.mxu0 0.0
    %3002 = vmatprep.subr.mxu0 0.0
    %3003 = vmatpush1.msra.mxu0 0.0
    %3004 = vmatprep.subr.mxu0 0.0
    %3005 = vmatpush1.msra.mxu0 0.0
    %3006 = vmatprep.subr.mxu0 0.0
    %3007 = vmatpush1.msra.mxu0 0.0
    %3008 = vmatprep.subr.mxu0 0.0
    %3009 = vmatpush1.msra.mxu0 0.0
    %3010 = vmatprep.subr.mxu0 0.0
    %3011 = vmatpush1.msra.mxu0 0.0
    %3012 = vmatprep.subr.mxu0 0.0
    %3013 = vmatpush1.msra.mxu0 0.0
    %3014 = vmatprep.subr.mxu0 0.0
    %3015 = vmatpush1.msra.mxu0 0.0
    %3016 = vmatprep.subr.mxu0 0.0
    %3017 = vmatpush1.msra.mxu0 0.0
    %3018 = vmatprep.subr.mxu0 0.0
    %3019 = vmatpush1.msra.mxu0 0.0
    %3020 = vmatprep.subr.mxu0 0.0
    %3021 = vmatpush1.msra.mxu0 0.0
    %3022 = vmatprep.subr.mxu0 0.0
    %3023 = vmatpush1.msra.mxu0 0.0
    %3024 = vmatprep.subr.mxu0 0.0
    %3025 = vmatpush1.msra.mxu0 0.0
    %3026 = vmatprep.subr.mxu0 0.0
    %3027 = vmatpush1.msra.mxu0 0.0
    %3028 = vmatprep.subr.mxu0 0.0
    %3029 = vmatpush1.msra.mxu0 0.0
    %3030 = vmatprep.subr.mxu0 0.0
    %3031 = vmatpush1.msra.mxu0 0.0
    %3032 = vmatprep.subr.mxu0 0.0
    %3033 = vmatpush1.msra.mxu0 0.0
    %3034 = vmatprep.subr.mxu0 0.0
    %3035 = vmatpush1.msra.mxu0 0.0
    %3036 = vmatprep.subr.mxu0 0.0
    %3037 = vmatpush1.msra.mxu0 0.0
    %3038 = vmatprep.subr.mxu0 0.0
    %3039 = vmatpush1.msra.mxu0 0.0
    %3040 = vmatprep.subr.mxu0 0.0
    %3041 = vmatpush1.msra.mxu0 0.0
    %3042 = vmatprep.subr.mxu0 0.0
    %3043 = vmatpush1.msra.mxu0 0.0
    %3044 = vmatprep.subr.mxu0 0.0
    %3045 = vmatpush1.msra.mxu0 0.0
    %3046 = vmatprep.subr.mxu0 0.0
    %3047 = vmatpush1.msra.mxu0 0.0
    %3048 = vmatprep.subr.mxu0 0.0
    %3049 = vmatpush1.msra.mxu0 0.0
    %3050 = vmatprep.subr.mxu0 0.0
    %3051 = vmatpush1.msra.mxu0 0.0
    %3052 = vmatprep.subr.mxu0 0.0
    %3053 = vmatpush1.msra.mxu0 0.0
    %3054 = vmatprep.mubr.f32.mxu0 0.0
    %3055 = vmatmul.mubr.f32.gmra.mrb[0].mxu0 %v2985
    %v3056 = vpop.f32.mrb[0].mxu0
    %v3057 = vadd.f32 0.0, %v3056
    %v3058 = vpop.f32.mrb[0].mxu0
    %3059 = vmatprep.mubr.f32.mxu0 0.0
    %3060 = vmatmul.mubr.f32.gmra.mrb[0].mxu0 %v2988
    %v3061 = vpop.f32.mrb[0].mxu0
    %v3062 = vadd.f32 0.0, %v3061
    %v3063 = vpop.f32.mrb[0].mxu0
    %3064 = vdwg.mxu0
    %v3065 = vadd.f32 %v2782, %v3057
    %v3066 = vadd.f32 %v2783, %v3062
    %v3067 = vld [vmem:[%s15] sm:$0x1]
    %v3069 = vlaneseq
    %v3070 = vshrl.u32 %v3069, 7
    %v3071 = vsub.s32 0, %v3070
    %v3072 = vrot.slane %v3067, %v3071
    %v3074 = vadd.f32 %v1945, %v3072
    %v3075 = vadd.f32 %v1946, %v3072
    %v3076 = vadd.f32 %v3065, %v3072
    %v3077 = vadd.f32 %v3066, %v3072
    %v3078 = vadd.f32 %v566, %v3074
    %v3079 = vadd.f32 %v567, %v3075
    %v3080 = vadd.f32 %v568, %v3076
    %v3081 = vadd.f32 %v569, %v3077
    %v3082 = vld [vmem:[#allocation5] sm:$0x1]
    %v3083 = vld [vmem:[#allocation7] sm:$0x1]
    %3084 = vadd.xlane.f32.xlu0 %v3078
    %v3085 = vpop.xlane.xlu0 %3084
    %3086 = vadd.xlane.f32.xlu0 %v3079
    %v3087 = vpop.xlane.xlu0 %3086
    %3088 = vadd.xlane.f32.xlu0 %v3080
    %v3089 = vpop.xlane.xlu0 %3088
    %3090 = vadd.xlane.f32.xlu0 %v3081
    %v3091 = vpop.xlane.xlu0 %3090
    %v3092 = vrcp.pop 128.0
    %v3093 = vmul.f32 %v3085, %v3092
    %v3094 = vmul.f32 %v3087, %v3092
    %v3095 = vmul.f32 %v3089, %v3092
    %v3096 = vmul.f32 %v3091, %v3092
    %v3097 = vsub.f32 %v3078, %v3093
    %v3098 = vsub.f32 %v3079, %v3094
    %v3099 = vsub.f32 %v3080, %v3095
    %v3100 = vsub.f32 %v3081, %v3096
    %v3101 = vmul.f32 %v3097, %v3097
    %v3102 = vmul.f32 %v3098, %v3098
    %v3103 = vmul.f32 %v3099, %v3099
    %v3104 = vmul.f32 %v3100, %v3100
    %3105 = vadd.xlane.f32.xlu0 %v3101
    %v3106 = vpop.xlane.xlu0 %3105
    %3107 = vadd.xlane.f32.xlu0 %v3102
    %v3108 = vpop.xlane.xlu0 %3107
    %3109 = vadd.xlane.f32.xlu0 %v3103
    %v3110 = vpop.xlane.xlu0 %3109
    %3111 = vadd.xlane.f32.xlu0 %v3104
    %v3112 = vpop.xlane.xlu0 %3111
    %v3113 = vmul.f32 %v3106, %v3092
    %v3114 = vmul.f32 %v3108, %v3092
    %v3115 = vmul.f32 %v3110, %v3092
    %v3116 = vmul.f32 %v3112, %v3092
    %v3117 = vadd.f32 %v3113, 1e-05
    %v3118 = vadd.f32 %v3114, 1e-05
    %v3119 = vadd.f32 %v3115, 1e-05
    %v3120 = vadd.f32 %v3116, 1e-05
    %v3121 = vrsqrt.pop %v3117
    %v3122 = vrsqrt.pop %v3118
    %v3123 = vrsqrt.pop %v3119
    %v3124 = vrsqrt.pop %v3120
    %v3125 = vmul.f32 %v3097, %v3121
    %v3126 = vmul.f32 %v3098, %v3122
    %v3127 = vmul.f32 %v3099, %v3123
    %v3128 = vmul.f32 %v3100, %v3124
    %v3130 = vlaneseq
    %v3131 = vshrl.u32 %v3130, 7
    %v3132 = vsub.s32 0, %v3131
    %v3133 = vrot.slane %v3082, %v3132
    %v3135 = vmul.f32 %v3125, %v3133
    %v3136 = vmul.f32 %v3126, %v3133
    %v3137 = vmul.f32 %v3127, %v3133
    %v3138 = vmul.f32 %v3128, %v3133
    %v3140 = vlaneseq
    %v3141 = vshrl.u32 %v3140, 7
    %v3142 = vsub.s32 0, %v3141
    %v3143 = vrot.slane %v3083, %v3142
    %v3145 = vadd.f32 %v3135, %v3143
    %v3146 = vadd.f32 %v3136, %v3143
    %v3147 = vadd.f32 %v3137, %v3143
    %v3148 = vadd.f32 %v3138, %v3143
    %v3149 = vld [vmem:[#allocation8] sm:$0xff]
    %v3150 = vld [vmem:[#allocation8 + $0x8] sm:$0xff]
    %v3151 = vld [vmem:[#allocation8 + $0x10] sm:$0xff]
    %v3152 = vld [vmem:[#allocation8 + $0x18] sm:$0xff]
    %v3153 = vld [vmem:[#allocation8 + $0x20] sm:$0xff]
    %v3154 = vld [vmem:[#allocation8 + $0x28] sm:$0xff]
    %v3155 = vld [vmem:[#allocation8 + $0x30] sm:$0xff]
    %v3156 = vld [vmem:[#allocation8 + $0x38] sm:$0xff]
    %v3157 = vld [vmem:[#allocation8 + $0x40] sm:$0xff]
    %v3158 = vld [vmem:[#allocation8 + $0x48] sm:$0xff]
    %v3159 = vld [vmem:[#allocation8 + $0x50] sm:$0xff]
    %v3160 = vld [vmem:[#allocation8 + $0x58] sm:$0xff]
    %v3161 = vld [vmem:[#allocation8 + $0x60] sm:$0xff]
    %v3162 = vld [vmem:[#allocation8 + $0x68] sm:$0xff]
    %v3163 = vld [vmem:[#allocation8 + $0x70] sm:$0xff]
    %v3164 = vld [vmem:[#allocation8 + $0x78] sm:$0xff]
    %v3165 = vld [vmem:[#allocation8 + $0x80] sm:$0xff]
    %v3166 = vld [vmem:[#allocation8 + $0x88] sm:$0xff]
    %v3167 = vld [vmem:[#allocation8 + $0x90] sm:$0xff]
    %v3168 = vld [vmem:[#allocation8 + $0x98] sm:$0xff]
    %v3169 = vld [vmem:[#allocation8 + $0xa0] sm:$0xff]
    %v3170 = vld [vmem:[#allocation8 + $0xa8] sm:$0xff]
    %v3171 = vld [vmem:[#allocation8 + $0xb0] sm:$0xff]
    %v3172 = vld [vmem:[#allocation8 + $0xb8] sm:$0xff]
    %v3173 = vld [vmem:[#allocation8 + $0xc0] sm:$0xff]
    %v3174 = vld [vmem:[#allocation8 + $0xc8] sm:$0xff]
    %v3175 = vld [vmem:[#allocation8 + $0xd0] sm:$0xff]
    %v3176 = vld [vmem:[#allocation8 + $0xd8] sm:$0xff]
    %v3177 = vld [vmem:[#allocation8 + $0xe0] sm:$0xff]
    %v3178 = vld [vmem:[#allocation8 + $0xe8] sm:$0xff]
    %v3179 = vld [vmem:[#allocation8 + $0xf0] sm:$0xff]
    %v3180 = vld [vmem:[#allocation8 + $0xf8] sm:$0xff]
    %v3181 = vld [vmem:[%s23] sm:$0x3]
    %v3183 = vlaneseq
    %v3184 = vshrl.u32 %v3183, 7
    %v3185 = vsub.s32 0, %v3184
    %v3186 = vrot.slane %v3181, %v3185
    %v3187 = vlaneseq
    %v3188 = vshrl.u32 %v3187, 7
    %v3189 = vsub.s32 1, %v3188
    %v3190 = vrot.slane %v3181, %v3189
    %3193 = vmatprep.subr.mxu0 %v3150
    %3194 = vmatpush1.msra.mxu0 %v3149
    %3195 = vmatprep.subr.mxu0 %v3152
    %3196 = vmatpush1.msra.mxu0 %v3151
    %3197 = vmatprep.subr.mxu0 %v3154
    %3198 = vmatpush1.msra.mxu0 %v3153
    %3199 = vmatprep.subr.mxu0 %v3156
    %3200 = vmatpush1.msra.mxu0 %v3155
    %3201 = vmatprep.subr.mxu0 %v3158
    %3202 = vmatpush1.msra.mxu0 %v3157
    %3203 = vmatprep.subr.mxu0 %v3160
    %3204 = vmatpush1.msra.mxu0 %v3159
    %3205 = vmatprep.subr.mxu0 %v3162
    %3206 = vmatpush1.msra.mxu0 %v3161
    %3207 = vmatprep.subr.mxu0 %v3164
    %3208 = vmatpush1.msra.mxu0 %v3163
    %3209 = vmatprep.subr.mxu0 %v3166
    %3210 = vmatpush1.msra.mxu0 %v3165
    %3211 = vmatprep.subr.mxu0 %v3168
    %3212 = vmatpush1.msra.mxu0 %v3167
    %3213 = vmatprep.subr.mxu0 %v3170
    %3214 = vmatpush1.msra.mxu0 %v3169
    %3215 = vmatprep.subr.mxu0 %v3172
    %3216 = vmatpush1.msra.mxu0 %v3171
    %3217 = vmatprep.subr.mxu0 %v3174
    %3218 = vmatpush1.msra.mxu0 %v3173
    %3219 = vmatprep.subr.mxu0 %v3176
    %3220 = vmatpush1.msra.mxu0 %v3175
    %3221 = vmatprep.subr.mxu0 %v3178
    %3222 = vmatpush1.msra.mxu0 %v3177
    %3223 = vmatprep.subr.mxu0 %v3180
    %3224 = vmatpush1.msra.mxu0 %v3179
    %3225 = vmatprep.subr.mxu0 0.0
    %3226 = vmatpush1.msra.mxu0 0.0
    %3227 = vmatprep.subr.mxu0 0.0
    %3228 = vmatpush1.msra.mxu0 0.0
    %3229 = vmatprep.subr.mxu0 0.0
    %3230 = vmatpush1.msra.mxu0 0.0
    %3231 = vmatprep.subr.mxu0 0.0
    %3232 = vmatpush1.msra.mxu0 0.0
    %3233 = vmatprep.subr.mxu0 0.0
    %3234 = vmatpush1.msra.mxu0 0.0
    %3235 = vmatprep.subr.mxu0 0.0
    %3236 = vmatpush1.msra.mxu0 0.0
    %3237 = vmatprep.subr.mxu0 0.0
    %3238 = vmatpush1.msra.mxu0 0.0
    %3239 = vmatprep.subr.mxu0 0.0
    %3240 = vmatpush1.msra.mxu0 0.0
    %3241 = vmatprep.subr.mxu0 0.0
    %3242 = vmatpush1.msra.mxu0 0.0
    %3243 = vmatprep.subr.mxu0 0.0
    %3244 = vmatpush1.msra.mxu0 0.0
    %3245 = vmatprep.subr.mxu0 0.0
    %3246 = vmatpush1.msra.mxu0 0.0
    %3247 = vmatprep.subr.mxu0 0.0
    %3248 = vmatpush1.msra.mxu0 0.0
    %3249 = vmatprep.subr.mxu0 0.0
    %3250 = vmatpush1.msra.mxu0 0.0
    %3251 = vmatprep.subr.mxu0 0.0
    %3252 = vmatpush1.msra.mxu0 0.0
    %3253 = vmatprep.subr.mxu0 0.0
    %3254 = vmatpush1.msra.mxu0 0.0
    %3255 = vmatprep.subr.mxu0 0.0
    %3256 = vmatpush1.msra.mxu0 0.0
    %3257 = vmatprep.mubr.f32.mxu0 0.0
    %3258 = vmatmul.mubr.f32.gmra.mrb[0].mxu0 %v3145
    %v3259 = vpop.f32.mrb[0].mxu0
    %v3260 = vadd.f32 %v3186, %v3259
    %v3261 = vpop.f32.mrb[0].mxu0
    %v3262 = vadd.f32 %v3190, %v3261
    %3263 = vmatprep.mubr.f32.mxu0 0.0
    %3264 = vmatmul.mubr.f32.gmra.mrb[0].mxu0 %v3146
    %v3265 = vpop.f32.mrb[0].mxu0
    %v3266 = vadd.f32 %v3186, %v3265
    %v3267 = vpop.f32.mrb[0].mxu0
    %v3268 = vadd.f32 %v3190, %v3267
    %3269 = vmatprep.mubr.f32.mxu0 0.0
    %3270 = vmatmul.mubr.f32.gmra.mrb[0].mxu0 %v3147
    %v3271 = vpop.f32.mrb[0].mxu0
    %v3272 = vadd.f32 %v3186, %v3271
    %v3273 = vpop.f32.mrb[0].mxu0
    %v3274 = vadd.f32 %v3190, %v3273
    %3275 = vmatprep.mubr.f32.mxu0 0.0
    %3276 = vmatmul.mubr.f32.gmra.mrb[0].mxu0 %v3148
    %v3277 = vpop.f32.mrb[0].mxu0
    %v3278 = vadd.f32 %v3186, %v3277
    %v3279 = vpop.f32.mrb[0].mxu0
    %v3280 = vadd.f32 %v3190, %v3279
    %3281 = vdwg.mxu0
    %v3282 = vmul.f32 %v3260, 0.5
    %v3283 = vmul.f32 %v3262, 0.5
    %v3284 = vmul.f32 %v3266, 0.5
    %v3285 = vmul.f32 %v3268, 0.5
    %v3286 = vmul.f32 %v3272, 0.5
    %v3287 = vmul.f32 %v3274, 0.5
    %v3288 = vmul.f32 %v3278, 0.5
    %v3289 = vmul.f32 %v3280, 0.5
    %v3290 = vmul.f32 %v3260, 0.70710677
    %v3291 = vmul.f32 %v3262, 0.70710677
    %v3292 = vmul.f32 %v3266, 0.70710677
    %v3293 = vmul.f32 %v3268, 0.70710677
    %v3294 = vmul.f32 %v3272, 0.70710677
    %v3295 = vmul.f32 %v3274, 0.70710677
    %v3296 = vmul.f32 %v3278, 0.70710677
    %v3297 = vmul.f32 %v3280, 0.70710677
    %v3298 = verf.f32.pop %v3290
    %v3299 = verf.f32.pop %v3291
    %v3300 = verf.f32.pop %v3292
    %v3301 = verf.f32.pop %v3293
    %v3302 = verf.f32.pop %v3294
    %v3303 = verf.f32.pop %v3295
    %v3304 = verf.f32.pop %v3296
    %v3305 = verf.f32.pop %v3297
    %v3306 = vadd.f32 %v3298, 1.0
    %v3307 = vadd.f32 %v3299, 1.0
    %v3308 = vadd.f32 %v3300, 1.0
    %v3309 = vadd.f32 %v3301, 1.0
    %v3310 = vadd.f32 %v3302, 1.0
    %v3311 = vadd.f32 %v3303, 1.0
    %v3312 = vadd.f32 %v3304, 1.0
    %v3313 = vadd.f32 %v3305, 1.0
    %v3314 = vmul.f32 %v3282, %v3306
    %v3315 = vmul.f32 %v3283, %v3307
    %v3316 = vmul.f32 %v3284, %v3308
    %v3317 = vmul.f32 %v3285, %v3309
    %v3318 = vmul.f32 %v3286, %v3310
    %v3319 = vmul.f32 %v3287, %v3311
    %v3320 = vmul.f32 %v3288, %v3312
    %v3321 = vmul.f32 %v3289, %v3313
    %v3322 = vld [vmem:[#allocation10] sm:$0xff]
    %v3323 = vld [vmem:[#allocation10 + $0x8] sm:$0xff]
    %v3324 = vld [vmem:[#allocation10 + $0x10] sm:$0xff]
    %v3325 = vld [vmem:[#allocation10 + $0x18] sm:$0xff]
    %v3326 = vld [vmem:[#allocation10 + $0x20] sm:$0xff]
    %v3327 = vld [vmem:[#allocation10 + $0x28] sm:$0xff]
    %v3328 = vld [vmem:[#allocation10 + $0x30] sm:$0xff]
    %v3329 = vld [vmem:[#allocation10 + $0x38] sm:$0xff]
    %v3330 = vld [vmem:[#allocation10 + $0x40] sm:$0xff]
    %v3331 = vld [vmem:[#allocation10 + $0x48] sm:$0xff]
    %v3332 = vld [vmem:[#allocation10 + $0x50] sm:$0xff]
    %v3333 = vld [vmem:[#allocation10 + $0x58] sm:$0xff]
    %v3334 = vld [vmem:[#allocation10 + $0x60] sm:$0xff]
    %v3335 = vld [vmem:[#allocation10 + $0x68] sm:$0xff]
    %v3336 = vld [vmem:[#allocation10 + $0x70] sm:$0xff]
    %v3337 = vld [vmem:[#allocation10 + $0x78] sm:$0xff]
    %v3338 = vld [vmem:[#allocation10 + $0x80] sm:$0xff]
    %v3339 = vld [vmem:[#allocation10 + $0x88] sm:$0xff]
    %v3340 = vld [vmem:[#allocation10 + $0x90] sm:$0xff]
    %v3341 = vld [vmem:[#allocation10 + $0x98] sm:$0xff]
    %v3342 = vld [vmem:[#allocation10 + $0xa0] sm:$0xff]
    %v3343 = vld [vmem:[#allocation10 + $0xa8] sm:$0xff]
    %v3344 = vld [vmem:[#allocation10 + $0xb0] sm:$0xff]
    %v3345 = vld [vmem:[#allocation10 + $0xb8] sm:$0xff]
    %v3346 = vld [vmem:[#allocation10 + $0xc0] sm:$0xff]
    %v3347 = vld [vmem:[#allocation10 + $0xc8] sm:$0xff]
    %v3348 = vld [vmem:[#allocation10 + $0xd0] sm:$0xff]
    %v3349 = vld [vmem:[#allocation10 + $0xd8] sm:$0xff]
    %v3350 = vld [vmem:[#allocation10 + $0xe0] sm:$0xff]
    %v3351 = vld [vmem:[#allocation10 + $0xe8] sm:$0xff]
    %v3352 = vld [vmem:[#allocation10 + $0xf0] sm:$0xff]
    %v3353 = vld [vmem:[#allocation10 + $0xf8] sm:$0xff]
    %3354 = vmatprep.subr.mxu0 0.0
    %3355 = vmatpush1.msra.mxu0 %v3322
    %3356 = vmatprep.subr.mxu0 0.0
    %3357 = vmatpush1.msra.mxu0 %v3323
    %3358 = vmatprep.subr.mxu0 0.0
    %3359 = vmatpush1.msra.mxu0 %v3324
    %3360 = vmatprep.subr.mxu0 0.0
    %3361 = vmatpush1.msra.mxu0 %v3325
    %3362 = vmatprep.subr.mxu0 0.0
    %3363 = vmatpush1.msra.mxu0 %v3326
    %3364 = vmatprep.subr.mxu0 0.0
    %3365 = vmatpush1.msra.mxu0 %v3327
    %3366 = vmatprep.subr.mxu0 0.0
    %3367 = vmatpush1.msra.mxu0 %v3328
    %3368 = vmatprep.subr.mxu0 0.0
    %3369 = vmatpush1.msra.mxu0 %v3329
    %3370 = vmatprep.subr.mxu0 0.0
    %3371 = vmatpush1.msra.mxu0 %v3330
    %3372 = vmatprep.subr.mxu0 0.0
    %3373 = vmatpush1.msra.mxu0 %v3331
    %3374 = vmatprep.subr.mxu0 0.0
    %3375 = vmatpush1.msra.mxu0 %v3332
    %3376 = vmatprep.subr.mxu0 0.0
    %3377 = vmatpush1.msra.mxu0 %v3333
    %3378 = vmatprep.subr.mxu0 0.0
    %3379 = vmatpush1.msra.mxu0 %v3334
    %3380 = vmatprep.subr.mxu0 0.0
    %3381 = vmatpush1.msra.mxu0 %v3335
    %3382 = vmatprep.subr.mxu0 0.0
    %3383 = vmatpush1.msra.mxu0 %v3336
    %3384 = vmatprep.subr.mxu0 0.0
    %3385 = vmatpush1.msra.mxu0 %v3337
    %3386 = vmatprep.subr.mxu0 0.0
    %3387 = vmatpush1.msra.mxu0 %v3338
    %3388 = vmatprep.subr.mxu0 0.0
    %3389 = vmatpush1.msra.mxu0 %v3339
    %3390 = vmatprep.subr.mxu0 0.0
    %3391 = vmatpush1.msra.mxu0 %v3340
    %3392 = vmatprep.subr.mxu0 0.0
    %3393 = vmatpush1.msra.mxu0 %v3341
    %3394 = vmatprep.subr.mxu0 0.0
    %3395 = vmatpush1.msra.mxu0 %v3342
    %3396 = vmatprep.subr.mxu0 0.0
    %3397 = vmatpush1.msra.mxu0 %v3343
    %3398 = vmatprep.subr.mxu0 0.0
    %3399 = vmatpush1.msra.mxu0 %v3344
    %3400 = vmatprep.subr.mxu0 0.0
    %3401 = vmatpush1.msra.mxu0 %v3345
    %3402 = vmatprep.subr.mxu0 0.0
    %3403 = vmatpush1.msra.mxu0 %v3346
    %3404 = vmatprep.subr.mxu0 0.0
    %3405 = vmatpush1.msra.mxu0 %v3347
    %3406 = vmatprep.subr.mxu0 0.0
    %3407 = vmatpush1.msra.mxu0 %v3348
    %3408 = vmatprep.subr.mxu0 0.0
    %3409 = vmatpush1.msra.mxu0 %v3349
    %3410 = vmatprep.subr.mxu0 0.0
    %3411 = vmatpush1.msra.mxu0 %v3350
    %3412 = vmatprep.subr.mxu0 0.0
    %3413 = vmatpush1.msra.mxu0 %v3351
    %3414 = vmatprep.subr.mxu0 0.0
    %3415 = vmatpush1.msra.mxu0 %v3352
    %3416 = vmatprep.subr.mxu0 0.0
    %3417 = vmatpush1.msra.mxu0 %v3353
    %3418 = vmatprep.mubr.f32.mxu0 %v3315
    %3419 = vmatmul.mubr.f32.gmra.mrb[0].mxu0 %v3314
    %v3420 = vpop.f32.mrb[0].mxu0
    %v3421 = vadd.f32 0.0, %v3420
    %v3422 = vpop.f32.mrb[0].mxu0
    %3423 = vmatprep.mubr.f32.mxu0 %v3317
    %3424 = vmatmul.mubr.f32.gmra.mrb[0].mxu0 %v3316
    %v3425 = vpop.f32.mrb[0].mxu0
    %v3426 = vadd.f32 0.0, %v3425
    %v3427 = vpop.f32.mrb[0].mxu0
    %3428 = vmatprep.mubr.f32.mxu0 %v3319
    %3429 = vmatmul.mubr.f32.gmra.mrb[0].mxu0 %v3318
    %v3430 = vpop.f32.mrb[0].mxu0
    %v3431 = vadd.f32 0.0, %v3430
    %v3432 = vpop.f32.mrb[0].mxu0
    %3433 = vmatprep.mubr.f32.mxu0 %v3321
    %3434 = vmatmul.mubr.f32.gmra.mrb[0].mxu0 %v3320
    %v3435 = vpop.f32.mrb[0].mxu0
    %v3436 = vadd.f32 0.0, %v3435
    %v3437 = vpop.f32.mrb[0].mxu0
    %3438 = vdwg.mxu0
    %v3439 = vadd.f32 %v3145, %v3421
    %v3440 = vadd.f32 %v3146, %v3426
    %v3441 = vadd.f32 %v3147, %v3431
    %v3442 = vadd.f32 %v3148, %v3436
    %v3443 = vld [vmem:[%s27] sm:$0x1]
    %v3445 = vlaneseq
    %v3446 = vshrl.u32 %v3445, 7
    %v3447 = vsub.s32 0, %v3446
    %v3448 = vrot.slane %v3443, %v3447
    %v3450 = vadd.f32 %v3439, %v3448
    %v3451 = vadd.f32 %v3440, %v3448
    %v3452 = vadd.f32 %v3441, %v3448
    %v3453 = vadd.f32 %v3442, %v3448
    %v3454 = vld [vmem:[#allocation11] sm:$0x1]
    %v3455 = vld [vmem:[#allocation13] sm:$0x1]
    %3456 = vadd.xlane.f32.xlu0 %v3450
    %v3457 = vpop.xlane.xlu0 %3456
    %3458 = vadd.xlane.f32.xlu0 %v3451
    %v3459 = vpop.xlane.xlu0 %3458
    %3460 = vadd.xlane.f32.xlu0 %v3452
    %v3461 = vpop.xlane.xlu0 %3460
    %3462 = vadd.xlane.f32.xlu0 %v3453
    %v3463 = vpop.xlane.xlu0 %3462
    %v3464 = vmul.f32 %v3457, %v3092
    %v3465 = vmul.f32 %v3459, %v3092
    %v3466 = vmul.f32 %v3461, %v3092
    %v3467 = vmul.f32 %v3463, %v3092
    %v3468 = vsub.f32 %v3450, %v3464
    %v3469 = vsub.f32 %v3451, %v3465
    %v3470 = vsub.f32 %v3452, %v3466
    %v3471 = vsub.f32 %v3453, %v3467
    %v3472 = vmul.f32 %v3468, %v3468
    %v3473 = vmul.f32 %v3469, %v3469
    %v3474 = vmul.f32 %v3470, %v3470
    %v3475 = vmul.f32 %v3471, %v3471
    %3476 = vadd.xlane.f32.xlu0 %v3472
    %v3477 = vpop.xlane.xlu0 %3476
    %3478 = vadd.xlane.f32.xlu0 %v3473
    %v3479 = vpop.xlane.xlu0 %3478
    %3480 = vadd.xlane.f32.xlu0 %v3474
    %v3481 = vpop.xlane.xlu0 %3480
    %3482 = vadd.xlane.f32.xlu0 %v3475
    %v3483 = vpop.xlane.xlu0 %3482
    %v3484 = vmul.f32 %v3477, %v3092
    %v3485 = vmul.f32 %v3479, %v3092
    %v3486 = vmul.f32 %v3481, %v3092
    %v3487 = vmul.f32 %v3483, %v3092
    %v3488 = vadd.f32 %v3484, 1e-05
    %v3489 = vadd.f32 %v3485, 1e-05
    %v3490 = vadd.f32 %v3486, 1e-05
    %v3491 = vadd.f32 %v3487, 1e-05
    %v3492 = vrsqrt.pop %v3488
    %v3493 = vrsqrt.pop %v3489
    %v3494 = vrsqrt.pop %v3490
    %v3495 = vrsqrt.pop %v3491
    %v3496 = vmul.f32 %v3468, %v3492
    %v3497 = vmul.f32 %v3469, %v3493
    %v3498 = vmul.f32 %v3470, %v3494
    %v3499 = vmul.f32 %v3471, %v3495
    %v3501 = vlaneseq
    %v3502 = vshrl.u32 %v3501, 7
    %v3503 = vsub.s32 0, %v3502
    %v3504 = vrot.slane %v3454, %v3503
    %v3506 = vmul.f32 %v3496, %v3504
    %v3507 = vmul.f32 %v3497, %v3504
    %v3508 = vmul.f32 %v3498, %v3504
    %v3509 = vmul.f32 %v3499, %v3504
    %v3511 = vlaneseq
    %v3512 = vshrl.u32 %v3511, 7
    %v3513 = vsub.s32 0, %v3512
    %v3514 = vrot.slane %v3455, %v3513
    %v3516 = vadd.f32 %v3506, %v3514
    %v3517 = vadd.f32 %v3507, %v3514
    %v3518 = vadd.f32 %v3508, %v3514
    %v3519 = vadd.f32 %v3509, %v3514
    %3520 = vst [vmem:[#allocation2 + $0x1] sm:$0xff] %v3516
    %3521 = vst [vmem:[#allocation2 + $0x9] sm:$0xff] %v3517
    %3522 = vst [vmem:[#allocation2] sm:$0x1] %v3516
    %3523 = vst [vmem:[#allocation2 + $0xa] sm:$0x80] %v3517
    %3524 = vst [vmem:[#allocation2 + $0x13] sm:$0xff] %v3518
    %3525 = vst [vmem:[#allocation2 + $0x1b] sm:$0xff] %v3519
    %3526 = vst [vmem:[#allocation2 + $0x12] sm:$0x1] %v3518
    %3527 = vst [vmem:[#allocation2 + $0x1c] sm:$0x80] %v3519
    %v3528 = vld [vmem:[#allocation2] sm:$0xff]
    %v3529 = vld [vmem:[#allocation2 + $0x8] sm:$0xff]
    %v3530 = vld [vmem:[#allocation2 + $0x10] sm:$0xff]
    %v3531 = vld [vmem:[#allocation2 + $0x18] sm:$0xff]
    %v3532 = vld [vmem:[#allocation2 + $0x20] sm:$0xf]
    %v3533 = vld [vmem:[#allocation14] sm:$0xff]
    %v3534 = vld [vmem:[#allocation14 + $0x8] sm:$0xff]
    %v3535 = vld [vmem:[#allocation14 + $0x10] sm:$0xff]
    %v3536 = vld [vmem:[#allocation14 + $0x18] sm:$0xff]
    %v3537 = vld [vmem:[#allocation14 + $0x20] sm:$0xff]
    %v3538 = vld [vmem:[#allocation14 + $0x28] sm:$0xff]
    %v3539 = vld [vmem:[#allocation14 + $0x30] sm:$0xff]
    %v3540 = vld [vmem:[#allocation14 + $0x38] sm:$0xff]
    %v3541 = vld [vmem:[#allocation14 + $0x40] sm:$0xff]
    %v3542 = vld [vmem:[#allocation14 + $0x48] sm:$0xff]
    %v3543 = vld [vmem:[#allocation14 + $0x50] sm:$0xff]
    %v3544 = vld [vmem:[#allocation14 + $0x58] sm:$0xff]
    %v3545 = vld [vmem:[#allocation14 + $0x60] sm:$0xff]
    %v3546 = vld [vmem:[#allocation14 + $0x68] sm:$0xff]
    %v3547 = vld [vmem:[#allocation14 + $0x70] sm:$0xff]
    %v3548 = vld [vmem:[#allocation14 + $0x78] sm:$0xff]
    %3549 = vmatprep.subr.mxu0 0.0
    %3550 = vmatpush1.msra.mxu0 %v3533
    %3551 = vmatprep.subr.mxu0 0.0
    %3552 = vmatpush1.msra.mxu0 %v3534
    %3553 = vmatprep.subr.mxu0 0.0
    %3554 = vmatpush1.msra.mxu0 %v3535
    %3555 = vmatprep.subr.mxu0 0.0
    %3556 = vmatpush1.msra.mxu0 %v3536
    %3557 = vmatprep.subr.mxu0 0.0
    %3558 = vmatpush1.msra.mxu0 %v3537
    %3559 = vmatprep.subr.mxu0 0.0
    %3560 = vmatpush1.msra.mxu0 %v3538
    %3561 = vmatprep.subr.mxu0 0.0
    %3562 = vmatpush1.msra.mxu0 %v3539
    %3563 = vmatprep.subr.mxu0 0.0
    %3564 = vmatpush1.msra.mxu0 %v3540
    %3565 = vmatprep.subr.mxu0 0.0
    %3566 = vmatpush1.msra.mxu0 %v3541
    %3567 = vmatprep.subr.mxu0 0.0
    %3568 = vmatpush1.msra.mxu0 %v3542
    %3569 = vmatprep.subr.mxu0 0.0
    %3570 = vmatpush1.msra.mxu0 %v3543
    %3571 = vmatprep.subr.mxu0 0.0
    %3572 = vmatpush1.msra.mxu0 %v3544
    %3573 = vmatprep.subr.mxu0 0.0
    %3574 = vmatpush1.msra.mxu0 %v3545
    %3575 = vmatprep.subr.mxu0 0.0
    %3576 = vmatpush1.msra.mxu0 %v3546
    %3577 = vmatprep.subr.mxu0 0.0
    %3578 = vmatpush1.msra.mxu0 %v3547
    %3579 = vmatprep.subr.mxu0 0.0
    %3580 = vmatpush1.msra.mxu0 %v3548
    %3581 = vmatprep.subr.mxu0 0.0
    %3582 = vmatpush1.msra.mxu0 0.0
    %3583 = vmatprep.subr.mxu0 0.0
    %3584 = vmatpush1.msra.mxu0 0.0
    %3585 = vmatprep.subr.mxu0 0.0
    %3586 = vmatpush1.msra.mxu0 0.0
    %3587 = vmatprep.subr.mxu0 0.0
    %3588 = vmatpush1.msra.mxu0 0.0
    %3589 = vmatprep.subr.mxu0 0.0
    %3590 = vmatpush1.msra.mxu0 0.0
    %3591 = vmatprep.subr.mxu0 0.0
    %3592 = vmatpush1.msra.mxu0 0.0
    %3593 = vmatprep.subr.mxu0 0.0
    %3594 = vmatpush1.msra.mxu0 0.0
    %3595 = vmatprep.subr.mxu0 0.0
    %3596 = vmatpush1.msra.mxu0 0.0
    %3597 = vmatprep.subr.mxu0 0.0
    %3598 = vmatpush1.msra.mxu0 0.0
    %3599 = vmatprep.subr.mxu0 0.0
    %3600 = vmatpush1.msra.mxu0 0.0
    %3601 = vmatprep.subr.mxu0 0.0
    %3602 = vmatpush1.msra.mxu0 0.0
    %3603 = vmatprep.subr.mxu0 0.0
    %3604 = vmatpush1.msra.mxu0 0.0
    %3605 = vmatprep.subr.mxu0 0.0
    %3606 = vmatpush1.msra.mxu0 0.0
    %3607 = vmatprep.subr.mxu0 0.0
    %3608 = vmatpush1.msra.mxu0 0.0
    %3609 = vmatprep.subr.mxu0 0.0
    %3610 = vmatpush1.msra.mxu0 0.0
    %3611 = vmatprep.subr.mxu0 0.0
    %3612 = vmatpush1.msra.mxu0 0.0
    %3613 = vmatprep.mubr.f32.mxu0 0.0
    %3614 = vmatmul.mubr.f32.gmra.mrb[0].mxu0 %v3528
    %v3615 = vpop.f32.mrb[0].mxu0
    %v3616 = vadd.f32 0.0, %v3615
    %v3617 = vpop.f32.mrb[0].mxu0
    %3618 = vmatprep.mubr.f32.mxu0 0.0
    %3619 = vmatmul.mubr.f32.gmra.mrb[0].mxu0 %v3529
    %v3620 = vpop.f32.mrb[0].mxu0
    %v3621 = vadd.f32 0.0, %v3620
    %v3622 = vpop.f32.mrb[0].mxu0
    %3623 = vmatprep.mubr.f32.mxu0 0.0
    %3624 = vmatmul.mubr.f32.gmra.mrb[0].mxu0 %v3530
    %v3625 = vpop.f32.mrb[0].mxu0
    %v3626 = vadd.f32 0.0, %v3625
    %v3627 = vpop.f32.mrb[0].mxu0
    %3628 = vmatprep.mubr.f32.mxu0 0.0
    %3629 = vmatmul.mubr.f32.gmra.mrb[0].mxu0 %v3531
    %v3630 = vpop.f32.mrb[0].mxu0
    %v3631 = vadd.f32 0.0, %v3630
    %v3632 = vpop.f32.mrb[0].mxu0
    %3633 = vmatprep.mubr.f32.mxu0 0.0
    %3634 = vmatmul.mubr.f32.gmra.mrb[0].mxu0 %v3532
    %v3635 = vpop.f32.mrb[0].mxu0
    %v3636 = vadd.f32 0.0, %v3635
    %v3637 = vpop.f32.mrb[0].mxu0
    %3638 = vdwg.mxu0
    %s3639 = scalar_lea.vmem [#allocation14], 128
    %v3640 = vld [vmem:[%s3639] sm:$0xff]
    %v3641 = vld [vmem:[%s3639 + $0x8] sm:$0xff]
    %v3642 = vld [vmem:[%s3639 + $0x10] sm:$0xff]
    %v3643 = vld [vmem:[%s3639 + $0x18] sm:$0xff]
    %v3644 = vld [vmem:[%s3639 + $0x20] sm:$0xff]
    %v3645 = vld [vmem:[%s3639 + $0x28] sm:$0xff]
    %v3646 = vld [vmem:[%s3639 + $0x30] sm:$0xff]
    %v3647 = vld [vmem:[%s3639 + $0x38] sm:$0xff]
    %v3648 = vld [vmem:[%s3639 + $0x40] sm:$0xff]
    %v3649 = vld [vmem:[%s3639 + $0x48] sm:$0xff]
    %v3650 = vld [vmem:[%s3639 + $0x50] sm:$0xff]
    %v3651 = vld [vmem:[%s3639 + $0x58] sm:$0xff]
    %v3652 = vld [vmem:[%s3639 + $0x60] sm:$0xff]
    %v3653 = vld [vmem:[%s3639 + $0x68] sm:$0xff]
    %v3654 = vld [vmem:[%s3639 + $0x70] sm:$0xff]
    %v3655 = vld [vmem:[%s3639 + $0x78] sm:$0xff]
    %3656 = vmatprep.subr.mxu0 0.0
    %3657 = vmatpush1.msra.mxu0 %v3640
    %3658 = vmatprep.subr.mxu0 0.0
    %3659 = vmatpush1.msra.mxu0 %v3641
    %3660 = vmatprep.subr.mxu0 0.0
    %3661 = vmatpush1.msra.mxu0 %v3642
    %3662 = vmatprep.subr.mxu0 0.0
    %3663 = vmatpush1.msra.mxu0 %v3643
    %3664 = vmatprep.subr.mxu0 0.0
    %3665 = vmatpush1.msra.mxu0 %v3644
    %3666 = vmatprep.subr.mxu0 0.0
    %3667 = vmatpush1.msra.mxu0 %v3645
    %3668 = vmatprep.subr.mxu0 0.0
    %3669 = vmatpush1.msra.mxu0 %v3646
    %3670 = vmatprep.subr.mxu0 0.0
    %3671 = vmatpush1.msra.mxu0 %v3647
    %3672 = vmatprep.subr.mxu0 0.0
    %3673 = vmatpush1.msra.mxu0 %v3648
    %3674 = vmatprep.subr.mxu0 0.0
    %3675 = vmatpush1.msra.mxu0 %v3649
    %3676 = vmatprep.subr.mxu0 0.0
    %3677 = vmatpush1.msra.mxu0 %v3650
    %3678 = vmatprep.subr.mxu0 0.0
    %3679 = vmatpush1.msra.mxu0 %v3651
    %3680 = vmatprep.subr.mxu0 0.0
    %3681 = vmatpush1.msra.mxu0 %v3652
    %3682 = vmatprep.subr.mxu0 0.0
    %3683 = vmatpush1.msra.mxu0 %v3653
    %3684 = vmatprep.subr.mxu0 0.0
    %3685 = vmatpush1.msra.mxu0 %v3654
    %3686 = vmatprep.subr.mxu0 0.0
    %3687 = vmatpush1.msra.mxu0 %v3655
    %3688 = vmatprep.subr.mxu0 0.0
    %3689 = vmatpush1.msra.mxu0 0.0
    %3690 = vmatprep.subr.mxu0 0.0
    %3691 = vmatpush1.msra.mxu0 0.0
    %3692 = vmatprep.subr.mxu0 0.0
    %3693 = vmatpush1.msra.mxu0 0.0
    %3694 = vmatprep.subr.mxu0 0.0
    %3695 = vmatpush1.msra.mxu0 0.0
    %3696 = vmatprep.subr.mxu0 0.0
    %3697 = vmatpush1.msra.mxu0 0.0
    %3698 = vmatprep.subr.mxu0 0.0
    %3699 = vmatpush1.msra.mxu0 0.0
    %3700 = vmatprep.subr.mxu0 0.0
    %3701 = vmatpush1.msra.mxu0 0.0
    %3702 = vmatprep.subr.mxu0 0.0
    %3703 = vmatpush1.msra.mxu0 0.0
    %3704 = vmatprep.subr.mxu0 0.0
    %3705 = vmatpush1.msra.mxu0 0.0
    %3706 = vmatprep.subr.mxu0 0.0
    %3707 = vmatpush1.msra.mxu0 0.0
    %3708 = vmatprep.subr.mxu0 0.0
    %3709 = vmatpush1.msra.mxu0 0.0
    %3710 = vmatprep.subr.mxu0 0.0
    %3711 = vmatpush1.msra.mxu0 0.0
    %3712 = vmatprep.subr.mxu0 0.0
    %3713 = vmatpush1.msra.mxu0 0.0
    %3714 = vmatprep.subr.mxu0 0.0
    %3715 = vmatpush1.msra.mxu0 0.0
    %3716 = vmatprep.subr.mxu0 0.0
    %3717 = vmatpush1.msra.mxu0 0.0
    %3718 = vmatprep.subr.mxu0 0.0
    %3719 = vmatpush1.msra.mxu0 0.0
    %3720 = vmatprep.mubr.f32.mxu0 0.0
    %3721 = vmatmul.mubr.f32.gmra.mrb[0].mxu0 %v3528
    %v3722 = vpop.f32.mrb[0].mxu0
    %v3723 = vadd.f32 0.0, %v3722
    %v3724 = vpop.f32.mrb[0].mxu0
    %3725 = vmatprep.mubr.f32.mxu0 0.0
    %3726 = vmatmul.mubr.f32.gmra.mrb[0].mxu0 %v3529
    %v3727 = vpop.f32.mrb[0].mxu0
    %v3728 = vadd.f32 0.0, %v3727
    %v3729 = vpop.f32.mrb[0].mxu0
    %3730 = vmatprep.mubr.f32.mxu0 0.0
    %3731 = vmatmul.mubr.f32.gmra.mrb[0].mxu0 %v3530
    %v3732 = vpop.f32.mrb[0].mxu0
    %v3733 = vadd.f32 0.0, %v3732
    %v3734 = vpop.f32.mrb[0].mxu0
    %3735 = vmatprep.mubr.f32.mxu0 0.0
    %3736 = vmatmul.mubr.f32.gmra.mrb[0].mxu0 %v3531
    %v3737 = vpop.f32.mrb[0].mxu0
    %v3738 = vadd.f32 0.0, %v3737
    %v3739 = vpop.f32.mrb[0].mxu0
    %3740 = vmatprep.mubr.f32.mxu0 0.0
    %3741 = vmatmul.mubr.f32.gmra.mrb[0].mxu0 %v3532
    %v3742 = vpop.f32.mrb[0].mxu0
    %v3743 = vadd.f32 0.0, %v3742
    %v3744 = vpop.f32.mrb[0].mxu0
    %3745 = vdwg.mxu0
    %s3746 = scalar_lea.vmem [#allocation14], 256
    %v3747 = vld [vmem:[%s3746] sm:$0xff]
    %v3748 = vld [vmem:[%s3746 + $0x8] sm:$0xff]
    %v3749 = vld [vmem:[%s3746 + $0x10] sm:$0xff]
    %v3750 = vld [vmem:[%s3746 + $0x18] sm:$0xff]
    %v3751 = vld [vmem:[%s3746 + $0x20] sm:$0xff]
    %v3752 = vld [vmem:[%s3746 + $0x28] sm:$0xff]
    %v3753 = vld [vmem:[%s3746 + $0x30] sm:$0xff]
    %v3754 = vld [vmem:[%s3746 + $0x38] sm:$0xff]
    %v3755 = vld [vmem:[%s3746 + $0x40] sm:$0xff]
    %v3756 = vld [vmem:[%s3746 + $0x48] sm:$0xff]
    %v3757 = vld [vmem:[%s3746 + $0x50] sm:$0xff]
    %v3758 = vld [vmem:[%s3746 + $0x58] sm:$0xff]
    %v3759 = vld [vmem:[%s3746 + $0x60] sm:$0xff]
    %v3760 = vld [vmem:[%s3746 + $0x68] sm:$0xff]
    %v3761 = vld [vmem:[%s3746 + $0x70] sm:$0xff]
    %v3762 = vld [vmem:[%s3746 + $0x78] sm:$0xff]
    %3763 = vmatprep.subr.mxu0 0.0
    %3764 = vmatpush1.msra.mxu0 %v3747
    %3765 = vmatprep.subr.mxu0 0.0
    %3766 = vmatpush1.msra.mxu0 %v3748
    %3767 = vmatprep.subr.mxu0 0.0
    %3768 = vmatpush1.msra.mxu0 %v3749
    %3769 = vmatprep.subr.mxu0 0.0
    %3770 = vmatpush1.msra.mxu0 %v3750
    %3771 = vmatprep.subr.mxu0 0.0
    %3772 = vmatpush1.msra.mxu0 %v3751
    %3773 = vmatprep.subr.mxu0 0.0
    %3774 = vmatpush1.msra.mxu0 %v3752
    %3775 = vmatprep.subr.mxu0 0.0
    %3776 = vmatpush1.msra.mxu0 %v3753
    %3777 = vmatprep.subr.mxu0 0.0
    %3778 = vmatpush1.msra.mxu0 %v3754
    %3779 = vmatprep.subr.mxu0 0.0
    %3780 = vmatpush1.msra.mxu0 %v3755
    %3781 = vmatprep.subr.mxu0 0.0
    %3782 = vmatpush1.msra.mxu0 %v3756
    %3783 = vmatprep.subr.mxu0 0.0
    %3784 = vmatpush1.msra.mxu0 %v3757
    %3785 = vmatprep.subr.mxu0 0.0
    %3786 = vmatpush1.msra.mxu0 %v3758
    %3787 = vmatprep.subr.mxu0 0.0
    %3788 = vmatpush1.msra.mxu0 %v3759
    %3789 = vmatprep.subr.mxu0 0.0
    %3790 = vmatpush1.msra.mxu0 %v3760
    %3791 = vmatprep.subr.mxu0 0.0
    %3792 = vmatpush1.msra.mxu0 %v3761
    %3793 = vmatprep.subr.mxu0 0.0
    %3794 = vmatpush1.msra.mxu0 %v3762
    %3795 = vmatprep.subr.mxu0 0.0
    %3796 = vmatpush1.msra.mxu0 0.0
    %3797 = vmatprep.subr.mxu0 0.0
    %3798 = vmatpush1.msra.mxu0 0.0
    %3799 = vmatprep.subr.mxu0 0.0
    %3800 = vmatpush1.msra.mxu0 0.0
    %3801 = vmatprep.subr.mxu0 0.0
    %3802 = vmatpush1.msra.mxu0 0.0
    %3803 = vmatprep.subr.mxu0 0.0
    %3804 = vmatpush1.msra.mxu0 0.0
    %3805 = vmatprep.subr.mxu0 0.0
    %3806 = vmatpush1.msra.mxu0 0.0
    %3807 = vmatprep.subr.mxu0 0.0
    %3808 = vmatpush1.msra.mxu0 0.0
    %3809 = vmatprep.subr.mxu0 0.0
    %3810 = vmatpush1.msra.mxu0 0.0
    %3811 = vmatprep.subr.mxu0 0.0
    %3812 = vmatpush1.msra.mxu0 0.0
    %3813 = vmatprep.subr.mxu0 0.0
    %3814 = vmatpush1.msra.mxu0 0.0
    %3815 = vmatprep.subr.mxu0 0.0
    %3816 = vmatpush1.msra.mxu0 0.0
    %3817 = vmatprep.subr.mxu0 0.0
    %3818 = vmatpush1.msra.mxu0 0.0
    %3819 = vmatprep.subr.mxu0 0.0
    %3820 = vmatpush1.msra.mxu0 0.0
    %3821 = vmatprep.subr.mxu0 0.0
    %3822 = vmatpush1.msra.mxu0 0.0
    %3823 = vmatprep.subr.mxu0 0.0
    %3824 = vmatpush1.msra.mxu0 0.0
    %3825 = vmatprep.subr.mxu0 0.0
    %3826 = vmatpush1.msra.mxu0 0.0
    %3827 = vmatprep.mubr.f32.mxu0 0.0
    %3828 = vmatmul.mubr.f32.gmra.mrb[0].mxu0 %v3528
    %v3829 = vpop.f32.mrb[0].mxu0
    %v3830 = vadd.f32 0.0, %v3829
    %v3831 = vpop.f32.mrb[0].mxu0
    %3832 = vmatprep.mubr.f32.mxu0 0.0
    %3833 = vmatmul.mubr.f32.gmra.mrb[0].mxu0 %v3529
    %v3834 = vpop.f32.mrb[0].mxu0
    %v3835 = vadd.f32 0.0, %v3834
    %v3836 = vpop.f32.mrb[0].mxu0
    %3837 = vmatprep.mubr.f32.mxu0 0.0
    %3838 = vmatmul.mubr.f32.gmra.mrb[0].mxu0 %v3530
    %v3839 = vpop.f32.mrb[0].mxu0
    %v3840 = vadd.f32 0.0, %v3839
    %v3841 = vpop.f32.mrb[0].mxu0
    %3842 = vmatprep.mubr.f32.mxu0 0.0
    %3843 = vmatmul.mubr.f32.gmra.mrb[0].mxu0 %v3531
    %v3844 = vpop.f32.mrb[0].mxu0
    %v3845 = vadd.f32 0.0, %v3844
    %v3846 = vpop.f32.mrb[0].mxu0
    %3847 = vmatprep.mubr.f32.mxu0 0.0
    %3848 = vmatmul.mubr.f32.gmra.mrb[0].mxu0 %v3532
    %v3849 = vpop.f32.mrb[0].mxu0
    %v3850 = vadd.f32 0.0, %v3849
    %v3851 = vpop.f32.mrb[0].mxu0
    %3852 = vdwg.mxu0
    %v3853 = vld [vmem:[%s35] sm:$0x1]
    %v3855 = vlaneseq
    %v3856 = vshrl.u32 %v3855, 7
    %v3857 = vsub.s32 0, %v3856
    %v3858 = vrot.slane %v3853, %v3857
    %v3860 = vadd.f32 %v3858, %v3616
    %v3861 = vadd.f32 %v3858, %v3621
    %vm3865 = vcmask 1046528
    %v3866 = vrot.slane %v3723, 1
    %v3867 = vrot.slane %v3728, 1
    %v3868 = vsel %vm3865, %v3866, %v3867
    %v3869 = vrot.slane %v3733, 1
    %v3870 = vsel %vm3865, %v3867, %v3869
    %v3873 = vadd.f32 %v3860, %v3868
    %v3874 = vadd.f32 %v3861, %v3870
    %vm3878 = vcmask 1045504
    %v3879 = vrot.slane %v3830, 2
    %v3880 = vrot.slane %v3835, 2
    %v3881 = vsel %vm3878, %v3879, %v3880
    %v3882 = vrot.slane %v3840, 2
    %v3883 = vsel %vm3878, %v3880, %v3882
    %v3886 = vadd.f32 %v3873, %v3881
    %v3887 = vadd.f32 %v3874, %v3883
    %v3888 = vld [vmem:[%s37] sm:$0x1]
    %v3890 = vlaneseq
    %v3891 = vshrl.u32 %v3890, 7
    %v3892 = vsub.s32 0, %v3891
    %v3893 = vrot.slane %v3888, %v3892
    %v3895 = vmul.f32 %v3886, %v3893
    %v3896 = vmul.f32 %v3887, %v3893
    %v3897 = vld [vmem:[%s39] sm:$0x1]
    %v3899 = vlaneseq
    %v3900 = vshrl.u32 %v3899, 7
    %v3901 = vsub.s32 0, %v3900
    %v3902 = vrot.slane %v3897, %v3901
    %v3904 = vadd.f32 %v3895, %v3902
    %v3905 = vadd.f32 %v3896, %v3902
    %vm3906 = vcmp.gt.f32.partialorder %v3904, 0.0
    %vm3907 = vcmp.gt.f32.partialorder %v3905, 0.0
    %v3908 = vmin.f32 %v3904, 0.0
    %v3909 = vmin.f32 %v3905, 0.0
    %v3910 = vmul.f32 %v3908, 1.442695
    %v3911 = vpow.pop %v3910
    %v3912 = vmul.f32 %v3909, 1.442695
    %v3913 = vpow.pop %v3912
    %v3914 = vsub.f32 %v3911, 1.0
    %v3915 = vsub.f32 %v3913, 1.0
    %v3916 = vsel %vm3906, %v3904, %v3914
    %v3917 = vsel %vm3907, %v3905, %v3915
    %3918 = vst [vmem:[#allocation2 + $0x1] sm:$0xff] %v3916
    %3919 = vst [vmem:[#allocation2 + $0x9] sm:$0xff] %v3917
    %3920 = vst [vmem:[#allocation2] sm:$0x1] -inf
    %3921 = vst [vmem:[#allocation2 + $0x11] sm:$0x1] -inf
    %v3922 = vld [vmem:[#allocation2] ss:$2 sm:$0xff]
    %s3923 = scalar_lea.vmem [#allocation2], 1
    %v3924 = vld [vmem:[%s3923] ss:$2 sm:$0xff]
    %s3925 = scalar_lea.vmem [#allocation2], 2
    %v3926 = vld [vmem:[%s3925] ss:$2 sm:$0xff]
    %v3927 = vmax.f32 %v3922, %v3924
    %v3928 = vmax.f32 %v3927, %v3926
    %v3929 = vld [vmem:[%s35] sm:$0x1]
    %v3931 = vlaneseq
    %v3932 = vshrl.u32 %v3931, 7
    %v3933 = vsub.s32 0, %v3932
    %v3934 = vrot.slane %v3929, %v3933
    %v3936 = vadd.f32 %v3934, %v3626
    %v3937 = vadd.f32 %v3934, %v3631
    %v3938 = vadd.f32 %v3934, %v3636
    %v3941 = vrot.slane %v3738, 1
    %v3942 = vsel %vm3865, %v3869, %v3941
    %v3943 = vrot.slane %v3743, 1
    %v3944 = vsel %vm3865, %v3941, %v3943
    %v3948 = vadd.f32 %v3936, %v3942
    %v3949 = vadd.f32 %v3937, %v3944
    %v3950 = vadd.f32 %v3938, %v3943
    %v3953 = vrot.slane %v3845, 2
    %v3954 = vsel %vm3878, %v3882, %v3953
    %v3955 = vrot.slane %v3850, 2
    %v3956 = vsel %vm3878, %v3953, %v3955
    %v3960 = vadd.f32 %v3948, %v3954
    %v3961 = vadd.f32 %v3949, %v3956
    %v3962 = vadd.f32 %v3950, %v3955
    %v3963 = vld [vmem:[%s37] sm:$0x1]
    %v3965 = vlaneseq
    %v3966 = vshrl.u32 %v3965, 7
    %v3967 = vsub.s32 0, %v3966
    %v3968 = vrot.slane %v3963, %v3967
    %v3970 = vmul.f32 %v3960, %v3968
    %v3971 = vmul.f32 %v3961, %v3968
    %v3972 = vmul.f32 %v3962, %v3968
    %v3973 = vld [vmem:[%s39] sm:$0x1]
    %v3975 = vlaneseq
    %v3976 = vshrl.u32 %v3975, 7
    %v3977 = vsub.s32 0, %v3976
    %v3978 = vrot.slane %v3973, %v3977
    %v3980 = vadd.f32 %v3970, %v3978
    %v3981 = vadd.f32 %v3971, %v3978
    %v3982 = vadd.f32 %v3972, %v3978
    %vm3983 = vcmp.gt.f32.partialorder %v3980, 0.0
    %vm3984 = vcmp.gt.f32.partialorder %v3981, 0.0
    %vm3985 = vcmp.gt.f32.partialorder %v3982, 0.0
    %v3986 = vmin.f32 %v3980, 0.0
    %v3987 = vmin.f32 %v3981, 0.0
    %v3988 = vmin.f32 %v3982, 0.0
    %v3989 = vmul.f32 %v3986, 1.442695
    %v3990 = vpow.pop %v3989
    %v3991 = vmul.f32 %v3987, 1.442695
    %v3992 = vpow.pop %v3991
    %v3993 = vmul.f32 %v3988, 1.442695
    %v3994 = vpow.pop %v3993
    %v3995 = vsub.f32 %v3990, 1.0
    %v3996 = vsub.f32 %v3992, 1.0
    %v3997 = vsub.f32 %v3994, 1.0
    %v3998 = vsel %vm3983, %v3980, %v3995
    %v3999 = vsel %vm3984, %v3981, %v3996
    %v4000 = vsel %vm3985, %v3982, %v3997
    %4001 = vst [vmem:[#allocation2 + $0x11] sm:$0xfc] %v3998
    %4002 = vst [vmem:[#allocation2 + $0x19] sm:$0xff] %v3999
    %4003 = vst [vmem:[#allocation2 + $0x21] sm:$0x3] %v4000
    %4004 = vst [vmem:[#allocation2 + $0x12] sm:$0x1] -inf
    %4005 = vst [vmem:[#allocation2 + $0x23] sm:$0x1] -inf
    %s4006 = scalar_lea.vmem [#allocation2], 18
    %v4007 = vld [vmem:[%s4006] ss:$2 sm:$0xff]
    %s4008 = scalar_lea.vmem [#allocation2], 19
    %v4009 = vld [vmem:[%s4008] ss:$2 sm:$0xff]
    %s4010 = scalar_lea.vmem [#allocation2], 20
    %v4011 = vld [vmem:[%s4010] ss:$2 sm:$0xff]
    %v4012 = vmax.f32 %v4007, %v4009
    %v4013 = vmax.f32 %v4012, %v4011
    %v4014 = vld [vmem:[#allocation16] sm:$0xff]
    %v4015 = vld [vmem:[#allocation16 + $0x8] sm:$0xff]
    %v4016 = vld [vmem:[#allocation16 + $0x10] sm:$0xff]
    %v4017 = vld [vmem:[#allocation16 + $0x18] sm:$0xff]
    %v4018 = vld [vmem:[#allocation16 + $0x20] sm:$0xff]
    %v4019 = vld [vmem:[#allocation16 + $0x28] sm:$0xff]
    %v4020 = vld [vmem:[#allocation16 + $0x30] sm:$0xff]
    %v4021 = vld [vmem:[#allocation16 + $0x38] sm:$0xff]
    %v4022 = vld [vmem:[#allocation16 + $0x40] sm:$0xff]
    %v4023 = vld [vmem:[#allocation16 + $0x48] sm:$0xff]
    %v4024 = vld [vmem:[#allocation16 + $0x50] sm:$0xff]
    %v4025 = vld [vmem:[#allocation16 + $0x58] sm:$0xff]
    %v4026 = vld [vmem:[#allocation16 + $0x60] sm:$0xff]
    %v4027 = vld [vmem:[#allocation16 + $0x68] sm:$0xff]
    %v4028 = vld [vmem:[#allocation16 + $0x70] sm:$0xff]
    %v4029 = vld [vmem:[#allocation16 + $0x78] sm:$0xff]
    %v4030 = vld [vmem:[#allocation16 + $0x80] sm:$0xff]
    %v4031 = vld [vmem:[#allocation16 + $0x88] sm:$0xff]
    %v4032 = vld [vmem:[#allocation16 + $0x90] sm:$0xff]
    %v4033 = vld [vmem:[#allocation16 + $0x98] sm:$0xff]
    %v4034 = vld [vmem:[#allocation16 + $0xa0] sm:$0xff]
    %v4035 = vld [vmem:[#allocation16 + $0xa8] sm:$0xff]
    %v4036 = vld [vmem:[#allocation16 + $0xb0] sm:$0xff]
    %v4037 = vld [vmem:[#allocation16 + $0xb8] sm:$0xff]
    %v4038 = vld [vmem:[#allocation16 + $0xc0] sm:$0xff]
    %v4039 = vld [vmem:[#allocation16 + $0xc8] sm:$0xff]
    %v4040 = vld [vmem:[#allocation16 + $0xd0] sm:$0xff]
    %v4041 = vld [vmem:[#allocation16 + $0xd8] sm:$0xff]
    %v4042 = vld [vmem:[#allocation16 + $0xe0] sm:$0xff]
    %v4043 = vld [vmem:[#allocation16 + $0xe8] sm:$0xff]
    %v4044 = vld [vmem:[#allocation16 + $0xf0] sm:$0xff]
    %v4045 = vld [vmem:[#allocation16 + $0xf8] sm:$0xff]
    %v4046 = vld [vmem:[#allocation16 + $0x100] sm:$0xff]
    %v4047 = vld [vmem:[#allocation16 + $0x108] sm:$0xff]
    %v4048 = vld [vmem:[#allocation16 + $0x110] sm:$0xff]
    %v4049 = vld [vmem:[#allocation16 + $0x118] sm:$0xff]
    %v4050 = vld [vmem:[#allocation16 + $0x120] sm:$0xff]
    %v4051 = vld [vmem:[#allocation16 + $0x128] sm:$0xff]
    %v4052 = vld [vmem:[#allocation16 + $0x130] sm:$0xff]
    %v4053 = vld [vmem:[#allocation16 + $0x138] sm:$0xff]
    %v4054 = vld [vmem:[#allocation16 + $0x140] sm:$0xff]
    %v4055 = vld [vmem:[#allocation16 + $0x148] sm:$0xff]
    %v4056 = vld [vmem:[#allocation16 + $0x150] sm:$0xff]
    %v4057 = vld [vmem:[#allocation16 + $0x158] sm:$0xff]
    %v4058 = vld [vmem:[#allocation16 + $0x160] sm:$0xff]
    %v4059 = vld [vmem:[#allocation16 + $0x168] sm:$0xff]
    %v4060 = vld [vmem:[#allocation16 + $0x170] sm:$0xff]
    %v4061 = vld [vmem:[#allocation16 + $0x178] sm:$0xff]
    %v4062 = vld [vmem:[#allocation17] sm:$0x7]
    %v4064 = vlaneseq
    %v4065 = vshrl.u32 %v4064, 7
    %v4066 = vsub.s32 0, %v4065
    %v4067 = vrot.slane %v4062, %v4066
    %v4068 = vlaneseq
    %v4069 = vshrl.u32 %v4068, 7
    %v4070 = vsub.s32 1, %v4069
    %v4071 = vrot.slane %v4062, %v4070
    %v4072 = vlaneseq
    %v4073 = vshrl.u32 %v4072, 7
    %v4074 = vsub.s32 2, %v4073
    %v4075 = vrot.slane %v4062, %v4074
    %4079 = vmatprep.subr.mxu0 %v4015
    %4080 = vmatpush1.msra.mxu0 %v4014
    %4081 = vmatprep.subr.mxu0 %v4018
    %4082 = vmatpush1.msra.mxu0 %v4017
    %4083 = vmatprep.subr.mxu0 %v4021
    %4084 = vmatpush1.msra.mxu0 %v4020
    %4085 = vmatprep.subr.mxu0 %v4024
    %4086 = vmatpush1.msra.mxu0 %v4023
    %4087 = vmatprep.subr.mxu0 %v4027
    %4088 = vmatpush1.msra.mxu0 %v4026
    %4089 = vmatprep.subr.mxu0 %v4030
    %4090 = vmatpush1.msra.mxu0 %v4029
    %4091 = vmatprep.subr.mxu0 %v4033
    %4092 = vmatpush1.msra.mxu0 %v4032
    %4093 = vmatprep.subr.mxu0 %v4036
    %4094 = vmatpush1.msra.mxu0 %v4035
    %4095 = vmatprep.subr.mxu0 %v4039
    %4096 = vmatpush1.msra.mxu0 %v4038
    %4097 = vmatprep.subr.mxu0 %v4042
    %4098 = vmatpush1.msra.mxu0 %v4041
    %4099 = vmatprep.subr.mxu0 %v4045
    %4100 = vmatpush1.msra.mxu0 %v4044
    %4101 = vmatprep.subr.mxu0 %v4048
    %4102 = vmatpush1.msra.mxu0 %v4047
    %4103 = vmatprep.subr.mxu0 %v4051
    %4104 = vmatpush1.msra.mxu0 %v4050
    %4105 = vmatprep.subr.mxu0 %v4054
    %4106 = vmatpush1.msra.mxu0 %v4053
    %4107 = vmatprep.subr.mxu0 %v4057
    %4108 = vmatpush1.msra.mxu0 %v4056
    %4109 = vmatprep.subr.mxu0 %v4060
    %4110 = vmatpush1.msra.mxu0 %v4059
    %4111 = vmatprep.subr.mxu0 0.0
    %4112 = vmatpush1.msra.mxu0 0.0
    %4113 = vmatprep.subr.mxu0 0.0
    %4114 = vmatpush1.msra.mxu0 0.0
    %4115 = vmatprep.subr.mxu0 0.0
    %4116 = vmatpush1.msra.mxu0 0.0
    %4117 = vmatprep.subr.mxu0 0.0
    %4118 = vmatpush1.msra.mxu0 0.0
    %4119 = vmatprep.subr.mxu0 0.0
    %4120 = vmatpush1.msra.mxu0 0.0
    %4121 = vmatprep.subr.mxu0 0.0
    %4122 = vmatpush1.msra.mxu0 0.0
    %4123 = vmatprep.subr.mxu0 0.0
    %4124 = vmatpush1.msra.mxu0 0.0
    %4125 = vmatprep.subr.mxu0 0.0
    %4126 = vmatpush1.msra.mxu0 0.0
    %4127 = vmatprep.subr.mxu0 0.0
    %4128 = vmatpush1.msra.mxu0 0.0
    %4129 = vmatprep.subr.mxu0 0.0
    %4130 = vmatpush1.msra.mxu0 0.0
    %4131 = vmatprep.subr.mxu0 0.0
    %4132 = vmatpush1.msra.mxu0 0.0
    %4133 = vmatprep.subr.mxu0 0.0
    %4134 = vmatpush1.msra.mxu0 0.0
    %4135 = vmatprep.subr.mxu0 0.0
    %4136 = vmatpush1.msra.mxu0 0.0
    %4137 = vmatprep.subr.mxu0 0.0
    %4138 = vmatpush1.msra.mxu0 0.0
    %4139 = vmatprep.subr.mxu0 0.0
    %4140 = vmatpush1.msra.mxu0 0.0
    %4141 = vmatprep.subr.mxu0 0.0
    %4142 = vmatpush1.msra.mxu0 0.0
    %4143 = vmatprep.mubr.f32.mxu0 0.0
    %4144 = vmatmul.mubr.f32.gmra.mrb[0].mxu0 %v3928
    %v4145 = vpop.f32.mrb[0].mxu0
    %v4146 = vadd.f32 %v4067, %v4145
    %v4147 = vpop.f32.mrb[0].mxu0
    %v4148 = vadd.f32 %v4071, %v4147
    %4149 = vmatprep.mubr.f32.mxu0 0.0
    %4150 = vmatmul.mubr.f32.gmra.mrb[0].mxu0 %v4013
    %v4151 = vpop.f32.mrb[0].mxu0
    %v4152 = vadd.f32 %v4067, %v4151
    %v4153 = vpop.f32.mrb[0].mxu0
    %v4154 = vadd.f32 %v4071, %v4153
    %4155 = vdwg.mxu0
    %4156 = vmatprep.subr.mxu0 0.0
    %4157 = vmatpush1.msra.mxu0 %v4016
    %4158 = vmatprep.subr.mxu0 0.0
    %4159 = vmatpush1.msra.mxu0 %v4019
    %4160 = vmatprep.subr.mxu0 0.0
    %4161 = vmatpush1.msra.mxu0 %v4022
    %4162 = vmatprep.subr.mxu0 0.0
    %4163 = vmatpush1.msra.mxu0 %v4025
    %4164 = vmatprep.subr.mxu0 0.0
    %4165 = vmatpush1.msra.mxu0 %v4028
    %4166 = vmatprep.subr.mxu0 0.0
    %4167 = vmatpush1.msra.mxu0 %v4031
    %4168 = vmatprep.subr.mxu0 0.0
    %4169 = vmatpush1.msra.mxu0 %v4034
    %4170 = vmatprep.subr.mxu0 0.0
    %4171 = vmatpush1.msra.mxu0 %v4037
    %4172 = vmatprep.subr.mxu0 0.0
    %4173 = vmatpush1.msra.mxu0 %v4040
    %4174 = vmatprep.subr.mxu0 0.0
    %4175 = vmatpush1.msra.mxu0 %v4043
    %4176 = vmatprep.subr.mxu0 0.0
    %4177 = vmatpush1.msra.mxu0 %v4046
    %4178 = vmatprep.subr.mxu0 0.0
    %4179 = vmatpush1.msra.mxu0 %v4049
    %4180 = vmatprep.subr.mxu0 0.0
    %4181 = vmatpush1.msra.mxu0 %v4052
    %4182 = vmatprep.subr.mxu0 0.0
    %4183 = vmatpush1.msra.mxu0 %v4055
    %4184 = vmatprep.subr.mxu0 0.0
    %4185 = vmatpush1.msra.mxu0 %v4058
    %4186 = vmatprep.subr.mxu0 0.0
    %4187 = vmatpush1.msra.mxu0 %v4061
    %4188 = vmatprep.subr.mxu0 0.0
    %4189 = vmatpush1.msra.mxu0 0.0
    %4190 = vmatprep.subr.mxu0 0.0
    %4191 = vmatpush1.msra.mxu0 0.0
    %4192 = vmatprep.subr.mxu0 0.0
    %4193 = vmatpush1.msra.mxu0 0.0
    %4194 = vmatprep.subr.mxu0 0.0
    %4195 = vmatpush1.msra.mxu0 0.0
    %4196 = vmatprep.subr.mxu0 0.0
    %4197 = vmatpush1.msra.mxu0 0.0
    %4198 = vmatprep.subr.mxu0 0.0
    %4199 = vmatpush1.msra.mxu0 0.0
    %4200 = vmatprep.subr.mxu0 0.0
    %4201 = vmatpush1.msra.mxu0 0.0
    %4202 = vmatprep.subr.mxu0 0.0
    %4203 = vmatpush1.msra.mxu0 0.0
    %4204 = vmatprep.subr.mxu0 0.0
    %4205 = vmatpush1.msra.mxu0 0.0
    %4206 = vmatprep.subr.mxu0 0.0
    %4207 = vmatpush1.msra.mxu0 0.0
    %4208 = vmatprep.subr.mxu0 0.0
    %4209 = vmatpush1.msra.mxu0 0.0
    %4210 = vmatprep.subr.mxu0 0.0
    %4211 = vmatpush1.msra.mxu0 0.0
    %4212 = vmatprep.subr.mxu0 0.0
    %4213 = vmatpush1.msra.mxu0 0.0
    %4214 = vmatprep.subr.mxu0 0.0
    %4215 = vmatpush1.msra.mxu0 0.0
    %4216 = vmatprep.subr.mxu0 0.0
    %4217 = vmatpush1.msra.mxu0 0.0
    %4218 = vmatprep.subr.mxu0 0.0
    %4219 = vmatpush1.msra.mxu0 0.0
    %4220 = vmatprep.mubr.f32.mxu0 0.0
    %4221 = vmatmul.mubr.f32.gmra.mrb[0].mxu0 %v3928
    %v4222 = vpop.f32.mrb[0].mxu0
    %v4223 = vadd.f32 %v4075, %v4222
    %v4224 = vpop.f32.mrb[0].mxu0
    %4225 = vmatprep.mubr.f32.mxu0 0.0
    %4226 = vmatmul.mubr.f32.gmra.mrb[0].mxu0 %v4013
    %v4227 = vpop.f32.mrb[0].mxu0
    %v4228 = vadd.f32 %v4075, %v4227
    %v4229 = vpop.f32.mrb[0].mxu0
    %4230 = vdwg.mxu0
    %v4231 = vld [vmem:[#allocation19] sm:$0xff]
    %v4232 = vld [vmem:[#allocation19 + $0x8] sm:$0xff]
    %v4233 = vld [vmem:[#allocation19 + $0x10] sm:$0xff]
    %v4234 = vld [vmem:[#allocation19 + $0x18] sm:$0xff]
    %v4235 = vld [vmem:[#allocation19 + $0x20] sm:$0xff]
    %v4236 = vld [vmem:[#allocation19 + $0x28] sm:$0xff]
    %v4237 = vld [vmem:[#allocation19 + $0x30] sm:$0xff]
    %v4238 = vld [vmem:[#allocation19 + $0x38] sm:$0xff]
    %v4239 = vld [vmem:[#allocation19 + $0x40] sm:$0xff]
    %v4240 = vld [vmem:[#allocation19 + $0x48] sm:$0xff]
    %v4241 = vld [vmem:[#allocation19 + $0x50] sm:$0xff]
    %v4242 = vld [vmem:[#allocation19 + $0x58] sm:$0xff]
    %v4243 = vld [vmem:[#allocation19 + $0x60] sm:$0xff]
    %v4244 = vld [vmem:[#allocation19 + $0x68] sm:$0xff]
    %v4245 = vld [vmem:[#allocation19 + $0x70] sm:$0xff]
    %v4246 = vld [vmem:[#allocation19 + $0x78] sm:$0xff]
    %v4248 = vsel %vm825, %v4146, 0
    %v4251 = vsel %vm825, %v4148, 0
    %4253 = vmatprep.subr.mxu0 0.0
    %4254 = vmatpush1.xpose.msra.mxu0 %v4251
    %4255 = vmatprep.subr.mxu0 0.0
    %4256 = vmatpush1.xpose.msra.mxu0 0.0
    %4257 = vmatprep.subr.mxu0 0.0
    %4258 = vmatpush1.xpose.msra.mxu0 0.0
    %4259 = vmatprep.subr.mxu0 0.0
    %4260 = vmatpush1.xpose.msra.mxu0 0.0
    %4261 = vmatprep.subr.mxu0 0.0
    %4262 = vmatpush1.xpose.msra.mxu0 0.0
    %4263 = vmatprep.subr.mxu0 0.0
    %4264 = vmatpush1.xpose.msra.mxu0 0.0
    %4265 = vmatprep.subr.mxu0 0.0
    %4266 = vmatpush1.xpose.msra.mxu0 0.0
    %4267 = vmatprep.subr.mxu0 0.0
    %4268 = vmatpush1.xpose.msra.mxu0 0.0
    %4269 = vmatprep.subr.mxu0 0.0
    %4270 = vmatpush1.xpose.msra.mxu0 0.0
    %4271 = vmatprep.subr.mxu0 0.0
    %4272 = vmatpush1.xpose.msra.mxu0 0.0
    %4273 = vmatprep.subr.mxu0 0.0
    %4274 = vmatpush1.xpose.msra.mxu0 0.0
    %4275 = vmatprep.subr.mxu0 0.0
    %4276 = vmatpush1.xpose.msra.mxu0 0.0
    %4277 = vmatprep.subr.mxu0 0.0
    %4278 = vmatpush1.xpose.msra.mxu0 0.0
    %4279 = vmatprep.subr.mxu0 0.0
    %4280 = vmatpush1.xpose.msra.mxu0 0.0
    %4281 = vmatprep.subr.mxu0 0.0
    %4282 = vmatpush1.xpose.msra.mxu0 0.0
    %4283 = vmatprep.subr.mxu0 0.0
    %4284 = vmatpush1.xpose.msra.mxu0 0.0
    %4285 = vmatprep.subr.mxu0 0.0
    %4286 = vmatpush1.xpose.msra.mxu0 0.0
    %4287 = vmatprep.subr.mxu0 0.0
    %4288 = vmatpush1.xpose.msra.mxu0 0.0
    %4289 = vmatprep.subr.mxu0 0.0
    %4290 = vmatpush1.xpose.msra.mxu0 0.0
    %4291 = vmatprep.subr.mxu0 0.0
    %4292 = vmatpush1.xpose.msra.mxu0 0.0
    %4293 = vmatprep.subr.mxu0 0.0
    %4294 = vmatpush1.xpose.msra.mxu0 0.0
    %4295 = vmatprep.subr.mxu0 0.0
    %4296 = vmatpush1.xpose.msra.mxu0 0.0
    %4297 = vmatprep.subr.mxu0 0.0
    %4298 = vmatpush1.xpose.msra.mxu0 0.0
    %4299 = vmatprep.subr.mxu0 0.0
    %4300 = vmatpush1.xpose.msra.mxu0 0.0
    %4301 = vmatprep.subr.mxu0 0.0
    %4302 = vmatpush1.xpose.msra.mxu0 0.0
    %4303 = vmatprep.subr.mxu0 0.0
    %4304 = vmatpush1.xpose.msra.mxu0 0.0
    %4305 = vmatprep.subr.mxu0 0.0
    %4306 = vmatpush1.xpose.msra.mxu0 0.0
    %4307 = vmatprep.subr.mxu0 0.0
    %4308 = vmatpush1.xpose.msra.mxu0 0.0
    %4309 = vmatprep.subr.mxu0 0.0
    %4310 = vmatpush1.xpose.msra.mxu0 0.0
    %4311 = vmatprep.subr.mxu0 0.0
    %4312 = vmatpush1.xpose.msra.mxu0 0.0
    %4313 = vmatprep.subr.mxu0 0.0
    %4314 = vmatpush1.xpose.msra.mxu0 0.0
    %4315 = vmatprep.subr.mxu0 0.0
    %4316 = vmatpush1.xpose.msra.mxu0 0.0
    %4317 = vmatprep.mubr.f32.mxu0 0.0
    %4318 = vmatmul.mubr.f32.gmra.mrb[0].mxu0 %v4248
    %v4319 = vpop.f32.mrb[0].mxu0
    %v4320 = vadd.f32 0.0, %v4319
    %v4321 = vpop.f32.mrb[0].mxu0
    %4322 = vdwg.mxu0
    %vm4323 = vcmask 64512
    %v4324 = vsel %vm4323, %v4320, -inf
    %4325 = vmax.xlane.f32.xlu0 %v4324
    %v4326 = vpop.xlane.xlu0 %4325
    %v4327 = vsub.f32 %v4320, %v4326
    %v4328 = vmul.f32 %v4327, 1.442695
    %v4329 = vpow.pop %v4328
    %v4330 = vsel %vm4323, %v4329, 0.0
    %4331 = vadd.xlane.f32.xlu0 %v4330
    %v4332 = vpop.xlane.xlu0 %4331
    %v4333 = vrcp.pop %v4332
    %v4334 = vmul.f32 %v4329, %v4333
    %v4336 = vsel %vm4323, %v4334, 0
    %4338 = vmatprep.subr.mxu0 0.0
    %4339 = vmatpush1.msra.mxu0 %v4223
    %4340 = vmatprep.subr.mxu0 0.0
    %4341 = vmatpush1.msra.mxu0 0.0
    %4342 = vmatprep.subr.mxu0 0.0
    %4343 = vmatpush1.msra.mxu0 0.0
    %4344 = vmatprep.subr.mxu0 0.0
    %4345 = vmatpush1.msra.mxu0 0.0
    %4346 = vmatprep.subr.mxu0 0.0
    %4347 = vmatpush1.msra.mxu0 0.0
    %4348 = vmatprep.subr.mxu0 0.0
    %4349 = vmatpush1.msra.mxu0 0.0
    %4350 = vmatprep.subr.mxu0 0.0
    %4351 = vmatpush1.msra.mxu0 0.0
    %4352 = vmatprep.subr.mxu0 0.0
    %4353 = vmatpush1.msra.mxu0 0.0
    %4354 = vmatprep.subr.mxu0 0.0
    %4355 = vmatpush1.msra.mxu0 0.0
    %4356 = vmatprep.subr.mxu0 0.0
    %4357 = vmatpush1.msra.mxu0 0.0
    %4358 = vmatprep.subr.mxu0 0.0
    %4359 = vmatpush1.msra.mxu0 0.0
    %4360 = vmatprep.subr.mxu0 0.0
    %4361 = vmatpush1.msra.mxu0 0.0
    %4362 = vmatprep.subr.mxu0 0.0
    %4363 = vmatpush1.msra.mxu0 0.0
    %4364 = vmatprep.subr.mxu0 0.0
    %4365 = vmatpush1.msra.mxu0 0.0
    %4366 = vmatprep.subr.mxu0 0.0
    %4367 = vmatpush1.msra.mxu0 0.0
    %4368 = vmatprep.subr.mxu0 0.0
    %4369 = vmatpush1.msra.mxu0 0.0
    %4370 = vmatprep.subr.mxu0 0.0
    %4371 = vmatpush1.msra.mxu0 0.0
    %4372 = vmatprep.subr.mxu0 0.0
    %4373 = vmatpush1.msra.mxu0 0.0
    %4374 = vmatprep.subr.mxu0 0.0
    %4375 = vmatpush1.msra.mxu0 0.0
    %4376 = vmatprep.subr.mxu0 0.0
    %4377 = vmatpush1.msra.mxu0 0.0
    %4378 = vmatprep.subr.mxu0 0.0
    %4379 = vmatpush1.msra.mxu0 0.0
    %4380 = vmatprep.subr.mxu0 0.0
    %4381 = vmatpush1.msra.mxu0 0.0
    %4382 = vmatprep.subr.mxu0 0.0
    %4383 = vmatpush1.msra.mxu0 0.0
    %4384 = vmatprep.subr.mxu0 0.0
    %4385 = vmatpush1.msra.mxu0 0.0
    %4386 = vmatprep.subr.mxu0 0.0
    %4387 = vmatpush1.msra.mxu0 0.0
    %4388 = vmatprep.subr.mxu0 0.0
    %4389 = vmatpush1.msra.mxu0 0.0
    %4390 = vmatprep.subr.mxu0 0.0
    %4391 = vmatpush1.msra.mxu0 0.0
    %4392 = vmatprep.subr.mxu0 0.0
    %4393 = vmatpush1.msra.mxu0 0.0
    %4394 = vmatprep.subr.mxu0 0.0
    %4395 = vmatpush1.msra.mxu0 0.0
    %4396 = vmatprep.subr.mxu0 0.0
    %4397 = vmatpush1.msra.mxu0 0.0
    %4398 = vmatprep.subr.mxu0 0.0
    %4399 = vmatpush1.msra.mxu0 0.0
    %4400 = vmatprep.subr.mxu0 0.0
    %4401 = vmatpush1.msra.mxu0 0.0
    %4402 = vmatprep.mubr.f32.mxu0 0.0
    %4403 = vmatmul.mubr.f32.gmra.mrb[0].mxu0 %v4336
    %v4404 = vpop.f32.mrb[0].mxu0
    %v4405 = vadd.f32 0.0, %v4404
    %v4406 = vpop.f32.mrb[0].mxu0
    %4407 = vdwg.mxu0
    %4408 = vrot.lane.b32.xlu0 %v4146, 96
    %v4409 = vpop.permute.xlu0 %4408
    %4410 = vrot.lane.b32.xlu0 %v4148, 96
    %v4411 = vpop.permute.xlu0 %4410
    %v4412 = vsel %vm825, %v4409, 0
    %v4414 = vsel %vm825, %v4411, 0
    %4416 = vmatprep.subr.mxu0 0.0
    %4417 = vmatpush1.xpose.msra.mxu0 %v4414
    %4418 = vmatprep.subr.mxu0 0.0
    %4419 = vmatpush1.xpose.msra.mxu0 0.0
    %4420 = vmatprep.subr.mxu0 0.0
    %4421 = vmatpush1.xpose.msra.mxu0 0.0
    %4422 = vmatprep.subr.mxu0 0.0
    %4423 = vmatpush1.xpose.msra.mxu0 0.0
    %4424 = vmatprep.subr.mxu0 0.0
    %4425 = vmatpush1.xpose.msra.mxu0 0.0
    %4426 = vmatprep.subr.mxu0 0.0
    %4427 = vmatpush1.xpose.msra.mxu0 0.0
    %4428 = vmatprep.subr.mxu0 0.0
    %4429 = vmatpush1.xpose.msra.mxu0 0.0
    %4430 = vmatprep.subr.mxu0 0.0
    %4431 = vmatpush1.xpose.msra.mxu0 0.0
    %4432 = vmatprep.subr.mxu0 0.0
    %4433 = vmatpush1.xpose.msra.mxu0 0.0
    %4434 = vmatprep.subr.mxu0 0.0
    %4435 = vmatpush1.xpose.msra.mxu0 0.0
    %4436 = vmatprep.subr.mxu0 0.0
    %4437 = vmatpush1.xpose.msra.mxu0 0.0
    %4438 = vmatprep.subr.mxu0 0.0
    %4439 = vmatpush1.xpose.msra.mxu0 0.0
    %4440 = vmatprep.subr.mxu0 0.0
    %4441 = vmatpush1.xpose.msra.mxu0 0.0
    %4442 = vmatprep.subr.mxu0 0.0
    %4443 = vmatpush1.xpose.msra.mxu0 0.0
    %4444 = vmatprep.subr.mxu0 0.0
    %4445 = vmatpush1.xpose.msra.mxu0 0.0
    %4446 = vmatprep.subr.mxu0 0.0
    %4447 = vmatpush1.xpose.msra.mxu0 0.0
    %4448 = vmatprep.subr.mxu0 0.0
    %4449 = vmatpush1.xpose.msra.mxu0 0.0
    %4450 = vmatprep.subr.mxu0 0.0
    %4451 = vmatpush1.xpose.msra.mxu0 0.0
    %4452 = vmatprep.subr.mxu0 0.0
    %4453 = vmatpush1.xpose.msra.mxu0 0.0
    %4454 = vmatprep.subr.mxu0 0.0
    %4455 = vmatpush1.xpose.msra.mxu0 0.0
    %4456 = vmatprep.subr.mxu0 0.0
    %4457 = vmatpush1.xpose.msra.mxu0 0.0
    %4458 = vmatprep.subr.mxu0 0.0
    %4459 = vmatpush1.xpose.msra.mxu0 0.0
    %4460 = vmatprep.subr.mxu0 0.0
    %4461 = vmatpush1.xpose.msra.mxu0 0.0
    %4462 = vmatprep.subr.mxu0 0.0
    %4463 = vmatpush1.xpose.msra.mxu0 0.0
    %4464 = vmatprep.subr.mxu0 0.0
    %4465 = vmatpush1.xpose.msra.mxu0 0.0
    %4466 = vmatprep.subr.mxu0 0.0
    %4467 = vmatpush1.xpose.msra.mxu0 0.0
    %4468 = vmatprep.subr.mxu0 0.0
    %4469 = vmatpush1.xpose.msra.mxu0 0.0
    %4470 = vmatprep.subr.mxu0 0.0
    %4471 = vmatpush1.xpose.msra.mxu0 0.0
    %4472 = vmatprep.subr.mxu0 0.0
    %4473 = vmatpush1.xpose.msra.mxu0 0.0
    %4474 = vmatprep.subr.mxu0 0.0
    %4475 = vmatpush1.xpose.msra.mxu0 0.0
    %4476 = vmatprep.subr.mxu0 0.0
    %4477 = vmatpush1.xpose.msra.mxu0 0.0
    %4478 = vmatprep.subr.mxu0 0.0
    %4479 = vmatpush1.xpose.msra.mxu0 0.0
    %4480 = vmatprep.mubr.f32.mxu0 0.0
    %4481 = vmatmul.mubr.f32.gmra.mrb[0].mxu0 %v4412
    %v4482 = vpop.f32.mrb[0].mxu0
    %v4483 = vadd.f32 0.0, %v4482
    %v4484 = vpop.f32.mrb[0].mxu0
    %4485 = vdwg.mxu0
    %v4486 = vsel %vm4323, %v4483, -inf
    %4487 = vmax.xlane.f32.xlu0 %v4486
    %v4488 = vpop.xlane.xlu0 %4487
    %v4489 = vsub.f32 %v4483, %v4488
    %v4490 = vmul.f32 %v4489, 1.442695
    %v4491 = vpow.pop %v4490
    %v4492 = vsel %vm4323, %v4491, 0.0
    %4493 = vadd.xlane.f32.xlu0 %v4492
    %v4494 = vpop.xlane.xlu0 %4493
    %v4495 = vrcp.pop %v4494
    %v4496 = vmul.f32 %v4491, %v4495
    %4498 = vrot.lane.b32.xlu0 %v4223, 96
    %v4499 = vpop.permute.xlu0 %4498
    %v4502 = vsel %vm4323, %v4496, 0
    %4504 = vmatprep.subr.mxu0 0.0
    %4505 = vmatpush1.msra.mxu0 %v4499
    %4506 = vmatprep.subr.mxu0 0.0
    %4507 = vmatpush1.msra.mxu0 0.0
    %4508 = vmatprep.subr.mxu0 0.0
    %4509 = vmatpush1.msra.mxu0 0.0
    %4510 = vmatprep.subr.mxu0 0.0
    %4511 = vmatpush1.msra.mxu0 0.0
    %4512 = vmatprep.subr.mxu0 0.0
    %4513 = vmatpush1.msra.mxu0 0.0
    %4514 = vmatprep.subr.mxu0 0.0
    %4515 = vmatpush1.msra.mxu0 0.0
    %4516 = vmatprep.subr.mxu0 0.0
    %4517 = vmatpush1.msra.mxu0 0.0
    %4518 = vmatprep.subr.mxu0 0.0
    %4519 = vmatpush1.msra.mxu0 0.0
    %4520 = vmatprep.subr.mxu0 0.0
    %4521 = vmatpush1.msra.mxu0 0.0
    %4522 = vmatprep.subr.mxu0 0.0
    %4523 = vmatpush1.msra.mxu0 0.0
    %4524 = vmatprep.subr.mxu0 0.0
    %4525 = vmatpush1.msra.mxu0 0.0
    %4526 = vmatprep.subr.mxu0 0.0
    %4527 = vmatpush1.msra.mxu0 0.0
    %4528 = vmatprep.subr.mxu0 0.0
    %4529 = vmatpush1.msra.mxu0 0.0
    %4530 = vmatprep.subr.mxu0 0.0
    %4531 = vmatpush1.msra.mxu0 0.0
    %4532 = vmatprep.subr.mxu0 0.0
    %4533 = vmatpush1.msra.mxu0 0.0
    %4534 = vmatprep.subr.mxu0 0.0
    %4535 = vmatpush1.msra.mxu0 0.0
    %4536 = vmatprep.subr.mxu0 0.0
    %4537 = vmatpush1.msra.mxu0 0.0
    %4538 = vmatprep.subr.mxu0 0.0
    %4539 = vmatpush1.msra.mxu0 0.0
    %4540 = vmatprep.subr.mxu0 0.0
    %4541 = vmatpush1.msra.mxu0 0.0
    %4542 = vmatprep.subr.mxu0 0.0
    %4543 = vmatpush1.msra.mxu0 0.0
    %4544 = vmatprep.subr.mxu0 0.0
    %4545 = vmatpush1.msra.mxu0 0.0
    %4546 = vmatprep.subr.mxu0 0.0
    %4547 = vmatpush1.msra.mxu0 0.0
    %4548 = vmatprep.subr.mxu0 0.0
    %4549 = vmatpush1.msra.mxu0 0.0
    %4550 = vmatprep.subr.mxu0 0.0
    %4551 = vmatpush1.msra.mxu0 0.0
    %4552 = vmatprep.subr.mxu0 0.0
    %4553 = vmatpush1.msra.mxu0 0.0
    %4554 = vmatprep.subr.mxu0 0.0
    %4555 = vmatpush1.msra.mxu0 0.0
    %4556 = vmatprep.subr.mxu0 0.0
    %4557 = vmatpush1.msra.mxu0 0.0
    %4558 = vmatprep.subr.mxu0 0.0
    %4559 = vmatpush1.msra.mxu0 0.0
    %4560 = vmatprep.subr.mxu0 0.0
    %4561 = vmatpush1.msra.mxu0 0.0
    %4562 = vmatprep.subr.mxu0 0.0
    %4563 = vmatpush1.msra.mxu0 0.0
    %4564 = vmatprep.subr.mxu0 0.0
    %4565 = vmatpush1.msra.mxu0 0.0
    %4566 = vmatprep.subr.mxu0 0.0
    %4567 = vmatpush1.msra.mxu0 0.0
    %4568 = vmatprep.mubr.f32.mxu0 0.0
    %4569 = vmatmul.mubr.f32.gmra.mrb[0].mxu0 %v4502
    %v4570 = vpop.f32.mrb[0].mxu0
    %v4571 = vadd.f32 0.0, %v4570
    %v4572 = vpop.f32.mrb[0].mxu0
    %4573 = vdwg.mxu0
    %v4575 = vsel %vm825, %v4571, 0
    %4577 = vmatprep.subr.mxu0 0.0
    %4578 = vmatpush1.msra.mxu0 %v4235
    %4579 = vmatprep.subr.mxu0 0.0
    %4580 = vmatpush1.msra.mxu0 %v4236
    %4581 = vmatprep.subr.mxu0 0.0
    %4582 = vmatpush1.msra.mxu0 %v4237
    %4583 = vmatprep.subr.mxu0 0.0
    %4584 = vmatpush1.msra.mxu0 %v4238
    %4585 = vmatprep.subr.mxu0 0.0
    %4586 = vmatpush1.msra.mxu0 0.0
    %4587 = vmatprep.subr.mxu0 0.0
    %4588 = vmatpush1.msra.mxu0 0.0
    %4589 = vmatprep.subr.mxu0 0.0
    %4590 = vmatpush1.msra.mxu0 0.0
    %4591 = vmatprep.subr.mxu0 0.0
    %4592 = vmatpush1.msra.mxu0 0.0
    %4593 = vmatprep.subr.mxu0 0.0
    %4594 = vmatpush1.msra.mxu0 0.0
    %4595 = vmatprep.subr.mxu0 0.0
    %4596 = vmatpush1.msra.mxu0 0.0
    %4597 = vmatprep.subr.mxu0 0.0
    %4598 = vmatpush1.msra.mxu0 0.0
    %4599 = vmatprep.subr.mxu0 0.0
    %4600 = vmatpush1.msra.mxu0 0.0
    %4601 = vmatprep.subr.mxu0 0.0
    %4602 = vmatpush1.msra.mxu0 0.0
    %4603 = vmatprep.subr.mxu0 0.0
    %4604 = vmatpush1.msra.mxu0 0.0
    %4605 = vmatprep.subr.mxu0 0.0
    %4606 = vmatpush1.msra.mxu0 0.0
    %4607 = vmatprep.subr.mxu0 0.0
    %4608 = vmatpush1.msra.mxu0 0.0
    %4609 = vmatprep.subr.mxu0 0.0
    %4610 = vmatpush1.msra.mxu0 0.0
    %4611 = vmatprep.subr.mxu0 0.0
    %4612 = vmatpush1.msra.mxu0 0.0
    %4613 = vmatprep.subr.mxu0 0.0
    %4614 = vmatpush1.msra.mxu0 0.0
    %4615 = vmatprep.subr.mxu0 0.0
    %4616 = vmatpush1.msra.mxu0 0.0
    %4617 = vmatprep.subr.mxu0 0.0
    %4618 = vmatpush1.msra.mxu0 0.0
    %4619 = vmatprep.subr.mxu0 0.0
    %4620 = vmatpush1.msra.mxu0 0.0
    %4621 = vmatprep.subr.mxu0 0.0
    %4622 = vmatpush1.msra.mxu0 0.0
    %4623 = vmatprep.subr.mxu0 0.0
    %4624 = vmatpush1.msra.mxu0 0.0
    %4625 = vmatprep.subr.mxu0 0.0
    %4626 = vmatpush1.msra.mxu0 0.0
    %4627 = vmatprep.subr.mxu0 0.0
    %4628 = vmatpush1.msra.mxu0 0.0
    %4629 = vmatprep.subr.mxu0 0.0
    %4630 = vmatpush1.msra.mxu0 0.0
    %4631 = vmatprep.subr.mxu0 0.0
    %4632 = vmatpush1.msra.mxu0 0.0
    %4633 = vmatprep.subr.mxu0 0.0
    %4634 = vmatpush1.msra.mxu0 0.0
    %4635 = vmatprep.subr.mxu0 0.0
    %4636 = vmatpush1.msra.mxu0 0.0
    %4637 = vmatprep.subr.mxu0 0.0
    %4638 = vmatpush1.msra.mxu0 0.0
    %4639 = vmatprep.subr.mxu0 0.0
    %4640 = vmatpush1.msra.mxu0 0.0
    %4641 = vmatprep.mubr.f32.mxu0 0.0
    %4642 = vmatmul.mubr.f32.gmra.mrb[0].mxu0 %v4575
    %v4643 = vpop.f32.mrb[0].mxu0
    %v4644 = vadd.f32 0.0, %v4643
    %v4645 = vpop.f32.mrb[0].mxu0
    %4646 = vdwg.mxu0
    %v4648 = vsel %vm825, %v4405, 0
    %4650 = vmatprep.subr.mxu0 0.0
    %4651 = vmatpush1.msra.mxu0 %v4231
    %4652 = vmatprep.subr.mxu0 0.0
    %4653 = vmatpush1.msra.mxu0 %v4232
    %4654 = vmatprep.subr.mxu0 0.0
    %4655 = vmatpush1.msra.mxu0 %v4233
    %4656 = vmatprep.subr.mxu0 0.0
    %4657 = vmatpush1.msra.mxu0 %v4234
    %4658 = vmatprep.subr.mxu0 0.0
    %4659 = vmatpush1.msra.mxu0 0.0
    %4660 = vmatprep.subr.mxu0 0.0
    %4661 = vmatpush1.msra.mxu0 0.0
    %4662 = vmatprep.subr.mxu0 0.0
    %4663 = vmatpush1.msra.mxu0 0.0
    %4664 = vmatprep.subr.mxu0 0.0
    %4665 = vmatpush1.msra.mxu0 0.0
    %4666 = vmatprep.subr.mxu0 0.0
    %4667 = vmatpush1.msra.mxu0 0.0
    %4668 = vmatprep.subr.mxu0 0.0
    %4669 = vmatpush1.msra.mxu0 0.0
    %4670 = vmatprep.subr.mxu0 0.0
    %4671 = vmatpush1.msra.mxu0 0.0
    %4672 = vmatprep.subr.mxu0 0.0
    %4673 = vmatpush1.msra.mxu0 0.0
    %4674 = vmatprep.subr.mxu0 0.0
    %4675 = vmatpush1.msra.mxu0 0.0
    %4676 = vmatprep.subr.mxu0 0.0
    %4677 = vmatpush1.msra.mxu0 0.0
    %4678 = vmatprep.subr.mxu0 0.0
    %4679 = vmatpush1.msra.mxu0 0.0
    %4680 = vmatprep.subr.mxu0 0.0
    %4681 = vmatpush1.msra.mxu0 0.0
    %4682 = vmatprep.subr.mxu0 0.0
    %4683 = vmatpush1.msra.mxu0 0.0
    %4684 = vmatprep.subr.mxu0 0.0
    %4685 = vmatpush1.msra.mxu0 0.0
    %4686 = vmatprep.subr.mxu0 0.0
    %4687 = vmatpush1.msra.mxu0 0.0
    %4688 = vmatprep.subr.mxu0 0.0
    %4689 = vmatpush1.msra.mxu0 0.0
    %4690 = vmatprep.subr.mxu0 0.0
    %4691 = vmatpush1.msra.mxu0 0.0
    %4692 = vmatprep.subr.mxu0 0.0
    %4693 = vmatpush1.msra.mxu0 0.0
    %4694 = vmatprep.subr.mxu0 0.0
    %4695 = vmatpush1.msra.mxu0 0.0
    %4696 = vmatprep.subr.mxu0 0.0
    %4697 = vmatpush1.msra.mxu0 0.0
    %4698 = vmatprep.subr.mxu0 0.0
    %4699 = vmatpush1.msra.mxu0 0.0
    %4700 = vmatprep.subr.mxu0 0.0
    %4701 = vmatpush1.msra.mxu0 0.0
    %4702 = vmatprep.subr.mxu0 0.0
    %4703 = vmatpush1.msra.mxu0 0.0
    %4704 = vmatprep.subr.mxu0 0.0
    %4705 = vmatpush1.msra.mxu0 0.0
    %4706 = vmatprep.subr.mxu0 0.0
    %4707 = vmatpush1.msra.mxu0 0.0
    %4708 = vmatprep.subr.mxu0 0.0
    %4709 = vmatpush1.msra.mxu0 0.0
    %4710 = vmatprep.subr.mxu0 0.0
    %4711 = vmatpush1.msra.mxu0 0.0
    %4712 = vmatprep.subr.mxu0 0.0
    %4713 = vmatpush1.msra.mxu0 0.0
    %4714 = vmatprep.mubr.f32.mxu0 0.0
    %4715 = vmatmul.mubr.f32.gmra.mrb[0].mxu0 %v4648
    %v4716 = vpop.f32.mrb[0].mxu0
    %v4717 = vadd.f32 %v4644, %v4716
    %v4718 = vpop.f32.mrb[0].mxu0
    %4719 = vdwg.mxu0
    %4720 = vrot.lane.b32.xlu0 %v4146, 64
    %v4721 = vpop.permute.xlu0 %4720
    %4722 = vrot.lane.b32.xlu0 %v4148, 64
    %v4723 = vpop.permute.xlu0 %4722
    %v4724 = vsel %vm825, %v4721, 0
    %v4726 = vsel %vm825, %v4723, 0
    %4728 = vmatprep.subr.mxu0 0.0
    %4729 = vmatpush1.xpose.msra.mxu0 %v4726
    %4730 = vmatprep.subr.mxu0 0.0
    %4731 = vmatpush1.xpose.msra.mxu0 0.0
    %4732 = vmatprep.subr.mxu0 0.0
    %4733 = vmatpush1.xpose.msra.mxu0 0.0
    %4734 = vmatprep.subr.mxu0 0.0
    %4735 = vmatpush1.xpose.msra.mxu0 0.0
    %4736 = vmatprep.subr.mxu0 0.0
    %4737 = vmatpush1.xpose.msra.mxu0 0.0
    %4738 = vmatprep.subr.mxu0 0.0
    %4739 = vmatpush1.xpose.msra.mxu0 0.0
    %4740 = vmatprep.subr.mxu0 0.0
    %4741 = vmatpush1.xpose.msra.mxu0 0.0
    %4742 = vmatprep.subr.mxu0 0.0
    %4743 = vmatpush1.xpose.msra.mxu0 0.0
    %4744 = vmatprep.subr.mxu0 0.0
    %4745 = vmatpush1.xpose.msra.mxu0 0.0
    %4746 = vmatprep.subr.mxu0 0.0
    %4747 = vmatpush1.xpose.msra.mxu0 0.0
    %4748 = vmatprep.subr.mxu0 0.0
    %4749 = vmatpush1.xpose.msra.mxu0 0.0
    %4750 = vmatprep.subr.mxu0 0.0
    %4751 = vmatpush1.xpose.msra.mxu0 0.0
    %4752 = vmatprep.subr.mxu0 0.0
    %4753 = vmatpush1.xpose.msra.mxu0 0.0
    %4754 = vmatprep.subr.mxu0 0.0
    %4755 = vmatpush1.xpose.msra.mxu0 0.0
    %4756 = vmatprep.subr.mxu0 0.0
    %4757 = vmatpush1.xpose.msra.mxu0 0.0
    %4758 = vmatprep.subr.mxu0 0.0
    %4759 = vmatpush1.xpose.msra.mxu0 0.0
    %4760 = vmatprep.subr.mxu0 0.0
    %4761 = vmatpush1.xpose.msra.mxu0 0.0
    %4762 = vmatprep.subr.mxu0 0.0
    %4763 = vmatpush1.xpose.msra.mxu0 0.0
    %4764 = vmatprep.subr.mxu0 0.0
    %4765 = vmatpush1.xpose.msra.mxu0 0.0
    %4766 = vmatprep.subr.mxu0 0.0
    %4767 = vmatpush1.xpose.msra.mxu0 0.0
    %4768 = vmatprep.subr.mxu0 0.0
    %4769 = vmatpush1.xpose.msra.mxu0 0.0
    %4770 = vmatprep.subr.mxu0 0.0
    %4771 = vmatpush1.xpose.msra.mxu0 0.0
    %4772 = vmatprep.subr.mxu0 0.0
    %4773 = vmatpush1.xpose.msra.mxu0 0.0
    %4774 = vmatprep.subr.mxu0 0.0
    %4775 = vmatpush1.xpose.msra.mxu0 0.0
    %4776 = vmatprep.subr.mxu0 0.0
    %4777 = vmatpush1.xpose.msra.mxu0 0.0
    %4778 = vmatprep.subr.mxu0 0.0
    %4779 = vmatpush1.xpose.msra.mxu0 0.0
    %4780 = vmatprep.subr.mxu0 0.0
    %4781 = vmatpush1.xpose.msra.mxu0 0.0
    %4782 = vmatprep.subr.mxu0 0.0
    %4783 = vmatpush1.xpose.msra.mxu0 0.0
    %4784 = vmatprep.subr.mxu0 0.0
    %4785 = vmatpush1.xpose.msra.mxu0 0.0
    %4786 = vmatprep.subr.mxu0 0.0
    %4787 = vmatpush1.xpose.msra.mxu0 0.0
    %4788 = vmatprep.subr.mxu0 0.0
    %4789 = vmatpush1.xpose.msra.mxu0 0.0
    %4790 = vmatprep.subr.mxu0 0.0
    %4791 = vmatpush1.xpose.msra.mxu0 0.0
    %4792 = vmatprep.mubr.f32.mxu0 0.0
    %4793 = vmatmul.mubr.f32.gmra.mrb[0].mxu0 %v4724
    %v4794 = vpop.f32.mrb[0].mxu0
    %v4795 = vadd.f32 0.0, %v4794
    %v4796 = vpop.f32.mrb[0].mxu0
    %4797 = vdwg.mxu0
    %v4798 = vsel %vm4323, %v4795, -inf
    %4799 = vmax.xlane.f32.xlu0 %v4798
    %v4800 = vpop.xlane.xlu0 %4799
    %v4801 = vsub.f32 %v4795, %v4800
    %v4802 = vmul.f32 %v4801, 1.442695
    %v4803 = vpow.pop %v4802
    %v4804 = vsel %vm4323, %v4803, 0.0
    %4805 = vadd.xlane.f32.xlu0 %v4804
    %v4806 = vpop.xlane.xlu0 %4805
    %v4807 = vrcp.pop %v4806
    %v4808 = vmul.f32 %v4803, %v4807
    %4809 = vrot.lane.b32.xlu0 %v4223, 64
    %v4810 = vpop.permute.xlu0 %4809
    %v4813 = vsel %vm4323, %v4808, 0
    %4815 = vmatprep.subr.mxu0 0.0
    %4816 = vmatpush1.msra.mxu0 %v4810
    %4817 = vmatprep.subr.mxu0 0.0
    %4818 = vmatpush1.msra.mxu0 0.0
    %4819 = vmatprep.subr.mxu0 0.0
    %4820 = vmatpush1.msra.mxu0 0.0
    %4821 = vmatprep.subr.mxu0 0.0
    %4822 = vmatpush1.msra.mxu0 0.0
    %4823 = vmatprep.subr.mxu0 0.0
    %4824 = vmatpush1.msra.mxu0 0.0
    %4825 = vmatprep.subr.mxu0 0.0
    %4826 = vmatpush1.msra.mxu0 0.0
    %4827 = vmatprep.subr.mxu0 0.0
    %4828 = vmatpush1.msra.mxu0 0.0
    %4829 = vmatprep.subr.mxu0 0.0
    %4830 = vmatpush1.msra.mxu0 0.0
    %4831 = vmatprep.subr.mxu0 0.0
    %4832 = vmatpush1.msra.mxu0 0.0
    %4833 = vmatprep.subr.mxu0 0.0
    %4834 = vmatpush1.msra.mxu0 0.0
    %4835 = vmatprep.subr.mxu0 0.0
    %4836 = vmatpush1.msra.mxu0 0.0
    %4837 = vmatprep.subr.mxu0 0.0
    %4838 = vmatpush1.msra.mxu0 0.0
    %4839 = vmatprep.subr.mxu0 0.0
    %4840 = vmatpush1.msra.mxu0 0.0
    %4841 = vmatprep.subr.mxu0 0.0
    %4842 = vmatpush1.msra.mxu0 0.0
    %4843 = vmatprep.subr.mxu0 0.0
    %4844 = vmatpush1.msra.mxu0 0.0
    %4845 = vmatprep.subr.mxu0 0.0
    %4846 = vmatpush1.msra.mxu0 0.0
    %4847 = vmatprep.subr.mxu0 0.0
    %4848 = vmatpush1.msra.mxu0 0.0
    %4849 = vmatprep.subr.mxu0 0.0
    %4850 = vmatpush1.msra.mxu0 0.0
    %4851 = vmatprep.subr.mxu0 0.0
    %4852 = vmatpush1.msra.mxu0 0.0
    %4853 = vmatprep.subr.mxu0 0.0
    %4854 = vmatpush1.msra.mxu0 0.0
    %4855 = vmatprep.subr.mxu0 0.0
    %4856 = vmatpush1.msra.mxu0 0.0
    %4857 = vmatprep.subr.mxu0 0.0
    %4858 = vmatpush1.msra.mxu0 0.0
    %4859 = vmatprep.subr.mxu0 0.0
    %4860 = vmatpush1.msra.mxu0 0.0
    %4861 = vmatprep.subr.mxu0 0.0
    %4862 = vmatpush1.msra.mxu0 0.0
    %4863 = vmatprep.subr.mxu0 0.0
    %4864 = vmatpush1.msra.mxu0 0.0
    %4865 = vmatprep.subr.mxu0 0.0
    %4866 = vmatpush1.msra.mxu0 0.0
    %4867 = vmatprep.subr.mxu0 0.0
    %4868 = vmatpush1.msra.mxu0 0.0
    %4869 = vmatprep.subr.mxu0 0.0
    %4870 = vmatpush1.msra.mxu0 0.0
    %4871 = vmatprep.subr.mxu0 0.0
    %4872 = vmatpush1.msra.mxu0 0.0
    %4873 = vmatprep.subr.mxu0 0.0
    %4874 = vmatpush1.msra.mxu0 0.0
    %4875 = vmatprep.subr.mxu0 0.0
    %4876 = vmatpush1.msra.mxu0 0.0
    %4877 = vmatprep.subr.mxu0 0.0
    %4878 = vmatpush1.msra.mxu0 0.0
    %4879 = vmatprep.mubr.f32.mxu0 0.0
    %4880 = vmatmul.mubr.f32.gmra.mrb[0].mxu0 %v4813
    %v4881 = vpop.f32.mrb[0].mxu0
    %v4882 = vadd.f32 0.0, %v4881
    %v4883 = vpop.f32.mrb[0].mxu0
    %4884 = vdwg.mxu0
    %v4886 = vsel %vm825, %v4882, 0
    %4888 = vmatprep.subr.mxu0 0.0
    %4889 = vmatpush1.msra.mxu0 %v4239
    %4890 = vmatprep.subr.mxu0 0.0
    %4891 = vmatpush1.msra.mxu0 %v4240
    %4892 = vmatprep.subr.mxu0 0.0
    %4893 = vmatpush1.msra.mxu0 %v4241
    %4894 = vmatprep.subr.mxu0 0.0
    %4895 = vmatpush1.msra.mxu0 %v4242
    %4896 = vmatprep.subr.mxu0 0.0
    %4897 = vmatpush1.msra.mxu0 0.0
    %4898 = vmatprep.subr.mxu0 0.0
    %4899 = vmatpush1.msra.mxu0 0.0
    %4900 = vmatprep.subr.mxu0 0.0
    %4901 = vmatpush1.msra.mxu0 0.0
    %4902 = vmatprep.subr.mxu0 0.0
    %4903 = vmatpush1.msra.mxu0 0.0
    %4904 = vmatprep.subr.mxu0 0.0
    %4905 = vmatpush1.msra.mxu0 0.0
    %4906 = vmatprep.subr.mxu0 0.0
    %4907 = vmatpush1.msra.mxu0 0.0
    %4908 = vmatprep.subr.mxu0 0.0
    %4909 = vmatpush1.msra.mxu0 0.0
    %4910 = vmatprep.subr.mxu0 0.0
    %4911 = vmatpush1.msra.mxu0 0.0
    %4912 = vmatprep.subr.mxu0 0.0
    %4913 = vmatpush1.msra.mxu0 0.0
    %4914 = vmatprep.subr.mxu0 0.0
    %4915 = vmatpush1.msra.mxu0 0.0
    %4916 = vmatprep.subr.mxu0 0.0
    %4917 = vmatpush1.msra.mxu0 0.0
    %4918 = vmatprep.subr.mxu0 0.0
    %4919 = vmatpush1.msra.mxu0 0.0
    %4920 = vmatprep.subr.mxu0 0.0
    %4921 = vmatpush1.msra.mxu0 0.0
    %4922 = vmatprep.subr.mxu0 0.0
    %4923 = vmatpush1.msra.mxu0 0.0
    %4924 = vmatprep.subr.mxu0 0.0
    %4925 = vmatpush1.msra.mxu0 0.0
    %4926 = vmatprep.subr.mxu0 0.0
    %4927 = vmatpush1.msra.mxu0 0.0
    %4928 = vmatprep.subr.mxu0 0.0
    %4929 = vmatpush1.msra.mxu0 0.0
    %4930 = vmatprep.subr.mxu0 0.0
    %4931 = vmatpush1.msra.mxu0 0.0
    %4932 = vmatprep.subr.mxu0 0.0
    %4933 = vmatpush1.msra.mxu0 0.0
    %4934 = vmatprep.subr.mxu0 0.0
    %4935 = vmatpush1.msra.mxu0 0.0
    %4936 = vmatprep.subr.mxu0 0.0
    %4937 = vmatpush1.msra.mxu0 0.0
    %4938 = vmatprep.subr.mxu0 0.0
    %4939 = vmatpush1.msra.mxu0 0.0
    %4940 = vmatprep.subr.mxu0 0.0
    %4941 = vmatpush1.msra.mxu0 0.0
    %4942 = vmatprep.subr.mxu0 0.0
    %4943 = vmatpush1.msra.mxu0 0.0
    %4944 = vmatprep.subr.mxu0 0.0
    %4945 = vmatpush1.msra.mxu0 0.0
    %4946 = vmatprep.subr.mxu0 0.0
    %4947 = vmatpush1.msra.mxu0 0.0
    %4948 = vmatprep.subr.mxu0 0.0
    %4949 = vmatpush1.msra.mxu0 0.0
    %4950 = vmatprep.subr.mxu0 0.0
    %4951 = vmatpush1.msra.mxu0 0.0
    %4952 = vmatprep.mubr.f32.mxu0 0.0
    %4953 = vmatmul.mubr.f32.gmra.mrb[0].mxu0 %v4886
    %v4954 = vpop.f32.mrb[0].mxu0
    %v4955 = vadd.f32 0.0, %v4954
    %v4956 = vpop.f32.mrb[0].mxu0
    %4957 = vdwg.mxu0
    %v4958 = vadd.f32 %v4717, %v4955
    %4959 = vrot.lane.b32.xlu0 %v4146, 32
    %v4960 = vpop.permute.xlu0 %4959
    %4961 = vrot.lane.b32.xlu0 %v4148, 32
    %v4962 = vpop.permute.xlu0 %4961
    %v4963 = vsel %vm825, %v4960, 0
    %v4965 = vsel %vm825, %v4962, 0
    %4967 = vmatprep.subr.mxu0 0.0
    %4968 = vmatpush1.xpose.msra.mxu0 %v4965
    %4969 = vmatprep.subr.mxu0 0.0
    %4970 = vmatpush1.xpose.msra.mxu0 0.0
    %4971 = vmatprep.subr.mxu0 0.0
    %4972 = vmatpush1.xpose.msra.mxu0 0.0
    %4973 = vmatprep.subr.mxu0 0.0
    %4974 = vmatpush1.xpose.msra.mxu0 0.0
    %4975 = vmatprep.subr.mxu0 0.0
    %4976 = vmatpush1.xpose.msra.mxu0 0.0
    %4977 = vmatprep.subr.mxu0 0.0
    %4978 = vmatpush1.xpose.msra.mxu0 0.0
    %4979 = vmatprep.subr.mxu0 0.0
    %4980 = vmatpush1.xpose.msra.mxu0 0.0
    %4981 = vmatprep.subr.mxu0 0.0
    %4982 = vmatpush1.xpose.msra.mxu0 0.0
    %4983 = vmatprep.subr.mxu0 0.0
    %4984 = vmatpush1.xpose.msra.mxu0 0.0
    %4985 = vmatprep.subr.mxu0 0.0
    %4986 = vmatpush1.xpose.msra.mxu0 0.0
    %4987 = vmatprep.subr.mxu0 0.0
    %4988 = vmatpush1.xpose.msra.mxu0 0.0
    %4989 = vmatprep.subr.mxu0 0.0
    %4990 = vmatpush1.xpose.msra.mxu0 0.0
    %4991 = vmatprep.subr.mxu0 0.0
    %4992 = vmatpush1.xpose.msra.mxu0 0.0
    %4993 = vmatprep.subr.mxu0 0.0
    %4994 = vmatpush1.xpose.msra.mxu0 0.0
    %4995 = vmatprep.subr.mxu0 0.0
    %4996 = vmatpush1.xpose.msra.mxu0 0.0
    %4997 = vmatprep.subr.mxu0 0.0
    %4998 = vmatpush1.xpose.msra.mxu0 0.0
    %4999 = vmatprep.subr.mxu0 0.0
    %5000 = vmatpush1.xpose.msra.mxu0 0.0
    %5001 = vmatprep.subr.mxu0 0.0
    %5002 = vmatpush1.xpose.msra.mxu0 0.0
    %5003 = vmatprep.subr.mxu0 0.0
    %5004 = vmatpush1.xpose.msra.mxu0 0.0
    %5005 = vmatprep.subr.mxu0 0.0
    %5006 = vmatpush1.xpose.msra.mxu0 0.0
    %5007 = vmatprep.subr.mxu0 0.0
    %5008 = vmatpush1.xpose.msra.mxu0 0.0
    %5009 = vmatprep.subr.mxu0 0.0
    %5010 = vmatpush1.xpose.msra.mxu0 0.0
    %5011 = vmatprep.subr.mxu0 0.0
    %5012 = vmatpush1.xpose.msra.mxu0 0.0
    %5013 = vmatprep.subr.mxu0 0.0
    %5014 = vmatpush1.xpose.msra.mxu0 0.0
    %5015 = vmatprep.subr.mxu0 0.0
    %5016 = vmatpush1.xpose.msra.mxu0 0.0
    %5017 = vmatprep.subr.mxu0 0.0
    %5018 = vmatpush1.xpose.msra.mxu0 0.0
    %5019 = vmatprep.subr.mxu0 0.0
    %5020 = vmatpush1.xpose.msra.mxu0 0.0
    %5021 = vmatprep.subr.mxu0 0.0
    %5022 = vmatpush1.xpose.msra.mxu0 0.0
    %5023 = vmatprep.subr.mxu0 0.0
    %5024 = vmatpush1.xpose.msra.mxu0 0.0
    %5025 = vmatprep.subr.mxu0 0.0
    %5026 = vmatpush1.xpose.msra.mxu0 0.0
    %5027 = vmatprep.subr.mxu0 0.0
    %5028 = vmatpush1.xpose.msra.mxu0 0.0
    %5029 = vmatprep.subr.mxu0 0.0
    %5030 = vmatpush1.xpose.msra.mxu0 0.0
    %5031 = vmatprep.mubr.f32.mxu0 0.0
    %5032 = vmatmul.mubr.f32.gmra.mrb[0].mxu0 %v4963
    %v5033 = vpop.f32.mrb[0].mxu0
    %v5034 = vadd.f32 0.0, %v5033
    %v5035 = vpop.f32.mrb[0].mxu0
    %5036 = vdwg.mxu0
    %v5037 = vsel %vm4323, %v5034, -inf
    %5038 = vmax.xlane.f32.xlu0 %v5037
    %v5039 = vpop.xlane.xlu0 %5038
    %v5040 = vsub.f32 %v5034, %v5039
    %v5041 = vmul.f32 %v5040, 1.442695
    %v5042 = vpow.pop %v5041
    %v5043 = vsel %vm4323, %v5042, 0.0
    %5044 = vadd.xlane.f32.xlu0 %v5043
    %v5045 = vpop.xlane.xlu0 %5044
    %v5046 = vrcp.pop %v5045
    %v5047 = vmul.f32 %v5042, %v5046
    %5048 = vrot.lane.b32.xlu0 %v4223, 32
    %v5049 = vpop.permute.xlu0 %5048
    %v5052 = vsel %vm4323, %v5047, 0
    %5054 = vmatprep.subr.mxu0 0.0
    %5055 = vmatpush1.msra.mxu0 %v5049
    %5056 = vmatprep.subr.mxu0 0.0
    %5057 = vmatpush1.msra.mxu0 0.0
    %5058 = vmatprep.subr.mxu0 0.0
    %5059 = vmatpush1.msra.mxu0 0.0
    %5060 = vmatprep.subr.mxu0 0.0
    %5061 = vmatpush1.msra.mxu0 0.0
    %5062 = vmatprep.subr.mxu0 0.0
    %5063 = vmatpush1.msra.mxu0 0.0
    %5064 = vmatprep.subr.mxu0 0.0
    %5065 = vmatpush1.msra.mxu0 0.0
    %5066 = vmatprep.subr.mxu0 0.0
    %5067 = vmatpush1.msra.mxu0 0.0
    %5068 = vmatprep.subr.mxu0 0.0
    %5069 = vmatpush1.msra.mxu0 0.0
    %5070 = vmatprep.subr.mxu0 0.0
    %5071 = vmatpush1.msra.mxu0 0.0
    %5072 = vmatprep.subr.mxu0 0.0
    %5073 = vmatpush1.msra.mxu0 0.0
    %5074 = vmatprep.subr.mxu0 0.0
    %5075 = vmatpush1.msra.mxu0 0.0
    %5076 = vmatprep.subr.mxu0 0.0
    %5077 = vmatpush1.msra.mxu0 0.0
    %5078 = vmatprep.subr.mxu0 0.0
    %5079 = vmatpush1.msra.mxu0 0.0
    %5080 = vmatprep.subr.mxu0 0.0
    %5081 = vmatpush1.msra.mxu0 0.0
    %5082 = vmatprep.subr.mxu0 0.0
    %5083 = vmatpush1.msra.mxu0 0.0
    %5084 = vmatprep.subr.mxu0 0.0
    %5085 = vmatpush1.msra.mxu0 0.0
    %5086 = vmatprep.subr.mxu0 0.0
    %5087 = vmatpush1.msra.mxu0 0.0
    %5088 = vmatprep.subr.mxu0 0.0
    %5089 = vmatpush1.msra.mxu0 0.0
    %5090 = vmatprep.subr.mxu0 0.0
    %5091 = vmatpush1.msra.mxu0 0.0
    %5092 = vmatprep.subr.mxu0 0.0
    %5093 = vmatpush1.msra.mxu0 0.0
    %5094 = vmatprep.subr.mxu0 0.0
    %5095 = vmatpush1.msra.mxu0 0.0
    %5096 = vmatprep.subr.mxu0 0.0
    %5097 = vmatpush1.msra.mxu0 0.0
    %5098 = vmatprep.subr.mxu0 0.0
    %5099 = vmatpush1.msra.mxu0 0.0
    %5100 = vmatprep.subr.mxu0 0.0
    %5101 = vmatpush1.msra.mxu0 0.0
    %5102 = vmatprep.subr.mxu0 0.0
    %5103 = vmatpush1.msra.mxu0 0.0
    %5104 = vmatprep.subr.mxu0 0.0
    %5105 = vmatpush1.msra.mxu0 0.0
    %5106 = vmatprep.subr.mxu0 0.0
    %5107 = vmatpush1.msra.mxu0 0.0
    %5108 = vmatprep.subr.mxu0 0.0
    %5109 = vmatpush1.msra.mxu0 0.0
    %5110 = vmatprep.subr.mxu0 0.0
    %5111 = vmatpush1.msra.mxu0 0.0
    %5112 = vmatprep.subr.mxu0 0.0
    %5113 = vmatpush1.msra.mxu0 0.0
    %5114 = vmatprep.subr.mxu0 0.0
    %5115 = vmatpush1.msra.mxu0 0.0
    %5116 = vmatprep.subr.mxu0 0.0
    %5117 = vmatpush1.msra.mxu0 0.0
    %5118 = vmatprep.mubr.f32.mxu0 0.0
    %5119 = vmatmul.mubr.f32.gmra.mrb[0].mxu0 %v5052
    %v5120 = vpop.f32.mrb[0].mxu0
    %v5121 = vadd.f32 0.0, %v5120
    %v5122 = vpop.f32.mrb[0].mxu0
    %5123 = vdwg.mxu0
    %v5125 = vsel %vm825, %v5121, 0
    %5127 = vmatprep.subr.mxu0 0.0
    %5128 = vmatpush1.msra.mxu0 %v4243
    %5129 = vmatprep.subr.mxu0 0.0
    %5130 = vmatpush1.msra.mxu0 %v4244
    %5131 = vmatprep.subr.mxu0 0.0
    %5132 = vmatpush1.msra.mxu0 %v4245
    %5133 = vmatprep.subr.mxu0 0.0
    %5134 = vmatpush1.msra.mxu0 %v4246
    %5135 = vmatprep.subr.mxu0 0.0
    %5136 = vmatpush1.msra.mxu0 0.0
    %5137 = vmatprep.subr.mxu0 0.0
    %5138 = vmatpush1.msra.mxu0 0.0
    %5139 = vmatprep.subr.mxu0 0.0
    %5140 = vmatpush1.msra.mxu0 0.0
    %5141 = vmatprep.subr.mxu0 0.0
    %5142 = vmatpush1.msra.mxu0 0.0
    %5143 = vmatprep.subr.mxu0 0.0
    %5144 = vmatpush1.msra.mxu0 0.0
    %5145 = vmatprep.subr.mxu0 0.0
    %5146 = vmatpush1.msra.mxu0 0.0
    %5147 = vmatprep.subr.mxu0 0.0
    %5148 = vmatpush1.msra.mxu0 0.0
    %5149 = vmatprep.subr.mxu0 0.0
    %5150 = vmatpush1.msra.mxu0 0.0
    %5151 = vmatprep.subr.mxu0 0.0
    %5152 = vmatpush1.msra.mxu0 0.0
    %5153 = vmatprep.subr.mxu0 0.0
    %5154 = vmatpush1.msra.mxu0 0.0
    %5155 = vmatprep.subr.mxu0 0.0
    %5156 = vmatpush1.msra.mxu0 0.0
    %5157 = vmatprep.subr.mxu0 0.0
    %5158 = vmatpush1.msra.mxu0 0.0
    %5159 = vmatprep.subr.mxu0 0.0
    %5160 = vmatpush1.msra.mxu0 0.0
    %5161 = vmatprep.subr.mxu0 0.0
    %5162 = vmatpush1.msra.mxu0 0.0
    %5163 = vmatprep.subr.mxu0 0.0
    %5164 = vmatpush1.msra.mxu0 0.0
    %5165 = vmatprep.subr.mxu0 0.0
    %5166 = vmatpush1.msra.mxu0 0.0
    %5167 = vmatprep.subr.mxu0 0.0
    %5168 = vmatpush1.msra.mxu0 0.0
    %5169 = vmatprep.subr.mxu0 0.0
    %5170 = vmatpush1.msra.mxu0 0.0
    %5171 = vmatprep.subr.mxu0 0.0
    %5172 = vmatpush1.msra.mxu0 0.0
    %5173 = vmatprep.subr.mxu0 0.0
    %5174 = vmatpush1.msra.mxu0 0.0
    %5175 = vmatprep.subr.mxu0 0.0
    %5176 = vmatpush1.msra.mxu0 0.0
    %5177 = vmatprep.subr.mxu0 0.0
    %5178 = vmatpush1.msra.mxu0 0.0
    %5179 = vmatprep.subr.mxu0 0.0
    %5180 = vmatpush1.msra.mxu0 0.0
    %5181 = vmatprep.subr.mxu0 0.0
    %5182 = vmatpush1.msra.mxu0 0.0
    %5183 = vmatprep.subr.mxu0 0.0
    %5184 = vmatpush1.msra.mxu0 0.0
    %5185 = vmatprep.subr.mxu0 0.0
    %5186 = vmatpush1.msra.mxu0 0.0
    %5187 = vmatprep.subr.mxu0 0.0
    %5188 = vmatpush1.msra.mxu0 0.0
    %5189 = vmatprep.subr.mxu0 0.0
    %5190 = vmatpush1.msra.mxu0 0.0
    %5191 = vmatprep.mubr.f32.mxu0 0.0
    %5192 = vmatmul.mubr.f32.gmra.mrb[0].mxu0 %v5125
    %v5193 = vpop.f32.mrb[0].mxu0
    %v5194 = vadd.f32 0.0, %v5193
    %v5195 = vpop.f32.mrb[0].mxu0
    %5196 = vdwg.mxu0
    %v5197 = vadd.f32 %v4958, %v5194
    %v5199 = vsel %vm825, %v4152, 0
    %v5202 = vsel %vm825, %v4154, 0
    %5204 = vmatprep.subr.mxu0 0.0
    %5205 = vmatpush1.xpose.msra.mxu0 %v5202
    %5206 = vmatprep.subr.mxu0 0.0
    %5207 = vmatpush1.xpose.msra.mxu0 0.0
    %5208 = vmatprep.subr.mxu0 0.0
    %5209 = vmatpush1.xpose.msra.mxu0 0.0
    %5210 = vmatprep.subr.mxu0 0.0
    %5211 = vmatpush1.xpose.msra.mxu0 0.0
    %5212 = vmatprep.subr.mxu0 0.0
    %5213 = vmatpush1.xpose.msra.mxu0 0.0
    %5214 = vmatprep.subr.mxu0 0.0
    %5215 = vmatpush1.xpose.msra.mxu0 0.0
    %5216 = vmatprep.subr.mxu0 0.0
    %5217 = vmatpush1.xpose.msra.mxu0 0.0
    %5218 = vmatprep.subr.mxu0 0.0
    %5219 = vmatpush1.xpose.msra.mxu0 0.0
    %5220 = vmatprep.subr.mxu0 0.0
    %5221 = vmatpush1.xpose.msra.mxu0 0.0
    %5222 = vmatprep.subr.mxu0 0.0
    %5223 = vmatpush1.xpose.msra.mxu0 0.0
    %5224 = vmatprep.subr.mxu0 0.0
    %5225 = vmatpush1.xpose.msra.mxu0 0.0
    %5226 = vmatprep.subr.mxu0 0.0
    %5227 = vmatpush1.xpose.msra.mxu0 0.0
    %5228 = vmatprep.subr.mxu0 0.0
    %5229 = vmatpush1.xpose.msra.mxu0 0.0
    %5230 = vmatprep.subr.mxu0 0.0
    %5231 = vmatpush1.xpose.msra.mxu0 0.0
    %5232 = vmatprep.subr.mxu0 0.0
    %5233 = vmatpush1.xpose.msra.mxu0 0.0
    %5234 = vmatprep.subr.mxu0 0.0
    %5235 = vmatpush1.xpose.msra.mxu0 0.0
    %5236 = vmatprep.subr.mxu0 0.0
    %5237 = vmatpush1.xpose.msra.mxu0 0.0
    %5238 = vmatprep.subr.mxu0 0.0
    %5239 = vmatpush1.xpose.msra.mxu0 0.0
    %5240 = vmatprep.subr.mxu0 0.0
    %5241 = vmatpush1.xpose.msra.mxu0 0.0
    %5242 = vmatprep.subr.mxu0 0.0
    %5243 = vmatpush1.xpose.msra.mxu0 0.0
    %5244 = vmatprep.subr.mxu0 0.0
    %5245 = vmatpush1.xpose.msra.mxu0 0.0
    %5246 = vmatprep.subr.mxu0 0.0
    %5247 = vmatpush1.xpose.msra.mxu0 0.0
    %5248 = vmatprep.subr.mxu0 0.0
    %5249 = vmatpush1.xpose.msra.mxu0 0.0
    %5250 = vmatprep.subr.mxu0 0.0
    %5251 = vmatpush1.xpose.msra.mxu0 0.0
    %5252 = vmatprep.subr.mxu0 0.0
    %5253 = vmatpush1.xpose.msra.mxu0 0.0
    %5254 = vmatprep.subr.mxu0 0.0
    %5255 = vmatpush1.xpose.msra.mxu0 0.0
    %5256 = vmatprep.subr.mxu0 0.0
    %5257 = vmatpush1.xpose.msra.mxu0 0.0
    %5258 = vmatprep.subr.mxu0 0.0
    %5259 = vmatpush1.xpose.msra.mxu0 0.0
    %5260 = vmatprep.subr.mxu0 0.0
    %5261 = vmatpush1.xpose.msra.mxu0 0.0
    %5262 = vmatprep.subr.mxu0 0.0
    %5263 = vmatpush1.xpose.msra.mxu0 0.0
    %5264 = vmatprep.subr.mxu0 0.0
    %5265 = vmatpush1.xpose.msra.mxu0 0.0
    %5266 = vmatprep.subr.mxu0 0.0
    %5267 = vmatpush1.xpose.msra.mxu0 0.0
    %5268 = vmatprep.mubr.f32.mxu0 0.0
    %5269 = vmatmul.mubr.f32.gmra.mrb[0].mxu0 %v5199
    %v5270 = vpop.f32.mrb[0].mxu0
    %v5271 = vadd.f32 0.0, %v5270
    %v5272 = vpop.f32.mrb[0].mxu0
    %5273 = vdwg.mxu0
    %v5274 = vsel %vm4323, %v5271, -inf
    %5275 = vmax.xlane.f32.xlu0 %v5274
    %v5276 = vpop.xlane.xlu0 %5275
    %v5277 = vsub.f32 %v5271, %v5276
    %v5278 = vmul.f32 %v5277, 1.442695
    %v5279 = vpow.pop %v5278
    %v5280 = vsel %vm4323, %v5279, 0.0
    %5281 = vadd.xlane.f32.xlu0 %v5280
    %v5282 = vpop.xlane.xlu0 %5281
    %v5283 = vrcp.pop %v5282
    %v5284 = vmul.f32 %v5279, %v5283
    %v5286 = vsel %vm4323, %v5284, 0
    %5288 = vmatprep.subr.mxu0 0.0
    %5289 = vmatpush1.msra.mxu0 %v4228
    %5290 = vmatprep.subr.mxu0 0.0
    %5291 = vmatpush1.msra.mxu0 0.0
    %5292 = vmatprep.subr.mxu0 0.0
    %5293 = vmatpush1.msra.mxu0 0.0
    %5294 = vmatprep.subr.mxu0 0.0
    %5295 = vmatpush1.msra.mxu0 0.0
    %5296 = vmatprep.subr.mxu0 0.0
    %5297 = vmatpush1.msra.mxu0 0.0
    %5298 = vmatprep.subr.mxu0 0.0
    %5299 = vmatpush1.msra.mxu0 0.0
    %5300 = vmatprep.subr.mxu0 0.0
    %5301 = vmatpush1.msra.mxu0 0.0
    %5302 = vmatprep.subr.mxu0 0.0
    %5303 = vmatpush1.msra.mxu0 0.0
    %5304 = vmatprep.subr.mxu0 0.0
    %5305 = vmatpush1.msra.mxu0 0.0
    %5306 = vmatprep.subr.mxu0 0.0
    %5307 = vmatpush1.msra.mxu0 0.0
    %5308 = vmatprep.subr.mxu0 0.0
    %5309 = vmatpush1.msra.mxu0 0.0
    %5310 = vmatprep.subr.mxu0 0.0
    %5311 = vmatpush1.msra.mxu0 0.0
    %5312 = vmatprep.subr.mxu0 0.0
    %5313 = vmatpush1.msra.mxu0 0.0
    %5314 = vmatprep.subr.mxu0 0.0
    %5315 = vmatpush1.msra.mxu0 0.0
    %5316 = vmatprep.subr.mxu0 0.0
    %5317 = vmatpush1.msra.mxu0 0.0
    %5318 = vmatprep.subr.mxu0 0.0
    %5319 = vmatpush1.msra.mxu0 0.0
    %5320 = vmatprep.subr.mxu0 0.0
    %5321 = vmatpush1.msra.mxu0 0.0
    %5322 = vmatprep.subr.mxu0 0.0
    %5323 = vmatpush1.msra.mxu0 0.0
    %5324 = vmatprep.subr.mxu0 0.0
    %5325 = vmatpush1.msra.mxu0 0.0
    %5326 = vmatprep.subr.mxu0 0.0
    %5327 = vmatpush1.msra.mxu0 0.0
    %5328 = vmatprep.subr.mxu0 0.0
    %5329 = vmatpush1.msra.mxu0 0.0
    %5330 = vmatprep.subr.mxu0 0.0
    %5331 = vmatpush1.msra.mxu0 0.0
    %5332 = vmatprep.subr.mxu0 0.0
    %5333 = vmatpush1.msra.mxu0 0.0
    %5334 = vmatprep.subr.mxu0 0.0
    %5335 = vmatpush1.msra.mxu0 0.0
    %5336 = vmatprep.subr.mxu0 0.0
    %5337 = vmatpush1.msra.mxu0 0.0
    %5338 = vmatprep.subr.mxu0 0.0
    %5339 = vmatpush1.msra.mxu0 0.0
    %5340 = vmatprep.subr.mxu0 0.0
    %5341 = vmatpush1.msra.mxu0 0.0
    %5342 = vmatprep.subr.mxu0 0.0
    %5343 = vmatpush1.msra.mxu0 0.0
    %5344 = vmatprep.subr.mxu0 0.0
    %5345 = vmatpush1.msra.mxu0 0.0
    %5346 = vmatprep.subr.mxu0 0.0
    %5347 = vmatpush1.msra.mxu0 0.0
    %5348 = vmatprep.subr.mxu0 0.0
    %5349 = vmatpush1.msra.mxu0 0.0
    %5350 = vmatprep.subr.mxu0 0.0
    %5351 = vmatpush1.msra.mxu0 0.0
    %5352 = vmatprep.mubr.f32.mxu0 0.0
    %5353 = vmatmul.mubr.f32.gmra.mrb[0].mxu0 %v5286
    %v5354 = vpop.f32.mrb[0].mxu0
    %v5355 = vadd.f32 0.0, %v5354
    %v5356 = vpop.f32.mrb[0].mxu0
    %5357 = vdwg.mxu0
    %5358 = vrot.lane.b32.xlu0 %v4152, 96
    %v5359 = vpop.permute.xlu0 %5358
    %5360 = vrot.lane.b32.xlu0 %v4154, 96
    %v5361 = vpop.permute.xlu0 %5360
    %v5362 = vsel %vm825, %v5359, 0
    %v5364 = vsel %vm825, %v5361, 0
    %5366 = vmatprep.subr.mxu0 0.0
    %5367 = vmatpush1.xpose.msra.mxu0 %v5364
    %5368 = vmatprep.subr.mxu0 0.0
    %5369 = vmatpush1.xpose.msra.mxu0 0.0
    %5370 = vmatprep.subr.mxu0 0.0
    %5371 = vmatpush1.xpose.msra.mxu0 0.0
    %5372 = vmatprep.subr.mxu0 0.0
    %5373 = vmatpush1.xpose.msra.mxu0 0.0
    %5374 = vmatprep.subr.mxu0 0.0
    %5375 = vmatpush1.xpose.msra.mxu0 0.0
    %5376 = vmatprep.subr.mxu0 0.0
    %5377 = vmatpush1.xpose.msra.mxu0 0.0
    %5378 = vmatprep.subr.mxu0 0.0
    %5379 = vmatpush1.xpose.msra.mxu0 0.0
    %5380 = vmatprep.subr.mxu0 0.0
    %5381 = vmatpush1.xpose.msra.mxu0 0.0
    %5382 = vmatprep.subr.mxu0 0.0
    %5383 = vmatpush1.xpose.msra.mxu0 0.0
    %5384 = vmatprep.subr.mxu0 0.0
    %5385 = vmatpush1.xpose.msra.mxu0 0.0
    %5386 = vmatprep.subr.mxu0 0.0
    %5387 = vmatpush1.xpose.msra.mxu0 0.0
    %5388 = vmatprep.subr.mxu0 0.0
    %5389 = vmatpush1.xpose.msra.mxu0 0.0
    %5390 = vmatprep.subr.mxu0 0.0
    %5391 = vmatpush1.xpose.msra.mxu0 0.0
    %5392 = vmatprep.subr.mxu0 0.0
    %5393 = vmatpush1.xpose.msra.mxu0 0.0
    %5394 = vmatprep.subr.mxu0 0.0
    %5395 = vmatpush1.xpose.msra.mxu0 0.0
    %5396 = vmatprep.subr.mxu0 0.0
    %5397 = vmatpush1.xpose.msra.mxu0 0.0
    %5398 = vmatprep.subr.mxu0 0.0
    %5399 = vmatpush1.xpose.msra.mxu0 0.0
    %5400 = vmatprep.subr.mxu0 0.0
    %5401 = vmatpush1.xpose.msra.mxu0 0.0
    %5402 = vmatprep.subr.mxu0 0.0
    %5403 = vmatpush1.xpose.msra.mxu0 0.0
    %5404 = vmatprep.subr.mxu0 0.0
    %5405 = vmatpush1.xpose.msra.mxu0 0.0
    %5406 = vmatprep.subr.mxu0 0.0
    %5407 = vmatpush1.xpose.msra.mxu0 0.0
    %5408 = vmatprep.subr.mxu0 0.0
    %5409 = vmatpush1.xpose.msra.mxu0 0.0
    %5410 = vmatprep.subr.mxu0 0.0
    %5411 = vmatpush1.xpose.msra.mxu0 0.0
    %5412 = vmatprep.subr.mxu0 0.0
    %5413 = vmatpush1.xpose.msra.mxu0 0.0
    %5414 = vmatprep.subr.mxu0 0.0
    %5415 = vmatpush1.xpose.msra.mxu0 0.0
    %5416 = vmatprep.subr.mxu0 0.0
    %5417 = vmatpush1.xpose.msra.mxu0 0.0
    %5418 = vmatprep.subr.mxu0 0.0
    %5419 = vmatpush1.xpose.msra.mxu0 0.0
    %5420 = vmatprep.subr.mxu0 0.0
    %5421 = vmatpush1.xpose.msra.mxu0 0.0
    %5422 = vmatprep.subr.mxu0 0.0
    %5423 = vmatpush1.xpose.msra.mxu0 0.0
    %5424 = vmatprep.subr.mxu0 0.0
    %5425 = vmatpush1.xpose.msra.mxu0 0.0
    %5426 = vmatprep.subr.mxu0 0.0
    %5427 = vmatpush1.xpose.msra.mxu0 0.0
    %5428 = vmatprep.subr.mxu0 0.0
    %5429 = vmatpush1.xpose.msra.mxu0 0.0
    %5430 = vmatprep.mubr.f32.mxu0 0.0
    %5431 = vmatmul.mubr.f32.gmra.mrb[0].mxu0 %v5362
    %v5432 = vpop.f32.mrb[0].mxu0
    %v5433 = vadd.f32 0.0, %v5432
    %v5434 = vpop.f32.mrb[0].mxu0
    %5435 = vdwg.mxu0
    %v5436 = vsel %vm4323, %v5433, -inf
    %5437 = vmax.xlane.f32.xlu0 %v5436
    %v5438 = vpop.xlane.xlu0 %5437
    %v5439 = vsub.f32 %v5433, %v5438
    %v5440 = vmul.f32 %v5439, 1.442695
    %v5441 = vpow.pop %v5440
    %v5442 = vsel %vm4323, %v5441, 0.0
    %5443 = vadd.xlane.f32.xlu0 %v5442
    %v5444 = vpop.xlane.xlu0 %5443
    %v5445 = vrcp.pop %v5444
    %v5446 = vmul.f32 %v5441, %v5445
    %5448 = vrot.lane.b32.xlu0 %v4228, 96
    %v5449 = vpop.permute.xlu0 %5448
    %v5452 = vsel %vm4323, %v5446, 0
    %5454 = vmatprep.subr.mxu0 0.0
    %5455 = vmatpush1.msra.mxu0 %v5449
    %5456 = vmatprep.subr.mxu0 0.0
    %5457 = vmatpush1.msra.mxu0 0.0
    %5458 = vmatprep.subr.mxu0 0.0
    %5459 = vmatpush1.msra.mxu0 0.0
    %5460 = vmatprep.subr.mxu0 0.0
    %5461 = vmatpush1.msra.mxu0 0.0
    %5462 = vmatprep.subr.mxu0 0.0
    %5463 = vmatpush1.msra.mxu0 0.0
    %5464 = vmatprep.subr.mxu0 0.0
    %5465 = vmatpush1.msra.mxu0 0.0
    %5466 = vmatprep.subr.mxu0 0.0
    %5467 = vmatpush1.msra.mxu0 0.0
    %5468 = vmatprep.subr.mxu0 0.0
    %5469 = vmatpush1.msra.mxu0 0.0
    %5470 = vmatprep.subr.mxu0 0.0
    %5471 = vmatpush1.msra.mxu0 0.0
    %5472 = vmatprep.subr.mxu0 0.0
    %5473 = vmatpush1.msra.mxu0 0.0
    %5474 = vmatprep.subr.mxu0 0.0
    %5475 = vmatpush1.msra.mxu0 0.0
    %5476 = vmatprep.subr.mxu0 0.0
    %5477 = vmatpush1.msra.mxu0 0.0
    %5478 = vmatprep.subr.mxu0 0.0
    %5479 = vmatpush1.msra.mxu0 0.0
    %5480 = vmatprep.subr.mxu0 0.0
    %5481 = vmatpush1.msra.mxu0 0.0
    %5482 = vmatprep.subr.mxu0 0.0
    %5483 = vmatpush1.msra.mxu0 0.0
    %5484 = vmatprep.subr.mxu0 0.0
    %5485 = vmatpush1.msra.mxu0 0.0
    %5486 = vmatprep.subr.mxu0 0.0
    %5487 = vmatpush1.msra.mxu0 0.0
    %5488 = vmatprep.subr.mxu0 0.0
    %5489 = vmatpush1.msra.mxu0 0.0
    %5490 = vmatprep.subr.mxu0 0.0
    %5491 = vmatpush1.msra.mxu0 0.0
    %5492 = vmatprep.subr.mxu0 0.0
    %5493 = vmatpush1.msra.mxu0 0.0
    %5494 = vmatprep.subr.mxu0 0.0
    %5495 = vmatpush1.msra.mxu0 0.0
    %5496 = vmatprep.subr.mxu0 0.0
    %5497 = vmatpush1.msra.mxu0 0.0
    %5498 = vmatprep.subr.mxu0 0.0
    %5499 = vmatpush1.msra.mxu0 0.0
    %5500 = vmatprep.subr.mxu0 0.0
    %5501 = vmatpush1.msra.mxu0 0.0
    %5502 = vmatprep.subr.mxu0 0.0
    %5503 = vmatpush1.msra.mxu0 0.0
    %5504 = vmatprep.subr.mxu0 0.0
    %5505 = vmatpush1.msra.mxu0 0.0
    %5506 = vmatprep.subr.mxu0 0.0
    %5507 = vmatpush1.msra.mxu0 0.0
    %5508 = vmatprep.subr.mxu0 0.0
    %5509 = vmatpush1.msra.mxu0 0.0
    %5510 = vmatprep.subr.mxu0 0.0
    %5511 = vmatpush1.msra.mxu0 0.0
    %5512 = vmatprep.subr.mxu0 0.0
    %5513 = vmatpush1.msra.mxu0 0.0
    %5514 = vmatprep.subr.mxu0 0.0
    %5515 = vmatpush1.msra.mxu0 0.0
    %5516 = vmatprep.subr.mxu0 0.0
    %5517 = vmatpush1.msra.mxu0 0.0
    %5518 = vmatprep.mubr.f32.mxu0 0.0
    %5519 = vmatmul.mubr.f32.gmra.mrb[0].mxu0 %v5452
    %v5520 = vpop.f32.mrb[0].mxu0
    %v5521 = vadd.f32 0.0, %v5520
    %v5522 = vpop.f32.mrb[0].mxu0
    %5523 = vdwg.mxu0
    %v5525 = vsel %vm825, %v5521, 0
    %5527 = vmatprep.subr.mxu0 0.0
    %5528 = vmatpush1.msra.mxu0 %v4235
    %5529 = vmatprep.subr.mxu0 0.0
    %5530 = vmatpush1.msra.mxu0 %v4236
    %5531 = vmatprep.subr.mxu0 0.0
    %5532 = vmatpush1.msra.mxu0 %v4237
    %5533 = vmatprep.subr.mxu0 0.0
    %5534 = vmatpush1.msra.mxu0 %v4238
    %5535 = vmatprep.subr.mxu0 0.0
    %5536 = vmatpush1.msra.mxu0 0.0
    %5537 = vmatprep.subr.mxu0 0.0
    %5538 = vmatpush1.msra.mxu0 0.0
    %5539 = vmatprep.subr.mxu0 0.0
    %5540 = vmatpush1.msra.mxu0 0.0
    %5541 = vmatprep.subr.mxu0 0.0
    %5542 = vmatpush1.msra.mxu0 0.0
    %5543 = vmatprep.subr.mxu0 0.0
    %5544 = vmatpush1.msra.mxu0 0.0
    %5545 = vmatprep.subr.mxu0 0.0
    %5546 = vmatpush1.msra.mxu0 0.0
    %5547 = vmatprep.subr.mxu0 0.0
    %5548 = vmatpush1.msra.mxu0 0.0
    %5549 = vmatprep.subr.mxu0 0.0
    %5550 = vmatpush1.msra.mxu0 0.0
    %5551 = vmatprep.subr.mxu0 0.0
    %5552 = vmatpush1.msra.mxu0 0.0
    %5553 = vmatprep.subr.mxu0 0.0
    %5554 = vmatpush1.msra.mxu0 0.0
    %5555 = vmatprep.subr.mxu0 0.0
    %5556 = vmatpush1.msra.mxu0 0.0
    %5557 = vmatprep.subr.mxu0 0.0
    %5558 = vmatpush1.msra.mxu0 0.0
    %5559 = vmatprep.subr.mxu0 0.0
    %5560 = vmatpush1.msra.mxu0 0.0
    %5561 = vmatprep.subr.mxu0 0.0
    %5562 = vmatpush1.msra.mxu0 0.0
    %5563 = vmatprep.subr.mxu0 0.0
    %5564 = vmatpush1.msra.mxu0 0.0
    %5565 = vmatprep.subr.mxu0 0.0
    %5566 = vmatpush1.msra.mxu0 0.0
    %5567 = vmatprep.subr.mxu0 0.0
    %5568 = vmatpush1.msra.mxu0 0.0
    %5569 = vmatprep.subr.mxu0 0.0
    %5570 = vmatpush1.msra.mxu0 0.0
    %5571 = vmatprep.subr.mxu0 0.0
    %5572 = vmatpush1.msra.mxu0 0.0
    %5573 = vmatprep.subr.mxu0 0.0
    %5574 = vmatpush1.msra.mxu0 0.0
    %5575 = vmatprep.subr.mxu0 0.0
    %5576 = vmatpush1.msra.mxu0 0.0
    %5577 = vmatprep.subr.mxu0 0.0
    %5578 = vmatpush1.msra.mxu0 0.0
    %5579 = vmatprep.subr.mxu0 0.0
    %5580 = vmatpush1.msra.mxu0 0.0
    %5581 = vmatprep.subr.mxu0 0.0
    %5582 = vmatpush1.msra.mxu0 0.0
    %5583 = vmatprep.subr.mxu0 0.0
    %5584 = vmatpush1.msra.mxu0 0.0
    %5585 = vmatprep.subr.mxu0 0.0
    %5586 = vmatpush1.msra.mxu0 0.0
    %5587 = vmatprep.subr.mxu0 0.0
    %5588 = vmatpush1.msra.mxu0 0.0
    %5589 = vmatprep.subr.mxu0 0.0
    %5590 = vmatpush1.msra.mxu0 0.0
    %5591 = vmatprep.mubr.f32.mxu0 0.0
    %5592 = vmatmul.mubr.f32.gmra.mrb[0].mxu0 %v5525
    %v5593 = vpop.f32.mrb[0].mxu0
    %v5594 = vadd.f32 0.0, %v5593
    %v5595 = vpop.f32.mrb[0].mxu0
    %5596 = vdwg.mxu0
    %v5598 = vsel %vm825, %v5355, 0
    %5600 = vmatprep.subr.mxu0 0.0
    %5601 = vmatpush1.msra.mxu0 %v4231
    %5602 = vmatprep.subr.mxu0 0.0
    %5603 = vmatpush1.msra.mxu0 %v4232
    %5604 = vmatprep.subr.mxu0 0.0
    %5605 = vmatpush1.msra.mxu0 %v4233
    %5606 = vmatprep.subr.mxu0 0.0
    %5607 = vmatpush1.msra.mxu0 %v4234
    %5608 = vmatprep.subr.mxu0 0.0
    %5609 = vmatpush1.msra.mxu0 0.0
    %5610 = vmatprep.subr.mxu0 0.0
    %5611 = vmatpush1.msra.mxu0 0.0
    %5612 = vmatprep.subr.mxu0 0.0
    %5613 = vmatpush1.msra.mxu0 0.0
    %5614 = vmatprep.subr.mxu0 0.0
    %5615 = vmatpush1.msra.mxu0 0.0
    %5616 = vmatprep.subr.mxu0 0.0
    %5617 = vmatpush1.msra.mxu0 0.0
    %5618 = vmatprep.subr.mxu0 0.0
    %5619 = vmatpush1.msra.mxu0 0.0
    %5620 = vmatprep.subr.mxu0 0.0
    %5621 = vmatpush1.msra.mxu0 0.0
    %5622 = vmatprep.subr.mxu0 0.0
    %5623 = vmatpush1.msra.mxu0 0.0
    %5624 = vmatprep.subr.mxu0 0.0
    %5625 = vmatpush1.msra.mxu0 0.0
    %5626 = vmatprep.subr.mxu0 0.0
    %5627 = vmatpush1.msra.mxu0 0.0
    %5628 = vmatprep.subr.mxu0 0.0
    %5629 = vmatpush1.msra.mxu0 0.0
    %5630 = vmatprep.subr.mxu0 0.0
    %5631 = vmatpush1.msra.mxu0 0.0
    %5632 = vmatprep.subr.mxu0 0.0
    %5633 = vmatpush1.msra.mxu0 0.0
    %5634 = vmatprep.subr.mxu0 0.0
    %5635 = vmatpush1.msra.mxu0 0.0
    %5636 = vmatprep.subr.mxu0 0.0
    %5637 = vmatpush1.msra.mxu0 0.0
    %5638 = vmatprep.subr.mxu0 0.0
    %5639 = vmatpush1.msra.mxu0 0.0
    %5640 = vmatprep.subr.mxu0 0.0
    %5641 = vmatpush1.msra.mxu0 0.0
    %5642 = vmatprep.subr.mxu0 0.0
    %5643 = vmatpush1.msra.mxu0 0.0
    %5644 = vmatprep.subr.mxu0 0.0
    %5645 = vmatpush1.msra.mxu0 0.0
    %5646 = vmatprep.subr.mxu0 0.0
    %5647 = vmatpush1.msra.mxu0 0.0
    %5648 = vmatprep.subr.mxu0 0.0
    %5649 = vmatpush1.msra.mxu0 0.0
    %5650 = vmatprep.subr.mxu0 0.0
    %5651 = vmatpush1.msra.mxu0 0.0
    %5652 = vmatprep.subr.mxu0 0.0
    %5653 = vmatpush1.msra.mxu0 0.0
    %5654 = vmatprep.subr.mxu0 0.0
    %5655 = vmatpush1.msra.mxu0 0.0
    %5656 = vmatprep.subr.mxu0 0.0
    %5657 = vmatpush1.msra.mxu0 0.0
    %5658 = vmatprep.subr.mxu0 0.0
    %5659 = vmatpush1.msra.mxu0 0.0
    %5660 = vmatprep.subr.mxu0 0.0
    %5661 = vmatpush1.msra.mxu0 0.0
    %5662 = vmatprep.subr.mxu0 0.0
    %5663 = vmatpush1.msra.mxu0 0.0
    %5664 = vmatprep.mubr.f32.mxu0 0.0
    %5665 = vmatmul.mubr.f32.gmra.mrb[0].mxu0 %v5598
    %v5666 = vpop.f32.mrb[0].mxu0
    %v5667 = vadd.f32 %v5594, %v5666
    %v5668 = vpop.f32.mrb[0].mxu0
    %5669 = vdwg.mxu0
    %5670 = vrot.lane.b32.xlu0 %v4152, 64
    %v5671 = vpop.permute.xlu0 %5670
    %5672 = vrot.lane.b32.xlu0 %v4154, 64
    %v5673 = vpop.permute.xlu0 %5672
    %v5674 = vsel %vm825, %v5671, 0
    %v5676 = vsel %vm825, %v5673, 0
    %5678 = vmatprep.subr.mxu0 0.0
    %5679 = vmatpush1.xpose.msra.mxu0 %v5676
    %5680 = vmatprep.subr.mxu0 0.0
    %5681 = vmatpush1.xpose.msra.mxu0 0.0
    %5682 = vmatprep.subr.mxu0 0.0
    %5683 = vmatpush1.xpose.msra.mxu0 0.0
    %5684 = vmatprep.subr.mxu0 0.0
    %5685 = vmatpush1.xpose.msra.mxu0 0.0
    %5686 = vmatprep.subr.mxu0 0.0
    %5687 = vmatpush1.xpose.msra.mxu0 0.0
    %5688 = vmatprep.subr.mxu0 0.0
    %5689 = vmatpush1.xpose.msra.mxu0 0.0
    %5690 = vmatprep.subr.mxu0 0.0
    %5691 = vmatpush1.xpose.msra.mxu0 0.0
    %5692 = vmatprep.subr.mxu0 0.0
    %5693 = vmatpush1.xpose.msra.mxu0 0.0
    %5694 = vmatprep.subr.mxu0 0.0
    %5695 = vmatpush1.xpose.msra.mxu0 0.0
    %5696 = vmatprep.subr.mxu0 0.0
    %5697 = vmatpush1.xpose.msra.mxu0 0.0
    %5698 = vmatprep.subr.mxu0 0.0
    %5699 = vmatpush1.xpose.msra.mxu0 0.0
    %5700 = vmatprep.subr.mxu0 0.0
    %5701 = vmatpush1.xpose.msra.mxu0 0.0
    %5702 = vmatprep.subr.mxu0 0.0
    %5703 = vmatpush1.xpose.msra.mxu0 0.0
    %5704 = vmatprep.subr.mxu0 0.0
    %5705 = vmatpush1.xpose.msra.mxu0 0.0
    %5706 = vmatprep.subr.mxu0 0.0
    %5707 = vmatpush1.xpose.msra.mxu0 0.0
    %5708 = vmatprep.subr.mxu0 0.0
    %5709 = vmatpush1.xpose.msra.mxu0 0.0
    %5710 = vmatprep.subr.mxu0 0.0
    %5711 = vmatpush1.xpose.msra.mxu0 0.0
    %5712 = vmatprep.subr.mxu0 0.0
    %5713 = vmatpush1.xpose.msra.mxu0 0.0
    %5714 = vmatprep.subr.mxu0 0.0
    %5715 = vmatpush1.xpose.msra.mxu0 0.0
    %5716 = vmatprep.subr.mxu0 0.0
    %5717 = vmatpush1.xpose.msra.mxu0 0.0
    %5718 = vmatprep.subr.mxu0 0.0
    %5719 = vmatpush1.xpose.msra.mxu0 0.0
    %5720 = vmatprep.subr.mxu0 0.0
    %5721 = vmatpush1.xpose.msra.mxu0 0.0
    %5722 = vmatprep.subr.mxu0 0.0
    %5723 = vmatpush1.xpose.msra.mxu0 0.0
    %5724 = vmatprep.subr.mxu0 0.0
    %5725 = vmatpush1.xpose.msra.mxu0 0.0
    %5726 = vmatprep.subr.mxu0 0.0
    %5727 = vmatpush1.xpose.msra.mxu0 0.0
    %5728 = vmatprep.subr.mxu0 0.0
    %5729 = vmatpush1.xpose.msra.mxu0 0.0
    %5730 = vmatprep.subr.mxu0 0.0
    %5731 = vmatpush1.xpose.msra.mxu0 0.0
    %5732 = vmatprep.subr.mxu0 0.0
    %5733 = vmatpush1.xpose.msra.mxu0 0.0
    %5734 = vmatprep.subr.mxu0 0.0
    %5735 = vmatpush1.xpose.msra.mxu0 0.0
    %5736 = vmatprep.subr.mxu0 0.0
    %5737 = vmatpush1.xpose.msra.mxu0 0.0
    %5738 = vmatprep.subr.mxu0 0.0
    %5739 = vmatpush1.xpose.msra.mxu0 0.0
    %5740 = vmatprep.subr.mxu0 0.0
    %5741 = vmatpush1.xpose.msra.mxu0 0.0
    %5742 = vmatprep.mubr.f32.mxu0 0.0
    %5743 = vmatmul.mubr.f32.gmra.mrb[0].mxu0 %v5674
    %v5744 = vpop.f32.mrb[0].mxu0
    %v5745 = vadd.f32 0.0, %v5744
    %v5746 = vpop.f32.mrb[0].mxu0
    %5747 = vdwg.mxu0
    %v5748 = vsel %vm4323, %v5745, -inf
    %5749 = vmax.xlane.f32.xlu0 %v5748
    %v5750 = vpop.xlane.xlu0 %5749
    %v5751 = vsub.f32 %v5745, %v5750
    %v5752 = vmul.f32 %v5751, 1.442695
    %v5753 = vpow.pop %v5752
    %v5754 = vsel %vm4323, %v5753, 0.0
    %5755 = vadd.xlane.f32.xlu0 %v5754
    %v5756 = vpop.xlane.xlu0 %5755
    %v5757 = vrcp.pop %v5756
    %v5758 = vmul.f32 %v5753, %v5757
    %5759 = vrot.lane.b32.xlu0 %v4228, 64
    %v5760 = vpop.permute.xlu0 %5759
    %v5763 = vsel %vm4323, %v5758, 0
    %5765 = vmatprep.subr.mxu0 0.0
    %5766 = vmatpush1.msra.mxu0 %v5760
    %5767 = vmatprep.subr.mxu0 0.0
    %5768 = vmatpush1.msra.mxu0 0.0
    %5769 = vmatprep.subr.mxu0 0.0
    %5770 = vmatpush1.msra.mxu0 0.0
    %5771 = vmatprep.subr.mxu0 0.0
    %5772 = vmatpush1.msra.mxu0 0.0
    %5773 = vmatprep.subr.mxu0 0.0
    %5774 = vmatpush1.msra.mxu0 0.0
    %5775 = vmatprep.subr.mxu0 0.0
    %5776 = vmatpush1.msra.mxu0 0.0
    %5777 = vmatprep.subr.mxu0 0.0
    %5778 = vmatpush1.msra.mxu0 0.0
    %5779 = vmatprep.subr.mxu0 0.0
    %5780 = vmatpush1.msra.mxu0 0.0
    %5781 = vmatprep.subr.mxu0 0.0
    %5782 = vmatpush1.msra.mxu0 0.0
    %5783 = vmatprep.subr.mxu0 0.0
    %5784 = vmatpush1.msra.mxu0 0.0
    %5785 = vmatprep.subr.mxu0 0.0
    %5786 = vmatpush1.msra.mxu0 0.0
    %5787 = vmatprep.subr.mxu0 0.0
    %5788 = vmatpush1.msra.mxu0 0.0
    %5789 = vmatprep.subr.mxu0 0.0
    %5790 = vmatpush1.msra.mxu0 0.0
    %5791 = vmatprep.subr.mxu0 0.0
    %5792 = vmatpush1.msra.mxu0 0.0
    %5793 = vmatprep.subr.mxu0 0.0
    %5794 = vmatpush1.msra.mxu0 0.0
    %5795 = vmatprep.subr.mxu0 0.0
    %5796 = vmatpush1.msra.mxu0 0.0
    %5797 = vmatprep.subr.mxu0 0.0
    %5798 = vmatpush1.msra.mxu0 0.0
    %5799 = vmatprep.subr.mxu0 0.0
    %5800 = vmatpush1.msra.mxu0 0.0
    %5801 = vmatprep.subr.mxu0 0.0
    %5802 = vmatpush1.msra.mxu0 0.0
    %5803 = vmatprep.subr.mxu0 0.0
    %5804 = vmatpush1.msra.mxu0 0.0
    %5805 = vmatprep.subr.mxu0 0.0
    %5806 = vmatpush1.msra.mxu0 0.0
    %5807 = vmatprep.subr.mxu0 0.0
    %5808 = vmatpush1.msra.mxu0 0.0
    %5809 = vmatprep.subr.mxu0 0.0
    %5810 = vmatpush1.msra.mxu0 0.0
    %5811 = vmatprep.subr.mxu0 0.0
    %5812 = vmatpush1.msra.mxu0 0.0
    %5813 = vmatprep.subr.mxu0 0.0
    %5814 = vmatpush1.msra.mxu0 0.0
    %5815 = vmatprep.subr.mxu0 0.0
    %5816 = vmatpush1.msra.mxu0 0.0
    %5817 = vmatprep.subr.mxu0 0.0
    %5818 = vmatpush1.msra.mxu0 0.0
    %5819 = vmatprep.subr.mxu0 0.0
    %5820 = vmatpush1.msra.mxu0 0.0
    %5821 = vmatprep.subr.mxu0 0.0
    %5822 = vmatpush1.msra.mxu0 0.0
    %5823 = vmatprep.subr.mxu0 0.0
    %5824 = vmatpush1.msra.mxu0 0.0
    %5825 = vmatprep.subr.mxu0 0.0
    %5826 = vmatpush1.msra.mxu0 0.0
    %5827 = vmatprep.subr.mxu0 0.0
    %5828 = vmatpush1.msra.mxu0 0.0
    %5829 = vmatprep.mubr.f32.mxu0 0.0
    %5830 = vmatmul.mubr.f32.gmra.mrb[0].mxu0 %v5763
    %v5831 = vpop.f32.mrb[0].mxu0
    %v5832 = vadd.f32 0.0, %v5831
    %v5833 = vpop.f32.mrb[0].mxu0
    %5834 = vdwg.mxu0
    %v5836 = vsel %vm825, %v5832, 0
    %5838 = vmatprep.subr.mxu0 0.0
    %5839 = vmatpush1.msra.mxu0 %v4239
    %5840 = vmatprep.subr.mxu0 0.0
    %5841 = vmatpush1.msra.mxu0 %v4240
    %5842 = vmatprep.subr.mxu0 0.0
    %5843 = vmatpush1.msra.mxu0 %v4241
    %5844 = vmatprep.subr.mxu0 0.0
    %5845 = vmatpush1.msra.mxu0 %v4242
    %5846 = vmatprep.subr.mxu0 0.0
    %5847 = vmatpush1.msra.mxu0 0.0
    %5848 = vmatprep.subr.mxu0 0.0
    %5849 = vmatpush1.msra.mxu0 0.0
    %5850 = vmatprep.subr.mxu0 0.0
    %5851 = vmatpush1.msra.mxu0 0.0
    %5852 = vmatprep.subr.mxu0 0.0
    %5853 = vmatpush1.msra.mxu0 0.0
    %5854 = vmatprep.subr.mxu0 0.0
    %5855 = vmatpush1.msra.mxu0 0.0
    %5856 = vmatprep.subr.mxu0 0.0
    %5857 = vmatpush1.msra.mxu0 0.0
    %5858 = vmatprep.subr.mxu0 0.0
    %5859 = vmatpush1.msra.mxu0 0.0
    %5860 = vmatprep.subr.mxu0 0.0
    %5861 = vmatpush1.msra.mxu0 0.0
    %5862 = vmatprep.subr.mxu0 0.0
    %5863 = vmatpush1.msra.mxu0 0.0
    %5864 = vmatprep.subr.mxu0 0.0
    %5865 = vmatpush1.msra.mxu0 0.0
    %5866 = vmatprep.subr.mxu0 0.0
    %5867 = vmatpush1.msra.mxu0 0.0
    %5868 = vmatprep.subr.mxu0 0.0
    %5869 = vmatpush1.msra.mxu0 0.0
    %5870 = vmatprep.subr.mxu0 0.0
    %5871 = vmatpush1.msra.mxu0 0.0
    %5872 = vmatprep.subr.mxu0 0.0
    %5873 = vmatpush1.msra.mxu0 0.0
    %5874 = vmatprep.subr.mxu0 0.0
    %5875 = vmatpush1.msra.mxu0 0.0
    %5876 = vmatprep.subr.mxu0 0.0
    %5877 = vmatpush1.msra.mxu0 0.0
    %5878 = vmatprep.subr.mxu0 0.0
    %5879 = vmatpush1.msra.mxu0 0.0
    %5880 = vmatprep.subr.mxu0 0.0
    %5881 = vmatpush1.msra.mxu0 0.0
    %5882 = vmatprep.subr.mxu0 0.0
    %5883 = vmatpush1.msra.mxu0 0.0
    %5884 = vmatprep.subr.mxu0 0.0
    %5885 = vmatpush1.msra.mxu0 0.0
    %5886 = vmatprep.subr.mxu0 0.0
    %5887 = vmatpush1.msra.mxu0 0.0
    %5888 = vmatprep.subr.mxu0 0.0
    %5889 = vmatpush1.msra.mxu0 0.0
    %5890 = vmatprep.subr.mxu0 0.0
    %5891 = vmatpush1.msra.mxu0 0.0
    %5892 = vmatprep.subr.mxu0 0.0
    %5893 = vmatpush1.msra.mxu0 0.0
    %5894 = vmatprep.subr.mxu0 0.0
    %5895 = vmatpush1.msra.mxu0 0.0
    %5896 = vmatprep.subr.mxu0 0.0
    %5897 = vmatpush1.msra.mxu0 0.0
    %5898 = vmatprep.subr.mxu0 0.0
    %5899 = vmatpush1.msra.mxu0 0.0
    %5900 = vmatprep.subr.mxu0 0.0
    %5901 = vmatpush1.msra.mxu0 0.0
    %5902 = vmatprep.mubr.f32.mxu0 0.0
    %5903 = vmatmul.mubr.f32.gmra.mrb[0].mxu0 %v5836
    %v5904 = vpop.f32.mrb[0].mxu0
    %v5905 = vadd.f32 0.0, %v5904
    %v5906 = vpop.f32.mrb[0].mxu0
    %5907 = vdwg.mxu0
    %v5908 = vadd.f32 %v5667, %v5905
    %5909 = vrot.lane.b32.xlu0 %v4152, 32
    %v5910 = vpop.permute.xlu0 %5909
    %5911 = vrot.lane.b32.xlu0 %v4154, 32
    %v5912 = vpop.permute.xlu0 %5911
    %v5913 = vsel %vm825, %v5910, 0
    %v5915 = vsel %vm825, %v5912, 0
    %5917 = vmatprep.subr.mxu0 0.0
    %5918 = vmatpush1.xpose.msra.mxu0 %v5915
    %5919 = vmatprep.subr.mxu0 0.0
    %5920 = vmatpush1.xpose.msra.mxu0 0.0
    %5921 = vmatprep.subr.mxu0 0.0
    %5922 = vmatpush1.xpose.msra.mxu0 0.0
    %5923 = vmatprep.subr.mxu0 0.0
    %5924 = vmatpush1.xpose.msra.mxu0 0.0
    %5925 = vmatprep.subr.mxu0 0.0
    %5926 = vmatpush1.xpose.msra.mxu0 0.0
    %5927 = vmatprep.subr.mxu0 0.0
    %5928 = vmatpush1.xpose.msra.mxu0 0.0
    %5929 = vmatprep.subr.mxu0 0.0
    %5930 = vmatpush1.xpose.msra.mxu0 0.0
    %5931 = vmatprep.subr.mxu0 0.0
    %5932 = vmatpush1.xpose.msra.mxu0 0.0
    %5933 = vmatprep.subr.mxu0 0.0
    %5934 = vmatpush1.xpose.msra.mxu0 0.0
    %5935 = vmatprep.subr.mxu0 0.0
    %5936 = vmatpush1.xpose.msra.mxu0 0.0
    %5937 = vmatprep.subr.mxu0 0.0
    %5938 = vmatpush1.xpose.msra.mxu0 0.0
    %5939 = vmatprep.subr.mxu0 0.0
    %5940 = vmatpush1.xpose.msra.mxu0 0.0
    %5941 = vmatprep.subr.mxu0 0.0
    %5942 = vmatpush1.xpose.msra.mxu0 0.0
    %5943 = vmatprep.subr.mxu0 0.0
    %5944 = vmatpush1.xpose.msra.mxu0 0.0
    %5945 = vmatprep.subr.mxu0 0.0
    %5946 = vmatpush1.xpose.msra.mxu0 0.0
    %5947 = vmatprep.subr.mxu0 0.0
    %5948 = vmatpush1.xpose.msra.mxu0 0.0
    %5949 = vmatprep.subr.mxu0 0.0
    %5950 = vmatpush1.xpose.msra.mxu0 0.0
    %5951 = vmatprep.subr.mxu0 0.0
    %5952 = vmatpush1.xpose.msra.mxu0 0.0
    %5953 = vmatprep.subr.mxu0 0.0
    %5954 = vmatpush1.xpose.msra.mxu0 0.0
    %5955 = vmatprep.subr.mxu0 0.0
    %5956 = vmatpush1.xpose.msra.mxu0 0.0
    %5957 = vmatprep.subr.mxu0 0.0
    %5958 = vmatpush1.xpose.msra.mxu0 0.0
    %5959 = vmatprep.subr.mxu0 0.0
    %5960 = vmatpush1.xpose.msra.mxu0 0.0
    %5961 = vmatprep.subr.mxu0 0.0
    %5962 = vmatpush1.xpose.msra.mxu0 0.0
    %5963 = vmatprep.subr.mxu0 0.0
    %5964 = vmatpush1.xpose.msra.mxu0 0.0
    %5965 = vmatprep.subr.mxu0 0.0
    %5966 = vmatpush1.xpose.msra.mxu0 0.0
    %5967 = vmatprep.subr.mxu0 0.0
    %5968 = vmatpush1.xpose.msra.mxu0 0.0
    %5969 = vmatprep.subr.mxu0 0.0
    %5970 = vmatpush1.xpose.msra.mxu0 0.0
    %5971 = vmatprep.subr.mxu0 0.0
    %5972 = vmatpush1.xpose.msra.mxu0 0.0
    %5973 = vmatprep.subr.mxu0 0.0
    %5974 = vmatpush1.xpose.msra.mxu0 0.0
    %5975 = vmatprep.subr.mxu0 0.0
    %5976 = vmatpush1.xpose.msra.mxu0 0.0
    %5977 = vmatprep.subr.mxu0 0.0
    %5978 = vmatpush1.xpose.msra.mxu0 0.0
    %5979 = vmatprep.subr.mxu0 0.0
    %5980 = vmatpush1.xpose.msra.mxu0 0.0
    %5981 = vmatprep.mubr.f32.mxu0 0.0
    %5982 = vmatmul.mubr.f32.gmra.mrb[0].mxu0 %v5913
    %v5983 = vpop.f32.mrb[0].mxu0
    %v5984 = vadd.f32 0.0, %v5983
    %v5985 = vpop.f32.mrb[0].mxu0
    %5986 = vdwg.mxu0
    %v5987 = vsel %vm4323, %v5984, -inf
    %5988 = vmax.xlane.f32.xlu0 %v5987
    %v5989 = vpop.xlane.xlu0 %5988
    %v5990 = vsub.f32 %v5984, %v5989
    %v5991 = vmul.f32 %v5990, 1.442695
    %v5992 = vpow.pop %v5991
    %v5993 = vsel %vm4323, %v5992, 0.0
    %5994 = vadd.xlane.f32.xlu0 %v5993
    %v5995 = vpop.xlane.xlu0 %5994
    %v5996 = vrcp.pop %v5995
    %v5997 = vmul.f32 %v5992, %v5996
    %5998 = vrot.lane.b32.xlu0 %v4228, 32
    %v5999 = vpop.permute.xlu0 %5998
    %v6002 = vsel %vm4323, %v5997, 0
    %6004 = vmatprep.subr.mxu0 0.0
    %6005 = vmatpush1.msra.mxu0 %v5999
    %6006 = vmatprep.subr.mxu0 0.0
    %6007 = vmatpush1.msra.mxu0 0.0
    %6008 = vmatprep.subr.mxu0 0.0
    %6009 = vmatpush1.msra.mxu0 0.0
    %6010 = vmatprep.subr.mxu0 0.0
    %6011 = vmatpush1.msra.mxu0 0.0
    %6012 = vmatprep.subr.mxu0 0.0
    %6013 = vmatpush1.msra.mxu0 0.0
    %6014 = vmatprep.subr.mxu0 0.0
    %6015 = vmatpush1.msra.mxu0 0.0
    %6016 = vmatprep.subr.mxu0 0.0
    %6017 = vmatpush1.msra.mxu0 0.0
    %6018 = vmatprep.subr.mxu0 0.0
    %6019 = vmatpush1.msra.mxu0 0.0
    %6020 = vmatprep.subr.mxu0 0.0
    %6021 = vmatpush1.msra.mxu0 0.0
    %6022 = vmatprep.subr.mxu0 0.0
    %6023 = vmatpush1.msra.mxu0 0.0
    %6024 = vmatprep.subr.mxu0 0.0
    %6025 = vmatpush1.msra.mxu0 0.0
    %6026 = vmatprep.subr.mxu0 0.0
    %6027 = vmatpush1.msra.mxu0 0.0
    %6028 = vmatprep.subr.mxu0 0.0
    %6029 = vmatpush1.msra.mxu0 0.0
    %6030 = vmatprep.subr.mxu0 0.0
    %6031 = vmatpush1.msra.mxu0 0.0
    %6032 = vmatprep.subr.mxu0 0.0
    %6033 = vmatpush1.msra.mxu0 0.0
    %6034 = vmatprep.subr.mxu0 0.0
    %6035 = vmatpush1.msra.mxu0 0.0
    %6036 = vmatprep.subr.mxu0 0.0
    %6037 = vmatpush1.msra.mxu0 0.0
    %6038 = vmatprep.subr.mxu0 0.0
    %6039 = vmatpush1.msra.mxu0 0.0
    %6040 = vmatprep.subr.mxu0 0.0
    %6041 = vmatpush1.msra.mxu0 0.0
    %6042 = vmatprep.subr.mxu0 0.0
    %6043 = vmatpush1.msra.mxu0 0.0
    %6044 = vmatprep.subr.mxu0 0.0
    %6045 = vmatpush1.msra.mxu0 0.0
    %6046 = vmatprep.subr.mxu0 0.0
    %6047 = vmatpush1.msra.mxu0 0.0
    %6048 = vmatprep.subr.mxu0 0.0
    %6049 = vmatpush1.msra.mxu0 0.0
    %6050 = vmatprep.subr.mxu0 0.0
    %6051 = vmatpush1.msra.mxu0 0.0
    %6052 = vmatprep.subr.mxu0 0.0
    %6053 = vmatpush1.msra.mxu0 0.0
    %6054 = vmatprep.subr.mxu0 0.0
    %6055 = vmatpush1.msra.mxu0 0.0
    %6056 = vmatprep.subr.mxu0 0.0
    %6057 = vmatpush1.msra.mxu0 0.0
    %6058 = vmatprep.subr.mxu0 0.0
    %6059 = vmatpush1.msra.mxu0 0.0
    %6060 = vmatprep.subr.mxu0 0.0
    %6061 = vmatpush1.msra.mxu0 0.0
    %6062 = vmatprep.subr.mxu0 0.0
    %6063 = vmatpush1.msra.mxu0 0.0
    %6064 = vmatprep.subr.mxu0 0.0
    %6065 = vmatpush1.msra.mxu0 0.0
    %6066 = vmatprep.subr.mxu0 0.0
    %6067 = vmatpush1.msra.mxu0 0.0
    %6068 = vmatprep.mubr.f32.mxu0 0.0
    %6069 = vmatmul.mubr.f32.gmra.mrb[0].mxu0 %v6002
    %v6070 = vpop.f32.mrb[0].mxu0
    %v6071 = vadd.f32 0.0, %v6070
    %v6072 = vpop.f32.mrb[0].mxu0
    %6073 = vdwg.mxu0
    %v6075 = vsel %vm825, %v6071, 0
    %6077 = vmatprep.subr.mxu0 0.0
    %6078 = vmatpush1.msra.mxu0 %v4243
    %6079 = vmatprep.subr.mxu0 0.0
    %6080 = vmatpush1.msra.mxu0 %v4244
    %6081 = vmatprep.subr.mxu0 0.0
    %6082 = vmatpush1.msra.mxu0 %v4245
    %6083 = vmatprep.subr.mxu0 0.0
    %6084 = vmatpush1.msra.mxu0 %v4246
    %6085 = vmatprep.subr.mxu0 0.0
    %6086 = vmatpush1.msra.mxu0 0.0
    %6087 = vmatprep.subr.mxu0 0.0
    %6088 = vmatpush1.msra.mxu0 0.0
    %6089 = vmatprep.subr.mxu0 0.0
    %6090 = vmatpush1.msra.mxu0 0.0
    %6091 = vmatprep.subr.mxu0 0.0
    %6092 = vmatpush1.msra.mxu0 0.0
    %6093 = vmatprep.subr.mxu0 0.0
    %6094 = vmatpush1.msra.mxu0 0.0
    %6095 = vmatprep.subr.mxu0 0.0
    %6096 = vmatpush1.msra.mxu0 0.0
    %6097 = vmatprep.subr.mxu0 0.0
    %6098 = vmatpush1.msra.mxu0 0.0
    %6099 = vmatprep.subr.mxu0 0.0
    %6100 = vmatpush1.msra.mxu0 0.0
    %6101 = vmatprep.subr.mxu0 0.0
    %6102 = vmatpush1.msra.mxu0 0.0
    %6103 = vmatprep.subr.mxu0 0.0
    %6104 = vmatpush1.msra.mxu0 0.0
    %6105 = vmatprep.subr.mxu0 0.0
    %6106 = vmatpush1.msra.mxu0 0.0
    %6107 = vmatprep.subr.mxu0 0.0
    %6108 = vmatpush1.msra.mxu0 0.0
    %6109 = vmatprep.subr.mxu0 0.0
    %6110 = vmatpush1.msra.mxu0 0.0
    %6111 = vmatprep.subr.mxu0 0.0
    %6112 = vmatpush1.msra.mxu0 0.0
    %6113 = vmatprep.subr.mxu0 0.0
    %6114 = vmatpush1.msra.mxu0 0.0
    %6115 = vmatprep.subr.mxu0 0.0
    %6116 = vmatpush1.msra.mxu0 0.0
    %6117 = vmatprep.subr.mxu0 0.0
    %6118 = vmatpush1.msra.mxu0 0.0
    %6119 = vmatprep.subr.mxu0 0.0
    %6120 = vmatpush1.msra.mxu0 0.0
    %6121 = vmatprep.subr.mxu0 0.0
    %6122 = vmatpush1.msra.mxu0 0.0
    %6123 = vmatprep.subr.mxu0 0.0
    %6124 = vmatpush1.msra.mxu0 0.0
    %6125 = vmatprep.subr.mxu0 0.0
    %6126 = vmatpush1.msra.mxu0 0.0
    %6127 = vmatprep.subr.mxu0 0.0
    %6128 = vmatpush1.msra.mxu0 0.0
    %6129 = vmatprep.subr.mxu0 0.0
    %6130 = vmatpush1.msra.mxu0 0.0
    %6131 = vmatprep.subr.mxu0 0.0
    %6132 = vmatpush1.msra.mxu0 0.0
    %6133 = vmatprep.subr.mxu0 0.0
    %6134 = vmatpush1.msra.mxu0 0.0
    %6135 = vmatprep.subr.mxu0 0.0
    %6136 = vmatpush1.msra.mxu0 0.0
    %6137 = vmatprep.subr.mxu0 0.0
    %6138 = vmatpush1.msra.mxu0 0.0
    %6139 = vmatprep.subr.mxu0 0.0
    %6140 = vmatpush1.msra.mxu0 0.0
    %6141 = vmatprep.mubr.f32.mxu0 0.0
    %6142 = vmatmul.mubr.f32.gmra.mrb[0].mxu0 %v6075
    %v6143 = vpop.f32.mrb[0].mxu0
    %v6144 = vadd.f32 0.0, %v6143
    %v6145 = vpop.f32.mrb[0].mxu0
    %6146 = vdwg.mxu0
    %v6147 = vadd.f32 %v5908, %v6144
    %v6148 = vld [vmem:[#allocation20] sm:$0x1]
    %v6150 = vlaneseq
    %v6151 = vshrl.u32 %v6150, 7
    %v6152 = vsub.s32 0, %v6151
    %v6153 = vrot.slane %v6148, %v6152
    %v6155 = vadd.f32 %v5197, %v6153
    %v6156 = vadd.f32 %v6147, %v6153
    %v6157 = vadd.f32 %v3928, %v6155
    %v6158 = vadd.f32 %v4013, %v6156
    %v6159 = vld [vmem:[#allocation22] sm:$0x1]
    %v6160 = vld [vmem:[#allocation23] sm:$0x1]
    %6161 = vadd.xlane.f32.xlu0 %v6157
    %v6162 = vpop.xlane.xlu0 %6161
    %6163 = vadd.xlane.f32.xlu0 %v6158
    %v6164 = vpop.xlane.xlu0 %6163
    %v6165 = vmul.f32 %v6162, %v3092
    %v6166 = vmul.f32 %v6164, %v3092
    %v6167 = vsub.f32 %v6157, %v6165
    %v6168 = vsub.f32 %v6158, %v6166
    %v6169 = vmul.f32 %v6167, %v6167
    %v6170 = vmul.f32 %v6168, %v6168
    %6171 = vadd.xlane.f32.xlu0 %v6169
    %v6172 = vpop.xlane.xlu0 %6171
    %6173 = vadd.xlane.f32.xlu0 %v6170
    %v6174 = vpop.xlane.xlu0 %6173
    %v6175 = vmul.f32 %v6172, %v3092
    %v6176 = vmul.f32 %v6174, %v3092
    %v6177 = vadd.f32 %v6175, 1e-05
    %v6178 = vadd.f32 %v6176, 1e-05
    %v6179 = vrsqrt.pop %v6177
    %v6180 = vrsqrt.pop %v6178
    %v6181 = vmul.f32 %v6167, %v6179
    %v6182 = vmul.f32 %v6168, %v6180
    %v6184 = vlaneseq
    %v6185 = vshrl.u32 %v6184, 7
    %v6186 = vsub.s32 0, %v6185
    %v6187 = vrot.slane %v6159, %v6186
    %v6189 = vmul.f32 %v6181, %v6187
    %v6190 = vmul.f32 %v6182, %v6187
    %v6192 = vlaneseq
    %v6193 = vshrl.u32 %v6192, 7
    %v6194 = vsub.s32 0, %v6193
    %v6195 = vrot.slane %v6160, %v6194
    %v6197 = vadd.f32 %v6189, %v6195
    %v6198 = vadd.f32 %v6190, %v6195
    %v6199 = vld [vmem:[#allocation25] sm:$0xff]
    %v6200 = vld [vmem:[#allocation25 + $0x8] sm:$0xff]
    %v6201 = vld [vmem:[#allocation25 + $0x10] sm:$0xff]
    %v6202 = vld [vmem:[#allocation25 + $0x18] sm:$0xff]
    %v6203 = vld [vmem:[#allocation25 + $0x20] sm:$0xff]
    %v6204 = vld [vmem:[#allocation25 + $0x28] sm:$0xff]
    %v6205 = vld [vmem:[#allocation25 + $0x30] sm:$0xff]
    %v6206 = vld [vmem:[#allocation25 + $0x38] sm:$0xff]
    %v6207 = vld [vmem:[#allocation25 + $0x40] sm:$0xff]
    %v6208 = vld [vmem:[#allocation25 + $0x48] sm:$0xff]
    %v6209 = vld [vmem:[#allocation25 + $0x50] sm:$0xff]
    %v6210 = vld [vmem:[#allocation25 + $0x58] sm:$0xff]
    %v6211 = vld [vmem:[#allocation25 + $0x60] sm:$0xff]
    %v6212 = vld [vmem:[#allocation25 + $0x68] sm:$0xff]
    %v6213 = vld [vmem:[#allocation25 + $0x70] sm:$0xff]
    %v6214 = vld [vmem:[#allocation25 + $0x78] sm:$0xff]
    %v6215 = vld [vmem:[#allocation25 + $0x80] sm:$0xff]
    %v6216 = vld [vmem:[#allocation25 + $0x88] sm:$0xff]
    %v6217 = vld [vmem:[#allocation25 + $0x90] sm:$0xff]
    %v6218 = vld [vmem:[#allocation25 + $0x98] sm:$0xff]
    %v6219 = vld [vmem:[#allocation25 + $0xa0] sm:$0xff]
    %v6220 = vld [vmem:[#allocation25 + $0xa8] sm:$0xff]
    %v6221 = vld [vmem:[#allocation25 + $0xb0] sm:$0xff]
    %v6222 = vld [vmem:[#allocation25 + $0xb8] sm:$0xff]
    %v6223 = vld [vmem:[#allocation25 + $0xc0] sm:$0xff]
    %v6224 = vld [vmem:[#allocation25 + $0xc8] sm:$0xff]
    %v6225 = vld [vmem:[#allocation25 + $0xd0] sm:$0xff]
    %v6226 = vld [vmem:[#allocation25 + $0xd8] sm:$0xff]
    %v6227 = vld [vmem:[#allocation25 + $0xe0] sm:$0xff]
    %v6228 = vld [vmem:[#allocation25 + $0xe8] sm:$0xff]
    %v6229 = vld [vmem:[#allocation25 + $0xf0] sm:$0xff]
    %v6230 = vld [vmem:[#allocation25 + $0xf8] sm:$0xff]
    %v6231 = vld [vmem:[#allocation26] sm:$0x3]
    %v6233 = vlaneseq
    %v6234 = vshrl.u32 %v6233, 7
    %v6235 = vsub.s32 0, %v6234
    %v6236 = vrot.slane %v6231, %v6235
    %v6237 = vlaneseq
    %v6238 = vshrl.u32 %v6237, 7
    %v6239 = vsub.s32 1, %v6238
    %v6240 = vrot.slane %v6231, %v6239
    %6243 = vmatprep.subr.mxu0 %v6200
    %6244 = vmatpush1.msra.mxu0 %v6199
    %6245 = vmatprep.subr.mxu0 %v6202
    %6246 = vmatpush1.msra.mxu0 %v6201
    %6247 = vmatprep.subr.mxu0 %v6204
    %6248 = vmatpush1.msra.mxu0 %v6203
    %6249 = vmatprep.subr.mxu0 %v6206
    %6250 = vmatpush1.msra.mxu0 %v6205
    %6251 = vmatprep.subr.mxu0 %v6208
    %6252 = vmatpush1.msra.mxu0 %v6207
    %6253 = vmatprep.subr.mxu0 %v6210
    %6254 = vmatpush1.msra.mxu0 %v6209
    %6255 = vmatprep.subr.mxu0 %v6212
    %6256 = vmatpush1.msra.mxu0 %v6211
    %6257 = vmatprep.subr.mxu0 %v6214
    %6258 = vmatpush1.msra.mxu0 %v6213
    %6259 = vmatprep.subr.mxu0 %v6216
    %6260 = vmatpush1.msra.mxu0 %v6215
    %6261 = vmatprep.subr.mxu0 %v6218
    %6262 = vmatpush1.msra.mxu0 %v6217
    %6263 = vmatprep.subr.mxu0 %v6220
    %6264 = vmatpush1.msra.mxu0 %v6219
    %6265 = vmatprep.subr.mxu0 %v6222
    %6266 = vmatpush1.msra.mxu0 %v6221
    %6267 = vmatprep.subr.mxu0 %v6224
    %6268 = vmatpush1.msra.mxu0 %v6223
    %6269 = vmatprep.subr.mxu0 %v6226
    %6270 = vmatpush1.msra.mxu0 %v6225
    %6271 = vmatprep.subr.mxu0 %v6228
    %6272 = vmatpush1.msra.mxu0 %v6227
    %6273 = vmatprep.subr.mxu0 %v6230
    %6274 = vmatpush1.msra.mxu0 %v6229
    %6275 = vmatprep.subr.mxu0 0.0
    %6276 = vmatpush1.msra.mxu0 0.0
    %6277 = vmatprep.subr.mxu0 0.0
    %6278 = vmatpush1.msra.mxu0 0.0
    %6279 = vmatprep.subr.mxu0 0.0
    %6280 = vmatpush1.msra.mxu0 0.0
    %6281 = vmatprep.subr.mxu0 0.0
    %6282 = vmatpush1.msra.mxu0 0.0
    %6283 = vmatprep.subr.mxu0 0.0
    %6284 = vmatpush1.msra.mxu0 0.0
    %6285 = vmatprep.subr.mxu0 0.0
    %6286 = vmatpush1.msra.mxu0 0.0
    %6287 = vmatprep.subr.mxu0 0.0
    %6288 = vmatpush1.msra.mxu0 0.0
    %6289 = vmatprep.subr.mxu0 0.0
    %6290 = vmatpush1.msra.mxu0 0.0
    %6291 = vmatprep.subr.mxu0 0.0
    %6292 = vmatpush1.msra.mxu0 0.0
    %6293 = vmatprep.subr.mxu0 0.0
    %6294 = vmatpush1.msra.mxu0 0.0
    %6295 = vmatprep.subr.mxu0 0.0
    %6296 = vmatpush1.msra.mxu0 0.0
    %6297 = vmatprep.subr.mxu0 0.0
    %6298 = vmatpush1.msra.mxu0 0.0
    %6299 = vmatprep.subr.mxu0 0.0
    %6300 = vmatpush1.msra.mxu0 0.0
    %6301 = vmatprep.subr.mxu0 0.0
    %6302 = vmatpush1.msra.mxu0 0.0
    %6303 = vmatprep.subr.mxu0 0.0
    %6304 = vmatpush1.msra.mxu0 0.0
    %6305 = vmatprep.subr.mxu0 0.0
    %6306 = vmatpush1.msra.mxu0 0.0
    %6307 = vmatprep.mubr.f32.mxu0 0.0
    %6308 = vmatmul.mubr.f32.gmra.mrb[0].mxu0 %v6197
    %v6309 = vpop.f32.mrb[0].mxu0
    %v6310 = vadd.f32 %v6236, %v6309
    %v6311 = vpop.f32.mrb[0].mxu0
    %v6312 = vadd.f32 %v6240, %v6311
    %6313 = vmatprep.mubr.f32.mxu0 0.0
    %6314 = vmatmul.mubr.f32.gmra.mrb[0].mxu0 %v6198
    %v6315 = vpop.f32.mrb[0].mxu0
    %v6316 = vadd.f32 %v6236, %v6315
    %v6317 = vpop.f32.mrb[0].mxu0
    %v6318 = vadd.f32 %v6240, %v6317
    %6319 = vdwg.mxu0
    %v6320 = vmul.f32 %v6310, 0.5
    %v6321 = vmul.f32 %v6312, 0.5
    %v6322 = vmul.f32 %v6316, 0.5
    %v6323 = vmul.f32 %v6318, 0.5
    %v6324 = vmul.f32 %v6310, 0.70710677
    %v6325 = vmul.f32 %v6312, 0.70710677
    %v6326 = vmul.f32 %v6316, 0.70710677
    %v6327 = vmul.f32 %v6318, 0.70710677
    %v6328 = verf.f32.pop %v6324
    %v6329 = verf.f32.pop %v6325
    %v6330 = verf.f32.pop %v6326
    %v6331 = verf.f32.pop %v6327
    %v6332 = vadd.f32 %v6328, 1.0
    %v6333 = vadd.f32 %v6329, 1.0
    %v6334 = vadd.f32 %v6330, 1.0
    %v6335 = vadd.f32 %v6331, 1.0
    %v6336 = vmul.f32 %v6320, %v6332
    %v6337 = vmul.f32 %v6321, %v6333
    %v6338 = vmul.f32 %v6322, %v6334
    %v6339 = vmul.f32 %v6323, %v6335
    %v6340 = vld [vmem:[#allocation28] sm:$0xff]
    %v6341 = vld [vmem:[#allocation28 + $0x8] sm:$0xff]
    %v6342 = vld [vmem:[#allocation28 + $0x10] sm:$0xff]
    %v6343 = vld [vmem:[#allocation28 + $0x18] sm:$0xff]
    %v6344 = vld [vmem:[#allocation28 + $0x20] sm:$0xff]
    %v6345 = vld [vmem:[#allocation28 + $0x28] sm:$0xff]
    %v6346 = vld [vmem:[#allocation28 + $0x30] sm:$0xff]
    %v6347 = vld [vmem:[#allocation28 + $0x38] sm:$0xff]
    %v6348 = vld [vmem:[#allocation28 + $0x40] sm:$0xff]
    %v6349 = vld [vmem:[#allocation28 + $0x48] sm:$0xff]
    %v6350 = vld [vmem:[#allocation28 + $0x50] sm:$0xff]
    %v6351 = vld [vmem:[#allocation28 + $0x58] sm:$0xff]
    %v6352 = vld [vmem:[#allocation28 + $0x60] sm:$0xff]
    %v6353 = vld [vmem:[#allocation28 + $0x68] sm:$0xff]
    %v6354 = vld [vmem:[#allocation28 + $0x70] sm:$0xff]
    %v6355 = vld [vmem:[#allocation28 + $0x78] sm:$0xff]
    %v6356 = vld [vmem:[#allocation28 + $0x80] sm:$0xff]
    %v6357 = vld [vmem:[#allocation28 + $0x88] sm:$0xff]
    %v6358 = vld [vmem:[#allocation28 + $0x90] sm:$0xff]
    %v6359 = vld [vmem:[#allocation28 + $0x98] sm:$0xff]
    %v6360 = vld [vmem:[#allocation28 + $0xa0] sm:$0xff]
    %v6361 = vld [vmem:[#allocation28 + $0xa8] sm:$0xff]
    %v6362 = vld [vmem:[#allocation28 + $0xb0] sm:$0xff]
    %v6363 = vld [vmem:[#allocation28 + $0xb8] sm:$0xff]
    %v6364 = vld [vmem:[#allocation28 + $0xc0] sm:$0xff]
    %v6365 = vld [vmem:[#allocation28 + $0xc8] sm:$0xff]
    %v6366 = vld [vmem:[#allocation28 + $0xd0] sm:$0xff]
    %v6367 = vld [vmem:[#allocation28 + $0xd8] sm:$0xff]
    %v6368 = vld [vmem:[#allocation28 + $0xe0] sm:$0xff]
    %v6369 = vld [vmem:[#allocation28 + $0xe8] sm:$0xff]
    %v6370 = vld [vmem:[#allocation28 + $0xf0] sm:$0xff]
    %v6371 = vld [vmem:[#allocation28 + $0xf8] sm:$0xff]
    %6372 = vmatprep.subr.mxu0 0.0
    %6373 = vmatpush1.msra.mxu0 %v6340
    %6374 = vmatprep.subr.mxu0 0.0
    %6375 = vmatpush1.msra.mxu0 %v6341
    %6376 = vmatprep.subr.mxu0 0.0
    %6377 = vmatpush1.msra.mxu0 %v6342
    %6378 = vmatprep.subr.mxu0 0.0
    %6379 = vmatpush1.msra.mxu0 %v6343
    %6380 = vmatprep.subr.mxu0 0.0
    %6381 = vmatpush1.msra.mxu0 %v6344
    %6382 = vmatprep.subr.mxu0 0.0
    %6383 = vmatpush1.msra.mxu0 %v6345
    %6384 = vmatprep.subr.mxu0 0.0
    %6385 = vmatpush1.msra.mxu0 %v6346
    %6386 = vmatprep.subr.mxu0 0.0
    %6387 = vmatpush1.msra.mxu0 %v6347
    %6388 = vmatprep.subr.mxu0 0.0
    %6389 = vmatpush1.msra.mxu0 %v6348
    %6390 = vmatprep.subr.mxu0 0.0
    %6391 = vmatpush1.msra.mxu0 %v6349
    %6392 = vmatprep.subr.mxu0 0.0
    %6393 = vmatpush1.msra.mxu0 %v6350
    %6394 = vmatprep.subr.mxu0 0.0
    %6395 = vmatpush1.msra.mxu0 %v6351
    %6396 = vmatprep.subr.mxu0 0.0
    %6397 = vmatpush1.msra.mxu0 %v6352
    %6398 = vmatprep.subr.mxu0 0.0
    %6399 = vmatpush1.msra.mxu0 %v6353
    %6400 = vmatprep.subr.mxu0 0.0
    %6401 = vmatpush1.msra.mxu0 %v6354
    %6402 = vmatprep.subr.mxu0 0.0
    %6403 = vmatpush1.msra.mxu0 %v6355
    %6404 = vmatprep.subr.mxu0 0.0
    %6405 = vmatpush1.msra.mxu0 %v6356
    %6406 = vmatprep.subr.mxu0 0.0
    %6407 = vmatpush1.msra.mxu0 %v6357
    %6408 = vmatprep.subr.mxu0 0.0
    %6409 = vmatpush1.msra.mxu0 %v6358
    %6410 = vmatprep.subr.mxu0 0.0
    %6411 = vmatpush1.msra.mxu0 %v6359
    %6412 = vmatprep.subr.mxu0 0.0
    %6413 = vmatpush1.msra.mxu0 %v6360
    %6414 = vmatprep.subr.mxu0 0.0
    %6415 = vmatpush1.msra.mxu0 %v6361
    %6416 = vmatprep.subr.mxu0 0.0
    %6417 = vmatpush1.msra.mxu0 %v6362
    %6418 = vmatprep.subr.mxu0 0.0
    %6419 = vmatpush1.msra.mxu0 %v6363
    %6420 = vmatprep.subr.mxu0 0.0
    %6421 = vmatpush1.msra.mxu0 %v6364
    %6422 = vmatprep.subr.mxu0 0.0
    %6423 = vmatpush1.msra.mxu0 %v6365
    %6424 = vmatprep.subr.mxu0 0.0
    %6425 = vmatpush1.msra.mxu0 %v6366
    %6426 = vmatprep.subr.mxu0 0.0
    %6427 = vmatpush1.msra.mxu0 %v6367
    %6428 = vmatprep.subr.mxu0 0.0
    %6429 = vmatpush1.msra.mxu0 %v6368
    %6430 = vmatprep.subr.mxu0 0.0
    %6431 = vmatpush1.msra.mxu0 %v6369
    %6432 = vmatprep.subr.mxu0 0.0
    %6433 = vmatpush1.msra.mxu0 %v6370
    %6434 = vmatprep.subr.mxu0 0.0
    %6435 = vmatpush1.msra.mxu0 %v6371
    %6436 = vmatprep.mubr.f32.mxu0 %v6337
    %6437 = vmatmul.mubr.f32.gmra.mrb[0].mxu0 %v6336
    %v6438 = vpop.f32.mrb[0].mxu0
    %v6439 = vadd.f32 0.0, %v6438
    %v6440 = vpop.f32.mrb[0].mxu0
    %6441 = vmatprep.mubr.f32.mxu0 %v6339
    %6442 = vmatmul.mubr.f32.gmra.mrb[0].mxu0 %v6338
    %v6443 = vpop.f32.mrb[0].mxu0
    %v6444 = vadd.f32 0.0, %v6443
    %v6445 = vpop.f32.mrb[0].mxu0
    %6446 = vdwg.mxu0
    %v6447 = vadd.f32 %v6197, %v6439
    %v6448 = vadd.f32 %v6198, %v6444
    %v6449 = vld [vmem:[#allocation29] sm:$0x1]
    %v6451 = vlaneseq
    %v6452 = vshrl.u32 %v6451, 7
    %v6453 = vsub.s32 0, %v6452
    %v6454 = vrot.slane %v6449, %v6453
    %v6456 = vadd.f32 %v6447, %v6454
    %v6457 = vadd.f32 %v6448, %v6454
    %v6458 = vld [vmem:[#allocation31] sm:$0x1]
    %v6459 = vld [vmem:[#allocation32] sm:$0x1]
    %6460 = vadd.xlane.f32.xlu0 %v6456
    %v6461 = vpop.xlane.xlu0 %6460
    %6462 = vadd.xlane.f32.xlu0 %v6457
    %v6463 = vpop.xlane.xlu0 %6462
    %v6464 = vmul.f32 %v6461, %v3092
    %v6465 = vmul.f32 %v6463, %v3092
    %v6466 = vsub.f32 %v6456, %v6464
    %v6467 = vsub.f32 %v6457, %v6465
    %v6468 = vmul.f32 %v6466, %v6466
    %v6469 = vmul.f32 %v6467, %v6467
    %6470 = vadd.xlane.f32.xlu0 %v6468
    %v6471 = vpop.xlane.xlu0 %6470
    %6472 = vadd.xlane.f32.xlu0 %v6469
    %v6473 = vpop.xlane.xlu0 %6472
    %v6474 = vmul.f32 %v6471, %v3092
    %v6475 = vmul.f32 %v6473, %v3092
    %v6476 = vadd.f32 %v6474, 1e-05
    %v6477 = vadd.f32 %v6475, 1e-05
    %v6478 = vrsqrt.pop %v6476
    %v6479 = vrsqrt.pop %v6477
    %v6480 = vmul.f32 %v6466, %v6478
    %v6481 = vmul.f32 %v6467, %v6479
    %v6483 = vlaneseq
    %v6484 = vshrl.u32 %v6483, 7
    %v6485 = vsub.s32 0, %v6484
    %v6486 = vrot.slane %v6458, %v6485
    %v6488 = vmul.f32 %v6480, %v6486
    %v6489 = vmul.f32 %v6481, %v6486
    %v6491 = vlaneseq
    %v6492 = vshrl.u32 %v6491, 7
    %v6493 = vsub.s32 0, %v6492
    %v6494 = vrot.slane %v6459, %v6493
    %v6496 = vadd.f32 %v6488, %v6494
    %v6497 = vadd.f32 %v6489, %v6494
    %6498 = vst [vmem:[#allocation2 + $0x1] sm:$0xff] %v6496
    %6499 = vst [vmem:[#allocation2] sm:$0x1] %v6496
    %6500 = vst [vmem:[#allocation2 + $0x2] sm:$0x80] %v6496
    %6501 = vst [vmem:[#allocation2 + $0xb] sm:$0xff] %v6497
    %6502 = vst [vmem:[#allocation2 + $0xa] sm:$0x1] %v6497
    %6503 = vst [vmem:[#allocation2 + $0xc] sm:$0x80] %v6497
    %v6504 = vld [vmem:[#allocation2] sm:$0xff]
    %v6505 = vld [vmem:[#allocation2 + $0x8] sm:$0xff]
    %v6506 = vld [vmem:[#allocation2 + $0x10] sm:$0xf]
    %v6507 = vld [vmem:[#allocation34] sm:$0xff]
    %v6508 = vld [vmem:[#allocation34 + $0x8] sm:$0xff]
    %v6509 = vld [vmem:[#allocation34 + $0x10] sm:$0xff]
    %v6510 = vld [vmem:[#allocation34 + $0x18] sm:$0xff]
    %v6511 = vld [vmem:[#allocation34 + $0x20] sm:$0xff]
    %v6512 = vld [vmem:[#allocation34 + $0x28] sm:$0xff]
    %v6513 = vld [vmem:[#allocation34 + $0x30] sm:$0xff]
    %v6514 = vld [vmem:[#allocation34 + $0x38] sm:$0xff]
    %v6515 = vld [vmem:[#allocation34 + $0x40] sm:$0xff]
    %v6516 = vld [vmem:[#allocation34 + $0x48] sm:$0xff]
    %v6517 = vld [vmem:[#allocation34 + $0x50] sm:$0xff]
    %v6518 = vld [vmem:[#allocation34 + $0x58] sm:$0xff]
    %v6519 = vld [vmem:[#allocation34 + $0x60] sm:$0xff]
    %v6520 = vld [vmem:[#allocation34 + $0x68] sm:$0xff]
    %v6521 = vld [vmem:[#allocation34 + $0x70] sm:$0xff]
    %v6522 = vld [vmem:[#allocation34 + $0x78] sm:$0xff]
    %6523 = vmatprep.subr.mxu0 0.0
    %6524 = vmatpush1.msra.mxu0 %v6507
    %6525 = vmatprep.subr.mxu0 0.0
    %6526 = vmatpush1.msra.mxu0 %v6508
    %6527 = vmatprep.subr.mxu0 0.0
    %6528 = vmatpush1.msra.mxu0 %v6509
    %6529 = vmatprep.subr.mxu0 0.0
    %6530 = vmatpush1.msra.mxu0 %v6510
    %6531 = vmatprep.subr.mxu0 0.0
    %6532 = vmatpush1.msra.mxu0 %v6511
    %6533 = vmatprep.subr.mxu0 0.0
    %6534 = vmatpush1.msra.mxu0 %v6512
    %6535 = vmatprep.subr.mxu0 0.0
    %6536 = vmatpush1.msra.mxu0 %v6513
    %6537 = vmatprep.subr.mxu0 0.0
    %6538 = vmatpush1.msra.mxu0 %v6514
    %6539 = vmatprep.subr.mxu0 0.0
    %6540 = vmatpush1.msra.mxu0 %v6515
    %6541 = vmatprep.subr.mxu0 0.0
    %6542 = vmatpush1.msra.mxu0 %v6516
    %6543 = vmatprep.subr.mxu0 0.0
    %6544 = vmatpush1.msra.mxu0 %v6517
    %6545 = vmatprep.subr.mxu0 0.0
    %6546 = vmatpush1.msra.mxu0 %v6518
    %6547 = vmatprep.subr.mxu0 0.0
    %6548 = vmatpush1.msra.mxu0 %v6519
    %6549 = vmatprep.subr.mxu0 0.0
    %6550 = vmatpush1.msra.mxu0 %v6520
    %6551 = vmatprep.subr.mxu0 0.0
    %6552 = vmatpush1.msra.mxu0 %v6521
    %6553 = vmatprep.subr.mxu0 0.0
    %6554 = vmatpush1.msra.mxu0 %v6522
    %6555 = vmatprep.subr.mxu0 0.0
    %6556 = vmatpush1.msra.mxu0 0.0
    %6557 = vmatprep.subr.mxu0 0.0
    %6558 = vmatpush1.msra.mxu0 0.0
    %6559 = vmatprep.subr.mxu0 0.0
    %6560 = vmatpush1.msra.mxu0 0.0
    %6561 = vmatprep.subr.mxu0 0.0
    %6562 = vmatpush1.msra.mxu0 0.0
    %6563 = vmatprep.subr.mxu0 0.0
    %6564 = vmatpush1.msra.mxu0 0.0
    %6565 = vmatprep.subr.mxu0 0.0
    %6566 = vmatpush1.msra.mxu0 0.0
    %6567 = vmatprep.subr.mxu0 0.0
    %6568 = vmatpush1.msra.mxu0 0.0
    %6569 = vmatprep.subr.mxu0 0.0
    %6570 = vmatpush1.msra.mxu0 0.0
    %6571 = vmatprep.subr.mxu0 0.0
    %6572 = vmatpush1.msra.mxu0 0.0
    %6573 = vmatprep.subr.mxu0 0.0
    %6574 = vmatpush1.msra.mxu0 0.0
    %6575 = vmatprep.subr.mxu0 0.0
    %6576 = vmatpush1.msra.mxu0 0.0
    %6577 = vmatprep.subr.mxu0 0.0
    %6578 = vmatpush1.msra.mxu0 0.0
    %6579 = vmatprep.subr.mxu0 0.0
    %6580 = vmatpush1.msra.mxu0 0.0
    %6581 = vmatprep.subr.mxu0 0.0
    %6582 = vmatpush1.msra.mxu0 0.0
    %6583 = vmatprep.subr.mxu0 0.0
    %6584 = vmatpush1.msra.mxu0 0.0
    %6585 = vmatprep.subr.mxu0 0.0
    %6586 = vmatpush1.msra.mxu0 0.0
    %6587 = vmatprep.mubr.f32.mxu0 0.0
    %6588 = vmatmul.mubr.f32.gmra.mrb[0].mxu0 %v6504
    %v6589 = vpop.f32.mrb[0].mxu0
    %v6590 = vadd.f32 0.0, %v6589
    %v6591 = vpop.f32.mrb[0].mxu0
    %6592 = vmatprep.mubr.f32.mxu0 0.0
    %6593 = vmatmul.mubr.f32.gmra.mrb[0].mxu0 %v6505
    %v6594 = vpop.f32.mrb[0].mxu0
    %v6595 = vadd.f32 0.0, %v6594
    %v6596 = vpop.f32.mrb[0].mxu0
    %6597 = vmatprep.mubr.f32.mxu0 0.0
    %6598 = vmatmul.mubr.f32.gmra.mrb[0].mxu0 %v6506
    %v6599 = vpop.f32.mrb[0].mxu0
    %v6600 = vadd.f32 0.0, %v6599
    %v6601 = vpop.f32.mrb[0].mxu0
    %6602 = vdwg.mxu0
    %s6603 = scalar_lea.vmem [#allocation34], 128
    %v6604 = vld [vmem:[%s6603] sm:$0xff]
    %v6605 = vld [vmem:[%s6603 + $0x8] sm:$0xff]
    %v6606 = vld [vmem:[%s6603 + $0x10] sm:$0xff]
    %v6607 = vld [vmem:[%s6603 + $0x18] sm:$0xff]
    %v6608 = vld [vmem:[%s6603 + $0x20] sm:$0xff]
    %v6609 = vld [vmem:[%s6603 + $0x28] sm:$0xff]
    %v6610 = vld [vmem:[%s6603 + $0x30] sm:$0xff]
    %v6611 = vld [vmem:[%s6603 + $0x38] sm:$0xff]
    %v6612 = vld [vmem:[%s6603 + $0x40] sm:$0xff]
    %v6613 = vld [vmem:[%s6603 + $0x48] sm:$0xff]
    %v6614 = vld [vmem:[%s6603 + $0x50] sm:$0xff]
    %v6615 = vld [vmem:[%s6603 + $0x58] sm:$0xff]
    %v6616 = vld [vmem:[%s6603 + $0x60] sm:$0xff]
    %v6617 = vld [vmem:[%s6603 + $0x68] sm:$0xff]
    %v6618 = vld [vmem:[%s6603 + $0x70] sm:$0xff]
    %v6619 = vld [vmem:[%s6603 + $0x78] sm:$0xff]
    %6620 = vmatprep.subr.mxu0 0.0
    %6621 = vmatpush1.msra.mxu0 %v6604
    %6622 = vmatprep.subr.mxu0 0.0
    %6623 = vmatpush1.msra.mxu0 %v6605
    %6624 = vmatprep.subr.mxu0 0.0
    %6625 = vmatpush1.msra.mxu0 %v6606
    %6626 = vmatprep.subr.mxu0 0.0
    %6627 = vmatpush1.msra.mxu0 %v6607
    %6628 = vmatprep.subr.mxu0 0.0
    %6629 = vmatpush1.msra.mxu0 %v6608
    %6630 = vmatprep.subr.mxu0 0.0
    %6631 = vmatpush1.msra.mxu0 %v6609
    %6632 = vmatprep.subr.mxu0 0.0
    %6633 = vmatpush1.msra.mxu0 %v6610
    %6634 = vmatprep.subr.mxu0 0.0
    %6635 = vmatpush1.msra.mxu0 %v6611
    %6636 = vmatprep.subr.mxu0 0.0
    %6637 = vmatpush1.msra.mxu0 %v6612
    %6638 = vmatprep.subr.mxu0 0.0
    %6639 = vmatpush1.msra.mxu0 %v6613
    %6640 = vmatprep.subr.mxu0 0.0
    %6641 = vmatpush1.msra.mxu0 %v6614
    %6642 = vmatprep.subr.mxu0 0.0
    %6643 = vmatpush1.msra.mxu0 %v6615
    %6644 = vmatprep.subr.mxu0 0.0
    %6645 = vmatpush1.msra.mxu0 %v6616
    %6646 = vmatprep.subr.mxu0 0.0
    %6647 = vmatpush1.msra.mxu0 %v6617
    %6648 = vmatprep.subr.mxu0 0.0
    %6649 = vmatpush1.msra.mxu0 %v6618
    %6650 = vmatprep.subr.mxu0 0.0
    %6651 = vmatpush1.msra.mxu0 %v6619
    %6652 = vmatprep.subr.mxu0 0.0
    %6653 = vmatpush1.msra.mxu0 0.0
    %6654 = vmatprep.subr.mxu0 0.0
    %6655 = vmatpush1.msra.mxu0 0.0
    %6656 = vmatprep.subr.mxu0 0.0
    %6657 = vmatpush1.msra.mxu0 0.0
    %6658 = vmatprep.subr.mxu0 0.0
    %6659 = vmatpush1.msra.mxu0 0.0
    %6660 = vmatprep.subr.mxu0 0.0
    %6661 = vmatpush1.msra.mxu0 0.0
    %6662 = vmatprep.subr.mxu0 0.0
    %6663 = vmatpush1.msra.mxu0 0.0
    %6664 = vmatprep.subr.mxu0 0.0
    %6665 = vmatpush1.msra.mxu0 0.0
    %6666 = vmatprep.subr.mxu0 0.0
    %6667 = vmatpush1.msra.mxu0 0.0
    %6668 = vmatprep.subr.mxu0 0.0
    %6669 = vmatpush1.msra.mxu0 0.0
    %6670 = vmatprep.subr.mxu0 0.0
    %6671 = vmatpush1.msra.mxu0 0.0
    %6672 = vmatprep.subr.mxu0 0.0
    %6673 = vmatpush1.msra.mxu0 0.0
    %6674 = vmatprep.subr.mxu0 0.0
    %6675 = vmatpush1.msra.mxu0 0.0
    %6676 = vmatprep.subr.mxu0 0.0
    %6677 = vmatpush1.msra.mxu0 0.0
    %6678 = vmatprep.subr.mxu0 0.0
    %6679 = vmatpush1.msra.mxu0 0.0
    %6680 = vmatprep.subr.mxu0 0.0
    %6681 = vmatpush1.msra.mxu0 0.0
    %6682 = vmatprep.subr.mxu0 0.0
    %6683 = vmatpush1.msra.mxu0 0.0
    %6684 = vmatprep.mubr.f32.mxu0 0.0
    %6685 = vmatmul.mubr.f32.gmra.mrb[0].mxu0 %v6504
    %v6686 = vpop.f32.mrb[0].mxu0
    %v6687 = vadd.f32 0.0, %v6686
    %v6688 = vpop.f32.mrb[0].mxu0
    %6689 = vmatprep.mubr.f32.mxu0 0.0
    %6690 = vmatmul.mubr.f32.gmra.mrb[0].mxu0 %v6505
    %v6691 = vpop.f32.mrb[0].mxu0
    %v6692 = vadd.f32 0.0, %v6691
    %v6693 = vpop.f32.mrb[0].mxu0
    %6694 = vmatprep.mubr.f32.mxu0 0.0
    %6695 = vmatmul.mubr.f32.gmra.mrb[0].mxu0 %v6506
    %v6696 = vpop.f32.mrb[0].mxu0
    %v6697 = vadd.f32 0.0, %v6696
    %v6698 = vpop.f32.mrb[0].mxu0
    %6699 = vdwg.mxu0
    %s6700 = scalar_lea.vmem [#allocation34], 256
    %v6701 = vld [vmem:[%s6700] sm:$0xff]
    %v6702 = vld [vmem:[%s6700 + $0x8] sm:$0xff]
    %v6703 = vld [vmem:[%s6700 + $0x10] sm:$0xff]
    %v6704 = vld [vmem:[%s6700 + $0x18] sm:$0xff]
    %v6705 = vld [vmem:[%s6700 + $0x20] sm:$0xff]
    %v6706 = vld [vmem:[%s6700 + $0x28] sm:$0xff]
    %v6707 = vld [vmem:[%s6700 + $0x30] sm:$0xff]
    %v6708 = vld [vmem:[%s6700 + $0x38] sm:$0xff]
    %v6709 = vld [vmem:[%s6700 + $0x40] sm:$0xff]
    %v6710 = vld [vmem:[%s6700 + $0x48] sm:$0xff]
    %v6711 = vld [vmem:[%s6700 + $0x50] sm:$0xff]
    %v6712 = vld [vmem:[%s6700 + $0x58] sm:$0xff]
    %v6713 = vld [vmem:[%s6700 + $0x60] sm:$0xff]
    %v6714 = vld [vmem:[%s6700 + $0x68] sm:$0xff]
    %v6715 = vld [vmem:[%s6700 + $0x70] sm:$0xff]
    %v6716 = vld [vmem:[%s6700 + $0x78] sm:$0xff]
    %6717 = vmatprep.subr.mxu0 0.0
    %6718 = vmatpush1.msra.mxu0 %v6701
    %6719 = vmatprep.subr.mxu0 0.0
    %6720 = vmatpush1.msra.mxu0 %v6702
    %6721 = vmatprep.subr.mxu0 0.0
    %6722 = vmatpush1.msra.mxu0 %v6703
    %6723 = vmatprep.subr.mxu0 0.0
    %6724 = vmatpush1.msra.mxu0 %v6704
    %6725 = vmatprep.subr.mxu0 0.0
    %6726 = vmatpush1.msra.mxu0 %v6705
    %6727 = vmatprep.subr.mxu0 0.0
    %6728 = vmatpush1.msra.mxu0 %v6706
    %6729 = vmatprep.subr.mxu0 0.0
    %6730 = vmatpush1.msra.mxu0 %v6707
    %6731 = vmatprep.subr.mxu0 0.0
    %6732 = vmatpush1.msra.mxu0 %v6708
    %6733 = vmatprep.subr.mxu0 0.0
    %6734 = vmatpush1.msra.mxu0 %v6709
    %6735 = vmatprep.subr.mxu0 0.0
    %6736 = vmatpush1.msra.mxu0 %v6710
    %6737 = vmatprep.subr.mxu0 0.0
    %6738 = vmatpush1.msra.mxu0 %v6711
    %6739 = vmatprep.subr.mxu0 0.0
    %6740 = vmatpush1.msra.mxu0 %v6712
    %6741 = vmatprep.subr.mxu0 0.0
    %6742 = vmatpush1.msra.mxu0 %v6713
    %6743 = vmatprep.subr.mxu0 0.0
    %6744 = vmatpush1.msra.mxu0 %v6714
    %6745 = vmatprep.subr.mxu0 0.0
    %6746 = vmatpush1.msra.mxu0 %v6715
    %6747 = vmatprep.subr.mxu0 0.0
    %6748 = vmatpush1.msra.mxu0 %v6716
    %6749 = vmatprep.subr.mxu0 0.0
    %6750 = vmatpush1.msra.mxu0 0.0
    %6751 = vmatprep.subr.mxu0 0.0
    %6752 = vmatpush1.msra.mxu0 0.0
    %6753 = vmatprep.subr.mxu0 0.0
    %6754 = vmatpush1.msra.mxu0 0.0
    %6755 = vmatprep.subr.mxu0 0.0
    %6756 = vmatpush1.msra.mxu0 0.0
    %6757 = vmatprep.subr.mxu0 0.0
    %6758 = vmatpush1.msra.mxu0 0.0
    %6759 = vmatprep.subr.mxu0 0.0
    %6760 = vmatpush1.msra.mxu0 0.0
    %6761 = vmatprep.subr.mxu0 0.0
    %6762 = vmatpush1.msra.mxu0 0.0
    %6763 = vmatprep.subr.mxu0 0.0
    %6764 = vmatpush1.msra.mxu0 0.0
    %6765 = vmatprep.subr.mxu0 0.0
    %6766 = vmatpush1.msra.mxu0 0.0
    %6767 = vmatprep.subr.mxu0 0.0
    %6768 = vmatpush1.msra.mxu0 0.0
    %6769 = vmatprep.subr.mxu0 0.0
    %6770 = vmatpush1.msra.mxu0 0.0
    %6771 = vmatprep.subr.mxu0 0.0
    %6772 = vmatpush1.msra.mxu0 0.0
    %6773 = vmatprep.subr.mxu0 0.0
    %6774 = vmatpush1.msra.mxu0 0.0
    %6775 = vmatprep.subr.mxu0 0.0
    %6776 = vmatpush1.msra.mxu0 0.0
    %6777 = vmatprep.subr.mxu0 0.0
    %6778 = vmatpush1.msra.mxu0 0.0
    %6779 = vmatprep.subr.mxu0 0.0
    %6780 = vmatpush1.msra.mxu0 0.0
    %6781 = vmatprep.mubr.f32.mxu0 0.0
    %6782 = vmatmul.mubr.f32.gmra.mrb[0].mxu0 %v6504
    %v6783 = vpop.f32.mrb[0].mxu0
    %v6784 = vadd.f32 0.0, %v6783
    %v6785 = vpop.f32.mrb[0].mxu0
    %6786 = vmatprep.mubr.f32.mxu0 0.0
    %6787 = vmatmul.mubr.f32.gmra.mrb[0].mxu0 %v6505
    %v6788 = vpop.f32.mrb[0].mxu0
    %v6789 = vadd.f32 0.0, %v6788
    %v6790 = vpop.f32.mrb[0].mxu0
    %6791 = vmatprep.mubr.f32.mxu0 0.0
    %6792 = vmatmul.mubr.f32.gmra.mrb[0].mxu0 %v6506
    %v6793 = vpop.f32.mrb[0].mxu0
    %v6794 = vadd.f32 0.0, %v6793
    %v6795 = vpop.f32.mrb[0].mxu0
    %6796 = vdwg.mxu0
    %v6797 = vld [vmem:[#allocation35] sm:$0x1]
    %v6799 = vlaneseq
    %v6800 = vshrl.u32 %v6799, 7
    %v6801 = vsub.s32 0, %v6800
    %v6802 = vrot.slane %v6797, %v6801
    %v6804 = vadd.f32 %v6802, %v6590
    %v6807 = vrot.slane %v6687, 1
    %v6808 = vrot.slane %v6692, 1
    %v6809 = vsel %vm3865, %v6807, %v6808
    %v6811 = vadd.f32 %v6804, %v6809
    %v6814 = vrot.slane %v6784, 2
    %v6815 = vrot.slane %v6789, 2
    %v6816 = vsel %vm3878, %v6814, %v6815
    %v6818 = vadd.f32 %v6811, %v6816
    %v6819 = vld [vmem:[#allocation37] sm:$0x1]
    %v6821 = vlaneseq
    %v6822 = vshrl.u32 %v6821, 7
    %v6823 = vsub.s32 0, %v6822
    %v6824 = vrot.slane %v6819, %v6823
    %v6826 = vmul.f32 %v6818, %v6824
    %v6827 = vld [vmem:[#allocation38] sm:$0x1]
    %v6829 = vlaneseq
    %v6830 = vshrl.u32 %v6829, 7
    %v6831 = vsub.s32 0, %v6830
    %v6832 = vrot.slane %v6827, %v6831
    %v6834 = vadd.f32 %v6826, %v6832
    %vm6835 = vcmp.gt.f32.partialorder %v6834, 0.0
    %v6836 = vmin.f32 %v6834, 0.0
    %v6837 = vmul.f32 %v6836, 1.442695
    %v6838 = vpow.pop %v6837
    %v6839 = vsub.f32 %v6838, 1.0
    %v6840 = vsel %vm6835, %v6834, %v6839
    %6841 = vst [vmem:[#allocation2 + $0x1] sm:$0xff] %v6840
    %6842 = vst [vmem:[#allocation2] sm:$0x1] -inf
    %6843 = vst [vmem:[#allocation2 + $0x9] sm:$0x1] -inf
    %v6844 = vld [vmem:[#allocation2] ss:$2 sm:$0xf]
    %v6845 = vld [vmem:[%s3923] ss:$2 sm:$0xf]
    %v6846 = vld [vmem:[%s3925] ss:$2 sm:$0xf]
    %v6847 = vmax.f32 %v6844, %v6845
    %v6848 = vmax.f32 %v6847, %v6846
    %v6849 = vld [vmem:[#allocation35] sm:$0x1]
    %v6851 = vlaneseq
    %v6852 = vshrl.u32 %v6851, 7
    %v6853 = vsub.s32 0, %v6852
    %v6854 = vrot.slane %v6849, %v6853
    %v6856 = vadd.f32 %v6854, %v6595
    %v6857 = vadd.f32 %v6854, %v6600
    %v6859 = vrot.slane %v6697, 1
    %v6860 = vsel %vm3865, %v6808, %v6859
    %v6863 = vadd.f32 %v6856, %v6860
    %v6864 = vadd.f32 %v6857, %v6859
    %v6866 = vrot.slane %v6794, 2
    %v6867 = vsel %vm3878, %v6815, %v6866
    %v6870 = vadd.f32 %v6863, %v6867
    %v6871 = vadd.f32 %v6864, %v6866
    %v6872 = vld [vmem:[#allocation37] sm:$0x1]
    %v6874 = vlaneseq
    %v6875 = vshrl.u32 %v6874, 7
    %v6876 = vsub.s32 0, %v6875
    %v6877 = vrot.slane %v6872, %v6876
    %v6879 = vmul.f32 %v6870, %v6877
    %v6880 = vmul.f32 %v6871, %v6877
    %v6881 = vld [vmem:[#allocation38] sm:$0x1]
    %v6883 = vlaneseq
    %v6884 = vshrl.u32 %v6883, 7
    %v6885 = vsub.s32 0, %v6884
    %v6886 = vrot.slane %v6881, %v6885
    %v6888 = vadd.f32 %v6879, %v6886
    %v6889 = vadd.f32 %v6880, %v6886
    %vm6890 = vcmp.gt.f32.partialorder %v6888, 0.0
    %vm6891 = vcmp.gt.f32.partialorder %v6889, 0.0
    %v6892 = vmin.f32 %v6888, 0.0
    %v6893 = vmin.f32 %v6889, 0.0
    %v6894 = vmul.f32 %v6892, 1.442695
    %v6895 = vpow.pop %v6894
    %v6896 = vmul.f32 %v6893, 1.442695
    %v6897 = vpow.pop %v6896
    %v6898 = vsub.f32 %v6895, 1.0
    %v6899 = vsub.f32 %v6897, 1.0
    %v6900 = vsel %vm6890, %v6888, %v6898
    %v6901 = vsel %vm6891, %v6889, %v6899
    %6902 = vst [vmem:[#allocation2 + $0x9] sm:$0xfc] %v6900
    %6903 = vst [vmem:[#allocation2 + $0x11] sm:$0x3] %v6901
    %6904 = vst [vmem:[#allocation2 + $0xa] sm:$0x1] -inf
    %6905 = vst [vmem:[#allocation2 + $0x13] sm:$0x1] -inf
    %s6906 = scalar_lea.vmem [#allocation2], 10
    %v6907 = vld [vmem:[%s6906] ss:$2 sm:$0xf]
    %s6908 = scalar_lea.vmem [#allocation2], 11
    %v6909 = vld [vmem:[%s6908] ss:$2 sm:$0xf]
    %s6910 = scalar_lea.vmem [#allocation2], 12
    %v6911 = vld [vmem:[%s6910] ss:$2 sm:$0xf]
    %v6912 = vmax.f32 %v6907, %v6909
    %v6913 = vmax.f32 %v6912, %v6911
    %6914 = vst [vmem:[%s73] sm:$0xf] %v6848
    %s6915 = scalar_lea.vmem %s73, 4
    %6916 = vst [vmem:[%s6915] sm:$0xf] %v6913
    // Predicated region
    $region242: #{informer_forward.1} parent=1 // pred_check
      _
    $region243: #{informer_forward.1} parent=1 // pred_check_branch
      %6918 = sbr.rel (0) target = $region245
    $region244: #{informer_forward.1} parent=1 // pred_region
      _
    $region245: #{informer_forward.1} parent=1 // pred_fallthru
      _
    // Predicated region
    $region246: #{informer_forward.1} parent=1 // pred_check
      _
    $region247: #{informer_forward.1} parent=1 // pred_check_branch
      %6920 = sbr.rel (0) target = $region249
    $region248: #{informer_forward.1} parent=1 // pred_region
      _
    $region249: #{informer_forward.1} parent=1 // pred_fallthru
      _
    %6921 = vsyncpa [#allocation4], 1
    %6922 = vsyncpa [#allocation6], 1
    %6923 = vsyncpa [#allocation9], 1
    %6924 = vsyncpa [#allocation12], 1
    %6925 = vsyncpa [#allocation15], 1
    %6926 = vsyncpa [#allocation18], 1
    %6927 = vsyncpa [#allocation21], 1
    %6928 = vsyncpa [#allocation24], 1
    %6929 = vsyncpa [#allocation27], 1
    %6930 = vsyncpa [#allocation30], 1
    %6931 = vsyncpa [#allocation33], 1
    %6932 = vsyncpa [#allocation36], 1
    %6933 = vsyncpa [#allocation39], 1

</llo_original>
